<compile_context>
chip_gen: v7x
topology: tpu7x:2x2x1
jax: 0.10.0
libtpu: 0.0.40
codegen_flags: <defaults>
</compile_context>

<pallas_src>
import functools

import jax
import jax.numpy as jnp
from jax.experimental import pallas as pl
from jax.experimental.pallas import tpu as pltpu

KERNEL_SIZES = [1, 2, 3, 4, 5]
BN_EPS = 1e-5
LANE = 128
SUBLANE = 8

_VMEM = pl.BlockSpec(memory_space=pltpu.MemorySpace.VMEM)


def _round_up(x, m):
    return (x + m - 1) // m * m


# ---------------------------------------------------------------------------
# Fused Pallas kernel: 5 x (Conv1d+BN+ReLU+Conv1d+BN+ReLU+global max) -> concat
#                      -> Linear+BN+ReLU -> Linear (lane-dense padded logits)
# ---------------------------------------------------------------------------

def fused_textcnn_kernel(x_ref, w1_ref, t1_ref, w2_ref, t2_ref,
                         wf1_ref, tf1_ref, wf2_ref, bf2_ref, out_ref):
    B, T, E = x_ref.shape
    KN = t1_ref.shape[-1]

    x = x_ref[...]                                   # (B, T, E) f32, load once

    pooled = []
    for bi, k in enumerate(KERNEL_SIZES):            # static unroll over branches
        L1 = T - k + 1                               # length after conv1
        L2 = L1 - k + 1                              # length after conv2 (== pool window)

        # ---- Conv1d #1 (im2col, one MXU matmul), bias+BN folded host-side ----
        x1 = jnp.concatenate([x[:, t:t + L1, :] for t in range(k)],
                             axis=-1).reshape(B * L1, k * E)
        w1 = w1_ref[bi][:k * E, :]                   # static slice of padded pack
        h = jnp.dot(x1, w1, preferred_element_type=jnp.float32) + t1_ref[bi]
        h = jnp.maximum(h, 0.0).reshape(B, L1, KN)

        # ---- Conv1d #2 (im2col, one MXU matmul) ----
        h2 = jnp.concatenate([h[:, t:t + L2, :] for t in range(k)],
                             axis=-1).reshape(B * L2, k * KN)
        w2 = w2_ref[bi][:k * KN, :]
        g = jnp.dot(h2, w2, preferred_element_type=jnp.float32) + t2_ref[bi]
        g = jnp.maximum(g, 0.0).reshape(B, L2, KN)

        # ---- MaxPool1d(kernel_size = L2) == global max over length ----
        pooled.append(jnp.max(g, axis=1))            # (B, KN)

    flat = jnp.concatenate(pooled, axis=-1)          # (B, 5*KN), stays in VMEM

    # ---- FC: Linear -> BN(eval, folded) -> ReLU -> Linear (padded to 128) ----
    hfc = jnp.dot(flat, wf1_ref[...], preferred_element_type=jnp.float32)
    hfc = jnp.maximum(hfc + tf1_ref[...], 0.0)
    out_ref[...] = (jnp.dot(hfc, wf2_ref[...], preferred_element_type=jnp.float32)
                    + bf2_ref[...])                  # (B_pad, 128) lane-dense store


# ---------------------------------------------------------------------------
# Parameter construction (deterministic, synthetic) with host-side folding
# ---------------------------------------------------------------------------

def fold_bn(gamma, beta, mean, var):
    scale = gamma / jnp.sqrt(var + BN_EPS)
    shift = beta - mean * scale
    return scale, shift


def make_params(key, embedding_dim, kernel_num, linear_hidden_size,
                label_size, vocab_size):
    # 1 + 5*12 + 8 = 69 draws -> split plenty of keys.
    keys = iter(jax.random.split(key, 128))
    nxt = lambda: next(keys)

    E, KN, H = embedding_dim, kernel_num, linear_hidden_size
    kmax = max(KERNEL_SIZES)
    label_pad = _round_up(label_size, LANE)

    params = {
        "embedding": 0.1 * jax.random.normal(nxt(), (vocab_size, E), jnp.float32),
    }

    w1_pack, t1_pack, w2_pack, t2_pack = [], [], [], []
    for k in KERNEL_SIZES:
        # conv1: weight stored as (k, E, KN)  (PyTorch layout is (KN, E, k))
        w1 = 0.1 * jax.random.normal(nxt(), (k, E, KN), jnp.float32)
        b1 = 0.1 * jax.random.normal(nxt(), (KN,), jnp.float32)
        g1 = 1.0 + 0.1 * jax.random.normal(nxt(), (KN,), jnp.float32)
        be1 = 0.1 * jax.random.normal(nxt(), (KN,), jnp.float32)
        m1 = 0.1 * jax.random.normal(nxt(), (KN,), jnp.float32)
        v1 = 1.0 + 0.1 * jax.random.uniform(nxt(), (KN,), jnp.float32)
        s1, sh1 = fold_bn(g1, be1, m1, v1)
        w1f = (w1 * s1).reshape(k * E, KN)                         # BN scale folded
        w1f = jnp.pad(w1f, ((0, (kmax - k) * E), (0, 0)))          # pad taps to kmax
        t1 = (b1 * s1 + sh1).reshape(1, KN)                        # bias+BN shift

        # conv2
        w2 = 0.1 * jax.random.normal(nxt(), (k, KN, KN), jnp.float32)
        b2 = 0.1 * jax.random.normal(nxt(), (KN,), jnp.float32)
        g2 = 1.0 + 0.1 * jax.random.normal(nxt(), (KN,), jnp.float32)
        be2 = 0.1 * jax.random.normal(nxt(), (KN,), jnp.float32)
        m2 = 0.1 * jax.random.normal(nxt(), (KN,), jnp.float32)
        v2 = 1.0 + 0.1 * jax.random.uniform(nxt(), (KN,), jnp.float32)
        s2, sh2 = fold_bn(g2, be2, m2, v2)
        w2f = (w2 * s2).reshape(k * KN, KN)
        w2f = jnp.pad(w2f, ((0, (kmax - k) * KN), (0, 0)))
        t2 = (b2 * s2 + sh2).reshape(1, KN)

        w1_pack.append(w1f); t1_pack.append(t1)
        w2_pack.append(w2f); t2_pack.append(t2)

    params["w1"] = jnp.stack(w1_pack)          # (5, kmax*E, KN)
    params["t1"] = jnp.stack(t1_pack)          # (5, 1, KN)
    params["w2"] = jnp.stack(w2_pack)          # (5, kmax*KN, KN)
    params["t2"] = jnp.stack(t2_pack)          # (5, 1, KN)

    # FC stack: Linear -> BN -> ReLU -> Linear
    fc_in = len(KERNEL_SIZES) * KN
    fw1 = 0.1 * jax.random.normal(nxt(), (fc_in, H), jnp.float32)
    fb1 = 0.1 * jax.random.normal(nxt(), (H,), jnp.float32)
    gf = 1.0 + 0.1 * jax.random.normal(nxt(), (H,), jnp.float32)
    bf = 0.1 * jax.random.normal(nxt(), (H,), jnp.float32)
    mf = 0.1 * jax.random.normal(nxt(), (H,), jnp.float32)
    vf = 1.0 + 0.1 * jax.random.uniform(nxt(), (H,), jnp.float32)
    sf, shf = fold_bn(gf, bf, mf, vf)
    params["fc_w1"] = fw1 * sf                                   # (fc_in, H)
    params["fc_t1"] = (fb1 * sf + shf).reshape(1, H)             # (1, H)

    fw2 = 0.1 * jax.random.normal(nxt(), (H, label_size), jnp.float32)
    fb2 = 0.1 * jax.random.normal(nxt(), (label_size,), jnp.float32)
    # zero-pad the label dim to 128 lanes so the final store is lane-dense
    params["fc_w2"] = jnp.pad(fw2, ((0, 0), (0, label_pad - label_size)))
    params["fc_b2"] = jnp.pad(fb2, (0, label_pad - label_size)).reshape(1, label_pad)
    return params


# ---------------------------------------------------------------------------
# Forward
# ---------------------------------------------------------------------------

@functools.partial(jax.jit, static_argnums=(2,))
def textcnn_forward(params, token_ids, label_size):
    # token_ids: (max_text_len, batch) int32 -- matches PyTorch (seq, batch)
    embeds = jnp.take(params["embedding"], token_ids, axis=0)    # (T, B, E)
    # PyTorch: embeds.permute(1, 2, 0) -> (B, E, T) NCW.  We use NLC (B, T, E).
    x = jnp.transpose(embeds, (1, 0, 2)).astype(jnp.float32)     # (B, T, E)

    B = x.shape[0]
    B_pad = _round_up(B, SUBLANE)                                # fill sublanes
    if B_pad != B:
        x = jnp.pad(x, ((0, B_pad - B), (0, 0), (0, 0)))

    label_pad = params["fc_b2"].shape[-1]
    out_pad = pl.pallas_call(
        fused_textcnn_kernel,
        out_shape=jax.ShapeDtypeStruct((B_pad, label_pad), jnp.float32),
        in_specs=[_VMEM] * 9,
        out_specs=_VMEM,
    )(x, params["w1"], params["t1"], params["w2"], params["t2"],
      params["fc_w1"], params["fc_t1"], params["fc_w2"], params["fc_b2"])

    return out_pad[:B, :label_size]


# ---------------------------------------------------------------------------
# Main
# ---------------------------------------------------------------------------

if __name__ == "__main__":
    # Small "opt" consistent with the module.
    batch = 4
    max_text_len = 16
    embedding_dim = 32
    kernel_num = 16
    linear_hidden_size = 32
    label_size = 8
    vocab_size = 50

    key = jax.random.PRNGKey(0)
    k_params, k_inputs = jax.random.split(key)

    params = make_params(k_params, embedding_dim, kernel_num,
                         linear_hidden_size, label_size, vocab_size)

    token_ids = jax.random.randint(k_inputs, (max_text_len, batch),
                                   minval=0, maxval=vocab_size, dtype=jnp.int32)

    logits = textcnn_forward(params, token_ids, label_size)
    jax.block_until_ready(logits)

    assert logits.shape == (batch, label_size), logits.shape
    assert logits.dtype == jnp.float32
    assert bool(jnp.all(jnp.isfinite(logits)))
    print("KERNEL_OK")
</pallas_src>

<mosaic_0001>
module attributes {stable_mosaic.version = 11 : i64} {
  func.func @fused_textcnn_kernel(%arg0: memref<8x16x32xf32, #tpu.memory_space<vmem>>, %arg1: memref<5x160x16xf32, #tpu.memory_space<vmem>>, %arg2: memref<5x1x16xf32, #tpu.memory_space<vmem>>, %arg3: memref<5x80x16xf32, #tpu.memory_space<vmem>>, %arg4: memref<5x1x16xf32, #tpu.memory_space<vmem>>, %arg5: memref<80x32xf32, #tpu.memory_space<vmem>>, %arg6: memref<1x32xf32, #tpu.memory_space<vmem>>, %arg7: memref<32x128xf32, #tpu.memory_space<vmem>>, %arg8: memref<1x128xf32, #tpu.memory_space<vmem>>, %arg9: memref<8x128xf32, #tpu.memory_space<vmem>>) attributes {dimension_semantics = [], scalar_prefetch = 0 : i64, scratch_operands = 0 : i64, tpu.core_type = #tpu.core_type<tc>} {
    %c0 = arith.constant 0 : index
    %c0_0 = arith.constant 0 : index
    %c0_1 = arith.constant 0 : index
    %0 = vector.load %arg0[%c0, %c0_0, %c0_1] : memref<8x16x32xf32, #tpu.memory_space<vmem>>, vector<8x16x32xf32>
    %1 = vector.shape_cast %0 : vector<8x16x32xf32> to vector<128x32xf32>
    %c0_2 = arith.constant 0 : index
    %c0_3 = arith.constant 0 : index
    %c0_4 = arith.constant 0 : index
    %2 = vector.load %arg1[%c0_2, %c0_3, %c0_4] : memref<5x160x16xf32, #tpu.memory_space<vmem>>, vector<1x160x16xf32>
    %3 = vector.shape_cast %2 : vector<1x160x16xf32> to vector<160x16xf32>
    %4 = vector.extract_strided_slice %3 {offsets = [0, 0], sizes = [32, 16], strides = [1, 1]} : vector<160x16xf32> to vector<32x16xf32>
    %cst = arith.constant dense<0.000000e+00> : vector<128x16xf32>
    %5 = tpu.matmul %1, %4, %cst {dimension_numbers = #tpu.dot_dimension_numbers<[1], [0], [0], [1], [0, 0, 1, 1], [], []>} : vector<128x32xf32>, vector<32x16xf32>, vector<128x16xf32> -> vector<128x16xf32>
    %c0_5 = arith.constant 0 : index
    %c0_6 = arith.constant 0 : index
    %c0_7 = arith.constant 0 : index
    %6 = vector.load %arg2[%c0_5, %c0_6, %c0_7] : memref<5x1x16xf32, #tpu.memory_space<vmem>>, vector<1x1x16xf32>
    %7 = vector.shape_cast %6 : vector<1x1x16xf32> to vector<1x16xf32>
    %8 = vector.broadcast %7 : vector<1x16xf32> to vector<128x16xf32>
    %9 = arith.addf %5, %8 : vector<128x16xf32>
    %cst_8 = arith.constant 0.000000e+00 : f32
    %10 = vector.broadcast %cst_8 : f32 to vector<128x16xf32>
    %11 = arith.maximumf %9, %10 : vector<128x16xf32>
    %12 = vector.shape_cast %11 : vector<128x16xf32> to vector<8x16x16xf32>
    %13 = vector.shape_cast %12 : vector<8x16x16xf32> to vector<128x16xf32>
    %c0_9 = arith.constant 0 : index
    %c0_10 = arith.constant 0 : index
    %c0_11 = arith.constant 0 : index
    %14 = vector.load %arg3[%c0_9, %c0_10, %c0_11] : memref<5x80x16xf32, #tpu.memory_space<vmem>>, vector<1x80x16xf32>
    %15 = vector.shape_cast %14 : vector<1x80x16xf32> to vector<80x16xf32>
    %16 = vector.extract_strided_slice %15 {offsets = [0, 0], sizes = [16, 16], strides = [1, 1]} : vector<80x16xf32> to vector<16x16xf32>
    %cst_12 = arith.constant dense<0.000000e+00> : vector<128x16xf32>
    %17 = tpu.matmul %13, %16, %cst_12 {dimension_numbers = #tpu.dot_dimension_numbers<[1], [0], [0], [1], [0, 0, 1, 1], [], []>} : vector<128x16xf32>, vector<16x16xf32>, vector<128x16xf32> -> vector<128x16xf32>
    %c0_13 = arith.constant 0 : index
    %c0_14 = arith.constant 0 : index
    %c0_15 = arith.constant 0 : index
    %18 = vector.load %arg4[%c0_13, %c0_14, %c0_15] : memref<5x1x16xf32, #tpu.memory_space<vmem>>, vector<1x1x16xf32>
    %19 = vector.shape_cast %18 : vector<1x1x16xf32> to vector<1x16xf32>
    %20 = vector.broadcast %19 : vector<1x16xf32> to vector<128x16xf32>
    %21 = arith.addf %17, %20 : vector<128x16xf32>
    %cst_16 = arith.constant 0.000000e+00 : f32
    %22 = vector.broadcast %cst_16 : f32 to vector<128x16xf32>
    %23 = arith.maximumf %21, %22 : vector<128x16xf32>
    %24 = vector.shape_cast %23 : vector<128x16xf32> to vector<8x16x16xf32>
    %cst_17 = arith.constant dense<0xFF800000> : vector<8x16xf32>
    %25 = vector.multi_reduction <maximumf>, %24, %cst_17 [1] : vector<8x16x16xf32> to vector<8x16xf32>
    %26 = vector.extract_strided_slice %0 {offsets = [0, 0, 0], sizes = [8, 15, 32], strides = [1, 1, 1]} : vector<8x16x32xf32> to vector<8x15x32xf32>
    %27 = vector.extract_strided_slice %0 {offsets = [0, 1, 0], sizes = [8, 15, 32], strides = [1, 1, 1]} : vector<8x16x32xf32> to vector<8x15x32xf32>
    %28 = tpu.concatenate %26, %27 in 2 : vector<8x15x32xf32>, vector<8x15x32xf32> -> vector<8x15x64xf32>
    %29 = vector.shape_cast %28 : vector<8x15x64xf32> to vector<120x64xf32>
    %c1 = arith.constant 1 : index
    %c0_18 = arith.constant 0 : index
    %c0_19 = arith.constant 0 : index
    %30 = vector.load %arg1[%c1, %c0_18, %c0_19] : memref<5x160x16xf32, #tpu.memory_space<vmem>>, vector<1x160x16xf32>
    %31 = vector.shape_cast %30 : vector<1x160x16xf32> to vector<160x16xf32>
    %32 = vector.extract_strided_slice %31 {offsets = [0, 0], sizes = [64, 16], strides = [1, 1]} : vector<160x16xf32> to vector<64x16xf32>
    %cst_20 = arith.constant dense<0.000000e+00> : vector<120x16xf32>
    %33 = tpu.matmul %29, %32, %cst_20 {dimension_numbers = #tpu.dot_dimension_numbers<[1], [0], [0], [1], [0, 0, 1, 1], [], []>} : vector<120x64xf32>, vector<64x16xf32>, vector<120x16xf32> -> vector<120x16xf32>
    %c1_21 = arith.constant 1 : index
    %c0_22 = arith.constant 0 : index
    %c0_23 = arith.constant 0 : index
    %34 = vector.load %arg2[%c1_21, %c0_22, %c0_23] : memref<5x1x16xf32, #tpu.memory_space<vmem>>, vector<1x1x16xf32>
    %35 = vector.shape_cast %34 : vector<1x1x16xf32> to vector<1x16xf32>
    %36 = vector.broadcast %35 : vector<1x16xf32> to vector<120x16xf32>
    %37 = arith.addf %33, %36 : vector<120x16xf32>
    %cst_24 = arith.constant 0.000000e+00 : f32
    %38 = vector.broadcast %cst_24 : f32 to vector<120x16xf32>
    %39 = arith.maximumf %37, %38 : vector<120x16xf32>
    %40 = vector.shape_cast %39 : vector<120x16xf32> to vector<8x15x16xf32>
    %41 = vector.extract_strided_slice %40 {offsets = [0, 0, 0], sizes = [8, 14, 16], strides = [1, 1, 1]} : vector<8x15x16xf32> to vector<8x14x16xf32>
    %42 = vector.extract_strided_slice %40 {offsets = [0, 1, 0], sizes = [8, 14, 16], strides = [1, 1, 1]} : vector<8x15x16xf32> to vector<8x14x16xf32>
    %43 = tpu.concatenate %41, %42 in 2 : vector<8x14x16xf32>, vector<8x14x16xf32> -> vector<8x14x32xf32>
    %44 = vector.shape_cast %43 : vector<8x14x32xf32> to vector<112x32xf32>
    %c1_25 = arith.constant 1 : index
    %c0_26 = arith.constant 0 : index
    %c0_27 = arith.constant 0 : index
    %45 = vector.load %arg3[%c1_25, %c0_26, %c0_27] : memref<5x80x16xf32, #tpu.memory_space<vmem>>, vector<1x80x16xf32>
    %46 = vector.shape_cast %45 : vector<1x80x16xf32> to vector<80x16xf32>
    %47 = vector.extract_strided_slice %46 {offsets = [0, 0], sizes = [32, 16], strides = [1, 1]} : vector<80x16xf32> to vector<32x16xf32>
    %cst_28 = arith.constant dense<0.000000e+00> : vector<112x16xf32>
    %48 = tpu.matmul %44, %47, %cst_28 {dimension_numbers = #tpu.dot_dimension_numbers<[1], [0], [0], [1], [0, 0, 1, 1], [], []>} : vector<112x32xf32>, vector<32x16xf32>, vector<112x16xf32> -> vector<112x16xf32>
    %c1_29 = arith.constant 1 : index
    %c0_30 = arith.constant 0 : index
    %c0_31 = arith.constant 0 : index
    %49 = vector.load %arg4[%c1_29, %c0_30, %c0_31] : memref<5x1x16xf32, #tpu.memory_space<vmem>>, vector<1x1x16xf32>
    %50 = vector.shape_cast %49 : vector<1x1x16xf32> to vector<1x16xf32>
    %51 = vector.broadcast %50 : vector<1x16xf32> to vector<112x16xf32>
    %52 = arith.addf %48, %51 : vector<112x16xf32>
    %cst_32 = arith.constant 0.000000e+00 : f32
    %53 = vector.broadcast %cst_32 : f32 to vector<112x16xf32>
    %54 = arith.maximumf %52, %53 : vector<112x16xf32>
    %55 = vector.shape_cast %54 : vector<112x16xf32> to vector<8x14x16xf32>
    %cst_33 = arith.constant dense<0xFF800000> : vector<8x16xf32>
    %56 = vector.multi_reduction <maximumf>, %55, %cst_33 [1] : vector<8x14x16xf32> to vector<8x16xf32>
    %57 = vector.extract_strided_slice %0 {offsets = [0, 0, 0], sizes = [8, 14, 32], strides = [1, 1, 1]} : vector<8x16x32xf32> to vector<8x14x32xf32>
    %58 = vector.extract_strided_slice %0 {offsets = [0, 1, 0], sizes = [8, 14, 32], strides = [1, 1, 1]} : vector<8x16x32xf32> to vector<8x14x32xf32>
    %59 = vector.extract_strided_slice %0 {offsets = [0, 2, 0], sizes = [8, 14, 32], strides = [1, 1, 1]} : vector<8x16x32xf32> to vector<8x14x32xf32>
    %60 = tpu.concatenate %57, %58, %59 in 2 : vector<8x14x32xf32>, vector<8x14x32xf32>, vector<8x14x32xf32> -> vector<8x14x96xf32>
    %61 = vector.shape_cast %60 : vector<8x14x96xf32> to vector<112x96xf32>
    %c2 = arith.constant 2 : index
    %c0_34 = arith.constant 0 : index
    %c0_35 = arith.constant 0 : index
    %62 = vector.load %arg1[%c2, %c0_34, %c0_35] : memref<5x160x16xf32, #tpu.memory_space<vmem>>, vector<1x160x16xf32>
    %63 = vector.shape_cast %62 : vector<1x160x16xf32> to vector<160x16xf32>
    %64 = vector.extract_strided_slice %63 {offsets = [0, 0], sizes = [96, 16], strides = [1, 1]} : vector<160x16xf32> to vector<96x16xf32>
    %cst_36 = arith.constant dense<0.000000e+00> : vector<112x16xf32>
    %65 = tpu.matmul %61, %64, %cst_36 {dimension_numbers = #tpu.dot_dimension_numbers<[1], [0], [0], [1], [0, 0, 1, 1], [], []>} : vector<112x96xf32>, vector<96x16xf32>, vector<112x16xf32> -> vector<112x16xf32>
    %c2_37 = arith.constant 2 : index
    %c0_38 = arith.constant 0 : index
    %c0_39 = arith.constant 0 : index
    %66 = vector.load %arg2[%c2_37, %c0_38, %c0_39] : memref<5x1x16xf32, #tpu.memory_space<vmem>>, vector<1x1x16xf32>
    %67 = vector.shape_cast %66 : vector<1x1x16xf32> to vector<1x16xf32>
    %68 = vector.broadcast %67 : vector<1x16xf32> to vector<112x16xf32>
    %69 = arith.addf %65, %68 : vector<112x16xf32>
    %cst_40 = arith.constant 0.000000e+00 : f32
    %70 = vector.broadcast %cst_40 : f32 to vector<112x16xf32>
    %71 = arith.maximumf %69, %70 : vector<112x16xf32>
    %72 = vector.shape_cast %71 : vector<112x16xf32> to vector<8x14x16xf32>
    %73 = vector.extract_strided_slice %72 {offsets = [0, 0, 0], sizes = [8, 12, 16], strides = [1, 1, 1]} : vector<8x14x16xf32> to vector<8x12x16xf32>
    %74 = vector.extract_strided_slice %72 {offsets = [0, 1, 0], sizes = [8, 12, 16], strides = [1, 1, 1]} : vector<8x14x16xf32> to vector<8x12x16xf32>
    %75 = vector.extract_strided_slice %72 {offsets = [0, 2, 0], sizes = [8, 12, 16], strides = [1, 1, 1]} : vector<8x14x16xf32> to vector<8x12x16xf32>
    %76 = tpu.concatenate %73, %74, %75 in 2 : vector<8x12x16xf32>, vector<8x12x16xf32>, vector<8x12x16xf32> -> vector<8x12x48xf32>
    %77 = vector.shape_cast %76 : vector<8x12x48xf32> to vector<96x48xf32>
    %c2_41 = arith.constant 2 : index
    %c0_42 = arith.constant 0 : index
    %c0_43 = arith.constant 0 : index
    %78 = vector.load %arg3[%c2_41, %c0_42, %c0_43] : memref<5x80x16xf32, #tpu.memory_space<vmem>>, vector<1x80x16xf32>
    %79 = vector.shape_cast %78 : vector<1x80x16xf32> to vector<80x16xf32>
    %80 = vector.extract_strided_slice %79 {offsets = [0, 0], sizes = [48, 16], strides = [1, 1]} : vector<80x16xf32> to vector<48x16xf32>
    %cst_44 = arith.constant dense<0.000000e+00> : vector<96x16xf32>
    %81 = tpu.matmul %77, %80, %cst_44 {dimension_numbers = #tpu.dot_dimension_numbers<[1], [0], [0], [1], [0, 0, 1, 1], [], []>} : vector<96x48xf32>, vector<48x16xf32>, vector<96x16xf32> -> vector<96x16xf32>
    %c2_45 = arith.constant 2 : index
    %c0_46 = arith.constant 0 : index
    %c0_47 = arith.constant 0 : index
    %82 = vector.load %arg4[%c2_45, %c0_46, %c0_47] : memref<5x1x16xf32, #tpu.memory_space<vmem>>, vector<1x1x16xf32>
    %83 = vector.shape_cast %82 : vector<1x1x16xf32> to vector<1x16xf32>
    %84 = vector.broadcast %83 : vector<1x16xf32> to vector<96x16xf32>
    %85 = arith.addf %81, %84 : vector<96x16xf32>
    %cst_48 = arith.constant 0.000000e+00 : f32
    %86 = vector.broadcast %cst_48 : f32 to vector<96x16xf32>
    %87 = arith.maximumf %85, %86 : vector<96x16xf32>
    %88 = vector.shape_cast %87 : vector<96x16xf32> to vector<8x12x16xf32>
    %cst_49 = arith.constant dense<0xFF800000> : vector<8x16xf32>
    %89 = vector.multi_reduction <maximumf>, %88, %cst_49 [1] : vector<8x12x16xf32> to vector<8x16xf32>
    %90 = vector.extract_strided_slice %0 {offsets = [0, 0, 0], sizes = [8, 13, 32], strides = [1, 1, 1]} : vector<8x16x32xf32> to vector<8x13x32xf32>
    %91 = vector.extract_strided_slice %0 {offsets = [0, 1, 0], sizes = [8, 13, 32], strides = [1, 1, 1]} : vector<8x16x32xf32> to vector<8x13x32xf32>
    %92 = vector.extract_strided_slice %0 {offsets = [0, 2, 0], sizes = [8, 13, 32], strides = [1, 1, 1]} : vector<8x16x32xf32> to vector<8x13x32xf32>
    %93 = vector.extract_strided_slice %0 {offsets = [0, 3, 0], sizes = [8, 13, 32], strides = [1, 1, 1]} : vector<8x16x32xf32> to vector<8x13x32xf32>
    %94 = tpu.concatenate %90, %91, %92, %93 in 2 : vector<8x13x32xf32>, vector<8x13x32xf32>, vector<8x13x32xf32>, vector<8x13x32xf32> -> vector<8x13x128xf32>
    %95 = vector.shape_cast %94 : vector<8x13x128xf32> to vector<104x128xf32>
    %c3 = arith.constant 3 : index
    %c0_50 = arith.constant 0 : index
    %c0_51 = arith.constant 0 : index
    %96 = vector.load %arg1[%c3, %c0_50, %c0_51] : memref<5x160x16xf32, #tpu.memory_space<vmem>>, vector<1x160x16xf32>
    %97 = vector.shape_cast %96 : vector<1x160x16xf32> to vector<160x16xf32>
    %98 = vector.extract_strided_slice %97 {offsets = [0, 0], sizes = [128, 16], strides = [1, 1]} : vector<160x16xf32> to vector<128x16xf32>
    %cst_52 = arith.constant dense<0.000000e+00> : vector<104x16xf32>
    %99 = tpu.matmul %95, %98, %cst_52 {dimension_numbers = #tpu.dot_dimension_numbers<[1], [0], [0], [1], [0, 0, 1, 1], [], []>} : vector<104x128xf32>, vector<128x16xf32>, vector<104x16xf32> -> vector<104x16xf32>
    %c3_53 = arith.constant 3 : index
    %c0_54 = arith.constant 0 : index
    %c0_55 = arith.constant 0 : index
    %100 = vector.load %arg2[%c3_53, %c0_54, %c0_55] : memref<5x1x16xf32, #tpu.memory_space<vmem>>, vector<1x1x16xf32>
    %101 = vector.shape_cast %100 : vector<1x1x16xf32> to vector<1x16xf32>
    %102 = vector.broadcast %101 : vector<1x16xf32> to vector<104x16xf32>
    %103 = arith.addf %99, %102 : vector<104x16xf32>
    %cst_56 = arith.constant 0.000000e+00 : f32
    %104 = vector.broadcast %cst_56 : f32 to vector<104x16xf32>
    %105 = arith.maximumf %103, %104 : vector<104x16xf32>
    %106 = vector.shape_cast %105 : vector<104x16xf32> to vector<8x13x16xf32>
    %107 = vector.extract_strided_slice %106 {offsets = [0, 0, 0], sizes = [8, 10, 16], strides = [1, 1, 1]} : vector<8x13x16xf32> to vector<8x10x16xf32>
    %108 = vector.extract_strided_slice %106 {offsets = [0, 1, 0], sizes = [8, 10, 16], strides = [1, 1, 1]} : vector<8x13x16xf32> to vector<8x10x16xf32>
    %109 = vector.extract_strided_slice %106 {offsets = [0, 2, 0], sizes = [8, 10, 16], strides = [1, 1, 1]} : vector<8x13x16xf32> to vector<8x10x16xf32>
    %110 = vector.extract_strided_slice %106 {offsets = [0, 3, 0], sizes = [8, 10, 16], strides = [1, 1, 1]} : vector<8x13x16xf32> to vector<8x10x16xf32>
    %111 = tpu.concatenate %107, %108, %109, %110 in 2 : vector<8x10x16xf32>, vector<8x10x16xf32>, vector<8x10x16xf32>, vector<8x10x16xf32> -> vector<8x10x64xf32>
    %112 = vector.shape_cast %111 : vector<8x10x64xf32> to vector<80x64xf32>
    %c3_57 = arith.constant 3 : index
    %c0_58 = arith.constant 0 : index
    %c0_59 = arith.constant 0 : index
    %113 = vector.load %arg3[%c3_57, %c0_58, %c0_59] : memref<5x80x16xf32, #tpu.memory_space<vmem>>, vector<1x80x16xf32>
    %114 = vector.shape_cast %113 : vector<1x80x16xf32> to vector<80x16xf32>
    %115 = vector.extract_strided_slice %114 {offsets = [0, 0], sizes = [64, 16], strides = [1, 1]} : vector<80x16xf32> to vector<64x16xf32>
    %cst_60 = arith.constant dense<0.000000e+00> : vector<80x16xf32>
    %116 = tpu.matmul %112, %115, %cst_60 {dimension_numbers = #tpu.dot_dimension_numbers<[1], [0], [0], [1], [0, 0, 1, 1], [], []>} : vector<80x64xf32>, vector<64x16xf32>, vector<80x16xf32> -> vector<80x16xf32>
    %c3_61 = arith.constant 3 : index
    %c0_62 = arith.constant 0 : index
    %c0_63 = arith.constant 0 : index
    %117 = vector.load %arg4[%c3_61, %c0_62, %c0_63] : memref<5x1x16xf32, #tpu.memory_space<vmem>>, vector<1x1x16xf32>
    %118 = vector.shape_cast %117 : vector<1x1x16xf32> to vector<1x16xf32>
    %119 = vector.broadcast %118 : vector<1x16xf32> to vector<80x16xf32>
    %120 = arith.addf %116, %119 : vector<80x16xf32>
    %cst_64 = arith.constant 0.000000e+00 : f32
    %121 = vector.broadcast %cst_64 : f32 to vector<80x16xf32>
    %122 = arith.maximumf %120, %121 : vector<80x16xf32>
    %123 = vector.shape_cast %122 : vector<80x16xf32> to vector<8x10x16xf32>
    %cst_65 = arith.constant dense<0xFF800000> : vector<8x16xf32>
    %124 = vector.multi_reduction <maximumf>, %123, %cst_65 [1] : vector<8x10x16xf32> to vector<8x16xf32>
    %125 = vector.extract_strided_slice %0 {offsets = [0, 0, 0], sizes = [8, 12, 32], strides = [1, 1, 1]} : vector<8x16x32xf32> to vector<8x12x32xf32>
    %126 = vector.extract_strided_slice %0 {offsets = [0, 1, 0], sizes = [8, 12, 32], strides = [1, 1, 1]} : vector<8x16x32xf32> to vector<8x12x32xf32>
    %127 = vector.extract_strided_slice %0 {offsets = [0, 2, 0], sizes = [8, 12, 32], strides = [1, 1, 1]} : vector<8x16x32xf32> to vector<8x12x32xf32>
    %128 = vector.extract_strided_slice %0 {offsets = [0, 3, 0], sizes = [8, 12, 32], strides = [1, 1, 1]} : vector<8x16x32xf32> to vector<8x12x32xf32>
    %129 = vector.extract_strided_slice %0 {offsets = [0, 4, 0], sizes = [8, 12, 32], strides = [1, 1, 1]} : vector<8x16x32xf32> to vector<8x12x32xf32>
    %130 = tpu.concatenate %125, %126, %127, %128, %129 in 2 : vector<8x12x32xf32>, vector<8x12x32xf32>, vector<8x12x32xf32>, vector<8x12x32xf32>, vector<8x12x32xf32> -> vector<8x12x160xf32>
    %131 = vector.shape_cast %130 : vector<8x12x160xf32> to vector<96x160xf32>
    %c4 = arith.constant 4 : index
    %c0_66 = arith.constant 0 : index
    %c0_67 = arith.constant 0 : index
    %132 = vector.load %arg1[%c4, %c0_66, %c0_67] : memref<5x160x16xf32, #tpu.memory_space<vmem>>, vector<1x160x16xf32>
    %133 = vector.shape_cast %132 : vector<1x160x16xf32> to vector<160x16xf32>
    %cst_68 = arith.constant dense<0.000000e+00> : vector<96x16xf32>
    %134 = tpu.matmul %131, %133, %cst_68 {dimension_numbers = #tpu.dot_dimension_numbers<[1], [0], [0], [1], [0, 0, 1, 1], [], []>} : vector<96x160xf32>, vector<160x16xf32>, vector<96x16xf32> -> vector<96x16xf32>
    %c4_69 = arith.constant 4 : index
    %c0_70 = arith.constant 0 : index
    %c0_71 = arith.constant 0 : index
    %135 = vector.load %arg2[%c4_69, %c0_70, %c0_71] : memref<5x1x16xf32, #tpu.memory_space<vmem>>, vector<1x1x16xf32>
    %136 = vector.shape_cast %135 : vector<1x1x16xf32> to vector<1x16xf32>
    %137 = vector.broadcast %136 : vector<1x16xf32> to vector<96x16xf32>
    %138 = arith.addf %134, %137 : vector<96x16xf32>
    %cst_72 = arith.constant 0.000000e+00 : f32
    %139 = vector.broadcast %cst_72 : f32 to vector<96x16xf32>
    %140 = arith.maximumf %138, %139 : vector<96x16xf32>
    %141 = vector.shape_cast %140 : vector<96x16xf32> to vector<8x12x16xf32>
    %142 = vector.extract_strided_slice %141 {offsets = [0, 0, 0], sizes = [8, 8, 16], strides = [1, 1, 1]} : vector<8x12x16xf32> to vector<8x8x16xf32>
    %143 = vector.extract_strided_slice %141 {offsets = [0, 1, 0], sizes = [8, 8, 16], strides = [1, 1, 1]} : vector<8x12x16xf32> to vector<8x8x16xf32>
    %144 = vector.extract_strided_slice %141 {offsets = [0, 2, 0], sizes = [8, 8, 16], strides = [1, 1, 1]} : vector<8x12x16xf32> to vector<8x8x16xf32>
    %145 = vector.extract_strided_slice %141 {offsets = [0, 3, 0], sizes = [8, 8, 16], strides = [1, 1, 1]} : vector<8x12x16xf32> to vector<8x8x16xf32>
    %146 = vector.extract_strided_slice %141 {offsets = [0, 4, 0], sizes = [8, 8, 16], strides = [1, 1, 1]} : vector<8x12x16xf32> to vector<8x8x16xf32>
    %147 = tpu.concatenate %142, %143, %144, %145, %146 in 2 : vector<8x8x16xf32>, vector<8x8x16xf32>, vector<8x8x16xf32>, vector<8x8x16xf32>, vector<8x8x16xf32> -> vector<8x8x80xf32>
    %148 = vector.shape_cast %147 : vector<8x8x80xf32> to vector<64x80xf32>
    %c4_73 = arith.constant 4 : index
    %c0_74 = arith.constant 0 : index
    %c0_75 = arith.constant 0 : index
    %149 = vector.load %arg3[%c4_73, %c0_74, %c0_75] : memref<5x80x16xf32, #tpu.memory_space<vmem>>, vector<1x80x16xf32>
    %150 = vector.shape_cast %149 : vector<1x80x16xf32> to vector<80x16xf32>
    %cst_76 = arith.constant dense<0.000000e+00> : vector<64x16xf32>
    %151 = tpu.matmul %148, %150, %cst_76 {dimension_numbers = #tpu.dot_dimension_numbers<[1], [0], [0], [1], [0, 0, 1, 1], [], []>} : vector<64x80xf32>, vector<80x16xf32>, vector<64x16xf32> -> vector<64x16xf32>
    %c4_77 = arith.constant 4 : index
    %c0_78 = arith.constant 0 : index
    %c0_79 = arith.constant 0 : index
    %152 = vector.load %arg4[%c4_77, %c0_78, %c0_79] : memref<5x1x16xf32, #tpu.memory_space<vmem>>, vector<1x1x16xf32>
    %153 = vector.shape_cast %152 : vector<1x1x16xf32> to vector<1x16xf32>
    %154 = vector.broadcast %153 : vector<1x16xf32> to vector<64x16xf32>
    %155 = arith.addf %151, %154 : vector<64x16xf32>
    %cst_80 = arith.constant 0.000000e+00 : f32
    %156 = vector.broadcast %cst_80 : f32 to vector<64x16xf32>
    %157 = arith.maximumf %155, %156 : vector<64x16xf32>
    %158 = vector.shape_cast %157 : vector<64x16xf32> to vector<8x8x16xf32>
    %cst_81 = arith.constant dense<0xFF800000> : vector<8x16xf32>
    %159 = vector.multi_reduction <maximumf>, %158, %cst_81 [1] : vector<8x8x16xf32> to vector<8x16xf32>
    %160 = tpu.concatenate %25, %56, %89, %124, %159 in 1 : vector<8x16xf32>, vector<8x16xf32>, vector<8x16xf32>, vector<8x16xf32>, vector<8x16xf32> -> vector<8x80xf32>
    %c0_82 = arith.constant 0 : index
    %c0_83 = arith.constant 0 : index
    %161 = vector.load %arg5[%c0_82, %c0_83] : memref<80x32xf32, #tpu.memory_space<vmem>>, vector<80x32xf32>
    %cst_84 = arith.constant dense<0.000000e+00> : vector<8x32xf32>
    %162 = tpu.matmul %160, %161, %cst_84 {dimension_numbers = #tpu.dot_dimension_numbers<[1], [0], [0], [1], [0, 0, 1, 1], [], []>} : vector<8x80xf32>, vector<80x32xf32>, vector<8x32xf32> -> vector<8x32xf32>
    %c0_85 = arith.constant 0 : index
    %c0_86 = arith.constant 0 : index
    %163 = vector.load %arg6[%c0_85, %c0_86] : memref<1x32xf32, #tpu.memory_space<vmem>>, vector<1x32xf32>
    %164 = vector.broadcast %163 : vector<1x32xf32> to vector<8x32xf32>
    %165 = arith.addf %162, %164 : vector<8x32xf32>
    %cst_87 = arith.constant 0.000000e+00 : f32
    %166 = vector.broadcast %cst_87 : f32 to vector<8x32xf32>
    %167 = arith.maximumf %165, %166 : vector<8x32xf32>
    %c0_88 = arith.constant 0 : index
    %c0_89 = arith.constant 0 : index
    %168 = vector.load %arg7[%c0_88, %c0_89] : memref<32x128xf32, #tpu.memory_space<vmem>>, vector<32x128xf32>
    %cst_90 = arith.constant dense<0.000000e+00> : vector<8x128xf32>
    %169 = tpu.matmul %167, %168, %cst_90 {dimension_numbers = #tpu.dot_dimension_numbers<[1], [0], [0], [1], [0, 0, 1, 1], [], []>} : vector<8x32xf32>, vector<32x128xf32>, vector<8x128xf32> -> vector<8x128xf32>
    %c0_91 = arith.constant 0 : index
    %c0_92 = arith.constant 0 : index
    %170 = vector.load %arg8[%c0_91, %c0_92] : memref<1x128xf32, #tpu.memory_space<vmem>>, vector<1x128xf32>
    %171 = vector.broadcast %170 : vector<1x128xf32> to vector<8x128xf32>
    %172 = arith.addf %169, %171 : vector<8x128xf32>
    %c0_93 = arith.constant 0 : index
    %c0_94 = arith.constant 0 : index
    %173 = vector.load %arg9[%c0_93, %c0_94] : memref<8x128xf32, #tpu.memory_space<vmem>>, vector<8x128xf32>
    tpu.vector_store %arg9[%c0_93, %c0_94], %172 {strides = array<i32>} : memref<8x128xf32, #tpu.memory_space<vmem>>, vector<8x128xf32>,
    return
  }
}

</mosaic_0001>

<llo_original>
// kernel: textcnn_forward.1
$region0: #{textcnn_forward.1}
  #allocation0 [shape = 'u32[]', space=smem, size = 0x4, offset = 0x4, fixed_abs, tag = 'smem constant byte address 0x4 - core index']
  #allocation1 [shape = 'u32[144,128]{1,0:T(1,128)}', space=vmem, size = 0x12000, scoped, tag = 'internal scratch']
  %s0 = inlined_call_operand.vmem [shape: f32[8,16,32], index: 0, kind: input, shape index: {}]
  %s1 = inlined_call_operand.vmem [shape: f32[5,160,16], index: 1, kind: input, shape index: {}]
  %s2 = inlined_call_operand.vmem [shape: f32[5,1,16], index: 2, kind: input, shape index: {}]
  %s3 = inlined_call_operand.vmem [shape: f32[5,80,16], index: 3, kind: input, shape index: {}]
  %s4 = inlined_call_operand.vmem [shape: f32[5,1,16], index: 4, kind: input, shape index: {}]
  %s5 = inlined_call_operand.vmem [shape: f32[80,32], index: 5, kind: input, shape index: {}]
  %s6 = inlined_call_operand.vmem [shape: f32[1,32], index: 6, kind: input, shape index: {}]
  %s7 = inlined_call_operand.vmem [shape: f32[32,128], index: 7, kind: input, shape index: {}]
  %s8 = inlined_call_operand.vmem [shape: f32[1,128], index: 8, kind: input, shape index: {}]
  %s9 = inlined_call_operand.vmem [shape: f32[8,128], index: 9, kind: output, shape index: {}]
  %s10 = sld [smem:[#allocation0]]
  $region46: #{textcnn_forward.1} parent=0
    _
  %s12 = ssub.s32 1, %s10
  %s13 = scalar_select 0, %s12, %s10
  // Predicated region
  $region2: #{textcnn_forward.1} parent=0 // pred_check
    _
  $region3: #{textcnn_forward.1} parent=0 // pred_check_branch
    %15 = sbr.rel (0) target = $region5
  $region4: #{textcnn_forward.1} parent=0 // pred_region
    _
  $region5: #{textcnn_forward.1} parent=0 // pred_fallthru
    _
  // Predicated region
  $region6: #{textcnn_forward.1} parent=0 // pred_check
    _
  $region7: #{textcnn_forward.1} parent=0 // pred_check_branch
    %17 = sbr.rel (0) target = $region9
  $region8: #{textcnn_forward.1} parent=0 // pred_region
    _
  $region9: #{textcnn_forward.1} parent=0 // pred_fallthru
    _
  // Predicated region
  $region10: #{textcnn_forward.1} parent=0 // pred_check
    _
  $region11: #{textcnn_forward.1} parent=0 // pred_check_branch
    %19 = sbr.rel (0) target = $region13
  $region12: #{textcnn_forward.1} parent=0 // pred_region
    _
  $region13: #{textcnn_forward.1} parent=0 // pred_fallthru
    _
  // Predicated region
  $region14: #{textcnn_forward.1} parent=0 // pred_check
    _
  $region15: #{textcnn_forward.1} parent=0 // pred_check_branch
    %21 = sbr.rel (0) target = $region17
  $region16: #{textcnn_forward.1} parent=0 // pred_region
    _
  $region17: #{textcnn_forward.1} parent=0 // pred_fallthru
    _
  // Predicated region
  $region18: #{textcnn_forward.1} parent=0 // pred_check
    _
  $region19: #{textcnn_forward.1} parent=0 // pred_check_branch
    %23 = sbr.rel (0) target = $region21
  $region20: #{textcnn_forward.1} parent=0 // pred_region
    _
  $region21: #{textcnn_forward.1} parent=0 // pred_fallthru
    _
  // Predicated region
  $region22: #{textcnn_forward.1} parent=0 // pred_check
    _
  $region23: #{textcnn_forward.1} parent=0 // pred_check_branch
    %25 = sbr.rel (0) target = $region25
  $region24: #{textcnn_forward.1} parent=0 // pred_region
    _
  $region25: #{textcnn_forward.1} parent=0 // pred_fallthru
    _
  // Predicated region
  $region26: #{textcnn_forward.1} parent=0 // pred_check
    _
  $region27: #{textcnn_forward.1} parent=0 // pred_check_branch
    %27 = sbr.rel (0) target = $region29
  $region28: #{textcnn_forward.1} parent=0 // pred_region
    _
  $region29: #{textcnn_forward.1} parent=0 // pred_fallthru
    _
  // Predicated region
  $region30: #{textcnn_forward.1} parent=0 // pred_check
    _
  $region31: #{textcnn_forward.1} parent=0 // pred_check_branch
    %29 = sbr.rel (0) target = $region33
  $region32: #{textcnn_forward.1} parent=0 // pred_region
    _
  $region33: #{textcnn_forward.1} parent=0 // pred_fallthru
    _
  // Predicated region
  $region34: #{textcnn_forward.1} parent=0 // pred_check
    _
  $region35: #{textcnn_forward.1} parent=0 // pred_check_branch
    %31 = sbr.rel (0) target = $region37
  $region36: #{textcnn_forward.1} parent=0 // pred_region
    _
  $region37: #{textcnn_forward.1} parent=0 // pred_fallthru
    _
  %v32 = vld [vmem:[%s0] sm:$0xff]
  %v33 = vld [vmem:[%s0 + $0x8] sm:$0xff]
  %v34 = vld [vmem:[%s0 + $0x10] sm:$0xff]
  %v35 = vld [vmem:[%s0 + $0x18] sm:$0xff]
  %v36 = vld [vmem:[%s0 + $0x20] sm:$0xff]
  %v37 = vld [vmem:[%s0 + $0x28] sm:$0xff]
  %v38 = vld [vmem:[%s0 + $0x30] sm:$0xff]
  %v39 = vld [vmem:[%s0 + $0x38] sm:$0xff]
  %v40 = vld [vmem:[%s0 + $0x40] sm:$0xff]
  %v41 = vld [vmem:[%s0 + $0x48] sm:$0xff]
  %v42 = vld [vmem:[%s0 + $0x50] sm:$0xff]
  %v43 = vld [vmem:[%s0 + $0x58] sm:$0xff]
  %v44 = vld [vmem:[%s0 + $0x60] sm:$0xff]
  %v45 = vld [vmem:[%s0 + $0x68] sm:$0xff]
  %v46 = vld [vmem:[%s0 + $0x70] sm:$0xff]
  %v47 = vld [vmem:[%s0 + $0x78] sm:$0xff]
  %v48 = vld [vmem:[%s1] sm:$0xff]
  %v49 = vld [vmem:[%s1 + $0x8] sm:$0xff]
  %v50 = vld [vmem:[%s1 + $0x10] sm:$0xff]
  %v51 = vld [vmem:[%s1 + $0x18] sm:$0xff]
  %v52 = vld [vmem:[%s2] sm:$0x1]
  %v54 = vlaneseq
  %v55 = vshrl.u32 %v54, 7
  %v56 = vsub.s32 0, %v55
  %v57 = vrot.slane %v52, %v56
  %vm59 = vcmask 261120
  %v61 = vsel %vm59, %v32, 0
  %v64 = vsel %vm59, %v33, 0
  %v67 = vsel %vm59, %v34, 0
  %v70 = vsel %vm59, %v35, 0
  %v73 = vsel %vm59, %v36, 0
  %v76 = vsel %vm59, %v37, 0
  %v79 = vsel %vm59, %v38, 0
  %v82 = vsel %vm59, %v39, 0
  %v85 = vsel %vm59, %v40, 0
  %v88 = vsel %vm59, %v41, 0
  %v91 = vsel %vm59, %v42, 0
  %v94 = vsel %vm59, %v43, 0
  %v97 = vsel %vm59, %v44, 0
  %v100 = vsel %vm59, %v45, 0
  %v103 = vsel %vm59, %v46, 0
  %v106 = vsel %vm59, %v47, 0
  %108 = vmatprep.subr.mxu0 0.0
  %109 = vmatpush1.msra.mxu0 %v48
  %110 = vmatprep.subr.mxu0 0.0
  %111 = vmatpush1.msra.mxu0 %v49
  %112 = vmatprep.subr.mxu0 0.0
  %113 = vmatpush1.msra.mxu0 %v50
  %114 = vmatprep.subr.mxu0 0.0
  %115 = vmatpush1.msra.mxu0 %v51
  %116 = vmatprep.subr.mxu0 0.0
  %117 = vmatpush1.msra.mxu0 0.0
  %118 = vmatprep.subr.mxu0 0.0
  %119 = vmatpush1.msra.mxu0 0.0
  %120 = vmatprep.subr.mxu0 0.0
  %121 = vmatpush1.msra.mxu0 0.0
  %122 = vmatprep.subr.mxu0 0.0
  %123 = vmatpush1.msra.mxu0 0.0
  %124 = vmatprep.subr.mxu0 0.0
  %125 = vmatpush1.msra.mxu0 0.0
  %126 = vmatprep.subr.mxu0 0.0
  %127 = vmatpush1.msra.mxu0 0.0
  %128 = vmatprep.subr.mxu0 0.0
  %129 = vmatpush1.msra.mxu0 0.0
  %130 = vmatprep.subr.mxu0 0.0
  %131 = vmatpush1.msra.mxu0 0.0
  %132 = vmatprep.subr.mxu0 0.0
  %133 = vmatpush1.msra.mxu0 0.0
  %134 = vmatprep.subr.mxu0 0.0
  %135 = vmatpush1.msra.mxu0 0.0
  %136 = vmatprep.subr.mxu0 0.0
  %137 = vmatpush1.msra.mxu0 0.0
  %138 = vmatprep.subr.mxu0 0.0
  %139 = vmatpush1.msra.mxu0 0.0
  %140 = vmatprep.subr.mxu0 0.0
  %141 = vmatpush1.msra.mxu0 0.0
  %142 = vmatprep.subr.mxu0 0.0
  %143 = vmatpush1.msra.mxu0 0.0
  %144 = vmatprep.subr.mxu0 0.0
  %145 = vmatpush1.msra.mxu0 0.0
  %146 = vmatprep.subr.mxu0 0.0
  %147 = vmatpush1.msra.mxu0 0.0
  %148 = vmatprep.subr.mxu0 0.0
  %149 = vmatpush1.msra.mxu0 0.0
  %150 = vmatprep.subr.mxu0 0.0
  %151 = vmatpush1.msra.mxu0 0.0
  %152 = vmatprep.subr.mxu0 0.0
  %153 = vmatpush1.msra.mxu0 0.0
  %154 = vmatprep.subr.mxu0 0.0
  %155 = vmatpush1.msra.mxu0 0.0
  %156 = vmatprep.subr.mxu0 0.0
  %157 = vmatpush1.msra.mxu0 0.0
  %158 = vmatprep.subr.mxu0 0.0
  %159 = vmatpush1.msra.mxu0 0.0
  %160 = vmatprep.subr.mxu0 0.0
  %161 = vmatpush1.msra.mxu0 0.0
  %162 = vmatprep.subr.mxu0 0.0
  %163 = vmatpush1.msra.mxu0 0.0
  %164 = vmatprep.subr.mxu0 0.0
  %165 = vmatpush1.msra.mxu0 0.0
  %166 = vmatprep.subr.mxu0 0.0
  %167 = vmatpush1.msra.mxu0 0.0
  %168 = vmatprep.subr.mxu0 0.0
  %169 = vmatpush1.msra.mxu0 0.0
  %170 = vmatprep.subr.mxu0 0.0
  %171 = vmatpush1.msra.mxu0 0.0
  %172 = vmatprep.mubr.f32.mxu0 0.0
  %173 = vmatmul.mubr.f32.gmra.mrb[0].mxu0 %v61
  %v174 = vpop.f32.mrb[0].mxu0
  %v175 = vadd.f32 %v57, %v174
  %v176 = vpop.f32.mrb[0].mxu0
  %177 = vmatprep.mubr.f32.mxu0 0.0
  %178 = vmatmul.mubr.f32.gmra.mrb[0].mxu0 %v64
  %v179 = vpop.f32.mrb[0].mxu0
  %v180 = vadd.f32 %v57, %v179
  %v181 = vpop.f32.mrb[0].mxu0
  %182 = vmatprep.mubr.f32.mxu0 0.0
  %183 = vmatmul.mubr.f32.gmra.mrb[0].mxu0 %v67
  %v184 = vpop.f32.mrb[0].mxu0
  %v185 = vadd.f32 %v57, %v184
  %v186 = vpop.f32.mrb[0].mxu0
  %187 = vmatprep.mubr.f32.mxu0 0.0
  %188 = vmatmul.mubr.f32.gmra.mrb[0].mxu0 %v70
  %v189 = vpop.f32.mrb[0].mxu0
  %v190 = vadd.f32 %v57, %v189
  %v191 = vpop.f32.mrb[0].mxu0
  %192 = vmatprep.mubr.f32.mxu0 0.0
  %193 = vmatmul.mubr.f32.gmra.mrb[0].mxu0 %v73
  %v194 = vpop.f32.mrb[0].mxu0
  %v195 = vadd.f32 %v57, %v194
  %v196 = vpop.f32.mrb[0].mxu0
  %197 = vmatprep.mubr.f32.mxu0 0.0
  %198 = vmatmul.mubr.f32.gmra.mrb[0].mxu0 %v76
  %v199 = vpop.f32.mrb[0].mxu0
  %v200 = vadd.f32 %v57, %v199
  %v201 = vpop.f32.mrb[0].mxu0
  %202 = vmatprep.mubr.f32.mxu0 0.0
  %203 = vmatmul.mubr.f32.gmra.mrb[0].mxu0 %v79
  %v204 = vpop.f32.mrb[0].mxu0
  %v205 = vadd.f32 %v57, %v204
  %v206 = vpop.f32.mrb[0].mxu0
  %207 = vmatprep.mubr.f32.mxu0 0.0
  %208 = vmatmul.mubr.f32.gmra.mrb[0].mxu0 %v82
  %v209 = vpop.f32.mrb[0].mxu0
  %v210 = vadd.f32 %v57, %v209
  %v211 = vpop.f32.mrb[0].mxu0
  %212 = vmatprep.mubr.f32.mxu0 0.0
  %213 = vmatmul.mubr.f32.gmra.mrb[0].mxu0 %v85
  %v214 = vpop.f32.mrb[0].mxu0
  %v215 = vadd.f32 %v57, %v214
  %v216 = vpop.f32.mrb[0].mxu0
  %217 = vmatprep.mubr.f32.mxu0 0.0
  %218 = vmatmul.mubr.f32.gmra.mrb[0].mxu0 %v88
  %v219 = vpop.f32.mrb[0].mxu0
  %v220 = vadd.f32 %v57, %v219
  %v221 = vpop.f32.mrb[0].mxu0
  %222 = vmatprep.mubr.f32.mxu0 0.0
  %223 = vmatmul.mubr.f32.gmra.mrb[0].mxu0 %v91
  %v224 = vpop.f32.mrb[0].mxu0
  %v225 = vadd.f32 %v57, %v224
  %v226 = vpop.f32.mrb[0].mxu0
  %227 = vmatprep.mubr.f32.mxu0 0.0
  %228 = vmatmul.mubr.f32.gmra.mrb[0].mxu0 %v94
  %v229 = vpop.f32.mrb[0].mxu0
  %v230 = vadd.f32 %v57, %v229
  %v231 = vpop.f32.mrb[0].mxu0
  %232 = vmatprep.mubr.f32.mxu0 0.0
  %233 = vmatmul.mubr.f32.gmra.mrb[0].mxu0 %v97
  %v234 = vpop.f32.mrb[0].mxu0
  %v235 = vadd.f32 %v57, %v234
  %v236 = vpop.f32.mrb[0].mxu0
  %237 = vmatprep.mubr.f32.mxu0 0.0
  %238 = vmatmul.mubr.f32.gmra.mrb[0].mxu0 %v100
  %v239 = vpop.f32.mrb[0].mxu0
  %v240 = vadd.f32 %v57, %v239
  %v241 = vpop.f32.mrb[0].mxu0
  %242 = vmatprep.mubr.f32.mxu0 0.0
  %243 = vmatmul.mubr.f32.gmra.mrb[0].mxu0 %v103
  %v244 = vpop.f32.mrb[0].mxu0
  %v245 = vadd.f32 %v57, %v244
  %v246 = vpop.f32.mrb[0].mxu0
  %247 = vmatprep.mubr.f32.mxu0 0.0
  %248 = vmatmul.mubr.f32.gmra.mrb[0].mxu0 %v106
  %v249 = vpop.f32.mrb[0].mxu0
  %v250 = vadd.f32 %v57, %v249
  %v251 = vpop.f32.mrb[0].mxu0
  %252 = vdwg.mxu0
  %v253 = vmax.f32 %v175, 0.0
  %v254 = vmax.f32 %v180, 0.0
  %v255 = vmax.f32 %v185, 0.0
  %v256 = vmax.f32 %v190, 0.0
  %v257 = vmax.f32 %v195, 0.0
  %v258 = vmax.f32 %v200, 0.0
  %v259 = vmax.f32 %v205, 0.0
  %v260 = vmax.f32 %v210, 0.0
  %v261 = vmax.f32 %v215, 0.0
  %v262 = vmax.f32 %v220, 0.0
  %v263 = vmax.f32 %v225, 0.0
  %v264 = vmax.f32 %v230, 0.0
  %v265 = vmax.f32 %v235, 0.0
  %v266 = vmax.f32 %v240, 0.0
  %v267 = vmax.f32 %v245, 0.0
  %v268 = vmax.f32 %v250, 0.0
  %v269 = vld [vmem:[%s3] sm:$0xff]
  %v270 = vld [vmem:[%s3 + $0x8] sm:$0xff]
  %v271 = vld [vmem:[%s4] sm:$0x1]
  %v273 = vlaneseq
  %v274 = vshrl.u32 %v273, 7
  %v275 = vsub.s32 0, %v274
  %v276 = vrot.slane %v271, %v275
  %vm278 = vcmask 130048
  %v280 = vsel %vm278, %v253, 0
  %v283 = vsel %vm278, %v254, 0
  %v286 = vsel %vm278, %v255, 0
  %v289 = vsel %vm278, %v256, 0
  %v292 = vsel %vm278, %v257, 0
  %v295 = vsel %vm278, %v258, 0
  %v298 = vsel %vm278, %v259, 0
  %v301 = vsel %vm278, %v260, 0
  %v304 = vsel %vm278, %v261, 0
  %v307 = vsel %vm278, %v262, 0
  %v310 = vsel %vm278, %v263, 0
  %v313 = vsel %vm278, %v264, 0
  %v316 = vsel %vm278, %v265, 0
  %v319 = vsel %vm278, %v266, 0
  %v322 = vsel %vm278, %v267, 0
  %v325 = vsel %vm278, %v268, 0
  %327 = vmatprep.subr.mxu0 0.0
  %328 = vmatpush1.msra.mxu0 %v269
  %329 = vmatprep.subr.mxu0 0.0
  %330 = vmatpush1.msra.mxu0 %v270
  %331 = vmatprep.subr.mxu0 0.0
  %332 = vmatpush1.msra.mxu0 0.0
  %333 = vmatprep.subr.mxu0 0.0
  %334 = vmatpush1.msra.mxu0 0.0
  %335 = vmatprep.subr.mxu0 0.0
  %336 = vmatpush1.msra.mxu0 0.0
  %337 = vmatprep.subr.mxu0 0.0
  %338 = vmatpush1.msra.mxu0 0.0
  %339 = vmatprep.subr.mxu0 0.0
  %340 = vmatpush1.msra.mxu0 0.0
  %341 = vmatprep.subr.mxu0 0.0
  %342 = vmatpush1.msra.mxu0 0.0
  %343 = vmatprep.subr.mxu0 0.0
  %344 = vmatpush1.msra.mxu0 0.0
  %345 = vmatprep.subr.mxu0 0.0
  %346 = vmatpush1.msra.mxu0 0.0
  %347 = vmatprep.subr.mxu0 0.0
  %348 = vmatpush1.msra.mxu0 0.0
  %349 = vmatprep.subr.mxu0 0.0
  %350 = vmatpush1.msra.mxu0 0.0
  %351 = vmatprep.subr.mxu0 0.0
  %352 = vmatpush1.msra.mxu0 0.0
  %353 = vmatprep.subr.mxu0 0.0
  %354 = vmatpush1.msra.mxu0 0.0
  %355 = vmatprep.subr.mxu0 0.0
  %356 = vmatpush1.msra.mxu0 0.0
  %357 = vmatprep.subr.mxu0 0.0
  %358 = vmatpush1.msra.mxu0 0.0
  %359 = vmatprep.subr.mxu0 0.0
  %360 = vmatpush1.msra.mxu0 0.0
  %361 = vmatprep.subr.mxu0 0.0
  %362 = vmatpush1.msra.mxu0 0.0
  %363 = vmatprep.subr.mxu0 0.0
  %364 = vmatpush1.msra.mxu0 0.0
  %365 = vmatprep.subr.mxu0 0.0
  %366 = vmatpush1.msra.mxu0 0.0
  %367 = vmatprep.subr.mxu0 0.0
  %368 = vmatpush1.msra.mxu0 0.0
  %369 = vmatprep.subr.mxu0 0.0
  %370 = vmatpush1.msra.mxu0 0.0
  %371 = vmatprep.subr.mxu0 0.0
  %372 = vmatpush1.msra.mxu0 0.0
  %373 = vmatprep.subr.mxu0 0.0
  %374 = vmatpush1.msra.mxu0 0.0
  %375 = vmatprep.subr.mxu0 0.0
  %376 = vmatpush1.msra.mxu0 0.0
  %377 = vmatprep.subr.mxu0 0.0
  %378 = vmatpush1.msra.mxu0 0.0
  %379 = vmatprep.subr.mxu0 0.0
  %380 = vmatpush1.msra.mxu0 0.0
  %381 = vmatprep.subr.mxu0 0.0
  %382 = vmatpush1.msra.mxu0 0.0
  %383 = vmatprep.subr.mxu0 0.0
  %384 = vmatpush1.msra.mxu0 0.0
  %385 = vmatprep.subr.mxu0 0.0
  %386 = vmatpush1.msra.mxu0 0.0
  %387 = vmatprep.subr.mxu0 0.0
  %388 = vmatpush1.msra.mxu0 0.0
  %389 = vmatprep.subr.mxu0 0.0
  %390 = vmatpush1.msra.mxu0 0.0
  %391 = vmatprep.mubr.f32.mxu0 0.0
  %392 = vmatmul.mubr.f32.gmra.mrb[0].mxu0 %v280
  %v393 = vpop.f32.mrb[0].mxu0
  %v394 = vadd.f32 %v276, %v393
  %v395 = vpop.f32.mrb[0].mxu0
  %396 = vmatprep.mubr.f32.mxu0 0.0
  %397 = vmatmul.mubr.f32.gmra.mrb[0].mxu0 %v283
  %v398 = vpop.f32.mrb[0].mxu0
  %v399 = vadd.f32 %v276, %v398
  %v400 = vpop.f32.mrb[0].mxu0
  %401 = vmatprep.mubr.f32.mxu0 0.0
  %402 = vmatmul.mubr.f32.gmra.mrb[0].mxu0 %v286
  %v403 = vpop.f32.mrb[0].mxu0
  %v404 = vadd.f32 %v276, %v403
  %v405 = vpop.f32.mrb[0].mxu0
  %406 = vmatprep.mubr.f32.mxu0 0.0
  %407 = vmatmul.mubr.f32.gmra.mrb[0].mxu0 %v289
  %v408 = vpop.f32.mrb[0].mxu0
  %v409 = vadd.f32 %v276, %v408
  %v410 = vpop.f32.mrb[0].mxu0
  %411 = vmatprep.mubr.f32.mxu0 0.0
  %412 = vmatmul.mubr.f32.gmra.mrb[0].mxu0 %v292
  %v413 = vpop.f32.mrb[0].mxu0
  %v414 = vadd.f32 %v276, %v413
  %v415 = vpop.f32.mrb[0].mxu0
  %416 = vmatprep.mubr.f32.mxu0 0.0
  %417 = vmatmul.mubr.f32.gmra.mrb[0].mxu0 %v295
  %v418 = vpop.f32.mrb[0].mxu0
  %v419 = vadd.f32 %v276, %v418
  %v420 = vpop.f32.mrb[0].mxu0
  %421 = vmatprep.mubr.f32.mxu0 0.0
  %422 = vmatmul.mubr.f32.gmra.mrb[0].mxu0 %v298
  %v423 = vpop.f32.mrb[0].mxu0
  %v424 = vadd.f32 %v276, %v423
  %v425 = vpop.f32.mrb[0].mxu0
  %426 = vmatprep.mubr.f32.mxu0 0.0
  %427 = vmatmul.mubr.f32.gmra.mrb[0].mxu0 %v301
  %v428 = vpop.f32.mrb[0].mxu0
  %v429 = vadd.f32 %v276, %v428
  %v430 = vpop.f32.mrb[0].mxu0
  %431 = vmatprep.mubr.f32.mxu0 0.0
  %432 = vmatmul.mubr.f32.gmra.mrb[0].mxu0 %v304
  %v433 = vpop.f32.mrb[0].mxu0
  %v434 = vadd.f32 %v276, %v433
  %v435 = vpop.f32.mrb[0].mxu0
  %436 = vmatprep.mubr.f32.mxu0 0.0
  %437 = vmatmul.mubr.f32.gmra.mrb[0].mxu0 %v307
  %v438 = vpop.f32.mrb[0].mxu0
  %v439 = vadd.f32 %v276, %v438
  %v440 = vpop.f32.mrb[0].mxu0
  %441 = vmatprep.mubr.f32.mxu0 0.0
  %442 = vmatmul.mubr.f32.gmra.mrb[0].mxu0 %v310
  %v443 = vpop.f32.mrb[0].mxu0
  %v444 = vadd.f32 %v276, %v443
  %v445 = vpop.f32.mrb[0].mxu0
  %446 = vmatprep.mubr.f32.mxu0 0.0
  %447 = vmatmul.mubr.f32.gmra.mrb[0].mxu0 %v313
  %v448 = vpop.f32.mrb[0].mxu0
  %v449 = vadd.f32 %v276, %v448
  %v450 = vpop.f32.mrb[0].mxu0
  %451 = vmatprep.mubr.f32.mxu0 0.0
  %452 = vmatmul.mubr.f32.gmra.mrb[0].mxu0 %v316
  %v453 = vpop.f32.mrb[0].mxu0
  %v454 = vadd.f32 %v276, %v453
  %v455 = vpop.f32.mrb[0].mxu0
  %456 = vmatprep.mubr.f32.mxu0 0.0
  %457 = vmatmul.mubr.f32.gmra.mrb[0].mxu0 %v319
  %v458 = vpop.f32.mrb[0].mxu0
  %v459 = vadd.f32 %v276, %v458
  %v460 = vpop.f32.mrb[0].mxu0
  %461 = vmatprep.mubr.f32.mxu0 0.0
  %462 = vmatmul.mubr.f32.gmra.mrb[0].mxu0 %v322
  %v463 = vpop.f32.mrb[0].mxu0
  %v464 = vadd.f32 %v276, %v463
  %v465 = vpop.f32.mrb[0].mxu0
  %466 = vmatprep.mubr.f32.mxu0 0.0
  %467 = vmatmul.mubr.f32.gmra.mrb[0].mxu0 %v325
  %v468 = vpop.f32.mrb[0].mxu0
  %v469 = vadd.f32 %v276, %v468
  %v470 = vpop.f32.mrb[0].mxu0
  %471 = vdwg.mxu0
  %v472 = vmax.f32 %v394, 0.0
  %v473 = vmax.f32 %v399, 0.0
  %v474 = vmax.f32 %v404, 0.0
  %v475 = vmax.f32 %v409, 0.0
  %v476 = vmax.f32 %v414, 0.0
  %v477 = vmax.f32 %v419, 0.0
  %v478 = vmax.f32 %v424, 0.0
  %v479 = vmax.f32 %v429, 0.0
  %v480 = vmax.f32 %v434, 0.0
  %v481 = vmax.f32 %v439, 0.0
  %v482 = vmax.f32 %v444, 0.0
  %v483 = vmax.f32 %v449, 0.0
  %v484 = vmax.f32 %v454, 0.0
  %v485 = vmax.f32 %v459, 0.0
  %v486 = vmax.f32 %v464, 0.0
  %v487 = vmax.f32 %v469, 0.0
  %v488 = vsel %vm278, %v472, -inf
  %v489 = vsel %vm278, %v473, -inf
  %v490 = vmax.f32 %v488, %v489
  %v491 = vrot.slane %v490, 4
  %v492 = vmax.f32 %v490, %v491
  %v493 = vrot.slane %v492, 2
  %v494 = vmax.f32 %v492, %v493
  %v495 = vrot.slane %v494, 1
  %v496 = vmax.f32 %v494, %v495
  %v497 = vsel %vm278, %v474, -inf
  %v498 = vsel %vm278, %v475, -inf
  %v499 = vmax.f32 %v497, %v498
  %v500 = vrot.slane %v499, 4
  %v501 = vmax.f32 %v499, %v500
  %v502 = vrot.slane %v501, 2
  %v503 = vmax.f32 %v501, %v502
  %v504 = vrot.slane %v503, 1
  %v505 = vmax.f32 %v503, %v504
  %v506 = vsel %vm278, %v476, -inf
  %v507 = vsel %vm278, %v477, -inf
  %v508 = vmax.f32 %v506, %v507
  %v509 = vrot.slane %v508, 4
  %v510 = vmax.f32 %v508, %v509
  %v511 = vrot.slane %v510, 2
  %v512 = vmax.f32 %v510, %v511
  %v513 = vrot.slane %v512, 1
  %v514 = vmax.f32 %v512, %v513
  %v515 = vsel %vm278, %v478, -inf
  %v516 = vsel %vm278, %v479, -inf
  %v517 = vmax.f32 %v515, %v516
  %v518 = vrot.slane %v517, 4
  %v519 = vmax.f32 %v517, %v518
  %v520 = vrot.slane %v519, 2
  %v521 = vmax.f32 %v519, %v520
  %v522 = vrot.slane %v521, 1
  %v523 = vmax.f32 %v521, %v522
  %v524 = vsel %vm278, %v480, -inf
  %v525 = vsel %vm278, %v481, -inf
  %v526 = vmax.f32 %v524, %v525
  %v527 = vrot.slane %v526, 4
  %v528 = vmax.f32 %v526, %v527
  %v529 = vrot.slane %v528, 2
  %v530 = vmax.f32 %v528, %v529
  %v531 = vrot.slane %v530, 1
  %v532 = vmax.f32 %v530, %v531
  %v533 = vsel %vm278, %v482, -inf
  %v534 = vsel %vm278, %v483, -inf
  %v535 = vmax.f32 %v533, %v534
  %v536 = vrot.slane %v535, 4
  %v537 = vmax.f32 %v535, %v536
  %v538 = vrot.slane %v537, 2
  %v539 = vmax.f32 %v537, %v538
  %v540 = vrot.slane %v539, 1
  %v541 = vmax.f32 %v539, %v540
  %v542 = vsel %vm278, %v484, -inf
  %v543 = vsel %vm278, %v485, -inf
  %v544 = vmax.f32 %v542, %v543
  %v545 = vrot.slane %v544, 4
  %v546 = vmax.f32 %v544, %v545
  %v547 = vrot.slane %v546, 2
  %v548 = vmax.f32 %v546, %v547
  %v549 = vrot.slane %v548, 1
  %v550 = vmax.f32 %v548, %v549
  %v551 = vsel %vm278, %v486, -inf
  %v552 = vsel %vm278, %v487, -inf
  %v553 = vmax.f32 %v551, %v552
  %v554 = vrot.slane %v553, 4
  %v555 = vmax.f32 %v553, %v554
  %v556 = vrot.slane %v555, 2
  %v557 = vmax.f32 %v555, %v556
  %v558 = vrot.slane %v557, 1
  %v559 = vmax.f32 %v557, %v558
  %vm560 = vcmask 1046528
  %v561 = vrot.slane %v32, 1
  %v562 = vrot.slane %v33, 1
  %v563 = vsel %vm560, %v561, %v562
  %v564 = vrot.slane %v34, 1
  %v565 = vrot.slane %v35, 1
  %v566 = vsel %vm560, %v564, %v565
  %v567 = vrot.slane %v36, 1
  %v568 = vrot.slane %v37, 1
  %v569 = vsel %vm560, %v567, %v568
  %v570 = vrot.slane %v38, 1
  %v571 = vrot.slane %v39, 1
  %v572 = vsel %vm560, %v570, %v571
  %v573 = vrot.slane %v40, 1
  %v574 = vrot.slane %v41, 1
  %v575 = vsel %vm560, %v573, %v574
  %v576 = vrot.slane %v42, 1
  %v577 = vrot.slane %v43, 1
  %v578 = vsel %vm560, %v576, %v577
  %v579 = vrot.slane %v44, 1
  %v580 = vrot.slane %v45, 1
  %v581 = vsel %vm560, %v579, %v580
  %v582 = vrot.slane %v46, 1
  %v583 = vrot.slane %v47, 1
  %v584 = vsel %vm560, %v582, %v583
  %585 = vrot.lane.b32.xlu0 %v563, 32
  %v586 = vpop.permute.xlu0 %585
  %587 = vrot.lane.b32.xlu0 %v562, 32
  %v588 = vpop.permute.xlu0 %587
  %589 = vrot.lane.b32.xlu0 %v566, 32
  %v590 = vpop.permute.xlu0 %589
  %591 = vrot.lane.b32.xlu0 %v565, 32
  %v592 = vpop.permute.xlu0 %591
  %593 = vrot.lane.b32.xlu0 %v569, 32
  %v594 = vpop.permute.xlu0 %593
  %595 = vrot.lane.b32.xlu0 %v568, 32
  %v596 = vpop.permute.xlu0 %595
  %597 = vrot.lane.b32.xlu0 %v572, 32
  %v598 = vpop.permute.xlu0 %597
  %599 = vrot.lane.b32.xlu0 %v571, 32
  %v600 = vpop.permute.xlu0 %599
  %601 = vrot.lane.b32.xlu0 %v575, 32
  %v602 = vpop.permute.xlu0 %601
  %603 = vrot.lane.b32.xlu0 %v574, 32
  %v604 = vpop.permute.xlu0 %603
  %605 = vrot.lane.b32.xlu0 %v578, 32
  %v606 = vpop.permute.xlu0 %605
  %607 = vrot.lane.b32.xlu0 %v577, 32
  %v608 = vpop.permute.xlu0 %607
  %609 = vrot.lane.b32.xlu0 %v581, 32
  %v610 = vpop.permute.xlu0 %609
  %611 = vrot.lane.b32.xlu0 %v580, 32
  %v612 = vpop.permute.xlu0 %611
  %613 = vrot.lane.b32.xlu0 %v584, 32
  %v614 = vpop.permute.xlu0 %613
  %615 = vrot.lane.b32.xlu0 %v583, 32
  %v616 = vpop.permute.xlu0 %615
  %v633 = vsel %vm59, %v32, %v586
  %v634 = vsel %vm59, %v33, %v588
  %v635 = vsel %vm59, %v34, %v590
  %v636 = vsel %vm59, %v35, %v592
  %v637 = vsel %vm59, %v36, %v594
  %v638 = vsel %vm59, %v37, %v596
  %v639 = vsel %vm59, %v38, %v598
  %v640 = vsel %vm59, %v39, %v600
  %v641 = vsel %vm59, %v40, %v602
  %v642 = vsel %vm59, %v41, %v604
  %v643 = vsel %vm59, %v42, %v606
  %v644 = vsel %vm59, %v43, %v608
  %v645 = vsel %vm59, %v44, %v610
  %v646 = vsel %vm59, %v45, %v612
  %v647 = vsel %vm59, %v46, %v614
  %v648 = vsel %vm59, %v47, %v616
  %v665 = vcombine.high %v633, %v633
  %v667 = vunpack.c.l.s4 1966171168
  %v668 = vunpack.c.0.s8 %v667
  %v669 = vlaneseq
  %v670 = vshrl.u32 %v669, 7
  %v671 = vsub.s32 %v668, %v670
  %v672 = vrot.slane %v633, %v671
  %v674 = vunpack.c.l.s4 1966171168
  %v675 = vunpack.c.0.s8 %v674
  %v676 = vlaneseq
  %v677 = vshrl.u32 %v676, 7
  %v678 = vsub.s32 %v675, %v677
  %v679 = vrot.slane %v665, %v678
  %v680 = vcombine.high %v672, %v672
  %v681 = vcombine.high %v679, %v679
  %v683 = vunpack.c.l.s4 1966171168
  %v684 = vunpack.c.0.s8 %v683
  %v685 = vlaneseq
  %v686 = vshrl.u32 %v685, 7
  %v687 = vsub.s32 %v684, %v686
  %v688 = vrot.slane %v672, %v687
  %v690 = vunpack.c.l.s4 1966171168
  %v691 = vunpack.c.0.s8 %v690
  %v692 = vlaneseq
  %v693 = vshrl.u32 %v692, 7
  %v694 = vsub.s32 %v691, %v693
  %v695 = vrot.slane %v679, %v694
  %v697 = vunpack.c.l.s4 1966171168
  %v698 = vunpack.c.0.s8 %v697
  %v699 = vlaneseq
  %v700 = vshrl.u32 %v699, 7
  %v701 = vsub.s32 %v698, %v700
  %v702 = vrot.slane %v680, %v701
  %v704 = vunpack.c.l.s4 1966171168
  %v705 = vunpack.c.0.s8 %v704
  %v706 = vlaneseq
  %v707 = vshrl.u32 %v706, 7
  %v708 = vsub.s32 %v705, %v707
  %v709 = vrot.slane %v681, %v708
  %v710 = vcombine.high %v688, %v688
  %v711 = vcombine.high %v695, %v695
  %v712 = vcombine.high %v702, %v702
  %v713 = vcombine.high %v709, %v709
  %v714 = vcombine.high %v634, %v634
  %v716 = vunpack.c.l.s4 1966171168
  %v717 = vunpack.c.0.s8 %v716
  %v718 = vlaneseq
  %v719 = vshrl.u32 %v718, 7
  %v720 = vsub.s32 %v717, %v719
  %v721 = vrot.slane %v634, %v720
  %v723 = vunpack.c.l.s4 1966171168
  %v724 = vunpack.c.0.s8 %v723
  %v725 = vlaneseq
  %v726 = vshrl.u32 %v725, 7
  %v727 = vsub.s32 %v724, %v726
  %v728 = vrot.slane %v714, %v727
  %v729 = vcombine.high %v721, %v721
  %v730 = vcombine.high %v728, %v728
  %v732 = vunpack.c.l.s4 1966171168
  %v733 = vunpack.c.0.s8 %v732
  %v734 = vlaneseq
  %v735 = vshrl.u32 %v734, 7
  %v736 = vsub.s32 %v733, %v735
  %v737 = vrot.slane %v721, %v736
  %v739 = vunpack.c.l.s4 1966171168
  %v740 = vunpack.c.0.s8 %v739
  %v741 = vlaneseq
  %v742 = vshrl.u32 %v741, 7
  %v743 = vsub.s32 %v740, %v742
  %v744 = vrot.slane %v728, %v743
  %v746 = vunpack.c.l.s4 1966171168
  %v747 = vunpack.c.0.s8 %v746
  %v748 = vlaneseq
  %v749 = vshrl.u32 %v748, 7
  %v750 = vsub.s32 %v747, %v749
  %v751 = vrot.slane %v729, %v750
  %v753 = vunpack.c.l.s4 1966171168
  %v754 = vunpack.c.0.s8 %v753
  %v755 = vlaneseq
  %v756 = vshrl.u32 %v755, 7
  %v757 = vsub.s32 %v754, %v756
  %v758 = vrot.slane %v730, %v757
  %v759 = vcombine.high %v737, %v737
  %v760 = vcombine.high %v744, %v744
  %v761 = vcombine.high %v751, %v751
  %v762 = vcombine.high %v635, %v635
  %v764 = vunpack.c.l.s4 1966171168
  %v765 = vunpack.c.0.s8 %v764
  %v766 = vlaneseq
  %v767 = vshrl.u32 %v766, 7
  %v768 = vsub.s32 %v765, %v767
  %v769 = vrot.slane %v635, %v768
  %v771 = vunpack.c.l.s4 1966171168
  %v772 = vunpack.c.0.s8 %v771
  %v773 = vlaneseq
  %v774 = vshrl.u32 %v773, 7
  %v775 = vsub.s32 %v772, %v774
  %v776 = vrot.slane %v762, %v775
  %v777 = vcombine.high %v769, %v769
  %v778 = vcombine.high %v776, %v776
  %v780 = vunpack.c.l.s4 1966171168
  %v781 = vunpack.c.0.s8 %v780
  %v782 = vlaneseq
  %v783 = vshrl.u32 %v782, 7
  %v784 = vsub.s32 %v781, %v783
  %v785 = vrot.slane %v769, %v784
  %v787 = vunpack.c.l.s4 1966171168
  %v788 = vunpack.c.0.s8 %v787
  %v789 = vlaneseq
  %v790 = vshrl.u32 %v789, 7
  %v791 = vsub.s32 %v788, %v790
  %v792 = vrot.slane %v776, %v791
  %v794 = vunpack.c.l.s4 1966171168
  %v795 = vunpack.c.0.s8 %v794
  %v796 = vlaneseq
  %v797 = vshrl.u32 %v796, 7
  %v798 = vsub.s32 %v795, %v797
  %v799 = vrot.slane %v777, %v798
  %v801 = vunpack.c.l.s4 1966171168
  %v802 = vunpack.c.0.s8 %v801
  %v803 = vlaneseq
  %v804 = vshrl.u32 %v803, 7
  %v805 = vsub.s32 %v802, %v804
  %v806 = vrot.slane %v778, %v805
  %v807 = vcombine.high %v785, %v785
  %v808 = vcombine.high %v792, %v792
  %v809 = vcombine.high %v799, %v799
  %v810 = vcombine.high %v806, %v806
  %v811 = vcombine.high %v636, %v636
  %v813 = vunpack.c.l.s4 1966171168
  %v814 = vunpack.c.0.s8 %v813
  %v815 = vlaneseq
  %v816 = vshrl.u32 %v815, 7
  %v817 = vsub.s32 %v814, %v816
  %v818 = vrot.slane %v636, %v817
  %v820 = vunpack.c.l.s4 1966171168
  %v821 = vunpack.c.0.s8 %v820
  %v822 = vlaneseq
  %v823 = vshrl.u32 %v822, 7
  %v824 = vsub.s32 %v821, %v823
  %v825 = vrot.slane %v811, %v824
  %v826 = vcombine.high %v818, %v818
  %v827 = vcombine.high %v825, %v825
  %v829 = vunpack.c.l.s4 1966171168
  %v830 = vunpack.c.0.s8 %v829
  %v831 = vlaneseq
  %v832 = vshrl.u32 %v831, 7
  %v833 = vsub.s32 %v830, %v832
  %v834 = vrot.slane %v818, %v833
  %v836 = vunpack.c.l.s4 1966171168
  %v837 = vunpack.c.0.s8 %v836
  %v838 = vlaneseq
  %v839 = vshrl.u32 %v838, 7
  %v840 = vsub.s32 %v837, %v839
  %v841 = vrot.slane %v825, %v840
  %v843 = vunpack.c.l.s4 1966171168
  %v844 = vunpack.c.0.s8 %v843
  %v845 = vlaneseq
  %v846 = vshrl.u32 %v845, 7
  %v847 = vsub.s32 %v844, %v846
  %v848 = vrot.slane %v826, %v847
  %v850 = vunpack.c.l.s4 1966171168
  %v851 = vunpack.c.0.s8 %v850
  %v852 = vlaneseq
  %v853 = vshrl.u32 %v852, 7
  %v854 = vsub.s32 %v851, %v853
  %v855 = vrot.slane %v827, %v854
  %v856 = vcombine.high %v834, %v834
  %v857 = vcombine.high %v841, %v841
  %v858 = vcombine.high %v848, %v848
  %v859 = vcombine.high %v637, %v637
  %v861 = vunpack.c.l.s4 1966171168
  %v862 = vunpack.c.0.s8 %v861
  %v863 = vlaneseq
  %v864 = vshrl.u32 %v863, 7
  %v865 = vsub.s32 %v862, %v864
  %v866 = vrot.slane %v637, %v865
  %v868 = vunpack.c.l.s4 1966171168
  %v869 = vunpack.c.0.s8 %v868
  %v870 = vlaneseq
  %v871 = vshrl.u32 %v870, 7
  %v872 = vsub.s32 %v869, %v871
  %v873 = vrot.slane %v859, %v872
  %v874 = vcombine.high %v866, %v866
  %v875 = vcombine.high %v873, %v873
  %v877 = vunpack.c.l.s4 1966171168
  %v878 = vunpack.c.0.s8 %v877
  %v879 = vlaneseq
  %v880 = vshrl.u32 %v879, 7
  %v881 = vsub.s32 %v878, %v880
  %v882 = vrot.slane %v866, %v881
  %v884 = vunpack.c.l.s4 1966171168
  %v885 = vunpack.c.0.s8 %v884
  %v886 = vlaneseq
  %v887 = vshrl.u32 %v886, 7
  %v888 = vsub.s32 %v885, %v887
  %v889 = vrot.slane %v873, %v888
  %v891 = vunpack.c.l.s4 1966171168
  %v892 = vunpack.c.0.s8 %v891
  %v893 = vlaneseq
  %v894 = vshrl.u32 %v893, 7
  %v895 = vsub.s32 %v892, %v894
  %v896 = vrot.slane %v874, %v895
  %v898 = vunpack.c.l.s4 1966171168
  %v899 = vunpack.c.0.s8 %v898
  %v900 = vlaneseq
  %v901 = vshrl.u32 %v900, 7
  %v902 = vsub.s32 %v899, %v901
  %v903 = vrot.slane %v875, %v902
  %v904 = vcombine.high %v882, %v882
  %v905 = vcombine.high %v889, %v889
  %v906 = vcombine.high %v896, %v896
  %v907 = vcombine.high %v903, %v903
  %v908 = vcombine.high %v638, %v638
  %v910 = vunpack.c.l.s4 1966171168
  %v911 = vunpack.c.0.s8 %v910
  %v912 = vlaneseq
  %v913 = vshrl.u32 %v912, 7
  %v914 = vsub.s32 %v911, %v913
  %v915 = vrot.slane %v638, %v914
  %v917 = vunpack.c.l.s4 1966171168
  %v918 = vunpack.c.0.s8 %v917
  %v919 = vlaneseq
  %v920 = vshrl.u32 %v919, 7
  %v921 = vsub.s32 %v918, %v920
  %v922 = vrot.slane %v908, %v921
  %v923 = vcombine.high %v915, %v915
  %v924 = vcombine.high %v922, %v922
  %v926 = vunpack.c.l.s4 1966171168
  %v927 = vunpack.c.0.s8 %v926
  %v928 = vlaneseq
  %v929 = vshrl.u32 %v928, 7
  %v930 = vsub.s32 %v927, %v929
  %v931 = vrot.slane %v915, %v930
  %v933 = vunpack.c.l.s4 1966171168
  %v934 = vunpack.c.0.s8 %v933
  %v935 = vlaneseq
  %v936 = vshrl.u32 %v935, 7
  %v937 = vsub.s32 %v934, %v936
  %v938 = vrot.slane %v922, %v937
  %v940 = vunpack.c.l.s4 1966171168
  %v941 = vunpack.c.0.s8 %v940
  %v942 = vlaneseq
  %v943 = vshrl.u32 %v942, 7
  %v944 = vsub.s32 %v941, %v943
  %v945 = vrot.slane %v923, %v944
  %v947 = vunpack.c.l.s4 1966171168
  %v948 = vunpack.c.0.s8 %v947
  %v949 = vlaneseq
  %v950 = vshrl.u32 %v949, 7
  %v951 = vsub.s32 %v948, %v950
  %v952 = vrot.slane %v924, %v951
  %v953 = vcombine.high %v931, %v931
  %v954 = vcombine.high %v938, %v938
  %v955 = vcombine.high %v945, %v945
  %v956 = vcombine.high %v639, %v639
  %v958 = vunpack.c.l.s4 1966171168
  %v959 = vunpack.c.0.s8 %v958
  %v960 = vlaneseq
  %v961 = vshrl.u32 %v960, 7
  %v962 = vsub.s32 %v959, %v961
  %v963 = vrot.slane %v639, %v962
  %v965 = vunpack.c.l.s4 1966171168
  %v966 = vunpack.c.0.s8 %v965
  %v967 = vlaneseq
  %v968 = vshrl.u32 %v967, 7
  %v969 = vsub.s32 %v966, %v968
  %v970 = vrot.slane %v956, %v969
  %v971 = vcombine.high %v963, %v963
  %v972 = vcombine.high %v970, %v970
  %v974 = vunpack.c.l.s4 1966171168
  %v975 = vunpack.c.0.s8 %v974
  %v976 = vlaneseq
  %v977 = vshrl.u32 %v976, 7
  %v978 = vsub.s32 %v975, %v977
  %v979 = vrot.slane %v963, %v978
  %v981 = vunpack.c.l.s4 1966171168
  %v982 = vunpack.c.0.s8 %v981
  %v983 = vlaneseq
  %v984 = vshrl.u32 %v983, 7
  %v985 = vsub.s32 %v982, %v984
  %v986 = vrot.slane %v970, %v985
  %v988 = vunpack.c.l.s4 1966171168
  %v989 = vunpack.c.0.s8 %v988
  %v990 = vlaneseq
  %v991 = vshrl.u32 %v990, 7
  %v992 = vsub.s32 %v989, %v991
  %v993 = vrot.slane %v971, %v992
  %v995 = vunpack.c.l.s4 1966171168
  %v996 = vunpack.c.0.s8 %v995
  %v997 = vlaneseq
  %v998 = vshrl.u32 %v997, 7
  %v999 = vsub.s32 %v996, %v998
  %v1000 = vrot.slane %v972, %v999
  %v1001 = vcombine.high %v979, %v979
  %v1002 = vcombine.high %v986, %v986
  %v1003 = vcombine.high %v993, %v993
  %v1004 = vcombine.high %v1000, %v1000
  %v1005 = vcombine.high %v640, %v640
  %v1007 = vunpack.c.l.s4 1966171168
  %v1008 = vunpack.c.0.s8 %v1007
  %v1009 = vlaneseq
  %v1010 = vshrl.u32 %v1009, 7
  %v1011 = vsub.s32 %v1008, %v1010
  %v1012 = vrot.slane %v640, %v1011
  %v1014 = vunpack.c.l.s4 1966171168
  %v1015 = vunpack.c.0.s8 %v1014
  %v1016 = vlaneseq
  %v1017 = vshrl.u32 %v1016, 7
  %v1018 = vsub.s32 %v1015, %v1017
  %v1019 = vrot.slane %v1005, %v1018
  %v1020 = vcombine.high %v1012, %v1012
  %v1021 = vcombine.high %v1019, %v1019
  %v1023 = vunpack.c.l.s4 1966171168
  %v1024 = vunpack.c.0.s8 %v1023
  %v1025 = vlaneseq
  %v1026 = vshrl.u32 %v1025, 7
  %v1027 = vsub.s32 %v1024, %v1026
  %v1028 = vrot.slane %v1012, %v1027
  %v1030 = vunpack.c.l.s4 1966171168
  %v1031 = vunpack.c.0.s8 %v1030
  %v1032 = vlaneseq
  %v1033 = vshrl.u32 %v1032, 7
  %v1034 = vsub.s32 %v1031, %v1033
  %v1035 = vrot.slane %v1019, %v1034
  %v1037 = vunpack.c.l.s4 1966171168
  %v1038 = vunpack.c.0.s8 %v1037
  %v1039 = vlaneseq
  %v1040 = vshrl.u32 %v1039, 7
  %v1041 = vsub.s32 %v1038, %v1040
  %v1042 = vrot.slane %v1020, %v1041
  %v1044 = vunpack.c.l.s4 1966171168
  %v1045 = vunpack.c.0.s8 %v1044
  %v1046 = vlaneseq
  %v1047 = vshrl.u32 %v1046, 7
  %v1048 = vsub.s32 %v1045, %v1047
  %v1049 = vrot.slane %v1021, %v1048
  %v1050 = vcombine.high %v1028, %v1028
  %v1051 = vcombine.high %v1035, %v1035
  %v1052 = vcombine.high %v1042, %v1042
  %v1053 = vcombine.high %v641, %v641
  %v1055 = vunpack.c.l.s4 1966171168
  %v1056 = vunpack.c.0.s8 %v1055
  %v1057 = vlaneseq
  %v1058 = vshrl.u32 %v1057, 7
  %v1059 = vsub.s32 %v1056, %v1058
  %v1060 = vrot.slane %v641, %v1059
  %v1062 = vunpack.c.l.s4 1966171168
  %v1063 = vunpack.c.0.s8 %v1062
  %v1064 = vlaneseq
  %v1065 = vshrl.u32 %v1064, 7
  %v1066 = vsub.s32 %v1063, %v1065
  %v1067 = vrot.slane %v1053, %v1066
  %v1068 = vcombine.high %v1060, %v1060
  %v1069 = vcombine.high %v1067, %v1067
  %v1071 = vunpack.c.l.s4 1966171168
  %v1072 = vunpack.c.0.s8 %v1071
  %v1073 = vlaneseq
  %v1074 = vshrl.u32 %v1073, 7
  %v1075 = vsub.s32 %v1072, %v1074
  %v1076 = vrot.slane %v1060, %v1075
  %v1078 = vunpack.c.l.s4 1966171168
  %v1079 = vunpack.c.0.s8 %v1078
  %v1080 = vlaneseq
  %v1081 = vshrl.u32 %v1080, 7
  %v1082 = vsub.s32 %v1079, %v1081
  %v1083 = vrot.slane %v1067, %v1082
  %v1085 = vunpack.c.l.s4 1966171168
  %v1086 = vunpack.c.0.s8 %v1085
  %v1087 = vlaneseq
  %v1088 = vshrl.u32 %v1087, 7
  %v1089 = vsub.s32 %v1086, %v1088
  %v1090 = vrot.slane %v1068, %v1089
  %v1092 = vunpack.c.l.s4 1966171168
  %v1093 = vunpack.c.0.s8 %v1092
  %v1094 = vlaneseq
  %v1095 = vshrl.u32 %v1094, 7
  %v1096 = vsub.s32 %v1093, %v1095
  %v1097 = vrot.slane %v1069, %v1096
  %v1098 = vcombine.high %v1076, %v1076
  %v1099 = vcombine.high %v1083, %v1083
  %v1100 = vcombine.high %v1090, %v1090
  %v1101 = vcombine.high %v1097, %v1097
  %v1102 = vcombine.high %v642, %v642
  %v1104 = vunpack.c.l.s4 1966171168
  %v1105 = vunpack.c.0.s8 %v1104
  %v1106 = vlaneseq
  %v1107 = vshrl.u32 %v1106, 7
  %v1108 = vsub.s32 %v1105, %v1107
  %v1109 = vrot.slane %v642, %v1108
  %v1111 = vunpack.c.l.s4 1966171168
  %v1112 = vunpack.c.0.s8 %v1111
  %v1113 = vlaneseq
  %v1114 = vshrl.u32 %v1113, 7
  %v1115 = vsub.s32 %v1112, %v1114
  %v1116 = vrot.slane %v1102, %v1115
  %v1117 = vcombine.high %v1109, %v1109
  %v1118 = vcombine.high %v1116, %v1116
  %v1120 = vunpack.c.l.s4 1966171168
  %v1121 = vunpack.c.0.s8 %v1120
  %v1122 = vlaneseq
  %v1123 = vshrl.u32 %v1122, 7
  %v1124 = vsub.s32 %v1121, %v1123
  %v1125 = vrot.slane %v1109, %v1124
  %v1127 = vunpack.c.l.s4 1966171168
  %v1128 = vunpack.c.0.s8 %v1127
  %v1129 = vlaneseq
  %v1130 = vshrl.u32 %v1129, 7
  %v1131 = vsub.s32 %v1128, %v1130
  %v1132 = vrot.slane %v1116, %v1131
  %v1134 = vunpack.c.l.s4 1966171168
  %v1135 = vunpack.c.0.s8 %v1134
  %v1136 = vlaneseq
  %v1137 = vshrl.u32 %v1136, 7
  %v1138 = vsub.s32 %v1135, %v1137
  %v1139 = vrot.slane %v1117, %v1138
  %v1141 = vunpack.c.l.s4 1966171168
  %v1142 = vunpack.c.0.s8 %v1141
  %v1143 = vlaneseq
  %v1144 = vshrl.u32 %v1143, 7
  %v1145 = vsub.s32 %v1142, %v1144
  %v1146 = vrot.slane %v1118, %v1145
  %v1147 = vcombine.high %v1125, %v1125
  %v1148 = vcombine.high %v1132, %v1132
  %v1149 = vcombine.high %v1139, %v1139
  %v1150 = vcombine.high %v643, %v643
  %v1152 = vunpack.c.l.s4 1966171168
  %v1153 = vunpack.c.0.s8 %v1152
  %v1154 = vlaneseq
  %v1155 = vshrl.u32 %v1154, 7
  %v1156 = vsub.s32 %v1153, %v1155
  %v1157 = vrot.slane %v643, %v1156
  %v1159 = vunpack.c.l.s4 1966171168
  %v1160 = vunpack.c.0.s8 %v1159
  %v1161 = vlaneseq
  %v1162 = vshrl.u32 %v1161, 7
  %v1163 = vsub.s32 %v1160, %v1162
  %v1164 = vrot.slane %v1150, %v1163
  %v1165 = vcombine.high %v1157, %v1157
  %v1166 = vcombine.high %v1164, %v1164
  %v1168 = vunpack.c.l.s4 1966171168
  %v1169 = vunpack.c.0.s8 %v1168
  %v1170 = vlaneseq
  %v1171 = vshrl.u32 %v1170, 7
  %v1172 = vsub.s32 %v1169, %v1171
  %v1173 = vrot.slane %v1157, %v1172
  %v1175 = vunpack.c.l.s4 1966171168
  %v1176 = vunpack.c.0.s8 %v1175
  %v1177 = vlaneseq
  %v1178 = vshrl.u32 %v1177, 7
  %v1179 = vsub.s32 %v1176, %v1178
  %v1180 = vrot.slane %v1164, %v1179
  %v1182 = vunpack.c.l.s4 1966171168
  %v1183 = vunpack.c.0.s8 %v1182
  %v1184 = vlaneseq
  %v1185 = vshrl.u32 %v1184, 7
  %v1186 = vsub.s32 %v1183, %v1185
  %v1187 = vrot.slane %v1165, %v1186
  %v1189 = vunpack.c.l.s4 1966171168
  %v1190 = vunpack.c.0.s8 %v1189
  %v1191 = vlaneseq
  %v1192 = vshrl.u32 %v1191, 7
  %v1193 = vsub.s32 %v1190, %v1192
  %v1194 = vrot.slane %v1166, %v1193
  %v1195 = vcombine.high %v1173, %v1173
  %v1196 = vcombine.high %v1180, %v1180
  %v1197 = vcombine.high %v1187, %v1187
  %v1198 = vcombine.high %v1194, %v1194
  %v1199 = vcombine.high %v644, %v644
  %v1201 = vunpack.c.l.s4 1966171168
  %v1202 = vunpack.c.0.s8 %v1201
  %v1203 = vlaneseq
  %v1204 = vshrl.u32 %v1203, 7
  %v1205 = vsub.s32 %v1202, %v1204
  %v1206 = vrot.slane %v644, %v1205
  %v1208 = vunpack.c.l.s4 1966171168
  %v1209 = vunpack.c.0.s8 %v1208
  %v1210 = vlaneseq
  %v1211 = vshrl.u32 %v1210, 7
  %v1212 = vsub.s32 %v1209, %v1211
  %v1213 = vrot.slane %v1199, %v1212
  %v1214 = vcombine.high %v1206, %v1206
  %v1215 = vcombine.high %v1213, %v1213
  %v1217 = vunpack.c.l.s4 1966171168
  %v1218 = vunpack.c.0.s8 %v1217
  %v1219 = vlaneseq
  %v1220 = vshrl.u32 %v1219, 7
  %v1221 = vsub.s32 %v1218, %v1220
  %v1222 = vrot.slane %v1206, %v1221
  %v1224 = vunpack.c.l.s4 1966171168
  %v1225 = vunpack.c.0.s8 %v1224
  %v1226 = vlaneseq
  %v1227 = vshrl.u32 %v1226, 7
  %v1228 = vsub.s32 %v1225, %v1227
  %v1229 = vrot.slane %v1213, %v1228
  %v1231 = vunpack.c.l.s4 1966171168
  %v1232 = vunpack.c.0.s8 %v1231
  %v1233 = vlaneseq
  %v1234 = vshrl.u32 %v1233, 7
  %v1235 = vsub.s32 %v1232, %v1234
  %v1236 = vrot.slane %v1214, %v1235
  %v1238 = vunpack.c.l.s4 1966171168
  %v1239 = vunpack.c.0.s8 %v1238
  %v1240 = vlaneseq
  %v1241 = vshrl.u32 %v1240, 7
  %v1242 = vsub.s32 %v1239, %v1241
  %v1243 = vrot.slane %v1215, %v1242
  %v1244 = vcombine.high %v1222, %v1222
  %v1245 = vcombine.high %v1229, %v1229
  %v1246 = vcombine.high %v1236, %v1236
  %v1247 = vcombine.high %v645, %v645
  %v1249 = vunpack.c.l.s4 1966171168
  %v1250 = vunpack.c.0.s8 %v1249
  %v1251 = vlaneseq
  %v1252 = vshrl.u32 %v1251, 7
  %v1253 = vsub.s32 %v1250, %v1252
  %v1254 = vrot.slane %v645, %v1253
  %v1256 = vunpack.c.l.s4 1966171168
  %v1257 = vunpack.c.0.s8 %v1256
  %v1258 = vlaneseq
  %v1259 = vshrl.u32 %v1258, 7
  %v1260 = vsub.s32 %v1257, %v1259
  %v1261 = vrot.slane %v1247, %v1260
  %v1262 = vcombine.high %v1254, %v1254
  %v1263 = vcombine.high %v1261, %v1261
  %v1265 = vunpack.c.l.s4 1966171168
  %v1266 = vunpack.c.0.s8 %v1265
  %v1267 = vlaneseq
  %v1268 = vshrl.u32 %v1267, 7
  %v1269 = vsub.s32 %v1266, %v1268
  %v1270 = vrot.slane %v1254, %v1269
  %v1272 = vunpack.c.l.s4 1966171168
  %v1273 = vunpack.c.0.s8 %v1272
  %v1274 = vlaneseq
  %v1275 = vshrl.u32 %v1274, 7
  %v1276 = vsub.s32 %v1273, %v1275
  %v1277 = vrot.slane %v1261, %v1276
  %v1279 = vunpack.c.l.s4 1966171168
  %v1280 = vunpack.c.0.s8 %v1279
  %v1281 = vlaneseq
  %v1282 = vshrl.u32 %v1281, 7
  %v1283 = vsub.s32 %v1280, %v1282
  %v1284 = vrot.slane %v1262, %v1283
  %v1286 = vunpack.c.l.s4 1966171168
  %v1287 = vunpack.c.0.s8 %v1286
  %v1288 = vlaneseq
  %v1289 = vshrl.u32 %v1288, 7
  %v1290 = vsub.s32 %v1287, %v1289
  %v1291 = vrot.slane %v1263, %v1290
  %v1292 = vcombine.high %v1270, %v1270
  %v1293 = vcombine.high %v1277, %v1277
  %v1294 = vcombine.high %v1284, %v1284
  %v1295 = vcombine.high %v1291, %v1291
  %v1296 = vcombine.high %v646, %v646
  %v1298 = vunpack.c.l.s4 1966171168
  %v1299 = vunpack.c.0.s8 %v1298
  %v1300 = vlaneseq
  %v1301 = vshrl.u32 %v1300, 7
  %v1302 = vsub.s32 %v1299, %v1301
  %v1303 = vrot.slane %v646, %v1302
  %v1305 = vunpack.c.l.s4 1966171168
  %v1306 = vunpack.c.0.s8 %v1305
  %v1307 = vlaneseq
  %v1308 = vshrl.u32 %v1307, 7
  %v1309 = vsub.s32 %v1306, %v1308
  %v1310 = vrot.slane %v1296, %v1309
  %v1311 = vcombine.high %v1303, %v1303
  %v1312 = vcombine.high %v1310, %v1310
  %v1314 = vunpack.c.l.s4 1966171168
  %v1315 = vunpack.c.0.s8 %v1314
  %v1316 = vlaneseq
  %v1317 = vshrl.u32 %v1316, 7
  %v1318 = vsub.s32 %v1315, %v1317
  %v1319 = vrot.slane %v1303, %v1318
  %v1321 = vunpack.c.l.s4 1966171168
  %v1322 = vunpack.c.0.s8 %v1321
  %v1323 = vlaneseq
  %v1324 = vshrl.u32 %v1323, 7
  %v1325 = vsub.s32 %v1322, %v1324
  %v1326 = vrot.slane %v1310, %v1325
  %v1328 = vunpack.c.l.s4 1966171168
  %v1329 = vunpack.c.0.s8 %v1328
  %v1330 = vlaneseq
  %v1331 = vshrl.u32 %v1330, 7
  %v1332 = vsub.s32 %v1329, %v1331
  %v1333 = vrot.slane %v1311, %v1332
  %v1335 = vunpack.c.l.s4 1966171168
  %v1336 = vunpack.c.0.s8 %v1335
  %v1337 = vlaneseq
  %v1338 = vshrl.u32 %v1337, 7
  %v1339 = vsub.s32 %v1336, %v1338
  %v1340 = vrot.slane %v1312, %v1339
  %v1341 = vcombine.high %v1319, %v1319
  %v1342 = vcombine.high %v1326, %v1326
  %v1343 = vcombine.high %v1333, %v1333
  %v1344 = vcombine.high %v647, %v647
  %v1346 = vunpack.c.l.s4 1966171168
  %v1347 = vunpack.c.0.s8 %v1346
  %v1348 = vlaneseq
  %v1349 = vshrl.u32 %v1348, 7
  %v1350 = vsub.s32 %v1347, %v1349
  %v1351 = vrot.slane %v647, %v1350
  %v1353 = vunpack.c.l.s4 1966171168
  %v1354 = vunpack.c.0.s8 %v1353
  %v1355 = vlaneseq
  %v1356 = vshrl.u32 %v1355, 7
  %v1357 = vsub.s32 %v1354, %v1356
  %v1358 = vrot.slane %v1344, %v1357
  %v1359 = vcombine.high %v1351, %v1351
  %v1360 = vcombine.high %v1358, %v1358
  %v1362 = vunpack.c.l.s4 1966171168
  %v1363 = vunpack.c.0.s8 %v1362
  %v1364 = vlaneseq
  %v1365 = vshrl.u32 %v1364, 7
  %v1366 = vsub.s32 %v1363, %v1365
  %v1367 = vrot.slane %v1351, %v1366
  %v1369 = vunpack.c.l.s4 1966171168
  %v1370 = vunpack.c.0.s8 %v1369
  %v1371 = vlaneseq
  %v1372 = vshrl.u32 %v1371, 7
  %v1373 = vsub.s32 %v1370, %v1372
  %v1374 = vrot.slane %v1358, %v1373
  %v1376 = vunpack.c.l.s4 1966171168
  %v1377 = vunpack.c.0.s8 %v1376
  %v1378 = vlaneseq
  %v1379 = vshrl.u32 %v1378, 7
  %v1380 = vsub.s32 %v1377, %v1379
  %v1381 = vrot.slane %v1359, %v1380
  %v1383 = vunpack.c.l.s4 1966171168
  %v1384 = vunpack.c.0.s8 %v1383
  %v1385 = vlaneseq
  %v1386 = vshrl.u32 %v1385, 7
  %v1387 = vsub.s32 %v1384, %v1386
  %v1388 = vrot.slane %v1360, %v1387
  %v1389 = vcombine.high %v1367, %v1367
  %v1390 = vcombine.high %v1374, %v1374
  %v1391 = vcombine.high %v1381, %v1381
  %v1392 = vcombine.high %v1388, %v1388
  %v1393 = vcombine.high %v648, %v648
  %v1395 = vunpack.c.l.s4 1966171168
  %v1396 = vunpack.c.0.s8 %v1395
  %v1397 = vlaneseq
  %v1398 = vshrl.u32 %v1397, 7
  %v1399 = vsub.s32 %v1396, %v1398
  %v1400 = vrot.slane %v648, %v1399
  %v1402 = vunpack.c.l.s4 1966171168
  %v1403 = vunpack.c.0.s8 %v1402
  %v1404 = vlaneseq
  %v1405 = vshrl.u32 %v1404, 7
  %v1406 = vsub.s32 %v1403, %v1405
  %v1407 = vrot.slane %v1393, %v1406
  %v1408 = vcombine.high %v1400, %v1400
  %v1409 = vcombine.high %v1407, %v1407
  %v1411 = vunpack.c.l.s4 1966171168
  %v1412 = vunpack.c.0.s8 %v1411
  %v1413 = vlaneseq
  %v1414 = vshrl.u32 %v1413, 7
  %v1415 = vsub.s32 %v1412, %v1414
  %v1416 = vrot.slane %v1400, %v1415
  %v1418 = vunpack.c.l.s4 1966171168
  %v1419 = vunpack.c.0.s8 %v1418
  %v1420 = vlaneseq
  %v1421 = vshrl.u32 %v1420, 7
  %v1422 = vsub.s32 %v1419, %v1421
  %v1423 = vrot.slane %v1407, %v1422
  %v1425 = vunpack.c.l.s4 1966171168
  %v1426 = vunpack.c.0.s8 %v1425
  %v1427 = vlaneseq
  %v1428 = vshrl.u32 %v1427, 7
  %v1429 = vsub.s32 %v1426, %v1428
  %v1430 = vrot.slane %v1408, %v1429
  %v1432 = vunpack.c.l.s4 1966171168
  %v1433 = vunpack.c.0.s8 %v1432
  %v1434 = vlaneseq
  %v1435 = vshrl.u32 %v1434, 7
  %v1436 = vsub.s32 %v1433, %v1435
  %v1437 = vrot.slane %v1409, %v1436
  %v1438 = vcombine.high %v1416, %v1416
  %v1439 = vcombine.high %v1423, %v1423
  %v1440 = vcombine.high %v1430, %v1430
  %s1441 = scalar_lea.vmem %s1, 160
  %v1442 = vld [vmem:[%s1441] sm:$0xff]
  %v1443 = vld [vmem:[%s1441 + $0x8] sm:$0xff]
  %v1444 = vld [vmem:[%s1441 + $0x10] sm:$0xff]
  %v1445 = vld [vmem:[%s1441 + $0x18] sm:$0xff]
  %v1446 = vld [vmem:[%s1441 + $0x20] sm:$0xff]
  %v1447 = vld [vmem:[%s1441 + $0x28] sm:$0xff]
  %v1448 = vld [vmem:[%s1441 + $0x30] sm:$0xff]
  %v1449 = vld [vmem:[%s1441 + $0x38] sm:$0xff]
  %s1450 = scalar_lea.vmem %s2, 1
  %v1451 = vld [vmem:[%s1450] sm:$0x1]
  %v1453 = vlaneseq
  %v1454 = vshrl.u32 %v1453, 7
  %v1455 = vsub.s32 0, %v1454
  %v1456 = vrot.slane %v1451, %v1455
  %v1458 = vcombine.low %v688, %v702
  %v1459 = vcombine.low %v710, %v712
  %v1460 = vcombine.low %v695, %v709
  %v1461 = vcombine.low %v711, %v713
  %v1463 = vunpack.c.l.s4 1966171168
  %v1464 = vunpack.c.0.s8 %v1463
  %v1465 = vlaneseq
  %v1466 = vshrl.u32 %v1465, 7
  %v1467 = vsub.s32 %v1464, %v1466
  %v1468 = vrot.slane %v1458, %v1467
  %v1470 = vunpack.c.l.s4 1966171168
  %v1471 = vunpack.c.0.s8 %v1470
  %v1472 = vlaneseq
  %v1473 = vshrl.u32 %v1472, 7
  %v1474 = vsub.s32 %v1471, %v1473
  %v1475 = vrot.slane %v1459, %v1474
  %v1477 = vunpack.c.l.s4 1966171168
  %v1478 = vunpack.c.0.s8 %v1477
  %v1479 = vlaneseq
  %v1480 = vshrl.u32 %v1479, 7
  %v1481 = vsub.s32 %v1478, %v1480
  %v1482 = vrot.slane %v1460, %v1481
  %v1484 = vunpack.c.l.s4 1966171168
  %v1485 = vunpack.c.0.s8 %v1484
  %v1486 = vlaneseq
  %v1487 = vshrl.u32 %v1486, 7
  %v1488 = vsub.s32 %v1485, %v1487
  %v1489 = vrot.slane %v1461, %v1488
  %v1490 = vcombine.low %v1468, %v1475
  %v1491 = vcombine.low %v1482, %v1489
  %v1493 = vunpack.c.l.s4 1966171168
  %v1494 = vunpack.c.0.s8 %v1493
  %v1495 = vlaneseq
  %v1496 = vshrl.u32 %v1495, 7
  %v1497 = vsub.s32 %v1494, %v1496
  %v1498 = vrot.slane %v1490, %v1497
  %v1500 = vunpack.c.l.s4 1966171168
  %v1501 = vunpack.c.0.s8 %v1500
  %v1502 = vlaneseq
  %v1503 = vshrl.u32 %v1502, 7
  %v1504 = vsub.s32 %v1501, %v1503
  %v1505 = vrot.slane %v1491, %v1504
  %v1506 = vcombine.low %v1498, %v1505
  %v1507 = vcombine.low %v737, %v751
  %v1508 = vcombine.low %v759, %v761
  %v1509 = vcombine.low %v744, %v758
  %v1510 = vcombine.low %v760, %v785
  %v1512 = vunpack.c.l.s4 1966171168
  %v1513 = vunpack.c.0.s8 %v1512
  %v1514 = vlaneseq
  %v1515 = vshrl.u32 %v1514, 7
  %v1516 = vsub.s32 %v1513, %v1515
  %v1517 = vrot.slane %v1507, %v1516
  %v1519 = vunpack.c.l.s4 1966171168
  %v1520 = vunpack.c.0.s8 %v1519
  %v1521 = vlaneseq
  %v1522 = vshrl.u32 %v1521, 7
  %v1523 = vsub.s32 %v1520, %v1522
  %v1524 = vrot.slane %v1508, %v1523
  %v1526 = vunpack.c.l.s4 1966171168
  %v1527 = vunpack.c.0.s8 %v1526
  %v1528 = vlaneseq
  %v1529 = vshrl.u32 %v1528, 7
  %v1530 = vsub.s32 %v1527, %v1529
  %v1531 = vrot.slane %v1509, %v1530
  %v1533 = vunpack.c.l.s4 1966171168
  %v1534 = vunpack.c.0.s8 %v1533
  %v1535 = vlaneseq
  %v1536 = vshrl.u32 %v1535, 7
  %v1537 = vsub.s32 %v1534, %v1536
  %v1538 = vrot.slane %v1510, %v1537
  %v1539 = vcombine.low %v1517, %v1524
  %v1540 = vcombine.low %v1531, %v1538
  %v1542 = vunpack.c.l.s4 1966171168
  %v1543 = vunpack.c.0.s8 %v1542
  %v1544 = vlaneseq
  %v1545 = vshrl.u32 %v1544, 7
  %v1546 = vsub.s32 %v1543, %v1545
  %v1547 = vrot.slane %v1539, %v1546
  %v1549 = vunpack.c.l.s4 1966171168
  %v1550 = vunpack.c.0.s8 %v1549
  %v1551 = vlaneseq
  %v1552 = vshrl.u32 %v1551, 7
  %v1553 = vsub.s32 %v1550, %v1552
  %v1554 = vrot.slane %v1540, %v1553
  %v1555 = vcombine.low %v1547, %v1554
  %v1556 = vcombine.low %v799, %v807
  %v1557 = vcombine.low %v809, %v792
  %v1558 = vcombine.low %v806, %v808
  %v1559 = vcombine.low %v810, %v834
  %v1561 = vunpack.c.l.s4 1966171168
  %v1562 = vunpack.c.0.s8 %v1561
  %v1563 = vlaneseq
  %v1564 = vshrl.u32 %v1563, 7
  %v1565 = vsub.s32 %v1562, %v1564
  %v1566 = vrot.slane %v1556, %v1565
  %v1568 = vunpack.c.l.s4 1966171168
  %v1569 = vunpack.c.0.s8 %v1568
  %v1570 = vlaneseq
  %v1571 = vshrl.u32 %v1570, 7
  %v1572 = vsub.s32 %v1569, %v1571
  %v1573 = vrot.slane %v1557, %v1572
  %v1575 = vunpack.c.l.s4 1966171168
  %v1576 = vunpack.c.0.s8 %v1575
  %v1577 = vlaneseq
  %v1578 = vshrl.u32 %v1577, 7
  %v1579 = vsub.s32 %v1576, %v1578
  %v1580 = vrot.slane %v1558, %v1579
  %v1582 = vunpack.c.l.s4 1966171168
  %v1583 = vunpack.c.0.s8 %v1582
  %v1584 = vlaneseq
  %v1585 = vshrl.u32 %v1584, 7
  %v1586 = vsub.s32 %v1583, %v1585
  %v1587 = vrot.slane %v1559, %v1586
  %v1588 = vcombine.low %v1566, %v1573
  %v1589 = vcombine.low %v1580, %v1587
  %v1591 = vunpack.c.l.s4 1966171168
  %v1592 = vunpack.c.0.s8 %v1591
  %v1593 = vlaneseq
  %v1594 = vshrl.u32 %v1593, 7
  %v1595 = vsub.s32 %v1592, %v1594
  %v1596 = vrot.slane %v1588, %v1595
  %v1598 = vunpack.c.l.s4 1966171168
  %v1599 = vunpack.c.0.s8 %v1598
  %v1600 = vlaneseq
  %v1601 = vshrl.u32 %v1600, 7
  %v1602 = vsub.s32 %v1599, %v1601
  %v1603 = vrot.slane %v1589, %v1602
  %v1604 = vcombine.low %v1596, %v1603
  %v1605 = vcombine.low %v848, %v856
  %v1606 = vcombine.low %v858, %v841
  %v1607 = vcombine.low %v855, %v857
  %v1608 = vcombine.low %v882, %v896
  %v1610 = vunpack.c.l.s4 1966171168
  %v1611 = vunpack.c.0.s8 %v1610
  %v1612 = vlaneseq
  %v1613 = vshrl.u32 %v1612, 7
  %v1614 = vsub.s32 %v1611, %v1613
  %v1615 = vrot.slane %v1605, %v1614
  %v1617 = vunpack.c.l.s4 1966171168
  %v1618 = vunpack.c.0.s8 %v1617
  %v1619 = vlaneseq
  %v1620 = vshrl.u32 %v1619, 7
  %v1621 = vsub.s32 %v1618, %v1620
  %v1622 = vrot.slane %v1606, %v1621
  %v1624 = vunpack.c.l.s4 1966171168
  %v1625 = vunpack.c.0.s8 %v1624
  %v1626 = vlaneseq
  %v1627 = vshrl.u32 %v1626, 7
  %v1628 = vsub.s32 %v1625, %v1627
  %v1629 = vrot.slane %v1607, %v1628
  %v1631 = vunpack.c.l.s4 1966171168
  %v1632 = vunpack.c.0.s8 %v1631
  %v1633 = vlaneseq
  %v1634 = vshrl.u32 %v1633, 7
  %v1635 = vsub.s32 %v1632, %v1634
  %v1636 = vrot.slane %v1608, %v1635
  %v1637 = vcombine.low %v1615, %v1622
  %v1638 = vcombine.low %v1629, %v1636
  %v1640 = vunpack.c.l.s4 1966171168
  %v1641 = vunpack.c.0.s8 %v1640
  %v1642 = vlaneseq
  %v1643 = vshrl.u32 %v1642, 7
  %v1644 = vsub.s32 %v1641, %v1643
  %v1645 = vrot.slane %v1637, %v1644
  %v1647 = vunpack.c.l.s4 1966171168
  %v1648 = vunpack.c.0.s8 %v1647
  %v1649 = vlaneseq
  %v1650 = vshrl.u32 %v1649, 7
  %v1651 = vsub.s32 %v1648, %v1650
  %v1652 = vrot.slane %v1638, %v1651
  %v1653 = vcombine.low %v1645, %v1652
  %v1654 = vcombine.low %v904, %v906
  %v1655 = vcombine.low %v889, %v903
  %v1656 = vcombine.low %v905, %v907
  %v1657 = vcombine.low %v931, %v945
  %v1659 = vunpack.c.l.s4 1966171168
  %v1660 = vunpack.c.0.s8 %v1659
  %v1661 = vlaneseq
  %v1662 = vshrl.u32 %v1661, 7
  %v1663 = vsub.s32 %v1660, %v1662
  %v1664 = vrot.slane %v1654, %v1663
  %v1666 = vunpack.c.l.s4 1966171168
  %v1667 = vunpack.c.0.s8 %v1666
  %v1668 = vlaneseq
  %v1669 = vshrl.u32 %v1668, 7
  %v1670 = vsub.s32 %v1667, %v1669
  %v1671 = vrot.slane %v1655, %v1670
  %v1673 = vunpack.c.l.s4 1966171168
  %v1674 = vunpack.c.0.s8 %v1673
  %v1675 = vlaneseq
  %v1676 = vshrl.u32 %v1675, 7
  %v1677 = vsub.s32 %v1674, %v1676
  %v1678 = vrot.slane %v1656, %v1677
  %v1680 = vunpack.c.l.s4 1966171168
  %v1681 = vunpack.c.0.s8 %v1680
  %v1682 = vlaneseq
  %v1683 = vshrl.u32 %v1682, 7
  %v1684 = vsub.s32 %v1681, %v1683
  %v1685 = vrot.slane %v1657, %v1684
  %v1686 = vcombine.low %v1664, %v1671
  %v1687 = vcombine.low %v1678, %v1685
  %v1689 = vunpack.c.l.s4 1966171168
  %v1690 = vunpack.c.0.s8 %v1689
  %v1691 = vlaneseq
  %v1692 = vshrl.u32 %v1691, 7
  %v1693 = vsub.s32 %v1690, %v1692
  %v1694 = vrot.slane %v1686, %v1693
  %v1696 = vunpack.c.l.s4 1966171168
  %v1697 = vunpack.c.0.s8 %v1696
  %v1698 = vlaneseq
  %v1699 = vshrl.u32 %v1698, 7
  %v1700 = vsub.s32 %v1697, %v1699
  %v1701 = vrot.slane %v1687, %v1700
  %v1702 = vcombine.low %v1694, %v1701
  %v1703 = vcombine.low %v953, %v955
  %v1704 = vcombine.low %v938, %v952
  %v1705 = vcombine.low %v954, %v979
  %v1706 = vcombine.low %v993, %v1001
  %v1708 = vunpack.c.l.s4 1966171168
  %v1709 = vunpack.c.0.s8 %v1708
  %v1710 = vlaneseq
  %v1711 = vshrl.u32 %v1710, 7
  %v1712 = vsub.s32 %v1709, %v1711
  %v1713 = vrot.slane %v1703, %v1712
  %v1715 = vunpack.c.l.s4 1966171168
  %v1716 = vunpack.c.0.s8 %v1715
  %v1717 = vlaneseq
  %v1718 = vshrl.u32 %v1717, 7
  %v1719 = vsub.s32 %v1716, %v1718
  %v1720 = vrot.slane %v1704, %v1719
  %v1722 = vunpack.c.l.s4 1966171168
  %v1723 = vunpack.c.0.s8 %v1722
  %v1724 = vlaneseq
  %v1725 = vshrl.u32 %v1724, 7
  %v1726 = vsub.s32 %v1723, %v1725
  %v1727 = vrot.slane %v1705, %v1726
  %v1729 = vunpack.c.l.s4 1966171168
  %v1730 = vunpack.c.0.s8 %v1729
  %v1731 = vlaneseq
  %v1732 = vshrl.u32 %v1731, 7
  %v1733 = vsub.s32 %v1730, %v1732
  %v1734 = vrot.slane %v1706, %v1733
  %v1735 = vcombine.low %v1713, %v1720
  %v1736 = vcombine.low %v1727, %v1734
  %v1738 = vunpack.c.l.s4 1966171168
  %v1739 = vunpack.c.0.s8 %v1738
  %v1740 = vlaneseq
  %v1741 = vshrl.u32 %v1740, 7
  %v1742 = vsub.s32 %v1739, %v1741
  %v1743 = vrot.slane %v1735, %v1742
  %v1745 = vunpack.c.l.s4 1966171168
  %v1746 = vunpack.c.0.s8 %v1745
  %v1747 = vlaneseq
  %v1748 = vshrl.u32 %v1747, 7
  %v1749 = vsub.s32 %v1746, %v1748
  %v1750 = vrot.slane %v1736, %v1749
  %v1751 = vcombine.low %v1743, %v1750
  %v1752 = vcombine.low %v1003, %v986
  %v1753 = vcombine.low %v1000, %v1002
  %v1754 = vcombine.low %v1004, %v1028
  %v1755 = vcombine.low %v1042, %v1050
  %v1757 = vunpack.c.l.s4 1966171168
  %v1758 = vunpack.c.0.s8 %v1757
  %v1759 = vlaneseq
  %v1760 = vshrl.u32 %v1759, 7
  %v1761 = vsub.s32 %v1758, %v1760
  %v1762 = vrot.slane %v1752, %v1761
  %v1764 = vunpack.c.l.s4 1966171168
  %v1765 = vunpack.c.0.s8 %v1764
  %v1766 = vlaneseq
  %v1767 = vshrl.u32 %v1766, 7
  %v1768 = vsub.s32 %v1765, %v1767
  %v1769 = vrot.slane %v1753, %v1768
  %v1771 = vunpack.c.l.s4 1966171168
  %v1772 = vunpack.c.0.s8 %v1771
  %v1773 = vlaneseq
  %v1774 = vshrl.u32 %v1773, 7
  %v1775 = vsub.s32 %v1772, %v1774
  %v1776 = vrot.slane %v1754, %v1775
  %v1778 = vunpack.c.l.s4 1966171168
  %v1779 = vunpack.c.0.s8 %v1778
  %v1780 = vlaneseq
  %v1781 = vshrl.u32 %v1780, 7
  %v1782 = vsub.s32 %v1779, %v1781
  %v1783 = vrot.slane %v1755, %v1782
  %v1784 = vcombine.low %v1762, %v1769
  %v1785 = vcombine.low %v1776, %v1783
  %v1787 = vunpack.c.l.s4 1966171168
  %v1788 = vunpack.c.0.s8 %v1787
  %v1789 = vlaneseq
  %v1790 = vshrl.u32 %v1789, 7
  %v1791 = vsub.s32 %v1788, %v1790
  %v1792 = vrot.slane %v1784, %v1791
  %v1794 = vunpack.c.l.s4 1966171168
  %v1795 = vunpack.c.0.s8 %v1794
  %v1796 = vlaneseq
  %v1797 = vshrl.u32 %v1796, 7
  %v1798 = vsub.s32 %v1795, %v1797
  %v1799 = vrot.slane %v1785, %v1798
  %v1800 = vcombine.low %v1792, %v1799
  %v1801 = vcombine.low %v1052, %v1035
  %v1802 = vcombine.low %v1049, %v1051
  %v1803 = vcombine.low %v1076, %v1090
  %v1804 = vcombine.low %v1098, %v1100
  %v1806 = vunpack.c.l.s4 1966171168
  %v1807 = vunpack.c.0.s8 %v1806
  %v1808 = vlaneseq
  %v1809 = vshrl.u32 %v1808, 7
  %v1810 = vsub.s32 %v1807, %v1809
  %v1811 = vrot.slane %v1801, %v1810
  %v1813 = vunpack.c.l.s4 1966171168
  %v1814 = vunpack.c.0.s8 %v1813
  %v1815 = vlaneseq
  %v1816 = vshrl.u32 %v1815, 7
  %v1817 = vsub.s32 %v1814, %v1816
  %v1818 = vrot.slane %v1802, %v1817
  %v1820 = vunpack.c.l.s4 1966171168
  %v1821 = vunpack.c.0.s8 %v1820
  %v1822 = vlaneseq
  %v1823 = vshrl.u32 %v1822, 7
  %v1824 = vsub.s32 %v1821, %v1823
  %v1825 = vrot.slane %v1803, %v1824
  %v1827 = vunpack.c.l.s4 1966171168
  %v1828 = vunpack.c.0.s8 %v1827
  %v1829 = vlaneseq
  %v1830 = vshrl.u32 %v1829, 7
  %v1831 = vsub.s32 %v1828, %v1830
  %v1832 = vrot.slane %v1804, %v1831
  %v1833 = vcombine.low %v1811, %v1818
  %v1834 = vcombine.low %v1825, %v1832
  %v1836 = vunpack.c.l.s4 1966171168
  %v1837 = vunpack.c.0.s8 %v1836
  %v1838 = vlaneseq
  %v1839 = vshrl.u32 %v1838, 7
  %v1840 = vsub.s32 %v1837, %v1839
  %v1841 = vrot.slane %v1833, %v1840
  %v1843 = vunpack.c.l.s4 1966171168
  %v1844 = vunpack.c.0.s8 %v1843
  %v1845 = vlaneseq
  %v1846 = vshrl.u32 %v1845, 7
  %v1847 = vsub.s32 %v1844, %v1846
  %v1848 = vrot.slane %v1834, %v1847
  %v1849 = vcombine.low %v1841, %v1848
  %v1850 = vcombine.low %v1083, %v1097
  %v1851 = vcombine.low %v1099, %v1101
  %v1852 = vcombine.low %v1125, %v1139
  %v1853 = vcombine.low %v1147, %v1149
  %v1855 = vunpack.c.l.s4 1966171168
  %v1856 = vunpack.c.0.s8 %v1855
  %v1857 = vlaneseq
  %v1858 = vshrl.u32 %v1857, 7
  %v1859 = vsub.s32 %v1856, %v1858
  %v1860 = vrot.slane %v1850, %v1859
  %v1862 = vunpack.c.l.s4 1966171168
  %v1863 = vunpack.c.0.s8 %v1862
  %v1864 = vlaneseq
  %v1865 = vshrl.u32 %v1864, 7
  %v1866 = vsub.s32 %v1863, %v1865
  %v1867 = vrot.slane %v1851, %v1866
  %v1869 = vunpack.c.l.s4 1966171168
  %v1870 = vunpack.c.0.s8 %v1869
  %v1871 = vlaneseq
  %v1872 = vshrl.u32 %v1871, 7
  %v1873 = vsub.s32 %v1870, %v1872
  %v1874 = vrot.slane %v1852, %v1873
  %v1876 = vunpack.c.l.s4 1966171168
  %v1877 = vunpack.c.0.s8 %v1876
  %v1878 = vlaneseq
  %v1879 = vshrl.u32 %v1878, 7
  %v1880 = vsub.s32 %v1877, %v1879
  %v1881 = vrot.slane %v1853, %v1880
  %v1882 = vcombine.low %v1860, %v1867
  %v1883 = vcombine.low %v1874, %v1881
  %v1885 = vunpack.c.l.s4 1966171168
  %v1886 = vunpack.c.0.s8 %v1885
  %v1887 = vlaneseq
  %v1888 = vshrl.u32 %v1887, 7
  %v1889 = vsub.s32 %v1886, %v1888
  %v1890 = vrot.slane %v1882, %v1889
  %v1892 = vunpack.c.l.s4 1966171168
  %v1893 = vunpack.c.0.s8 %v1892
  %v1894 = vlaneseq
  %v1895 = vshrl.u32 %v1894, 7
  %v1896 = vsub.s32 %v1893, %v1895
  %v1897 = vrot.slane %v1883, %v1896
  %v1898 = vcombine.low %v1890, %v1897
  %v1899 = vcombine.low %v1132, %v1146
  %v1900 = vcombine.low %v1148, %v1173
  %v1901 = vcombine.low %v1187, %v1195
  %v1902 = vcombine.low %v1197, %v1180
  %v1904 = vunpack.c.l.s4 1966171168
  %v1905 = vunpack.c.0.s8 %v1904
  %v1906 = vlaneseq
  %v1907 = vshrl.u32 %v1906, 7
  %v1908 = vsub.s32 %v1905, %v1907
  %v1909 = vrot.slane %v1899, %v1908
  %v1911 = vunpack.c.l.s4 1966171168
  %v1912 = vunpack.c.0.s8 %v1911
  %v1913 = vlaneseq
  %v1914 = vshrl.u32 %v1913, 7
  %v1915 = vsub.s32 %v1912, %v1914
  %v1916 = vrot.slane %v1900, %v1915
  %v1918 = vunpack.c.l.s4 1966171168
  %v1919 = vunpack.c.0.s8 %v1918
  %v1920 = vlaneseq
  %v1921 = vshrl.u32 %v1920, 7
  %v1922 = vsub.s32 %v1919, %v1921
  %v1923 = vrot.slane %v1901, %v1922
  %v1925 = vunpack.c.l.s4 1966171168
  %v1926 = vunpack.c.0.s8 %v1925
  %v1927 = vlaneseq
  %v1928 = vshrl.u32 %v1927, 7
  %v1929 = vsub.s32 %v1926, %v1928
  %v1930 = vrot.slane %v1902, %v1929
  %v1931 = vcombine.low %v1909, %v1916
  %v1932 = vcombine.low %v1923, %v1930
  %v1934 = vunpack.c.l.s4 1966171168
  %v1935 = vunpack.c.0.s8 %v1934
  %v1936 = vlaneseq
  %v1937 = vshrl.u32 %v1936, 7
  %v1938 = vsub.s32 %v1935, %v1937
  %v1939 = vrot.slane %v1931, %v1938
  %v1941 = vunpack.c.l.s4 1966171168
  %v1942 = vunpack.c.0.s8 %v1941
  %v1943 = vlaneseq
  %v1944 = vshrl.u32 %v1943, 7
  %v1945 = vsub.s32 %v1942, %v1944
  %v1946 = vrot.slane %v1932, %v1945
  %v1947 = vcombine.low %v1939, %v1946
  %v1948 = vcombine.low %v1194, %v1196
  %v1949 = vcombine.low %v1198, %v1222
  %v1950 = vcombine.low %v1236, %v1244
  %v1951 = vcombine.low %v1246, %v1229
  %v1953 = vunpack.c.l.s4 1966171168
  %v1954 = vunpack.c.0.s8 %v1953
  %v1955 = vlaneseq
  %v1956 = vshrl.u32 %v1955, 7
  %v1957 = vsub.s32 %v1954, %v1956
  %v1958 = vrot.slane %v1948, %v1957
  %v1960 = vunpack.c.l.s4 1966171168
  %v1961 = vunpack.c.0.s8 %v1960
  %v1962 = vlaneseq
  %v1963 = vshrl.u32 %v1962, 7
  %v1964 = vsub.s32 %v1961, %v1963
  %v1965 = vrot.slane %v1949, %v1964
  %v1967 = vunpack.c.l.s4 1966171168
  %v1968 = vunpack.c.0.s8 %v1967
  %v1969 = vlaneseq
  %v1970 = vshrl.u32 %v1969, 7
  %v1971 = vsub.s32 %v1968, %v1970
  %v1972 = vrot.slane %v1950, %v1971
  %v1974 = vunpack.c.l.s4 1966171168
  %v1975 = vunpack.c.0.s8 %v1974
  %v1976 = vlaneseq
  %v1977 = vshrl.u32 %v1976, 7
  %v1978 = vsub.s32 %v1975, %v1977
  %v1979 = vrot.slane %v1951, %v1978
  %v1980 = vcombine.low %v1958, %v1965
  %v1981 = vcombine.low %v1972, %v1979
  %v1983 = vunpack.c.l.s4 1966171168
  %v1984 = vunpack.c.0.s8 %v1983
  %v1985 = vlaneseq
  %v1986 = vshrl.u32 %v1985, 7
  %v1987 = vsub.s32 %v1984, %v1986
  %v1988 = vrot.slane %v1980, %v1987
  %v1990 = vunpack.c.l.s4 1966171168
  %v1991 = vunpack.c.0.s8 %v1990
  %v1992 = vlaneseq
  %v1993 = vshrl.u32 %v1992, 7
  %v1994 = vsub.s32 %v1991, %v1993
  %v1995 = vrot.slane %v1981, %v1994
  %v1996 = vcombine.low %v1988, %v1995
  %v1997 = vcombine.low %v1243, %v1245
  %v1998 = vcombine.low %v1270, %v1284
  %v1999 = vcombine.low %v1292, %v1294
  %v2000 = vcombine.low %v1277, %v1291
  %v2002 = vunpack.c.l.s4 1966171168
  %v2003 = vunpack.c.0.s8 %v2002
  %v2004 = vlaneseq
  %v2005 = vshrl.u32 %v2004, 7
  %v2006 = vsub.s32 %v2003, %v2005
  %v2007 = vrot.slane %v1997, %v2006
  %v2009 = vunpack.c.l.s4 1966171168
  %v2010 = vunpack.c.0.s8 %v2009
  %v2011 = vlaneseq
  %v2012 = vshrl.u32 %v2011, 7
  %v2013 = vsub.s32 %v2010, %v2012
  %v2014 = vrot.slane %v1998, %v2013
  %v2016 = vunpack.c.l.s4 1966171168
  %v2017 = vunpack.c.0.s8 %v2016
  %v2018 = vlaneseq
  %v2019 = vshrl.u32 %v2018, 7
  %v2020 = vsub.s32 %v2017, %v2019
  %v2021 = vrot.slane %v1999, %v2020
  %v2023 = vunpack.c.l.s4 1966171168
  %v2024 = vunpack.c.0.s8 %v2023
  %v2025 = vlaneseq
  %v2026 = vshrl.u32 %v2025, 7
  %v2027 = vsub.s32 %v2024, %v2026
  %v2028 = vrot.slane %v2000, %v2027
  %v2029 = vcombine.low %v2007, %v2014
  %v2030 = vcombine.low %v2021, %v2028
  %v2032 = vunpack.c.l.s4 1966171168
  %v2033 = vunpack.c.0.s8 %v2032
  %v2034 = vlaneseq
  %v2035 = vshrl.u32 %v2034, 7
  %v2036 = vsub.s32 %v2033, %v2035
  %v2037 = vrot.slane %v2029, %v2036
  %v2039 = vunpack.c.l.s4 1966171168
  %v2040 = vunpack.c.0.s8 %v2039
  %v2041 = vlaneseq
  %v2042 = vshrl.u32 %v2041, 7
  %v2043 = vsub.s32 %v2040, %v2042
  %v2044 = vrot.slane %v2030, %v2043
  %v2045 = vcombine.low %v2037, %v2044
  %v2046 = vcombine.low %v1293, %v1295
  %v2047 = vcombine.low %v1319, %v1333
  %v2048 = vcombine.low %v1341, %v1343
  %v2049 = vcombine.low %v1326, %v1340
  %v2051 = vunpack.c.l.s4 1966171168
  %v2052 = vunpack.c.0.s8 %v2051
  %v2053 = vlaneseq
  %v2054 = vshrl.u32 %v2053, 7
  %v2055 = vsub.s32 %v2052, %v2054
  %v2056 = vrot.slane %v2046, %v2055
  %v2058 = vunpack.c.l.s4 1966171168
  %v2059 = vunpack.c.0.s8 %v2058
  %v2060 = vlaneseq
  %v2061 = vshrl.u32 %v2060, 7
  %v2062 = vsub.s32 %v2059, %v2061
  %v2063 = vrot.slane %v2047, %v2062
  %v2065 = vunpack.c.l.s4 1966171168
  %v2066 = vunpack.c.0.s8 %v2065
  %v2067 = vlaneseq
  %v2068 = vshrl.u32 %v2067, 7
  %v2069 = vsub.s32 %v2066, %v2068
  %v2070 = vrot.slane %v2048, %v2069
  %v2072 = vunpack.c.l.s4 1966171168
  %v2073 = vunpack.c.0.s8 %v2072
  %v2074 = vlaneseq
  %v2075 = vshrl.u32 %v2074, 7
  %v2076 = vsub.s32 %v2073, %v2075
  %v2077 = vrot.slane %v2049, %v2076
  %v2078 = vcombine.low %v2056, %v2063
  %v2079 = vcombine.low %v2070, %v2077
  %v2081 = vunpack.c.l.s4 1966171168
  %v2082 = vunpack.c.0.s8 %v2081
  %v2083 = vlaneseq
  %v2084 = vshrl.u32 %v2083, 7
  %v2085 = vsub.s32 %v2082, %v2084
  %v2086 = vrot.slane %v2078, %v2085
  %v2088 = vunpack.c.l.s4 1966171168
  %v2089 = vunpack.c.0.s8 %v2088
  %v2090 = vlaneseq
  %v2091 = vshrl.u32 %v2090, 7
  %v2092 = vsub.s32 %v2089, %v2091
  %v2093 = vrot.slane %v2079, %v2092
  %v2094 = vcombine.low %v2086, %v2093
  %v2095 = vcombine.low %v1342, %v1367
  %v2096 = vcombine.low %v1381, %v1389
  %v2097 = vcombine.low %v1391, %v1374
  %v2098 = vcombine.low %v1388, %v1390
  %v2100 = vunpack.c.l.s4 1966171168
  %v2101 = vunpack.c.0.s8 %v2100
  %v2102 = vlaneseq
  %v2103 = vshrl.u32 %v2102, 7
  %v2104 = vsub.s32 %v2101, %v2103
  %v2105 = vrot.slane %v2095, %v2104
  %v2107 = vunpack.c.l.s4 1966171168
  %v2108 = vunpack.c.0.s8 %v2107
  %v2109 = vlaneseq
  %v2110 = vshrl.u32 %v2109, 7
  %v2111 = vsub.s32 %v2108, %v2110
  %v2112 = vrot.slane %v2096, %v2111
  %v2114 = vunpack.c.l.s4 1966171168
  %v2115 = vunpack.c.0.s8 %v2114
  %v2116 = vlaneseq
  %v2117 = vshrl.u32 %v2116, 7
  %v2118 = vsub.s32 %v2115, %v2117
  %v2119 = vrot.slane %v2097, %v2118
  %v2121 = vunpack.c.l.s4 1966171168
  %v2122 = vunpack.c.0.s8 %v2121
  %v2123 = vlaneseq
  %v2124 = vshrl.u32 %v2123, 7
  %v2125 = vsub.s32 %v2122, %v2124
  %v2126 = vrot.slane %v2098, %v2125
  %v2127 = vcombine.low %v2105, %v2112
  %v2128 = vcombine.low %v2119, %v2126
  %v2130 = vunpack.c.l.s4 1966171168
  %v2131 = vunpack.c.0.s8 %v2130
  %v2132 = vlaneseq
  %v2133 = vshrl.u32 %v2132, 7
  %v2134 = vsub.s32 %v2131, %v2133
  %v2135 = vrot.slane %v2127, %v2134
  %v2137 = vunpack.c.l.s4 1966171168
  %v2138 = vunpack.c.0.s8 %v2137
  %v2139 = vlaneseq
  %v2140 = vshrl.u32 %v2139, 7
  %v2141 = vsub.s32 %v2138, %v2140
  %v2142 = vrot.slane %v2128, %v2141
  %v2143 = vcombine.low %v2135, %v2142
  %v2144 = vcombine.low %v1392, %v1416
  %v2145 = vcombine.low %v1430, %v1438
  %v2146 = vcombine.low %v1440, %v1423
  %v2147 = vcombine.low %v1437, %v1439
  %v2149 = vunpack.c.l.s4 1966171168
  %v2150 = vunpack.c.0.s8 %v2149
  %v2151 = vlaneseq
  %v2152 = vshrl.u32 %v2151, 7
  %v2153 = vsub.s32 %v2150, %v2152
  %v2154 = vrot.slane %v2144, %v2153
  %v2156 = vunpack.c.l.s4 1966171168
  %v2157 = vunpack.c.0.s8 %v2156
  %v2158 = vlaneseq
  %v2159 = vshrl.u32 %v2158, 7
  %v2160 = vsub.s32 %v2157, %v2159
  %v2161 = vrot.slane %v2145, %v2160
  %v2163 = vunpack.c.l.s4 1966171168
  %v2164 = vunpack.c.0.s8 %v2163
  %v2165 = vlaneseq
  %v2166 = vshrl.u32 %v2165, 7
  %v2167 = vsub.s32 %v2164, %v2166
  %v2168 = vrot.slane %v2146, %v2167
  %v2170 = vunpack.c.l.s4 1966171168
  %v2171 = vunpack.c.0.s8 %v2170
  %v2172 = vlaneseq
  %v2173 = vshrl.u32 %v2172, 7
  %v2174 = vsub.s32 %v2171, %v2173
  %v2175 = vrot.slane %v2147, %v2174
  %v2176 = vcombine.low %v2154, %v2161
  %v2177 = vcombine.low %v2168, %v2175
  %v2179 = vunpack.c.l.s4 1966171168
  %v2180 = vunpack.c.0.s8 %v2179
  %v2181 = vlaneseq
  %v2182 = vshrl.u32 %v2181, 7
  %v2183 = vsub.s32 %v2180, %v2182
  %v2184 = vrot.slane %v2176, %v2183
  %v2186 = vunpack.c.l.s4 1966171168
  %v2187 = vunpack.c.0.s8 %v2186
  %v2188 = vlaneseq
  %v2189 = vshrl.u32 %v2188, 7
  %v2190 = vsub.s32 %v2187, %v2189
  %v2191 = vrot.slane %v2177, %v2190
  %v2192 = vcombine.low %v2184, %v2191
  %vm2193 = vcmask 523264
  %v2194 = vsel %vm2193, %v1506, 0
  %v2196 = vsel %vm2193, %v1555, 0
  %v2198 = vsel %vm2193, %v1604, 0
  %v2200 = vsel %vm2193, %v1653, 0
  %v2202 = vsel %vm2193, %v1702, 0
  %v2204 = vsel %vm2193, %v1751, 0
  %v2206 = vsel %vm2193, %v1800, 0
  %v2208 = vsel %vm2193, %v1849, 0
  %v2210 = vsel %vm2193, %v1898, 0
  %v2212 = vsel %vm2193, %v1947, 0
  %v2214 = vsel %vm2193, %v1996, 0
  %v2216 = vsel %vm2193, %v2045, 0
  %v2218 = vsel %vm2193, %v2094, 0
  %v2220 = vsel %vm2193, %v2143, 0
  %v2222 = vsel %vm2193, %v2192, 0
  %2224 = vmatprep.subr.mxu0 0.0
  %2225 = vmatpush1.msra.mxu0 %v1442
  %2226 = vmatprep.subr.mxu0 0.0
  %2227 = vmatpush1.msra.mxu0 %v1443
  %2228 = vmatprep.subr.mxu0 0.0
  %2229 = vmatpush1.msra.mxu0 %v1444
  %2230 = vmatprep.subr.mxu0 0.0
  %2231 = vmatpush1.msra.mxu0 %v1445
  %2232 = vmatprep.subr.mxu0 0.0
  %2233 = vmatpush1.msra.mxu0 %v1446
  %2234 = vmatprep.subr.mxu0 0.0
  %2235 = vmatpush1.msra.mxu0 %v1447
  %2236 = vmatprep.subr.mxu0 0.0
  %2237 = vmatpush1.msra.mxu0 %v1448
  %2238 = vmatprep.subr.mxu0 0.0
  %2239 = vmatpush1.msra.mxu0 %v1449
  %2240 = vmatprep.subr.mxu0 0.0
  %2241 = vmatpush1.msra.mxu0 0.0
  %2242 = vmatprep.subr.mxu0 0.0
  %2243 = vmatpush1.msra.mxu0 0.0
  %2244 = vmatprep.subr.mxu0 0.0
  %2245 = vmatpush1.msra.mxu0 0.0
  %2246 = vmatprep.subr.mxu0 0.0
  %2247 = vmatpush1.msra.mxu0 0.0
  %2248 = vmatprep.subr.mxu0 0.0
  %2249 = vmatpush1.msra.mxu0 0.0
  %2250 = vmatprep.subr.mxu0 0.0
  %2251 = vmatpush1.msra.mxu0 0.0
  %2252 = vmatprep.subr.mxu0 0.0
  %2253 = vmatpush1.msra.mxu0 0.0
  %2254 = vmatprep.subr.mxu0 0.0
  %2255 = vmatpush1.msra.mxu0 0.0
  %2256 = vmatprep.subr.mxu0 0.0
  %2257 = vmatpush1.msra.mxu0 0.0
  %2258 = vmatprep.subr.mxu0 0.0
  %2259 = vmatpush1.msra.mxu0 0.0
  %2260 = vmatprep.subr.mxu0 0.0
  %2261 = vmatpush1.msra.mxu0 0.0
  %2262 = vmatprep.subr.mxu0 0.0
  %2263 = vmatpush1.msra.mxu0 0.0
  %2264 = vmatprep.subr.mxu0 0.0
  %2265 = vmatpush1.msra.mxu0 0.0
  %2266 = vmatprep.subr.mxu0 0.0
  %2267 = vmatpush1.msra.mxu0 0.0
  %2268 = vmatprep.subr.mxu0 0.0
  %2269 = vmatpush1.msra.mxu0 0.0
  %2270 = vmatprep.subr.mxu0 0.0
  %2271 = vmatpush1.msra.mxu0 0.0
  %2272 = vmatprep.subr.mxu0 0.0
  %2273 = vmatpush1.msra.mxu0 0.0
  %2274 = vmatprep.subr.mxu0 0.0
  %2275 = vmatpush1.msra.mxu0 0.0
  %2276 = vmatprep.subr.mxu0 0.0
  %2277 = vmatpush1.msra.mxu0 0.0
  %2278 = vmatprep.subr.mxu0 0.0
  %2279 = vmatpush1.msra.mxu0 0.0
  %2280 = vmatprep.subr.mxu0 0.0
  %2281 = vmatpush1.msra.mxu0 0.0
  %2282 = vmatprep.subr.mxu0 0.0
  %2283 = vmatpush1.msra.mxu0 0.0
  %2284 = vmatprep.subr.mxu0 0.0
  %2285 = vmatpush1.msra.mxu0 0.0
  %2286 = vmatprep.subr.mxu0 0.0
  %2287 = vmatpush1.msra.mxu0 0.0
  %2288 = vmatprep.mubr.f32.mxu0 0.0
  %2289 = vmatmul.mubr.f32.gmra.mrb[0].mxu0 %v2194
  %v2290 = vpop.f32.mrb[0].mxu0
  %v2291 = vadd.f32 %v1456, %v2290
  %v2292 = vpop.f32.mrb[0].mxu0
  %2293 = vmatprep.mubr.f32.mxu0 0.0
  %2294 = vmatmul.mubr.f32.gmra.mrb[0].mxu0 %v2196
  %v2295 = vpop.f32.mrb[0].mxu0
  %v2296 = vadd.f32 %v1456, %v2295
  %v2297 = vpop.f32.mrb[0].mxu0
  %2298 = vmatprep.mubr.f32.mxu0 0.0
  %2299 = vmatmul.mubr.f32.gmra.mrb[0].mxu0 %v2198
  %v2300 = vpop.f32.mrb[0].mxu0
  %v2301 = vadd.f32 %v1456, %v2300
  %v2302 = vpop.f32.mrb[0].mxu0
  %2303 = vmatprep.mubr.f32.mxu0 0.0
  %2304 = vmatmul.mubr.f32.gmra.mrb[0].mxu0 %v2200
  %v2305 = vpop.f32.mrb[0].mxu0
  %v2306 = vadd.f32 %v1456, %v2305
  %v2307 = vpop.f32.mrb[0].mxu0
  %2308 = vmatprep.mubr.f32.mxu0 0.0
  %2309 = vmatmul.mubr.f32.gmra.mrb[0].mxu0 %v2202
  %v2310 = vpop.f32.mrb[0].mxu0
  %v2311 = vadd.f32 %v1456, %v2310
  %v2312 = vpop.f32.mrb[0].mxu0
  %2313 = vmatprep.mubr.f32.mxu0 0.0
  %2314 = vmatmul.mubr.f32.gmra.mrb[0].mxu0 %v2204
  %v2315 = vpop.f32.mrb[0].mxu0
  %v2316 = vadd.f32 %v1456, %v2315
  %v2317 = vpop.f32.mrb[0].mxu0
  %2318 = vmatprep.mubr.f32.mxu0 0.0
  %2319 = vmatmul.mubr.f32.gmra.mrb[0].mxu0 %v2206
  %v2320 = vpop.f32.mrb[0].mxu0
  %v2321 = vadd.f32 %v1456, %v2320
  %v2322 = vpop.f32.mrb[0].mxu0
  %2323 = vmatprep.mubr.f32.mxu0 0.0
  %2324 = vmatmul.mubr.f32.gmra.mrb[0].mxu0 %v2208
  %v2325 = vpop.f32.mrb[0].mxu0
  %v2326 = vadd.f32 %v1456, %v2325
  %v2327 = vpop.f32.mrb[0].mxu0
  %2328 = vmatprep.mubr.f32.mxu0 0.0
  %2329 = vmatmul.mubr.f32.gmra.mrb[0].mxu0 %v2210
  %v2330 = vpop.f32.mrb[0].mxu0
  %v2331 = vadd.f32 %v1456, %v2330
  %v2332 = vpop.f32.mrb[0].mxu0
  %2333 = vmatprep.mubr.f32.mxu0 0.0
  %2334 = vmatmul.mubr.f32.gmra.mrb[0].mxu0 %v2212
  %v2335 = vpop.f32.mrb[0].mxu0
  %v2336 = vadd.f32 %v1456, %v2335
  %v2337 = vpop.f32.mrb[0].mxu0
  %2338 = vmatprep.mubr.f32.mxu0 0.0
  %2339 = vmatmul.mubr.f32.gmra.mrb[0].mxu0 %v2214
  %v2340 = vpop.f32.mrb[0].mxu0
  %v2341 = vadd.f32 %v1456, %v2340
  %v2342 = vpop.f32.mrb[0].mxu0
  %2343 = vmatprep.mubr.f32.mxu0 0.0
  %2344 = vmatmul.mubr.f32.gmra.mrb[0].mxu0 %v2216
  %v2345 = vpop.f32.mrb[0].mxu0
  %v2346 = vadd.f32 %v1456, %v2345
  %v2347 = vpop.f32.mrb[0].mxu0
  %2348 = vmatprep.mubr.f32.mxu0 0.0
  %2349 = vmatmul.mubr.f32.gmra.mrb[0].mxu0 %v2218
  %v2350 = vpop.f32.mrb[0].mxu0
  %v2351 = vadd.f32 %v1456, %v2350
  %v2352 = vpop.f32.mrb[0].mxu0
  %2353 = vmatprep.mubr.f32.mxu0 0.0
  %2354 = vmatmul.mubr.f32.gmra.mrb[0].mxu0 %v2220
  %v2355 = vpop.f32.mrb[0].mxu0
  %v2356 = vadd.f32 %v1456, %v2355
  %v2357 = vpop.f32.mrb[0].mxu0
  %2358 = vmatprep.mubr.f32.mxu0 0.0
  %2359 = vmatmul.mubr.f32.gmra.mrb[0].mxu0 %v2222
  %v2360 = vpop.f32.mrb[0].mxu0
  %v2361 = vadd.f32 %v1456, %v2360
  %v2362 = vpop.f32.mrb[0].mxu0
  %2363 = vdwg.mxu0
  %v2364 = vmax.f32 %v2291, 0.0
  %v2365 = vmax.f32 %v2296, 0.0
  %v2366 = vmax.f32 %v2301, 0.0
  %v2367 = vmax.f32 %v2306, 0.0
  %v2368 = vmax.f32 %v2311, 0.0
  %v2369 = vmax.f32 %v2316, 0.0
  %v2370 = vmax.f32 %v2321, 0.0
  %v2371 = vmax.f32 %v2326, 0.0
  %v2372 = vmax.f32 %v2331, 0.0
  %v2373 = vmax.f32 %v2336, 0.0
  %v2374 = vmax.f32 %v2341, 0.0
  %v2375 = vmax.f32 %v2346, 0.0
  %v2376 = vmax.f32 %v2351, 0.0
  %v2377 = vmax.f32 %v2356, 0.0
  %v2378 = vmax.f32 %v2361, 0.0
  %v2394 = vcombine.high %v2364, %v2364
  %v2396 = vunpack.c.l.s4 1966171168
  %v2397 = vunpack.c.0.s8 %v2396
  %v2398 = vlaneseq
  %v2399 = vshrl.u32 %v2398, 7
  %v2400 = vsub.s32 %v2397, %v2399
  %v2401 = vrot.slane %v2364, %v2400
  %v2403 = vunpack.c.l.s4 1966171168
  %v2404 = vunpack.c.0.s8 %v2403
  %v2405 = vlaneseq
  %v2406 = vshrl.u32 %v2405, 7
  %v2407 = vsub.s32 %v2404, %v2406
  %v2408 = vrot.slane %v2394, %v2407
  %v2409 = vcombine.high %v2401, %v2401
  %v2410 = vcombine.high %v2408, %v2408
  %v2412 = vunpack.c.l.s4 1966171168
  %v2413 = vunpack.c.0.s8 %v2412
  %v2414 = vlaneseq
  %v2415 = vshrl.u32 %v2414, 7
  %v2416 = vsub.s32 %v2413, %v2415
  %v2417 = vrot.slane %v2401, %v2416
  %v2419 = vunpack.c.l.s4 1966171168
  %v2420 = vunpack.c.0.s8 %v2419
  %v2421 = vlaneseq
  %v2422 = vshrl.u32 %v2421, 7
  %v2423 = vsub.s32 %v2420, %v2422
  %v2424 = vrot.slane %v2408, %v2423
  %v2426 = vunpack.c.l.s4 1966171168
  %v2427 = vunpack.c.0.s8 %v2426
  %v2428 = vlaneseq
  %v2429 = vshrl.u32 %v2428, 7
  %v2430 = vsub.s32 %v2427, %v2429
  %v2431 = vrot.slane %v2409, %v2430
  %v2433 = vunpack.c.l.s4 1966171168
  %v2434 = vunpack.c.0.s8 %v2433
  %v2435 = vlaneseq
  %v2436 = vshrl.u32 %v2435, 7
  %v2437 = vsub.s32 %v2434, %v2436
  %v2438 = vrot.slane %v2410, %v2437
  %v2439 = vcombine.high %v2417, %v2417
  %v2440 = vcombine.high %v2424, %v2424
  %v2441 = vcombine.high %v2431, %v2431
  %v2442 = vcombine.high %v2438, %v2438
  %v2443 = vcombine.high %v2365, %v2365
  %v2445 = vunpack.c.l.s4 1966171168
  %v2446 = vunpack.c.0.s8 %v2445
  %v2447 = vlaneseq
  %v2448 = vshrl.u32 %v2447, 7
  %v2449 = vsub.s32 %v2446, %v2448
  %v2450 = vrot.slane %v2365, %v2449
  %v2452 = vunpack.c.l.s4 1966171168
  %v2453 = vunpack.c.0.s8 %v2452
  %v2454 = vlaneseq
  %v2455 = vshrl.u32 %v2454, 7
  %v2456 = vsub.s32 %v2453, %v2455
  %v2457 = vrot.slane %v2443, %v2456
  %v2458 = vcombine.high %v2450, %v2450
  %v2459 = vcombine.high %v2457, %v2457
  %v2461 = vunpack.c.l.s4 1966171168
  %v2462 = vunpack.c.0.s8 %v2461
  %v2463 = vlaneseq
  %v2464 = vshrl.u32 %v2463, 7
  %v2465 = vsub.s32 %v2462, %v2464
  %v2466 = vrot.slane %v2450, %v2465
  %v2468 = vunpack.c.l.s4 1966171168
  %v2469 = vunpack.c.0.s8 %v2468
  %v2470 = vlaneseq
  %v2471 = vshrl.u32 %v2470, 7
  %v2472 = vsub.s32 %v2469, %v2471
  %v2473 = vrot.slane %v2457, %v2472
  %v2475 = vunpack.c.l.s4 1966171168
  %v2476 = vunpack.c.0.s8 %v2475
  %v2477 = vlaneseq
  %v2478 = vshrl.u32 %v2477, 7
  %v2479 = vsub.s32 %v2476, %v2478
  %v2480 = vrot.slane %v2458, %v2479
  %v2482 = vunpack.c.l.s4 1966171168
  %v2483 = vunpack.c.0.s8 %v2482
  %v2484 = vlaneseq
  %v2485 = vshrl.u32 %v2484, 7
  %v2486 = vsub.s32 %v2483, %v2485
  %v2487 = vrot.slane %v2459, %v2486
  %v2488 = vcombine.high %v2466, %v2466
  %v2489 = vcombine.high %v2473, %v2473
  %v2490 = vcombine.high %v2480, %v2480
  %v2491 = vcombine.high %v2487, %v2487
  %v2492 = vcombine.high %v2366, %v2366
  %v2494 = vunpack.c.l.s4 1966171168
  %v2495 = vunpack.c.0.s8 %v2494
  %v2496 = vlaneseq
  %v2497 = vshrl.u32 %v2496, 7
  %v2498 = vsub.s32 %v2495, %v2497
  %v2499 = vrot.slane %v2366, %v2498
  %v2501 = vunpack.c.l.s4 1966171168
  %v2502 = vunpack.c.0.s8 %v2501
  %v2503 = vlaneseq
  %v2504 = vshrl.u32 %v2503, 7
  %v2505 = vsub.s32 %v2502, %v2504
  %v2506 = vrot.slane %v2492, %v2505
  %v2507 = vcombine.high %v2499, %v2499
  %v2508 = vcombine.high %v2506, %v2506
  %v2510 = vunpack.c.l.s4 1966171168
  %v2511 = vunpack.c.0.s8 %v2510
  %v2512 = vlaneseq
  %v2513 = vshrl.u32 %v2512, 7
  %v2514 = vsub.s32 %v2511, %v2513
  %v2515 = vrot.slane %v2499, %v2514
  %v2517 = vunpack.c.l.s4 1966171168
  %v2518 = vunpack.c.0.s8 %v2517
  %v2519 = vlaneseq
  %v2520 = vshrl.u32 %v2519, 7
  %v2521 = vsub.s32 %v2518, %v2520
  %v2522 = vrot.slane %v2506, %v2521
  %v2524 = vunpack.c.l.s4 1966171168
  %v2525 = vunpack.c.0.s8 %v2524
  %v2526 = vlaneseq
  %v2527 = vshrl.u32 %v2526, 7
  %v2528 = vsub.s32 %v2525, %v2527
  %v2529 = vrot.slane %v2507, %v2528
  %v2531 = vunpack.c.l.s4 1966171168
  %v2532 = vunpack.c.0.s8 %v2531
  %v2533 = vlaneseq
  %v2534 = vshrl.u32 %v2533, 7
  %v2535 = vsub.s32 %v2532, %v2534
  %v2536 = vrot.slane %v2508, %v2535
  %v2537 = vcombine.high %v2515, %v2515
  %v2538 = vcombine.high %v2522, %v2522
  %v2539 = vcombine.high %v2529, %v2529
  %v2540 = vcombine.high %v2536, %v2536
  %v2541 = vcombine.high %v2367, %v2367
  %v2543 = vunpack.c.l.s4 1966171168
  %v2544 = vunpack.c.0.s8 %v2543
  %v2545 = vlaneseq
  %v2546 = vshrl.u32 %v2545, 7
  %v2547 = vsub.s32 %v2544, %v2546
  %v2548 = vrot.slane %v2367, %v2547
  %v2550 = vunpack.c.l.s4 1966171168
  %v2551 = vunpack.c.0.s8 %v2550
  %v2552 = vlaneseq
  %v2553 = vshrl.u32 %v2552, 7
  %v2554 = vsub.s32 %v2551, %v2553
  %v2555 = vrot.slane %v2541, %v2554
  %v2556 = vcombine.high %v2548, %v2548
  %v2557 = vcombine.high %v2555, %v2555
  %v2559 = vunpack.c.l.s4 1966171168
  %v2560 = vunpack.c.0.s8 %v2559
  %v2561 = vlaneseq
  %v2562 = vshrl.u32 %v2561, 7
  %v2563 = vsub.s32 %v2560, %v2562
  %v2564 = vrot.slane %v2548, %v2563
  %v2566 = vunpack.c.l.s4 1966171168
  %v2567 = vunpack.c.0.s8 %v2566
  %v2568 = vlaneseq
  %v2569 = vshrl.u32 %v2568, 7
  %v2570 = vsub.s32 %v2567, %v2569
  %v2571 = vrot.slane %v2555, %v2570
  %v2573 = vunpack.c.l.s4 1966171168
  %v2574 = vunpack.c.0.s8 %v2573
  %v2575 = vlaneseq
  %v2576 = vshrl.u32 %v2575, 7
  %v2577 = vsub.s32 %v2574, %v2576
  %v2578 = vrot.slane %v2556, %v2577
  %v2580 = vunpack.c.l.s4 1966171168
  %v2581 = vunpack.c.0.s8 %v2580
  %v2582 = vlaneseq
  %v2583 = vshrl.u32 %v2582, 7
  %v2584 = vsub.s32 %v2581, %v2583
  %v2585 = vrot.slane %v2557, %v2584
  %v2586 = vcombine.high %v2564, %v2564
  %v2587 = vcombine.high %v2571, %v2571
  %v2588 = vcombine.high %v2578, %v2578
  %v2589 = vcombine.high %v2585, %v2585
  %v2590 = vcombine.high %v2368, %v2368
  %v2592 = vunpack.c.l.s4 1966171168
  %v2593 = vunpack.c.0.s8 %v2592
  %v2594 = vlaneseq
  %v2595 = vshrl.u32 %v2594, 7
  %v2596 = vsub.s32 %v2593, %v2595
  %v2597 = vrot.slane %v2368, %v2596
  %v2599 = vunpack.c.l.s4 1966171168
  %v2600 = vunpack.c.0.s8 %v2599
  %v2601 = vlaneseq
  %v2602 = vshrl.u32 %v2601, 7
  %v2603 = vsub.s32 %v2600, %v2602
  %v2604 = vrot.slane %v2590, %v2603
  %v2605 = vcombine.high %v2597, %v2597
  %v2606 = vcombine.high %v2604, %v2604
  %v2608 = vunpack.c.l.s4 1966171168
  %v2609 = vunpack.c.0.s8 %v2608
  %v2610 = vlaneseq
  %v2611 = vshrl.u32 %v2610, 7
  %v2612 = vsub.s32 %v2609, %v2611
  %v2613 = vrot.slane %v2597, %v2612
  %v2615 = vunpack.c.l.s4 1966171168
  %v2616 = vunpack.c.0.s8 %v2615
  %v2617 = vlaneseq
  %v2618 = vshrl.u32 %v2617, 7
  %v2619 = vsub.s32 %v2616, %v2618
  %v2620 = vrot.slane %v2604, %v2619
  %v2622 = vunpack.c.l.s4 1966171168
  %v2623 = vunpack.c.0.s8 %v2622
  %v2624 = vlaneseq
  %v2625 = vshrl.u32 %v2624, 7
  %v2626 = vsub.s32 %v2623, %v2625
  %v2627 = vrot.slane %v2605, %v2626
  %v2629 = vunpack.c.l.s4 1966171168
  %v2630 = vunpack.c.0.s8 %v2629
  %v2631 = vlaneseq
  %v2632 = vshrl.u32 %v2631, 7
  %v2633 = vsub.s32 %v2630, %v2632
  %v2634 = vrot.slane %v2606, %v2633
  %v2635 = vcombine.high %v2613, %v2613
  %v2636 = vcombine.high %v2620, %v2620
  %v2637 = vcombine.high %v2627, %v2627
  %v2638 = vcombine.high %v2634, %v2634
  %v2639 = vcombine.high %v2369, %v2369
  %v2641 = vunpack.c.l.s4 1966171168
  %v2642 = vunpack.c.0.s8 %v2641
  %v2643 = vlaneseq
  %v2644 = vshrl.u32 %v2643, 7
  %v2645 = vsub.s32 %v2642, %v2644
  %v2646 = vrot.slane %v2369, %v2645
  %v2648 = vunpack.c.l.s4 1966171168
  %v2649 = vunpack.c.0.s8 %v2648
  %v2650 = vlaneseq
  %v2651 = vshrl.u32 %v2650, 7
  %v2652 = vsub.s32 %v2649, %v2651
  %v2653 = vrot.slane %v2639, %v2652
  %v2654 = vcombine.high %v2646, %v2646
  %v2655 = vcombine.high %v2653, %v2653
  %v2657 = vunpack.c.l.s4 1966171168
  %v2658 = vunpack.c.0.s8 %v2657
  %v2659 = vlaneseq
  %v2660 = vshrl.u32 %v2659, 7
  %v2661 = vsub.s32 %v2658, %v2660
  %v2662 = vrot.slane %v2646, %v2661
  %v2664 = vunpack.c.l.s4 1966171168
  %v2665 = vunpack.c.0.s8 %v2664
  %v2666 = vlaneseq
  %v2667 = vshrl.u32 %v2666, 7
  %v2668 = vsub.s32 %v2665, %v2667
  %v2669 = vrot.slane %v2653, %v2668
  %v2671 = vunpack.c.l.s4 1966171168
  %v2672 = vunpack.c.0.s8 %v2671
  %v2673 = vlaneseq
  %v2674 = vshrl.u32 %v2673, 7
  %v2675 = vsub.s32 %v2672, %v2674
  %v2676 = vrot.slane %v2654, %v2675
  %v2678 = vunpack.c.l.s4 1966171168
  %v2679 = vunpack.c.0.s8 %v2678
  %v2680 = vlaneseq
  %v2681 = vshrl.u32 %v2680, 7
  %v2682 = vsub.s32 %v2679, %v2681
  %v2683 = vrot.slane %v2655, %v2682
  %v2684 = vcombine.high %v2662, %v2662
  %v2685 = vcombine.high %v2669, %v2669
  %v2686 = vcombine.high %v2676, %v2676
  %v2687 = vcombine.high %v2683, %v2683
  %v2688 = vcombine.high %v2370, %v2370
  %v2690 = vunpack.c.l.s4 1966171168
  %v2691 = vunpack.c.0.s8 %v2690
  %v2692 = vlaneseq
  %v2693 = vshrl.u32 %v2692, 7
  %v2694 = vsub.s32 %v2691, %v2693
  %v2695 = vrot.slane %v2370, %v2694
  %v2697 = vunpack.c.l.s4 1966171168
  %v2698 = vunpack.c.0.s8 %v2697
  %v2699 = vlaneseq
  %v2700 = vshrl.u32 %v2699, 7
  %v2701 = vsub.s32 %v2698, %v2700
  %v2702 = vrot.slane %v2688, %v2701
  %v2703 = vcombine.high %v2695, %v2695
  %v2704 = vcombine.high %v2702, %v2702
  %v2706 = vunpack.c.l.s4 1966171168
  %v2707 = vunpack.c.0.s8 %v2706
  %v2708 = vlaneseq
  %v2709 = vshrl.u32 %v2708, 7
  %v2710 = vsub.s32 %v2707, %v2709
  %v2711 = vrot.slane %v2695, %v2710
  %v2713 = vunpack.c.l.s4 1966171168
  %v2714 = vunpack.c.0.s8 %v2713
  %v2715 = vlaneseq
  %v2716 = vshrl.u32 %v2715, 7
  %v2717 = vsub.s32 %v2714, %v2716
  %v2718 = vrot.slane %v2702, %v2717
  %v2720 = vunpack.c.l.s4 1966171168
  %v2721 = vunpack.c.0.s8 %v2720
  %v2722 = vlaneseq
  %v2723 = vshrl.u32 %v2722, 7
  %v2724 = vsub.s32 %v2721, %v2723
  %v2725 = vrot.slane %v2703, %v2724
  %v2727 = vunpack.c.l.s4 1966171168
  %v2728 = vunpack.c.0.s8 %v2727
  %v2729 = vlaneseq
  %v2730 = vshrl.u32 %v2729, 7
  %v2731 = vsub.s32 %v2728, %v2730
  %v2732 = vrot.slane %v2704, %v2731
  %v2733 = vcombine.high %v2711, %v2711
  %v2734 = vcombine.high %v2718, %v2718
  %v2735 = vcombine.high %v2725, %v2725
  %v2736 = vcombine.high %v2732, %v2732
  %v2737 = vcombine.high %v2371, %v2371
  %v2739 = vunpack.c.l.s4 1966171168
  %v2740 = vunpack.c.0.s8 %v2739
  %v2741 = vlaneseq
  %v2742 = vshrl.u32 %v2741, 7
  %v2743 = vsub.s32 %v2740, %v2742
  %v2744 = vrot.slane %v2371, %v2743
  %v2746 = vunpack.c.l.s4 1966171168
  %v2747 = vunpack.c.0.s8 %v2746
  %v2748 = vlaneseq
  %v2749 = vshrl.u32 %v2748, 7
  %v2750 = vsub.s32 %v2747, %v2749
  %v2751 = vrot.slane %v2737, %v2750
  %v2752 = vcombine.high %v2744, %v2744
  %v2753 = vcombine.high %v2751, %v2751
  %v2755 = vunpack.c.l.s4 1966171168
  %v2756 = vunpack.c.0.s8 %v2755
  %v2757 = vlaneseq
  %v2758 = vshrl.u32 %v2757, 7
  %v2759 = vsub.s32 %v2756, %v2758
  %v2760 = vrot.slane %v2744, %v2759
  %v2762 = vunpack.c.l.s4 1966171168
  %v2763 = vunpack.c.0.s8 %v2762
  %v2764 = vlaneseq
  %v2765 = vshrl.u32 %v2764, 7
  %v2766 = vsub.s32 %v2763, %v2765
  %v2767 = vrot.slane %v2751, %v2766
  %v2769 = vunpack.c.l.s4 1966171168
  %v2770 = vunpack.c.0.s8 %v2769
  %v2771 = vlaneseq
  %v2772 = vshrl.u32 %v2771, 7
  %v2773 = vsub.s32 %v2770, %v2772
  %v2774 = vrot.slane %v2752, %v2773
  %v2776 = vunpack.c.l.s4 1966171168
  %v2777 = vunpack.c.0.s8 %v2776
  %v2778 = vlaneseq
  %v2779 = vshrl.u32 %v2778, 7
  %v2780 = vsub.s32 %v2777, %v2779
  %v2781 = vrot.slane %v2753, %v2780
  %v2782 = vcombine.high %v2760, %v2760
  %v2783 = vcombine.high %v2767, %v2767
  %v2784 = vcombine.high %v2774, %v2774
  %v2785 = vcombine.high %v2781, %v2781
  %v2786 = vcombine.high %v2372, %v2372
  %v2788 = vunpack.c.l.s4 1966171168
  %v2789 = vunpack.c.0.s8 %v2788
  %v2790 = vlaneseq
  %v2791 = vshrl.u32 %v2790, 7
  %v2792 = vsub.s32 %v2789, %v2791
  %v2793 = vrot.slane %v2372, %v2792
  %v2795 = vunpack.c.l.s4 1966171168
  %v2796 = vunpack.c.0.s8 %v2795
  %v2797 = vlaneseq
  %v2798 = vshrl.u32 %v2797, 7
  %v2799 = vsub.s32 %v2796, %v2798
  %v2800 = vrot.slane %v2786, %v2799
  %v2801 = vcombine.high %v2793, %v2793
  %v2802 = vcombine.high %v2800, %v2800
  %v2804 = vunpack.c.l.s4 1966171168
  %v2805 = vunpack.c.0.s8 %v2804
  %v2806 = vlaneseq
  %v2807 = vshrl.u32 %v2806, 7
  %v2808 = vsub.s32 %v2805, %v2807
  %v2809 = vrot.slane %v2793, %v2808
  %v2811 = vunpack.c.l.s4 1966171168
  %v2812 = vunpack.c.0.s8 %v2811
  %v2813 = vlaneseq
  %v2814 = vshrl.u32 %v2813, 7
  %v2815 = vsub.s32 %v2812, %v2814
  %v2816 = vrot.slane %v2800, %v2815
  %v2818 = vunpack.c.l.s4 1966171168
  %v2819 = vunpack.c.0.s8 %v2818
  %v2820 = vlaneseq
  %v2821 = vshrl.u32 %v2820, 7
  %v2822 = vsub.s32 %v2819, %v2821
  %v2823 = vrot.slane %v2801, %v2822
  %v2825 = vunpack.c.l.s4 1966171168
  %v2826 = vunpack.c.0.s8 %v2825
  %v2827 = vlaneseq
  %v2828 = vshrl.u32 %v2827, 7
  %v2829 = vsub.s32 %v2826, %v2828
  %v2830 = vrot.slane %v2802, %v2829
  %v2831 = vcombine.high %v2809, %v2809
  %v2832 = vcombine.high %v2816, %v2816
  %v2833 = vcombine.high %v2823, %v2823
  %v2834 = vcombine.high %v2830, %v2830
  %v2835 = vcombine.high %v2373, %v2373
  %v2837 = vunpack.c.l.s4 1966171168
  %v2838 = vunpack.c.0.s8 %v2837
  %v2839 = vlaneseq
  %v2840 = vshrl.u32 %v2839, 7
  %v2841 = vsub.s32 %v2838, %v2840
  %v2842 = vrot.slane %v2373, %v2841
  %v2844 = vunpack.c.l.s4 1966171168
  %v2845 = vunpack.c.0.s8 %v2844
  %v2846 = vlaneseq
  %v2847 = vshrl.u32 %v2846, 7
  %v2848 = vsub.s32 %v2845, %v2847
  %v2849 = vrot.slane %v2835, %v2848
  %v2850 = vcombine.high %v2842, %v2842
  %v2851 = vcombine.high %v2849, %v2849
  %v2853 = vunpack.c.l.s4 1966171168
  %v2854 = vunpack.c.0.s8 %v2853
  %v2855 = vlaneseq
  %v2856 = vshrl.u32 %v2855, 7
  %v2857 = vsub.s32 %v2854, %v2856
  %v2858 = vrot.slane %v2842, %v2857
  %v2860 = vunpack.c.l.s4 1966171168
  %v2861 = vunpack.c.0.s8 %v2860
  %v2862 = vlaneseq
  %v2863 = vshrl.u32 %v2862, 7
  %v2864 = vsub.s32 %v2861, %v2863
  %v2865 = vrot.slane %v2849, %v2864
  %v2867 = vunpack.c.l.s4 1966171168
  %v2868 = vunpack.c.0.s8 %v2867
  %v2869 = vlaneseq
  %v2870 = vshrl.u32 %v2869, 7
  %v2871 = vsub.s32 %v2868, %v2870
  %v2872 = vrot.slane %v2850, %v2871
  %v2874 = vunpack.c.l.s4 1966171168
  %v2875 = vunpack.c.0.s8 %v2874
  %v2876 = vlaneseq
  %v2877 = vshrl.u32 %v2876, 7
  %v2878 = vsub.s32 %v2875, %v2877
  %v2879 = vrot.slane %v2851, %v2878
  %v2880 = vcombine.high %v2858, %v2858
  %v2881 = vcombine.high %v2865, %v2865
  %v2882 = vcombine.high %v2872, %v2872
  %v2883 = vcombine.high %v2879, %v2879
  %v2884 = vcombine.high %v2374, %v2374
  %v2886 = vunpack.c.l.s4 1966171168
  %v2887 = vunpack.c.0.s8 %v2886
  %v2888 = vlaneseq
  %v2889 = vshrl.u32 %v2888, 7
  %v2890 = vsub.s32 %v2887, %v2889
  %v2891 = vrot.slane %v2374, %v2890
  %v2893 = vunpack.c.l.s4 1966171168
  %v2894 = vunpack.c.0.s8 %v2893
  %v2895 = vlaneseq
  %v2896 = vshrl.u32 %v2895, 7
  %v2897 = vsub.s32 %v2894, %v2896
  %v2898 = vrot.slane %v2884, %v2897
  %v2899 = vcombine.high %v2891, %v2891
  %v2900 = vcombine.high %v2898, %v2898
  %v2902 = vunpack.c.l.s4 1966171168
  %v2903 = vunpack.c.0.s8 %v2902
  %v2904 = vlaneseq
  %v2905 = vshrl.u32 %v2904, 7
  %v2906 = vsub.s32 %v2903, %v2905
  %v2907 = vrot.slane %v2891, %v2906
  %v2909 = vunpack.c.l.s4 1966171168
  %v2910 = vunpack.c.0.s8 %v2909
  %v2911 = vlaneseq
  %v2912 = vshrl.u32 %v2911, 7
  %v2913 = vsub.s32 %v2910, %v2912
  %v2914 = vrot.slane %v2898, %v2913
  %v2916 = vunpack.c.l.s4 1966171168
  %v2917 = vunpack.c.0.s8 %v2916
  %v2918 = vlaneseq
  %v2919 = vshrl.u32 %v2918, 7
  %v2920 = vsub.s32 %v2917, %v2919
  %v2921 = vrot.slane %v2899, %v2920
  %v2923 = vunpack.c.l.s4 1966171168
  %v2924 = vunpack.c.0.s8 %v2923
  %v2925 = vlaneseq
  %v2926 = vshrl.u32 %v2925, 7
  %v2927 = vsub.s32 %v2924, %v2926
  %v2928 = vrot.slane %v2900, %v2927
  %v2929 = vcombine.high %v2907, %v2907
  %v2930 = vcombine.high %v2914, %v2914
  %v2931 = vcombine.high %v2921, %v2921
  %v2932 = vcombine.high %v2928, %v2928
  %v2933 = vcombine.high %v2375, %v2375
  %v2935 = vunpack.c.l.s4 1966171168
  %v2936 = vunpack.c.0.s8 %v2935
  %v2937 = vlaneseq
  %v2938 = vshrl.u32 %v2937, 7
  %v2939 = vsub.s32 %v2936, %v2938
  %v2940 = vrot.slane %v2375, %v2939
  %v2942 = vunpack.c.l.s4 1966171168
  %v2943 = vunpack.c.0.s8 %v2942
  %v2944 = vlaneseq
  %v2945 = vshrl.u32 %v2944, 7
  %v2946 = vsub.s32 %v2943, %v2945
  %v2947 = vrot.slane %v2933, %v2946
  %v2948 = vcombine.high %v2940, %v2940
  %v2949 = vcombine.high %v2947, %v2947
  %v2951 = vunpack.c.l.s4 1966171168
  %v2952 = vunpack.c.0.s8 %v2951
  %v2953 = vlaneseq
  %v2954 = vshrl.u32 %v2953, 7
  %v2955 = vsub.s32 %v2952, %v2954
  %v2956 = vrot.slane %v2940, %v2955
  %v2958 = vunpack.c.l.s4 1966171168
  %v2959 = vunpack.c.0.s8 %v2958
  %v2960 = vlaneseq
  %v2961 = vshrl.u32 %v2960, 7
  %v2962 = vsub.s32 %v2959, %v2961
  %v2963 = vrot.slane %v2947, %v2962
  %v2965 = vunpack.c.l.s4 1966171168
  %v2966 = vunpack.c.0.s8 %v2965
  %v2967 = vlaneseq
  %v2968 = vshrl.u32 %v2967, 7
  %v2969 = vsub.s32 %v2966, %v2968
  %v2970 = vrot.slane %v2948, %v2969
  %v2972 = vunpack.c.l.s4 1966171168
  %v2973 = vunpack.c.0.s8 %v2972
  %v2974 = vlaneseq
  %v2975 = vshrl.u32 %v2974, 7
  %v2976 = vsub.s32 %v2973, %v2975
  %v2977 = vrot.slane %v2949, %v2976
  %v2978 = vcombine.high %v2956, %v2956
  %v2979 = vcombine.high %v2963, %v2963
  %v2980 = vcombine.high %v2970, %v2970
  %v2981 = vcombine.high %v2977, %v2977
  %v2982 = vcombine.high %v2376, %v2376
  %v2984 = vunpack.c.l.s4 1966171168
  %v2985 = vunpack.c.0.s8 %v2984
  %v2986 = vlaneseq
  %v2987 = vshrl.u32 %v2986, 7
  %v2988 = vsub.s32 %v2985, %v2987
  %v2989 = vrot.slane %v2376, %v2988
  %v2991 = vunpack.c.l.s4 1966171168
  %v2992 = vunpack.c.0.s8 %v2991
  %v2993 = vlaneseq
  %v2994 = vshrl.u32 %v2993, 7
  %v2995 = vsub.s32 %v2992, %v2994
  %v2996 = vrot.slane %v2982, %v2995
  %v2997 = vcombine.high %v2989, %v2989
  %v2998 = vcombine.high %v2996, %v2996
  %v3000 = vunpack.c.l.s4 1966171168
  %v3001 = vunpack.c.0.s8 %v3000
  %v3002 = vlaneseq
  %v3003 = vshrl.u32 %v3002, 7
  %v3004 = vsub.s32 %v3001, %v3003
  %v3005 = vrot.slane %v2989, %v3004
  %v3007 = vunpack.c.l.s4 1966171168
  %v3008 = vunpack.c.0.s8 %v3007
  %v3009 = vlaneseq
  %v3010 = vshrl.u32 %v3009, 7
  %v3011 = vsub.s32 %v3008, %v3010
  %v3012 = vrot.slane %v2996, %v3011
  %v3014 = vunpack.c.l.s4 1966171168
  %v3015 = vunpack.c.0.s8 %v3014
  %v3016 = vlaneseq
  %v3017 = vshrl.u32 %v3016, 7
  %v3018 = vsub.s32 %v3015, %v3017
  %v3019 = vrot.slane %v2997, %v3018
  %v3021 = vunpack.c.l.s4 1966171168
  %v3022 = vunpack.c.0.s8 %v3021
  %v3023 = vlaneseq
  %v3024 = vshrl.u32 %v3023, 7
  %v3025 = vsub.s32 %v3022, %v3024
  %v3026 = vrot.slane %v2998, %v3025
  %v3027 = vcombine.high %v3005, %v3005
  %v3028 = vcombine.high %v3012, %v3012
  %v3029 = vcombine.high %v3019, %v3019
  %v3030 = vcombine.high %v3026, %v3026
  %v3031 = vcombine.high %v2377, %v2377
  %v3033 = vunpack.c.l.s4 1966171168
  %v3034 = vunpack.c.0.s8 %v3033
  %v3035 = vlaneseq
  %v3036 = vshrl.u32 %v3035, 7
  %v3037 = vsub.s32 %v3034, %v3036
  %v3038 = vrot.slane %v2377, %v3037
  %v3040 = vunpack.c.l.s4 1966171168
  %v3041 = vunpack.c.0.s8 %v3040
  %v3042 = vlaneseq
  %v3043 = vshrl.u32 %v3042, 7
  %v3044 = vsub.s32 %v3041, %v3043
  %v3045 = vrot.slane %v3031, %v3044
  %v3046 = vcombine.high %v3038, %v3038
  %v3047 = vcombine.high %v3045, %v3045
  %v3049 = vunpack.c.l.s4 1966171168
  %v3050 = vunpack.c.0.s8 %v3049
  %v3051 = vlaneseq
  %v3052 = vshrl.u32 %v3051, 7
  %v3053 = vsub.s32 %v3050, %v3052
  %v3054 = vrot.slane %v3038, %v3053
  %v3056 = vunpack.c.l.s4 1966171168
  %v3057 = vunpack.c.0.s8 %v3056
  %v3058 = vlaneseq
  %v3059 = vshrl.u32 %v3058, 7
  %v3060 = vsub.s32 %v3057, %v3059
  %v3061 = vrot.slane %v3045, %v3060
  %v3063 = vunpack.c.l.s4 1966171168
  %v3064 = vunpack.c.0.s8 %v3063
  %v3065 = vlaneseq
  %v3066 = vshrl.u32 %v3065, 7
  %v3067 = vsub.s32 %v3064, %v3066
  %v3068 = vrot.slane %v3046, %v3067
  %v3070 = vunpack.c.l.s4 1966171168
  %v3071 = vunpack.c.0.s8 %v3070
  %v3072 = vlaneseq
  %v3073 = vshrl.u32 %v3072, 7
  %v3074 = vsub.s32 %v3071, %v3073
  %v3075 = vrot.slane %v3047, %v3074
  %v3076 = vcombine.high %v3054, %v3054
  %v3077 = vcombine.high %v3061, %v3061
  %v3078 = vcombine.high %v3068, %v3068
  %v3079 = vcombine.high %v3075, %v3075
  %v3080 = vcombine.high %v2378, %v2378
  %v3082 = vunpack.c.l.s4 1966171168
  %v3083 = vunpack.c.0.s8 %v3082
  %v3084 = vlaneseq
  %v3085 = vshrl.u32 %v3084, 7
  %v3086 = vsub.s32 %v3083, %v3085
  %v3087 = vrot.slane %v2378, %v3086
  %v3089 = vunpack.c.l.s4 1966171168
  %v3090 = vunpack.c.0.s8 %v3089
  %v3091 = vlaneseq
  %v3092 = vshrl.u32 %v3091, 7
  %v3093 = vsub.s32 %v3090, %v3092
  %v3094 = vrot.slane %v3080, %v3093
  %v3095 = vcombine.high %v3087, %v3087
  %v3096 = vcombine.high %v3094, %v3094
  %v3098 = vunpack.c.l.s4 1966171168
  %v3099 = vunpack.c.0.s8 %v3098
  %v3100 = vlaneseq
  %v3101 = vshrl.u32 %v3100, 7
  %v3102 = vsub.s32 %v3099, %v3101
  %v3103 = vrot.slane %v3087, %v3102
  %v3105 = vunpack.c.l.s4 1966171168
  %v3106 = vunpack.c.0.s8 %v3105
  %v3107 = vlaneseq
  %v3108 = vshrl.u32 %v3107, 7
  %v3109 = vsub.s32 %v3106, %v3108
  %v3110 = vrot.slane %v3094, %v3109
  %v3112 = vunpack.c.l.s4 1966171168
  %v3113 = vunpack.c.0.s8 %v3112
  %v3114 = vlaneseq
  %v3115 = vshrl.u32 %v3114, 7
  %v3116 = vsub.s32 %v3113, %v3115
  %v3117 = vrot.slane %v3095, %v3116
  %v3119 = vunpack.c.l.s4 1966171168
  %v3120 = vunpack.c.0.s8 %v3119
  %v3121 = vlaneseq
  %v3122 = vshrl.u32 %v3121, 7
  %v3123 = vsub.s32 %v3120, %v3122
  %v3124 = vrot.slane %v3096, %v3123
  %v3125 = vcombine.high %v3103, %v3103
  %v3126 = vcombine.high %v3110, %v3110
  %v3127 = vcombine.high %v3117, %v3117
  %v3128 = vcombine.high %v3124, %v3124
  %v3129 = vcombine.low %v2417, %v2431
  %v3130 = vcombine.low %v2439, %v2441
  %v3131 = vcombine.low %v2424, %v2438
  %v3132 = vcombine.low %v2440, %v2442
  %v3134 = vunpack.c.l.s4 1966171168
  %v3135 = vunpack.c.0.s8 %v3134
  %v3136 = vlaneseq
  %v3137 = vshrl.u32 %v3136, 7
  %v3138 = vsub.s32 %v3135, %v3137
  %v3139 = vrot.slane %v3129, %v3138
  %v3141 = vunpack.c.l.s4 1966171168
  %v3142 = vunpack.c.0.s8 %v3141
  %v3143 = vlaneseq
  %v3144 = vshrl.u32 %v3143, 7
  %v3145 = vsub.s32 %v3142, %v3144
  %v3146 = vrot.slane %v3130, %v3145
  %v3148 = vunpack.c.l.s4 1966171168
  %v3149 = vunpack.c.0.s8 %v3148
  %v3150 = vlaneseq
  %v3151 = vshrl.u32 %v3150, 7
  %v3152 = vsub.s32 %v3149, %v3151
  %v3153 = vrot.slane %v3131, %v3152
  %v3155 = vunpack.c.l.s4 1966171168
  %v3156 = vunpack.c.0.s8 %v3155
  %v3157 = vlaneseq
  %v3158 = vshrl.u32 %v3157, 7
  %v3159 = vsub.s32 %v3156, %v3158
  %v3160 = vrot.slane %v3132, %v3159
  %v3161 = vcombine.low %v3139, %v3146
  %v3162 = vcombine.low %v3153, %v3160
  %v3164 = vunpack.c.l.s4 1966171168
  %v3165 = vunpack.c.0.s8 %v3164
  %v3166 = vlaneseq
  %v3167 = vshrl.u32 %v3166, 7
  %v3168 = vsub.s32 %v3165, %v3167
  %v3169 = vrot.slane %v3161, %v3168
  %v3171 = vunpack.c.l.s4 1966171168
  %v3172 = vunpack.c.0.s8 %v3171
  %v3173 = vlaneseq
  %v3174 = vshrl.u32 %v3173, 7
  %v3175 = vsub.s32 %v3172, %v3174
  %v3176 = vrot.slane %v3162, %v3175
  %v3177 = vcombine.low %v3169, %v3176
  %v3178 = vcombine.low %v2466, %v2480
  %v3179 = vcombine.low %v2488, %v2490
  %v3180 = vcombine.low %v2473, %v2487
  %v3182 = vunpack.c.l.s4 1966171168
  %v3183 = vunpack.c.0.s8 %v3182
  %v3184 = vlaneseq
  %v3185 = vshrl.u32 %v3184, 7
  %v3186 = vsub.s32 %v3183, %v3185
  %v3187 = vrot.slane %v3178, %v3186
  %v3189 = vunpack.c.l.s4 1966171168
  %v3190 = vunpack.c.0.s8 %v3189
  %v3191 = vlaneseq
  %v3192 = vshrl.u32 %v3191, 7
  %v3193 = vsub.s32 %v3190, %v3192
  %v3194 = vrot.slane %v3179, %v3193
  %v3196 = vunpack.c.l.s4 1966171168
  %v3197 = vunpack.c.0.s8 %v3196
  %v3198 = vlaneseq
  %v3199 = vshrl.u32 %v3198, 7
  %v3200 = vsub.s32 %v3197, %v3199
  %v3201 = vrot.slane %v3180, %v3200
  %v3202 = vcombine.low %v3187, %v3194
  %v3204 = vunpack.c.l.s4 1966171168
  %v3205 = vunpack.c.0.s8 %v3204
  %v3206 = vlaneseq
  %v3207 = vshrl.u32 %v3206, 7
  %v3208 = vsub.s32 %v3205, %v3207
  %v3209 = vrot.slane %v3202, %v3208
  %v3211 = vunpack.c.l.s4 1966171168
  %v3212 = vunpack.c.0.s8 %v3211
  %v3213 = vlaneseq
  %v3214 = vshrl.u32 %v3213, 7
  %v3215 = vsub.s32 %v3212, %v3214
  %v3216 = vrot.slane %v3201, %v3215
  %v3217 = vcombine.low %v3209, %v3216
  %v3218 = vcombine.low %v2491, %v2515
  %v3219 = vcombine.low %v2529, %v2537
  %v3220 = vcombine.low %v2539, %v2522
  %v3221 = vcombine.low %v2536, %v2538
  %v3223 = vunpack.c.l.s4 1966171168
  %v3224 = vunpack.c.0.s8 %v3223
  %v3225 = vlaneseq
  %v3226 = vshrl.u32 %v3225, 7
  %v3227 = vsub.s32 %v3224, %v3226
  %v3228 = vrot.slane %v3218, %v3227
  %v3230 = vunpack.c.l.s4 1966171168
  %v3231 = vunpack.c.0.s8 %v3230
  %v3232 = vlaneseq
  %v3233 = vshrl.u32 %v3232, 7
  %v3234 = vsub.s32 %v3231, %v3233
  %v3235 = vrot.slane %v3219, %v3234
  %v3237 = vunpack.c.l.s4 1966171168
  %v3238 = vunpack.c.0.s8 %v3237
  %v3239 = vlaneseq
  %v3240 = vshrl.u32 %v3239, 7
  %v3241 = vsub.s32 %v3238, %v3240
  %v3242 = vrot.slane %v3220, %v3241
  %v3244 = vunpack.c.l.s4 1966171168
  %v3245 = vunpack.c.0.s8 %v3244
  %v3246 = vlaneseq
  %v3247 = vshrl.u32 %v3246, 7
  %v3248 = vsub.s32 %v3245, %v3247
  %v3249 = vrot.slane %v3221, %v3248
  %v3250 = vcombine.low %v3228, %v3235
  %v3251 = vcombine.low %v3242, %v3249
  %v3253 = vunpack.c.l.s4 1966171168
  %v3254 = vunpack.c.0.s8 %v3253
  %v3255 = vlaneseq
  %v3256 = vshrl.u32 %v3255, 7
  %v3257 = vsub.s32 %v3254, %v3256
  %v3258 = vrot.slane %v3250, %v3257
  %v3260 = vunpack.c.l.s4 1966171168
  %v3261 = vunpack.c.0.s8 %v3260
  %v3262 = vlaneseq
  %v3263 = vshrl.u32 %v3262, 7
  %v3264 = vsub.s32 %v3261, %v3263
  %v3265 = vrot.slane %v3251, %v3264
  %v3266 = vcombine.low %v3258, %v3265
  %v3267 = vcombine.low %v2540, %v2564
  %v3268 = vcombine.low %v2578, %v2586
  %v3269 = vcombine.low %v2588, %v2571
  %v3271 = vunpack.c.l.s4 1966171168
  %v3272 = vunpack.c.0.s8 %v3271
  %v3273 = vlaneseq
  %v3274 = vshrl.u32 %v3273, 7
  %v3275 = vsub.s32 %v3272, %v3274
  %v3276 = vrot.slane %v3267, %v3275
  %v3278 = vunpack.c.l.s4 1966171168
  %v3279 = vunpack.c.0.s8 %v3278
  %v3280 = vlaneseq
  %v3281 = vshrl.u32 %v3280, 7
  %v3282 = vsub.s32 %v3279, %v3281
  %v3283 = vrot.slane %v3268, %v3282
  %v3285 = vunpack.c.l.s4 1966171168
  %v3286 = vunpack.c.0.s8 %v3285
  %v3287 = vlaneseq
  %v3288 = vshrl.u32 %v3287, 7
  %v3289 = vsub.s32 %v3286, %v3288
  %v3290 = vrot.slane %v3269, %v3289
  %v3291 = vcombine.low %v3276, %v3283
  %v3293 = vunpack.c.l.s4 1966171168
  %v3294 = vunpack.c.0.s8 %v3293
  %v3295 = vlaneseq
  %v3296 = vshrl.u32 %v3295, 7
  %v3297 = vsub.s32 %v3294, %v3296
  %v3298 = vrot.slane %v3291, %v3297
  %v3300 = vunpack.c.l.s4 1966171168
  %v3301 = vunpack.c.0.s8 %v3300
  %v3302 = vlaneseq
  %v3303 = vshrl.u32 %v3302, 7
  %v3304 = vsub.s32 %v3301, %v3303
  %v3305 = vrot.slane %v3290, %v3304
  %v3306 = vcombine.low %v3298, %v3305
  %v3307 = vcombine.low %v2587, %v2589
  %v3308 = vcombine.low %v2613, %v2627
  %v3309 = vcombine.low %v2635, %v2637
  %v3310 = vcombine.low %v2620, %v2634
  %v3312 = vunpack.c.l.s4 1966171168
  %v3313 = vunpack.c.0.s8 %v3312
  %v3314 = vlaneseq
  %v3315 = vshrl.u32 %v3314, 7
  %v3316 = vsub.s32 %v3313, %v3315
  %v3317 = vrot.slane %v3307, %v3316
  %v3319 = vunpack.c.l.s4 1966171168
  %v3320 = vunpack.c.0.s8 %v3319
  %v3321 = vlaneseq
  %v3322 = vshrl.u32 %v3321, 7
  %v3323 = vsub.s32 %v3320, %v3322
  %v3324 = vrot.slane %v3308, %v3323
  %v3326 = vunpack.c.l.s4 1966171168
  %v3327 = vunpack.c.0.s8 %v3326
  %v3328 = vlaneseq
  %v3329 = vshrl.u32 %v3328, 7
  %v3330 = vsub.s32 %v3327, %v3329
  %v3331 = vrot.slane %v3309, %v3330
  %v3333 = vunpack.c.l.s4 1966171168
  %v3334 = vunpack.c.0.s8 %v3333
  %v3335 = vlaneseq
  %v3336 = vshrl.u32 %v3335, 7
  %v3337 = vsub.s32 %v3334, %v3336
  %v3338 = vrot.slane %v3310, %v3337
  %v3339 = vcombine.low %v3317, %v3324
  %v3340 = vcombine.low %v3331, %v3338
  %v3342 = vunpack.c.l.s4 1966171168
  %v3343 = vunpack.c.0.s8 %v3342
  %v3344 = vlaneseq
  %v3345 = vshrl.u32 %v3344, 7
  %v3346 = vsub.s32 %v3343, %v3345
  %v3347 = vrot.slane %v3339, %v3346
  %v3349 = vunpack.c.l.s4 1966171168
  %v3350 = vunpack.c.0.s8 %v3349
  %v3351 = vlaneseq
  %v3352 = vshrl.u32 %v3351, 7
  %v3353 = vsub.s32 %v3350, %v3352
  %v3354 = vrot.slane %v3340, %v3353
  %v3355 = vcombine.low %v3347, %v3354
  %v3356 = vcombine.low %v2636, %v2638
  %v3357 = vcombine.low %v2662, %v2676
  %v3358 = vcombine.low %v2684, %v2686
  %v3360 = vunpack.c.l.s4 1966171168
  %v3361 = vunpack.c.0.s8 %v3360
  %v3362 = vlaneseq
  %v3363 = vshrl.u32 %v3362, 7
  %v3364 = vsub.s32 %v3361, %v3363
  %v3365 = vrot.slane %v3356, %v3364
  %v3367 = vunpack.c.l.s4 1966171168
  %v3368 = vunpack.c.0.s8 %v3367
  %v3369 = vlaneseq
  %v3370 = vshrl.u32 %v3369, 7
  %v3371 = vsub.s32 %v3368, %v3370
  %v3372 = vrot.slane %v3357, %v3371
  %v3374 = vunpack.c.l.s4 1966171168
  %v3375 = vunpack.c.0.s8 %v3374
  %v3376 = vlaneseq
  %v3377 = vshrl.u32 %v3376, 7
  %v3378 = vsub.s32 %v3375, %v3377
  %v3379 = vrot.slane %v3358, %v3378
  %v3380 = vcombine.low %v3365, %v3372
  %v3382 = vunpack.c.l.s4 1966171168
  %v3383 = vunpack.c.0.s8 %v3382
  %v3384 = vlaneseq
  %v3385 = vshrl.u32 %v3384, 7
  %v3386 = vsub.s32 %v3383, %v3385
  %v3387 = vrot.slane %v3380, %v3386
  %v3389 = vunpack.c.l.s4 1966171168
  %v3390 = vunpack.c.0.s8 %v3389
  %v3391 = vlaneseq
  %v3392 = vshrl.u32 %v3391, 7
  %v3393 = vsub.s32 %v3390, %v3392
  %v3394 = vrot.slane %v3379, %v3393
  %v3395 = vcombine.low %v3387, %v3394
  %v3396 = vcombine.low %v2683, %v2685
  %v3397 = vcombine.low %v2687, %v2711
  %v3398 = vcombine.low %v2725, %v2733
  %v3399 = vcombine.low %v2735, %v2718
  %v3401 = vunpack.c.l.s4 1966171168
  %v3402 = vunpack.c.0.s8 %v3401
  %v3403 = vlaneseq
  %v3404 = vshrl.u32 %v3403, 7
  %v3405 = vsub.s32 %v3402, %v3404
  %v3406 = vrot.slane %v3396, %v3405
  %v3408 = vunpack.c.l.s4 1966171168
  %v3409 = vunpack.c.0.s8 %v3408
  %v3410 = vlaneseq
  %v3411 = vshrl.u32 %v3410, 7
  %v3412 = vsub.s32 %v3409, %v3411
  %v3413 = vrot.slane %v3397, %v3412
  %v3415 = vunpack.c.l.s4 1966171168
  %v3416 = vunpack.c.0.s8 %v3415
  %v3417 = vlaneseq
  %v3418 = vshrl.u32 %v3417, 7
  %v3419 = vsub.s32 %v3416, %v3418
  %v3420 = vrot.slane %v3398, %v3419
  %v3422 = vunpack.c.l.s4 1966171168
  %v3423 = vunpack.c.0.s8 %v3422
  %v3424 = vlaneseq
  %v3425 = vshrl.u32 %v3424, 7
  %v3426 = vsub.s32 %v3423, %v3425
  %v3427 = vrot.slane %v3399, %v3426
  %v3428 = vcombine.low %v3406, %v3413
  %v3429 = vcombine.low %v3420, %v3427
  %v3431 = vunpack.c.l.s4 1966171168
  %v3432 = vunpack.c.0.s8 %v3431
  %v3433 = vlaneseq
  %v3434 = vshrl.u32 %v3433, 7
  %v3435 = vsub.s32 %v3432, %v3434
  %v3436 = vrot.slane %v3428, %v3435
  %v3438 = vunpack.c.l.s4 1966171168
  %v3439 = vunpack.c.0.s8 %v3438
  %v3440 = vlaneseq
  %v3441 = vshrl.u32 %v3440, 7
  %v3442 = vsub.s32 %v3439, %v3441
  %v3443 = vrot.slane %v3429, %v3442
  %v3444 = vcombine.low %v3436, %v3443
  %v3445 = vcombine.low %v2732, %v2734
  %v3446 = vcombine.low %v2736, %v2760
  %v3447 = vcombine.low %v2774, %v2782
  %v3449 = vunpack.c.l.s4 1966171168
  %v3450 = vunpack.c.0.s8 %v3449
  %v3451 = vlaneseq
  %v3452 = vshrl.u32 %v3451, 7
  %v3453 = vsub.s32 %v3450, %v3452
  %v3454 = vrot.slane %v3445, %v3453
  %v3456 = vunpack.c.l.s4 1966171168
  %v3457 = vunpack.c.0.s8 %v3456
  %v3458 = vlaneseq
  %v3459 = vshrl.u32 %v3458, 7
  %v3460 = vsub.s32 %v3457, %v3459
  %v3461 = vrot.slane %v3446, %v3460
  %v3463 = vunpack.c.l.s4 1966171168
  %v3464 = vunpack.c.0.s8 %v3463
  %v3465 = vlaneseq
  %v3466 = vshrl.u32 %v3465, 7
  %v3467 = vsub.s32 %v3464, %v3466
  %v3468 = vrot.slane %v3447, %v3467
  %v3469 = vcombine.low %v3454, %v3461
  %v3471 = vunpack.c.l.s4 1966171168
  %v3472 = vunpack.c.0.s8 %v3471
  %v3473 = vlaneseq
  %v3474 = vshrl.u32 %v3473, 7
  %v3475 = vsub.s32 %v3472, %v3474
  %v3476 = vrot.slane %v3469, %v3475
  %v3478 = vunpack.c.l.s4 1966171168
  %v3479 = vunpack.c.0.s8 %v3478
  %v3480 = vlaneseq
  %v3481 = vshrl.u32 %v3480, 7
  %v3482 = vsub.s32 %v3479, %v3481
  %v3483 = vrot.slane %v3468, %v3482
  %v3484 = vcombine.low %v3476, %v3483
  %v3485 = vcombine.low %v2767, %v2781
  %v3486 = vcombine.low %v2783, %v2785
  %v3487 = vcombine.low %v2809, %v2823
  %v3488 = vcombine.low %v2831, %v2833
  %v3490 = vunpack.c.l.s4 1966171168
  %v3491 = vunpack.c.0.s8 %v3490
  %v3492 = vlaneseq
  %v3493 = vshrl.u32 %v3492, 7
  %v3494 = vsub.s32 %v3491, %v3493
  %v3495 = vrot.slane %v3485, %v3494
  %v3497 = vunpack.c.l.s4 1966171168
  %v3498 = vunpack.c.0.s8 %v3497
  %v3499 = vlaneseq
  %v3500 = vshrl.u32 %v3499, 7
  %v3501 = vsub.s32 %v3498, %v3500
  %v3502 = vrot.slane %v3486, %v3501
  %v3504 = vunpack.c.l.s4 1966171168
  %v3505 = vunpack.c.0.s8 %v3504
  %v3506 = vlaneseq
  %v3507 = vshrl.u32 %v3506, 7
  %v3508 = vsub.s32 %v3505, %v3507
  %v3509 = vrot.slane %v3487, %v3508
  %v3511 = vunpack.c.l.s4 1966171168
  %v3512 = vunpack.c.0.s8 %v3511
  %v3513 = vlaneseq
  %v3514 = vshrl.u32 %v3513, 7
  %v3515 = vsub.s32 %v3512, %v3514
  %v3516 = vrot.slane %v3488, %v3515
  %v3517 = vcombine.low %v3495, %v3502
  %v3518 = vcombine.low %v3509, %v3516
  %v3520 = vunpack.c.l.s4 1966171168
  %v3521 = vunpack.c.0.s8 %v3520
  %v3522 = vlaneseq
  %v3523 = vshrl.u32 %v3522, 7
  %v3524 = vsub.s32 %v3521, %v3523
  %v3525 = vrot.slane %v3517, %v3524
  %v3527 = vunpack.c.l.s4 1966171168
  %v3528 = vunpack.c.0.s8 %v3527
  %v3529 = vlaneseq
  %v3530 = vshrl.u32 %v3529, 7
  %v3531 = vsub.s32 %v3528, %v3530
  %v3532 = vrot.slane %v3518, %v3531
  %v3533 = vcombine.low %v3525, %v3532
  %v3534 = vcombine.low %v2816, %v2830
  %v3535 = vcombine.low %v2832, %v2834
  %v3536 = vcombine.low %v2858, %v2872
  %v3538 = vunpack.c.l.s4 1966171168
  %v3539 = vunpack.c.0.s8 %v3538
  %v3540 = vlaneseq
  %v3541 = vshrl.u32 %v3540, 7
  %v3542 = vsub.s32 %v3539, %v3541
  %v3543 = vrot.slane %v3534, %v3542
  %v3545 = vunpack.c.l.s4 1966171168
  %v3546 = vunpack.c.0.s8 %v3545
  %v3547 = vlaneseq
  %v3548 = vshrl.u32 %v3547, 7
  %v3549 = vsub.s32 %v3546, %v3548
  %v3550 = vrot.slane %v3535, %v3549
  %v3552 = vunpack.c.l.s4 1966171168
  %v3553 = vunpack.c.0.s8 %v3552
  %v3554 = vlaneseq
  %v3555 = vshrl.u32 %v3554, 7
  %v3556 = vsub.s32 %v3553, %v3555
  %v3557 = vrot.slane %v3536, %v3556
  %v3558 = vcombine.low %v3543, %v3550
  %v3560 = vunpack.c.l.s4 1966171168
  %v3561 = vunpack.c.0.s8 %v3560
  %v3562 = vlaneseq
  %v3563 = vshrl.u32 %v3562, 7
  %v3564 = vsub.s32 %v3561, %v3563
  %v3565 = vrot.slane %v3558, %v3564
  %v3567 = vunpack.c.l.s4 1966171168
  %v3568 = vunpack.c.0.s8 %v3567
  %v3569 = vlaneseq
  %v3570 = vshrl.u32 %v3569, 7
  %v3571 = vsub.s32 %v3568, %v3570
  %v3572 = vrot.slane %v3557, %v3571
  %v3573 = vcombine.low %v3565, %v3572
  %v3574 = vcombine.low %v2882, %v2865
  %v3575 = vcombine.low %v2879, %v2881
  %v3576 = vcombine.low %v2883, %v2907
  %v3577 = vcombine.low %v2921, %v2929
  %v3579 = vunpack.c.l.s4 1966171168
  %v3580 = vunpack.c.0.s8 %v3579
  %v3581 = vlaneseq
  %v3582 = vshrl.u32 %v3581, 7
  %v3583 = vsub.s32 %v3580, %v3582
  %v3584 = vrot.slane %v3574, %v3583
  %v3586 = vunpack.c.l.s4 1966171168
  %v3587 = vunpack.c.0.s8 %v3586
  %v3588 = vlaneseq
  %v3589 = vshrl.u32 %v3588, 7
  %v3590 = vsub.s32 %v3587, %v3589
  %v3591 = vrot.slane %v3575, %v3590
  %v3593 = vunpack.c.l.s4 1966171168
  %v3594 = vunpack.c.0.s8 %v3593
  %v3595 = vlaneseq
  %v3596 = vshrl.u32 %v3595, 7
  %v3597 = vsub.s32 %v3594, %v3596
  %v3598 = vrot.slane %v3576, %v3597
  %v3600 = vunpack.c.l.s4 1966171168
  %v3601 = vunpack.c.0.s8 %v3600
  %v3602 = vlaneseq
  %v3603 = vshrl.u32 %v3602, 7
  %v3604 = vsub.s32 %v3601, %v3603
  %v3605 = vrot.slane %v3577, %v3604
  %v3606 = vcombine.low %v3584, %v3591
  %v3607 = vcombine.low %v3598, %v3605
  %v3609 = vunpack.c.l.s4 1966171168
  %v3610 = vunpack.c.0.s8 %v3609
  %v3611 = vlaneseq
  %v3612 = vshrl.u32 %v3611, 7
  %v3613 = vsub.s32 %v3610, %v3612
  %v3614 = vrot.slane %v3606, %v3613
  %v3616 = vunpack.c.l.s4 1966171168
  %v3617 = vunpack.c.0.s8 %v3616
  %v3618 = vlaneseq
  %v3619 = vshrl.u32 %v3618, 7
  %v3620 = vsub.s32 %v3617, %v3619
  %v3621 = vrot.slane %v3607, %v3620
  %v3622 = vcombine.low %v3614, %v3621
  %v3623 = vcombine.low %v2931, %v2914
  %v3624 = vcombine.low %v2928, %v2930
  %v3625 = vcombine.low %v2932, %v2956
  %v3627 = vunpack.c.l.s4 1966171168
  %v3628 = vunpack.c.0.s8 %v3627
  %v3629 = vlaneseq
  %v3630 = vshrl.u32 %v3629, 7
  %v3631 = vsub.s32 %v3628, %v3630
  %v3632 = vrot.slane %v3623, %v3631
  %v3634 = vunpack.c.l.s4 1966171168
  %v3635 = vunpack.c.0.s8 %v3634
  %v3636 = vlaneseq
  %v3637 = vshrl.u32 %v3636, 7
  %v3638 = vsub.s32 %v3635, %v3637
  %v3639 = vrot.slane %v3624, %v3638
  %v3641 = vunpack.c.l.s4 1966171168
  %v3642 = vunpack.c.0.s8 %v3641
  %v3643 = vlaneseq
  %v3644 = vshrl.u32 %v3643, 7
  %v3645 = vsub.s32 %v3642, %v3644
  %v3646 = vrot.slane %v3625, %v3645
  %v3647 = vcombine.low %v3632, %v3639
  %v3649 = vunpack.c.l.s4 1966171168
  %v3650 = vunpack.c.0.s8 %v3649
  %v3651 = vlaneseq
  %v3652 = vshrl.u32 %v3651, 7
  %v3653 = vsub.s32 %v3650, %v3652
  %v3654 = vrot.slane %v3647, %v3653
  %v3656 = vunpack.c.l.s4 1966171168
  %v3657 = vunpack.c.0.s8 %v3656
  %v3658 = vlaneseq
  %v3659 = vshrl.u32 %v3658, 7
  %v3660 = vsub.s32 %v3657, %v3659
  %v3661 = vrot.slane %v3646, %v3660
  %v3662 = vcombine.low %v3654, %v3661
  %v3663 = vcombine.low %v2978, %v2980
  %v3664 = vcombine.low %v2963, %v2977
  %v3665 = vcombine.low %v2979, %v2981
  %v3666 = vcombine.low %v3005, %v3019
  %v3668 = vunpack.c.l.s4 1966171168
  %v3669 = vunpack.c.0.s8 %v3668
  %v3670 = vlaneseq
  %v3671 = vshrl.u32 %v3670, 7
  %v3672 = vsub.s32 %v3669, %v3671
  %v3673 = vrot.slane %v3663, %v3672
  %v3675 = vunpack.c.l.s4 1966171168
  %v3676 = vunpack.c.0.s8 %v3675
  %v3677 = vlaneseq
  %v3678 = vshrl.u32 %v3677, 7
  %v3679 = vsub.s32 %v3676, %v3678
  %v3680 = vrot.slane %v3664, %v3679
  %v3682 = vunpack.c.l.s4 1966171168
  %v3683 = vunpack.c.0.s8 %v3682
  %v3684 = vlaneseq
  %v3685 = vshrl.u32 %v3684, 7
  %v3686 = vsub.s32 %v3683, %v3685
  %v3687 = vrot.slane %v3665, %v3686
  %v3689 = vunpack.c.l.s4 1966171168
  %v3690 = vunpack.c.0.s8 %v3689
  %v3691 = vlaneseq
  %v3692 = vshrl.u32 %v3691, 7
  %v3693 = vsub.s32 %v3690, %v3692
  %v3694 = vrot.slane %v3666, %v3693
  %v3695 = vcombine.low %v3673, %v3680
  %v3696 = vcombine.low %v3687, %v3694
  %v3698 = vunpack.c.l.s4 1966171168
  %v3699 = vunpack.c.0.s8 %v3698
  %v3700 = vlaneseq
  %v3701 = vshrl.u32 %v3700, 7
  %v3702 = vsub.s32 %v3699, %v3701
  %v3703 = vrot.slane %v3695, %v3702
  %v3705 = vunpack.c.l.s4 1966171168
  %v3706 = vunpack.c.0.s8 %v3705
  %v3707 = vlaneseq
  %v3708 = vshrl.u32 %v3707, 7
  %v3709 = vsub.s32 %v3706, %v3708
  %v3710 = vrot.slane %v3696, %v3709
  %v3711 = vcombine.low %v3703, %v3710
  %v3712 = vcombine.low %v3027, %v3029
  %v3713 = vcombine.low %v3012, %v3026
  %v3714 = vcombine.low %v3028, %v3030
  %v3716 = vunpack.c.l.s4 1966171168
  %v3717 = vunpack.c.0.s8 %v3716
  %v3718 = vlaneseq
  %v3719 = vshrl.u32 %v3718, 7
  %v3720 = vsub.s32 %v3717, %v3719
  %v3721 = vrot.slane %v3712, %v3720
  %v3723 = vunpack.c.l.s4 1966171168
  %v3724 = vunpack.c.0.s8 %v3723
  %v3725 = vlaneseq
  %v3726 = vshrl.u32 %v3725, 7
  %v3727 = vsub.s32 %v3724, %v3726
  %v3728 = vrot.slane %v3713, %v3727
  %v3730 = vunpack.c.l.s4 1966171168
  %v3731 = vunpack.c.0.s8 %v3730
  %v3732 = vlaneseq
  %v3733 = vshrl.u32 %v3732, 7
  %v3734 = vsub.s32 %v3731, %v3733
  %v3735 = vrot.slane %v3714, %v3734
  %v3736 = vcombine.low %v3721, %v3728
  %v3738 = vunpack.c.l.s4 1966171168
  %v3739 = vunpack.c.0.s8 %v3738
  %v3740 = vlaneseq
  %v3741 = vshrl.u32 %v3740, 7
  %v3742 = vsub.s32 %v3739, %v3741
  %v3743 = vrot.slane %v3736, %v3742
  %v3745 = vunpack.c.l.s4 1966171168
  %v3746 = vunpack.c.0.s8 %v3745
  %v3747 = vlaneseq
  %v3748 = vshrl.u32 %v3747, 7
  %v3749 = vsub.s32 %v3746, %v3748
  %v3750 = vrot.slane %v3735, %v3749
  %v3751 = vcombine.low %v3743, %v3750
  %v3752 = vcombine.low %v3068, %v3076
  %v3753 = vcombine.low %v3078, %v3061
  %v3754 = vcombine.low %v3075, %v3077
  %v3755 = vcombine.low %v3079, %v3103
  %v3757 = vunpack.c.l.s4 1966171168
  %v3758 = vunpack.c.0.s8 %v3757
  %v3759 = vlaneseq
  %v3760 = vshrl.u32 %v3759, 7
  %v3761 = vsub.s32 %v3758, %v3760
  %v3762 = vrot.slane %v3752, %v3761
  %v3764 = vunpack.c.l.s4 1966171168
  %v3765 = vunpack.c.0.s8 %v3764
  %v3766 = vlaneseq
  %v3767 = vshrl.u32 %v3766, 7
  %v3768 = vsub.s32 %v3765, %v3767
  %v3769 = vrot.slane %v3753, %v3768
  %v3771 = vunpack.c.l.s4 1966171168
  %v3772 = vunpack.c.0.s8 %v3771
  %v3773 = vlaneseq
  %v3774 = vshrl.u32 %v3773, 7
  %v3775 = vsub.s32 %v3772, %v3774
  %v3776 = vrot.slane %v3754, %v3775
  %v3778 = vunpack.c.l.s4 1966171168
  %v3779 = vunpack.c.0.s8 %v3778
  %v3780 = vlaneseq
  %v3781 = vshrl.u32 %v3780, 7
  %v3782 = vsub.s32 %v3779, %v3781
  %v3783 = vrot.slane %v3755, %v3782
  %v3784 = vcombine.low %v3762, %v3769
  %v3785 = vcombine.low %v3776, %v3783
  %v3787 = vunpack.c.l.s4 1966171168
  %v3788 = vunpack.c.0.s8 %v3787
  %v3789 = vlaneseq
  %v3790 = vshrl.u32 %v3789, 7
  %v3791 = vsub.s32 %v3788, %v3790
  %v3792 = vrot.slane %v3784, %v3791
  %v3794 = vunpack.c.l.s4 1966171168
  %v3795 = vunpack.c.0.s8 %v3794
  %v3796 = vlaneseq
  %v3797 = vshrl.u32 %v3796, 7
  %v3798 = vsub.s32 %v3795, %v3797
  %v3799 = vrot.slane %v3785, %v3798
  %v3800 = vcombine.low %v3792, %v3799
  %v3801 = vcombine.low %v3117, %v3125
  %v3802 = vcombine.low %v3127, %v3110
  %v3803 = vcombine.low %v3124, %v3126
  %v3805 = vunpack.c.l.s4 1966171168
  %v3806 = vunpack.c.0.s8 %v3805
  %v3807 = vlaneseq
  %v3808 = vshrl.u32 %v3807, 7
  %v3809 = vsub.s32 %v3806, %v3808
  %v3810 = vrot.slane %v3801, %v3809
  %v3812 = vunpack.c.l.s4 1966171168
  %v3813 = vunpack.c.0.s8 %v3812
  %v3814 = vlaneseq
  %v3815 = vshrl.u32 %v3814, 7
  %v3816 = vsub.s32 %v3813, %v3815
  %v3817 = vrot.slane %v3802, %v3816
  %v3819 = vunpack.c.l.s4 1966171168
  %v3820 = vunpack.c.0.s8 %v3819
  %v3821 = vlaneseq
  %v3822 = vshrl.u32 %v3821, 7
  %v3823 = vsub.s32 %v3820, %v3822
  %v3824 = vrot.slane %v3803, %v3823
  %v3825 = vcombine.low %v3810, %v3817
  %v3827 = vunpack.c.l.s4 1966171168
  %v3828 = vunpack.c.0.s8 %v3827
  %v3829 = vlaneseq
  %v3830 = vshrl.u32 %v3829, 7
  %v3831 = vsub.s32 %v3828, %v3830
  %v3832 = vrot.slane %v3825, %v3831
  %v3834 = vunpack.c.l.s4 1966171168
  %v3835 = vunpack.c.0.s8 %v3834
  %v3836 = vlaneseq
  %v3837 = vshrl.u32 %v3836, 7
  %v3838 = vsub.s32 %v3835, %v3837
  %v3839 = vrot.slane %v3824, %v3838
  %v3840 = vcombine.low %v3832, %v3839
  %v3857 = vcombine.low %v2431, %v2439
  %v3858 = vcombine.low %v2441, %v2424
  %v3859 = vcombine.low %v2438, %v2440
  %v3860 = vcombine.low %v2442, %v2466
  %v3862 = vunpack.c.l.s4 1966171168
  %v3863 = vunpack.c.0.s8 %v3862
  %v3864 = vlaneseq
  %v3865 = vshrl.u32 %v3864, 7
  %v3866 = vsub.s32 %v3863, %v3865
  %v3867 = vrot.slane %v3857, %v3866
  %v3869 = vunpack.c.l.s4 1966171168
  %v3870 = vunpack.c.0.s8 %v3869
  %v3871 = vlaneseq
  %v3872 = vshrl.u32 %v3871, 7
  %v3873 = vsub.s32 %v3870, %v3872
  %v3874 = vrot.slane %v3858, %v3873
  %v3876 = vunpack.c.l.s4 1966171168
  %v3877 = vunpack.c.0.s8 %v3876
  %v3878 = vlaneseq
  %v3879 = vshrl.u32 %v3878, 7
  %v3880 = vsub.s32 %v3877, %v3879
  %v3881 = vrot.slane %v3859, %v3880
  %v3883 = vunpack.c.l.s4 1966171168
  %v3884 = vunpack.c.0.s8 %v3883
  %v3885 = vlaneseq
  %v3886 = vshrl.u32 %v3885, 7
  %v3887 = vsub.s32 %v3884, %v3886
  %v3888 = vrot.slane %v3860, %v3887
  %v3889 = vcombine.low %v3867, %v3874
  %v3890 = vcombine.low %v3881, %v3888
  %v3892 = vunpack.c.l.s4 1966171168
  %v3893 = vunpack.c.0.s8 %v3892
  %v3894 = vlaneseq
  %v3895 = vshrl.u32 %v3894, 7
  %v3896 = vsub.s32 %v3893, %v3895
  %v3897 = vrot.slane %v3889, %v3896
  %v3899 = vunpack.c.l.s4 1966171168
  %v3900 = vunpack.c.0.s8 %v3899
  %v3901 = vlaneseq
  %v3902 = vshrl.u32 %v3901, 7
  %v3903 = vsub.s32 %v3900, %v3902
  %v3904 = vrot.slane %v3890, %v3903
  %v3905 = vcombine.low %v3897, %v3904
  %v3906 = vcombine.low %v2480, %v2488
  %v3907 = vcombine.low %v2490, %v2473
  %v3908 = vcombine.low %v2487, %v2489
  %v3910 = vunpack.c.l.s4 1966171168
  %v3911 = vunpack.c.0.s8 %v3910
  %v3912 = vlaneseq
  %v3913 = vshrl.u32 %v3912, 7
  %v3914 = vsub.s32 %v3911, %v3913
  %v3915 = vrot.slane %v3906, %v3914
  %v3917 = vunpack.c.l.s4 1966171168
  %v3918 = vunpack.c.0.s8 %v3917
  %v3919 = vlaneseq
  %v3920 = vshrl.u32 %v3919, 7
  %v3921 = vsub.s32 %v3918, %v3920
  %v3922 = vrot.slane %v3907, %v3921
  %v3924 = vunpack.c.l.s4 1966171168
  %v3925 = vunpack.c.0.s8 %v3924
  %v3926 = vlaneseq
  %v3927 = vshrl.u32 %v3926, 7
  %v3928 = vsub.s32 %v3925, %v3927
  %v3929 = vrot.slane %v3908, %v3928
  %v3930 = vcombine.low %v3915, %v3922
  %v3932 = vunpack.c.l.s4 1966171168
  %v3933 = vunpack.c.0.s8 %v3932
  %v3934 = vlaneseq
  %v3935 = vshrl.u32 %v3934, 7
  %v3936 = vsub.s32 %v3933, %v3935
  %v3937 = vrot.slane %v3930, %v3936
  %v3939 = vunpack.c.l.s4 1966171168
  %v3940 = vunpack.c.0.s8 %v3939
  %v3941 = vlaneseq
  %v3942 = vshrl.u32 %v3941, 7
  %v3943 = vsub.s32 %v3940, %v3942
  %v3944 = vrot.slane %v3929, %v3943
  %v3945 = vcombine.low %v3937, %v3944
  %v3946 = vcombine.low %v2515, %v2529
  %v3947 = vcombine.low %v2537, %v2539
  %v3948 = vcombine.low %v2522, %v2536
  %v3949 = vcombine.low %v2538, %v2540
  %v3951 = vunpack.c.l.s4 1966171168
  %v3952 = vunpack.c.0.s8 %v3951
  %v3953 = vlaneseq
  %v3954 = vshrl.u32 %v3953, 7
  %v3955 = vsub.s32 %v3952, %v3954
  %v3956 = vrot.slane %v3946, %v3955
  %v3958 = vunpack.c.l.s4 1966171168
  %v3959 = vunpack.c.0.s8 %v3958
  %v3960 = vlaneseq
  %v3961 = vshrl.u32 %v3960, 7
  %v3962 = vsub.s32 %v3959, %v3961
  %v3963 = vrot.slane %v3947, %v3962
  %v3965 = vunpack.c.l.s4 1966171168
  %v3966 = vunpack.c.0.s8 %v3965
  %v3967 = vlaneseq
  %v3968 = vshrl.u32 %v3967, 7
  %v3969 = vsub.s32 %v3966, %v3968
  %v3970 = vrot.slane %v3948, %v3969
  %v3972 = vunpack.c.l.s4 1966171168
  %v3973 = vunpack.c.0.s8 %v3972
  %v3974 = vlaneseq
  %v3975 = vshrl.u32 %v3974, 7
  %v3976 = vsub.s32 %v3973, %v3975
  %v3977 = vrot.slane %v3949, %v3976
  %v3978 = vcombine.low %v3956, %v3963
  %v3979 = vcombine.low %v3970, %v3977
  %v3981 = vunpack.c.l.s4 1966171168
  %v3982 = vunpack.c.0.s8 %v3981
  %v3983 = vlaneseq
  %v3984 = vshrl.u32 %v3983, 7
  %v3985 = vsub.s32 %v3982, %v3984
  %v3986 = vrot.slane %v3978, %v3985
  %v3988 = vunpack.c.l.s4 1966171168
  %v3989 = vunpack.c.0.s8 %v3988
  %v3990 = vlaneseq
  %v3991 = vshrl.u32 %v3990, 7
  %v3992 = vsub.s32 %v3989, %v3991
  %v3993 = vrot.slane %v3979, %v3992
  %v3994 = vcombine.low %v3986, %v3993
  %v3995 = vcombine.low %v2564, %v2578
  %v3996 = vcombine.low %v2586, %v2588
  %v3997 = vcombine.low %v2571, %v2585
  %v3999 = vunpack.c.l.s4 1966171168
  %v4000 = vunpack.c.0.s8 %v3999
  %v4001 = vlaneseq
  %v4002 = vshrl.u32 %v4001, 7
  %v4003 = vsub.s32 %v4000, %v4002
  %v4004 = vrot.slane %v3995, %v4003
  %v4006 = vunpack.c.l.s4 1966171168
  %v4007 = vunpack.c.0.s8 %v4006
  %v4008 = vlaneseq
  %v4009 = vshrl.u32 %v4008, 7
  %v4010 = vsub.s32 %v4007, %v4009
  %v4011 = vrot.slane %v3996, %v4010
  %v4013 = vunpack.c.l.s4 1966171168
  %v4014 = vunpack.c.0.s8 %v4013
  %v4015 = vlaneseq
  %v4016 = vshrl.u32 %v4015, 7
  %v4017 = vsub.s32 %v4014, %v4016
  %v4018 = vrot.slane %v3997, %v4017
  %v4019 = vcombine.low %v4004, %v4011
  %v4021 = vunpack.c.l.s4 1966171168
  %v4022 = vunpack.c.0.s8 %v4021
  %v4023 = vlaneseq
  %v4024 = vshrl.u32 %v4023, 7
  %v4025 = vsub.s32 %v4022, %v4024
  %v4026 = vrot.slane %v4019, %v4025
  %v4028 = vunpack.c.l.s4 1966171168
  %v4029 = vunpack.c.0.s8 %v4028
  %v4030 = vlaneseq
  %v4031 = vshrl.u32 %v4030, 7
  %v4032 = vsub.s32 %v4029, %v4031
  %v4033 = vrot.slane %v4018, %v4032
  %v4034 = vcombine.low %v4026, %v4033
  %v4035 = vcombine.low %v2589, %v2613
  %v4036 = vcombine.low %v2627, %v2635
  %v4037 = vcombine.low %v2637, %v2620
  %v4038 = vcombine.low %v2634, %v2636
  %v4040 = vunpack.c.l.s4 1966171168
  %v4041 = vunpack.c.0.s8 %v4040
  %v4042 = vlaneseq
  %v4043 = vshrl.u32 %v4042, 7
  %v4044 = vsub.s32 %v4041, %v4043
  %v4045 = vrot.slane %v4035, %v4044
  %v4047 = vunpack.c.l.s4 1966171168
  %v4048 = vunpack.c.0.s8 %v4047
  %v4049 = vlaneseq
  %v4050 = vshrl.u32 %v4049, 7
  %v4051 = vsub.s32 %v4048, %v4050
  %v4052 = vrot.slane %v4036, %v4051
  %v4054 = vunpack.c.l.s4 1966171168
  %v4055 = vunpack.c.0.s8 %v4054
  %v4056 = vlaneseq
  %v4057 = vshrl.u32 %v4056, 7
  %v4058 = vsub.s32 %v4055, %v4057
  %v4059 = vrot.slane %v4037, %v4058
  %v4061 = vunpack.c.l.s4 1966171168
  %v4062 = vunpack.c.0.s8 %v4061
  %v4063 = vlaneseq
  %v4064 = vshrl.u32 %v4063, 7
  %v4065 = vsub.s32 %v4062, %v4064
  %v4066 = vrot.slane %v4038, %v4065
  %v4067 = vcombine.low %v4045, %v4052
  %v4068 = vcombine.low %v4059, %v4066
  %v4070 = vunpack.c.l.s4 1966171168
  %v4071 = vunpack.c.0.s8 %v4070
  %v4072 = vlaneseq
  %v4073 = vshrl.u32 %v4072, 7
  %v4074 = vsub.s32 %v4071, %v4073
  %v4075 = vrot.slane %v4067, %v4074
  %v4077 = vunpack.c.l.s4 1966171168
  %v4078 = vunpack.c.0.s8 %v4077
  %v4079 = vlaneseq
  %v4080 = vshrl.u32 %v4079, 7
  %v4081 = vsub.s32 %v4078, %v4080
  %v4082 = vrot.slane %v4068, %v4081
  %v4083 = vcombine.low %v4075, %v4082
  %v4084 = vcombine.low %v2638, %v2662
  %v4085 = vcombine.low %v2676, %v2684
  %v4086 = vcombine.low %v2686, %v2669
  %v4088 = vunpack.c.l.s4 1966171168
  %v4089 = vunpack.c.0.s8 %v4088
  %v4090 = vlaneseq
  %v4091 = vshrl.u32 %v4090, 7
  %v4092 = vsub.s32 %v4089, %v4091
  %v4093 = vrot.slane %v4084, %v4092
  %v4095 = vunpack.c.l.s4 1966171168
  %v4096 = vunpack.c.0.s8 %v4095
  %v4097 = vlaneseq
  %v4098 = vshrl.u32 %v4097, 7
  %v4099 = vsub.s32 %v4096, %v4098
  %v4100 = vrot.slane %v4085, %v4099
  %v4102 = vunpack.c.l.s4 1966171168
  %v4103 = vunpack.c.0.s8 %v4102
  %v4104 = vlaneseq
  %v4105 = vshrl.u32 %v4104, 7
  %v4106 = vsub.s32 %v4103, %v4105
  %v4107 = vrot.slane %v4086, %v4106
  %v4108 = vcombine.low %v4093, %v4100
  %v4110 = vunpack.c.l.s4 1966171168
  %v4111 = vunpack.c.0.s8 %v4110
  %v4112 = vlaneseq
  %v4113 = vshrl.u32 %v4112, 7
  %v4114 = vsub.s32 %v4111, %v4113
  %v4115 = vrot.slane %v4108, %v4114
  %v4117 = vunpack.c.l.s4 1966171168
  %v4118 = vunpack.c.0.s8 %v4117
  %v4119 = vlaneseq
  %v4120 = vshrl.u32 %v4119, 7
  %v4121 = vsub.s32 %v4118, %v4120
  %v4122 = vrot.slane %v4107, %v4121
  %v4123 = vcombine.low %v4115, %v4122
  %v4124 = vcombine.low %v2685, %v2687
  %v4125 = vcombine.low %v2711, %v2725
  %v4126 = vcombine.low %v2733, %v2735
  %v4127 = vcombine.low %v2718, %v2732
  %v4129 = vunpack.c.l.s4 1966171168
  %v4130 = vunpack.c.0.s8 %v4129
  %v4131 = vlaneseq
  %v4132 = vshrl.u32 %v4131, 7
  %v4133 = vsub.s32 %v4130, %v4132
  %v4134 = vrot.slane %v4124, %v4133
  %v4136 = vunpack.c.l.s4 1966171168
  %v4137 = vunpack.c.0.s8 %v4136
  %v4138 = vlaneseq
  %v4139 = vshrl.u32 %v4138, 7
  %v4140 = vsub.s32 %v4137, %v4139
  %v4141 = vrot.slane %v4125, %v4140
  %v4143 = vunpack.c.l.s4 1966171168
  %v4144 = vunpack.c.0.s8 %v4143
  %v4145 = vlaneseq
  %v4146 = vshrl.u32 %v4145, 7
  %v4147 = vsub.s32 %v4144, %v4146
  %v4148 = vrot.slane %v4126, %v4147
  %v4150 = vunpack.c.l.s4 1966171168
  %v4151 = vunpack.c.0.s8 %v4150
  %v4152 = vlaneseq
  %v4153 = vshrl.u32 %v4152, 7
  %v4154 = vsub.s32 %v4151, %v4153
  %v4155 = vrot.slane %v4127, %v4154
  %v4156 = vcombine.low %v4134, %v4141
  %v4157 = vcombine.low %v4148, %v4155
  %v4159 = vunpack.c.l.s4 1966171168
  %v4160 = vunpack.c.0.s8 %v4159
  %v4161 = vlaneseq
  %v4162 = vshrl.u32 %v4161, 7
  %v4163 = vsub.s32 %v4160, %v4162
  %v4164 = vrot.slane %v4156, %v4163
  %v4166 = vunpack.c.l.s4 1966171168
  %v4167 = vunpack.c.0.s8 %v4166
  %v4168 = vlaneseq
  %v4169 = vshrl.u32 %v4168, 7
  %v4170 = vsub.s32 %v4167, %v4169
  %v4171 = vrot.slane %v4157, %v4170
  %v4172 = vcombine.low %v4164, %v4171
  %v4173 = vcombine.low %v2734, %v2736
  %v4174 = vcombine.low %v2760, %v2774
  %v4175 = vcombine.low %v2782, %v2784
  %v4177 = vunpack.c.l.s4 1966171168
  %v4178 = vunpack.c.0.s8 %v4177
  %v4179 = vlaneseq
  %v4180 = vshrl.u32 %v4179, 7
  %v4181 = vsub.s32 %v4178, %v4180
  %v4182 = vrot.slane %v4173, %v4181
  %v4184 = vunpack.c.l.s4 1966171168
  %v4185 = vunpack.c.0.s8 %v4184
  %v4186 = vlaneseq
  %v4187 = vshrl.u32 %v4186, 7
  %v4188 = vsub.s32 %v4185, %v4187
  %v4189 = vrot.slane %v4174, %v4188
  %v4191 = vunpack.c.l.s4 1966171168
  %v4192 = vunpack.c.0.s8 %v4191
  %v4193 = vlaneseq
  %v4194 = vshrl.u32 %v4193, 7
  %v4195 = vsub.s32 %v4192, %v4194
  %v4196 = vrot.slane %v4175, %v4195
  %v4197 = vcombine.low %v4182, %v4189
  %v4199 = vunpack.c.l.s4 1966171168
  %v4200 = vunpack.c.0.s8 %v4199
  %v4201 = vlaneseq
  %v4202 = vshrl.u32 %v4201, 7
  %v4203 = vsub.s32 %v4200, %v4202
  %v4204 = vrot.slane %v4197, %v4203
  %v4206 = vunpack.c.l.s4 1966171168
  %v4207 = vunpack.c.0.s8 %v4206
  %v4208 = vlaneseq
  %v4209 = vshrl.u32 %v4208, 7
  %v4210 = vsub.s32 %v4207, %v4209
  %v4211 = vrot.slane %v4196, %v4210
  %v4212 = vcombine.low %v4204, %v4211
  %v4213 = vcombine.low %v2781, %v2783
  %v4214 = vcombine.low %v2785, %v2809
  %v4215 = vcombine.low %v2823, %v2831
  %v4216 = vcombine.low %v2833, %v2816
  %v4218 = vunpack.c.l.s4 1966171168
  %v4219 = vunpack.c.0.s8 %v4218
  %v4220 = vlaneseq
  %v4221 = vshrl.u32 %v4220, 7
  %v4222 = vsub.s32 %v4219, %v4221
  %v4223 = vrot.slane %v4213, %v4222
  %v4225 = vunpack.c.l.s4 1966171168
  %v4226 = vunpack.c.0.s8 %v4225
  %v4227 = vlaneseq
  %v4228 = vshrl.u32 %v4227, 7
  %v4229 = vsub.s32 %v4226, %v4228
  %v4230 = vrot.slane %v4214, %v4229
  %v4232 = vunpack.c.l.s4 1966171168
  %v4233 = vunpack.c.0.s8 %v4232
  %v4234 = vlaneseq
  %v4235 = vshrl.u32 %v4234, 7
  %v4236 = vsub.s32 %v4233, %v4235
  %v4237 = vrot.slane %v4215, %v4236
  %v4239 = vunpack.c.l.s4 1966171168
  %v4240 = vunpack.c.0.s8 %v4239
  %v4241 = vlaneseq
  %v4242 = vshrl.u32 %v4241, 7
  %v4243 = vsub.s32 %v4240, %v4242
  %v4244 = vrot.slane %v4216, %v4243
  %v4245 = vcombine.low %v4223, %v4230
  %v4246 = vcombine.low %v4237, %v4244
  %v4248 = vunpack.c.l.s4 1966171168
  %v4249 = vunpack.c.0.s8 %v4248
  %v4250 = vlaneseq
  %v4251 = vshrl.u32 %v4250, 7
  %v4252 = vsub.s32 %v4249, %v4251
  %v4253 = vrot.slane %v4245, %v4252
  %v4255 = vunpack.c.l.s4 1966171168
  %v4256 = vunpack.c.0.s8 %v4255
  %v4257 = vlaneseq
  %v4258 = vshrl.u32 %v4257, 7
  %v4259 = vsub.s32 %v4256, %v4258
  %v4260 = vrot.slane %v4246, %v4259
  %v4261 = vcombine.low %v4253, %v4260
  %v4262 = vcombine.low %v2830, %v2832
  %v4263 = vcombine.low %v2834, %v2858
  %v4264 = vcombine.low %v2872, %v2880
  %v4266 = vunpack.c.l.s4 1966171168
  %v4267 = vunpack.c.0.s8 %v4266
  %v4268 = vlaneseq
  %v4269 = vshrl.u32 %v4268, 7
  %v4270 = vsub.s32 %v4267, %v4269
  %v4271 = vrot.slane %v4262, %v4270
  %v4273 = vunpack.c.l.s4 1966171168
  %v4274 = vunpack.c.0.s8 %v4273
  %v4275 = vlaneseq
  %v4276 = vshrl.u32 %v4275, 7
  %v4277 = vsub.s32 %v4274, %v4276
  %v4278 = vrot.slane %v4263, %v4277
  %v4280 = vunpack.c.l.s4 1966171168
  %v4281 = vunpack.c.0.s8 %v4280
  %v4282 = vlaneseq
  %v4283 = vshrl.u32 %v4282, 7
  %v4284 = vsub.s32 %v4281, %v4283
  %v4285 = vrot.slane %v4264, %v4284
  %v4286 = vcombine.low %v4271, %v4278
  %v4288 = vunpack.c.l.s4 1966171168
  %v4289 = vunpack.c.0.s8 %v4288
  %v4290 = vlaneseq
  %v4291 = vshrl.u32 %v4290, 7
  %v4292 = vsub.s32 %v4289, %v4291
  %v4293 = vrot.slane %v4286, %v4292
  %v4295 = vunpack.c.l.s4 1966171168
  %v4296 = vunpack.c.0.s8 %v4295
  %v4297 = vlaneseq
  %v4298 = vshrl.u32 %v4297, 7
  %v4299 = vsub.s32 %v4296, %v4298
  %v4300 = vrot.slane %v4285, %v4299
  %v4301 = vcombine.low %v4293, %v4300
  %v4302 = vcombine.low %v2865, %v2879
  %v4303 = vcombine.low %v2881, %v2883
  %v4304 = vcombine.low %v2907, %v2921
  %v4305 = vcombine.low %v2929, %v2931
  %v4307 = vunpack.c.l.s4 1966171168
  %v4308 = vunpack.c.0.s8 %v4307
  %v4309 = vlaneseq
  %v4310 = vshrl.u32 %v4309, 7
  %v4311 = vsub.s32 %v4308, %v4310
  %v4312 = vrot.slane %v4302, %v4311
  %v4314 = vunpack.c.l.s4 1966171168
  %v4315 = vunpack.c.0.s8 %v4314
  %v4316 = vlaneseq
  %v4317 = vshrl.u32 %v4316, 7
  %v4318 = vsub.s32 %v4315, %v4317
  %v4319 = vrot.slane %v4303, %v4318
  %v4321 = vunpack.c.l.s4 1966171168
  %v4322 = vunpack.c.0.s8 %v4321
  %v4323 = vlaneseq
  %v4324 = vshrl.u32 %v4323, 7
  %v4325 = vsub.s32 %v4322, %v4324
  %v4326 = vrot.slane %v4304, %v4325
  %v4328 = vunpack.c.l.s4 1966171168
  %v4329 = vunpack.c.0.s8 %v4328
  %v4330 = vlaneseq
  %v4331 = vshrl.u32 %v4330, 7
  %v4332 = vsub.s32 %v4329, %v4331
  %v4333 = vrot.slane %v4305, %v4332
  %v4334 = vcombine.low %v4312, %v4319
  %v4335 = vcombine.low %v4326, %v4333
  %v4337 = vunpack.c.l.s4 1966171168
  %v4338 = vunpack.c.0.s8 %v4337
  %v4339 = vlaneseq
  %v4340 = vshrl.u32 %v4339, 7
  %v4341 = vsub.s32 %v4338, %v4340
  %v4342 = vrot.slane %v4334, %v4341
  %v4344 = vunpack.c.l.s4 1966171168
  %v4345 = vunpack.c.0.s8 %v4344
  %v4346 = vlaneseq
  %v4347 = vshrl.u32 %v4346, 7
  %v4348 = vsub.s32 %v4345, %v4347
  %v4349 = vrot.slane %v4335, %v4348
  %v4350 = vcombine.low %v4342, %v4349
  %v4351 = vcombine.low %v2914, %v2928
  %v4352 = vcombine.low %v2930, %v2932
  %v4353 = vcombine.low %v2956, %v2970
  %v4355 = vunpack.c.l.s4 1966171168
  %v4356 = vunpack.c.0.s8 %v4355
  %v4357 = vlaneseq
  %v4358 = vshrl.u32 %v4357, 7
  %v4359 = vsub.s32 %v4356, %v4358
  %v4360 = vrot.slane %v4351, %v4359
  %v4362 = vunpack.c.l.s4 1966171168
  %v4363 = vunpack.c.0.s8 %v4362
  %v4364 = vlaneseq
  %v4365 = vshrl.u32 %v4364, 7
  %v4366 = vsub.s32 %v4363, %v4365
  %v4367 = vrot.slane %v4352, %v4366
  %v4369 = vunpack.c.l.s4 1966171168
  %v4370 = vunpack.c.0.s8 %v4369
  %v4371 = vlaneseq
  %v4372 = vshrl.u32 %v4371, 7
  %v4373 = vsub.s32 %v4370, %v4372
  %v4374 = vrot.slane %v4353, %v4373
  %v4375 = vcombine.low %v4360, %v4367
  %v4377 = vunpack.c.l.s4 1966171168
  %v4378 = vunpack.c.0.s8 %v4377
  %v4379 = vlaneseq
  %v4380 = vshrl.u32 %v4379, 7
  %v4381 = vsub.s32 %v4378, %v4380
  %v4382 = vrot.slane %v4375, %v4381
  %v4384 = vunpack.c.l.s4 1966171168
  %v4385 = vunpack.c.0.s8 %v4384
  %v4386 = vlaneseq
  %v4387 = vshrl.u32 %v4386, 7
  %v4388 = vsub.s32 %v4385, %v4387
  %v4389 = vrot.slane %v4374, %v4388
  %v4390 = vcombine.low %v4382, %v4389
  %v4391 = vcombine.low %v2980, %v2963
  %v4392 = vcombine.low %v2977, %v2979
  %v4393 = vcombine.low %v2981, %v3005
  %v4394 = vcombine.low %v3019, %v3027
  %v4396 = vunpack.c.l.s4 1966171168
  %v4397 = vunpack.c.0.s8 %v4396
  %v4398 = vlaneseq
  %v4399 = vshrl.u32 %v4398, 7
  %v4400 = vsub.s32 %v4397, %v4399
  %v4401 = vrot.slane %v4391, %v4400
  %v4403 = vunpack.c.l.s4 1966171168
  %v4404 = vunpack.c.0.s8 %v4403
  %v4405 = vlaneseq
  %v4406 = vshrl.u32 %v4405, 7
  %v4407 = vsub.s32 %v4404, %v4406
  %v4408 = vrot.slane %v4392, %v4407
  %v4410 = vunpack.c.l.s4 1966171168
  %v4411 = vunpack.c.0.s8 %v4410
  %v4412 = vlaneseq
  %v4413 = vshrl.u32 %v4412, 7
  %v4414 = vsub.s32 %v4411, %v4413
  %v4415 = vrot.slane %v4393, %v4414
  %v4417 = vunpack.c.l.s4 1966171168
  %v4418 = vunpack.c.0.s8 %v4417
  %v4419 = vlaneseq
  %v4420 = vshrl.u32 %v4419, 7
  %v4421 = vsub.s32 %v4418, %v4420
  %v4422 = vrot.slane %v4394, %v4421
  %v4423 = vcombine.low %v4401, %v4408
  %v4424 = vcombine.low %v4415, %v4422
  %v4426 = vunpack.c.l.s4 1966171168
  %v4427 = vunpack.c.0.s8 %v4426
  %v4428 = vlaneseq
  %v4429 = vshrl.u32 %v4428, 7
  %v4430 = vsub.s32 %v4427, %v4429
  %v4431 = vrot.slane %v4423, %v4430
  %v4433 = vunpack.c.l.s4 1966171168
  %v4434 = vunpack.c.0.s8 %v4433
  %v4435 = vlaneseq
  %v4436 = vshrl.u32 %v4435, 7
  %v4437 = vsub.s32 %v4434, %v4436
  %v4438 = vrot.slane %v4424, %v4437
  %v4439 = vcombine.low %v4431, %v4438
  %v4440 = vcombine.low %v3029, %v3012
  %v4441 = vcombine.low %v3026, %v3028
  %v4442 = vcombine.low %v3030, %v3054
  %v4444 = vunpack.c.l.s4 1966171168
  %v4445 = vunpack.c.0.s8 %v4444
  %v4446 = vlaneseq
  %v4447 = vshrl.u32 %v4446, 7
  %v4448 = vsub.s32 %v4445, %v4447
  %v4449 = vrot.slane %v4440, %v4448
  %v4451 = vunpack.c.l.s4 1966171168
  %v4452 = vunpack.c.0.s8 %v4451
  %v4453 = vlaneseq
  %v4454 = vshrl.u32 %v4453, 7
  %v4455 = vsub.s32 %v4452, %v4454
  %v4456 = vrot.slane %v4441, %v4455
  %v4458 = vunpack.c.l.s4 1966171168
  %v4459 = vunpack.c.0.s8 %v4458
  %v4460 = vlaneseq
  %v4461 = vshrl.u32 %v4460, 7
  %v4462 = vsub.s32 %v4459, %v4461
  %v4463 = vrot.slane %v4442, %v4462
  %v4464 = vcombine.low %v4449, %v4456
  %v4466 = vunpack.c.l.s4 1966171168
  %v4467 = vunpack.c.0.s8 %v4466
  %v4468 = vlaneseq
  %v4469 = vshrl.u32 %v4468, 7
  %v4470 = vsub.s32 %v4467, %v4469
  %v4471 = vrot.slane %v4464, %v4470
  %v4473 = vunpack.c.l.s4 1966171168
  %v4474 = vunpack.c.0.s8 %v4473
  %v4475 = vlaneseq
  %v4476 = vshrl.u32 %v4475, 7
  %v4477 = vsub.s32 %v4474, %v4476
  %v4478 = vrot.slane %v4463, %v4477
  %v4479 = vcombine.low %v4471, %v4478
  %v4480 = vcombine.low %v3076, %v3078
  %v4481 = vcombine.low %v3061, %v3075
  %v4482 = vcombine.low %v3077, %v3079
  %v4483 = vcombine.low %v3103, %v3117
  %v4485 = vunpack.c.l.s4 1966171168
  %v4486 = vunpack.c.0.s8 %v4485
  %v4487 = vlaneseq
  %v4488 = vshrl.u32 %v4487, 7
  %v4489 = vsub.s32 %v4486, %v4488
  %v4490 = vrot.slane %v4480, %v4489
  %v4492 = vunpack.c.l.s4 1966171168
  %v4493 = vunpack.c.0.s8 %v4492
  %v4494 = vlaneseq
  %v4495 = vshrl.u32 %v4494, 7
  %v4496 = vsub.s32 %v4493, %v4495
  %v4497 = vrot.slane %v4481, %v4496
  %v4499 = vunpack.c.l.s4 1966171168
  %v4500 = vunpack.c.0.s8 %v4499
  %v4501 = vlaneseq
  %v4502 = vshrl.u32 %v4501, 7
  %v4503 = vsub.s32 %v4500, %v4502
  %v4504 = vrot.slane %v4482, %v4503
  %v4506 = vunpack.c.l.s4 1966171168
  %v4507 = vunpack.c.0.s8 %v4506
  %v4508 = vlaneseq
  %v4509 = vshrl.u32 %v4508, 7
  %v4510 = vsub.s32 %v4507, %v4509
  %v4511 = vrot.slane %v4483, %v4510
  %v4512 = vcombine.low %v4490, %v4497
  %v4513 = vcombine.low %v4504, %v4511
  %v4515 = vunpack.c.l.s4 1966171168
  %v4516 = vunpack.c.0.s8 %v4515
  %v4517 = vlaneseq
  %v4518 = vshrl.u32 %v4517, 7
  %v4519 = vsub.s32 %v4516, %v4518
  %v4520 = vrot.slane %v4512, %v4519
  %v4522 = vunpack.c.l.s4 1966171168
  %v4523 = vunpack.c.0.s8 %v4522
  %v4524 = vlaneseq
  %v4525 = vshrl.u32 %v4524, 7
  %v4526 = vsub.s32 %v4523, %v4525
  %v4527 = vrot.slane %v4513, %v4526
  %v4528 = vcombine.low %v4520, %v4527
  %v4529 = vcombine.low %v3125, %v3127
  %v4530 = vcombine.low %v3110, %v3124
  %v4531 = vcombine.low %v3126, %v3128
  %v4533 = vunpack.c.l.s4 1966171168
  %v4534 = vunpack.c.0.s8 %v4533
  %v4535 = vlaneseq
  %v4536 = vshrl.u32 %v4535, 7
  %v4537 = vsub.s32 %v4534, %v4536
  %v4538 = vrot.slane %v4529, %v4537
  %v4540 = vunpack.c.l.s4 1966171168
  %v4541 = vunpack.c.0.s8 %v4540
  %v4542 = vlaneseq
  %v4543 = vshrl.u32 %v4542, 7
  %v4544 = vsub.s32 %v4541, %v4543
  %v4545 = vrot.slane %v4530, %v4544
  %v4547 = vunpack.c.l.s4 1966171168
  %v4548 = vunpack.c.0.s8 %v4547
  %v4549 = vlaneseq
  %v4550 = vshrl.u32 %v4549, 7
  %v4551 = vsub.s32 %v4548, %v4550
  %v4552 = vrot.slane %v4531, %v4551
  %v4553 = vcombine.low %v4538, %v4545
  %v4555 = vunpack.c.l.s4 1966171168
  %v4556 = vunpack.c.0.s8 %v4555
  %v4557 = vlaneseq
  %v4558 = vshrl.u32 %v4557, 7
  %v4559 = vsub.s32 %v4556, %v4558
  %v4560 = vrot.slane %v4553, %v4559
  %v4562 = vunpack.c.l.s4 1966171168
  %v4563 = vunpack.c.0.s8 %v4562
  %v4564 = vlaneseq
  %v4565 = vshrl.u32 %v4564, 7
  %v4566 = vsub.s32 %v4563, %v4565
  %v4567 = vrot.slane %v4552, %v4566
  %v4568 = vcombine.low %v4560, %v4567
  %4569 = vrot.lane.b32.xlu0 %v3905, 16
  %v4570 = vpop.permute.xlu0 %4569
  %4571 = vrot.lane.b32.xlu0 %v3945, 16
  %v4572 = vpop.permute.xlu0 %4571
  %4573 = vrot.lane.b32.xlu0 %v3994, 16
  %v4574 = vpop.permute.xlu0 %4573
  %4575 = vrot.lane.b32.xlu0 %v4034, 16
  %v4576 = vpop.permute.xlu0 %4575
  %4577 = vrot.lane.b32.xlu0 %v4083, 16
  %v4578 = vpop.permute.xlu0 %4577
  %4579 = vrot.lane.b32.xlu0 %v4123, 16
  %v4580 = vpop.permute.xlu0 %4579
  %4581 = vrot.lane.b32.xlu0 %v4172, 16
  %v4582 = vpop.permute.xlu0 %4581
  %4583 = vrot.lane.b32.xlu0 %v4212, 16
  %v4584 = vpop.permute.xlu0 %4583
  %4585 = vrot.lane.b32.xlu0 %v4261, 16
  %v4586 = vpop.permute.xlu0 %4585
  %4587 = vrot.lane.b32.xlu0 %v4301, 16
  %v4588 = vpop.permute.xlu0 %4587
  %4589 = vrot.lane.b32.xlu0 %v4350, 16
  %v4590 = vpop.permute.xlu0 %4589
  %4591 = vrot.lane.b32.xlu0 %v4390, 16
  %v4592 = vpop.permute.xlu0 %4591
  %4593 = vrot.lane.b32.xlu0 %v4439, 16
  %v4594 = vpop.permute.xlu0 %4593
  %4595 = vrot.lane.b32.xlu0 %v4479, 16
  %v4596 = vpop.permute.xlu0 %4595
  %4597 = vrot.lane.b32.xlu0 %v4528, 16
  %v4598 = vpop.permute.xlu0 %4597
  %4599 = vrot.lane.b32.xlu0 %v4568, 16
  %v4600 = vpop.permute.xlu0 %4599
  %v4617 = vsel %vm278, %v3177, %v4570
  %v4618 = vsel %vm278, %v3217, %v4572
  %v4619 = vsel %vm278, %v3266, %v4574
  %v4620 = vsel %vm278, %v3306, %v4576
  %v4621 = vsel %vm278, %v3355, %v4578
  %v4622 = vsel %vm278, %v3395, %v4580
  %v4623 = vsel %vm278, %v3444, %v4582
  %v4624 = vsel %vm278, %v3484, %v4584
  %v4625 = vsel %vm278, %v3533, %v4586
  %v4626 = vsel %vm278, %v3573, %v4588
  %v4627 = vsel %vm278, %v3622, %v4590
  %v4628 = vsel %vm278, %v3662, %v4592
  %v4629 = vsel %vm278, %v3711, %v4594
  %v4630 = vsel %vm278, %v3751, %v4596
  %v4631 = vsel %vm278, %v3800, %v4598
  %v4632 = vsel %vm278, %v3840, %v4600
  %v4649 = vcombine.high %v4617, %v4617
  %v4651 = vunpack.c.l.s4 1983009808
  %v4652 = vunpack.c.0.s8 %v4651
  %v4653 = vlaneseq
  %v4654 = vshrl.u32 %v4653, 7
  %v4655 = vsub.s32 %v4652, %v4654
  %v4656 = vrot.slane %v4617, %v4655
  %v4658 = vunpack.c.l.s4 1983009808
  %v4659 = vunpack.c.0.s8 %v4658
  %v4660 = vlaneseq
  %v4661 = vshrl.u32 %v4660, 7
  %v4662 = vsub.s32 %v4659, %v4661
  %v4663 = vrot.slane %v4649, %v4662
  %v4664 = vcombine.high %v4656, %v4656
  %v4665 = vcombine.high %v4663, %v4663
  %v4666 = vcombine.high %v4618, %v4618
  %v4668 = vunpack.c.l.s4 1983009808
  %v4669 = vunpack.c.0.s8 %v4668
  %v4670 = vlaneseq
  %v4671 = vshrl.u32 %v4670, 7
  %v4672 = vsub.s32 %v4669, %v4671
  %v4673 = vrot.slane %v4618, %v4672
  %v4675 = vunpack.c.l.s4 1983009808
  %v4676 = vunpack.c.0.s8 %v4675
  %v4677 = vlaneseq
  %v4678 = vshrl.u32 %v4677, 7
  %v4679 = vsub.s32 %v4676, %v4678
  %v4680 = vrot.slane %v4666, %v4679
  %v4681 = vcombine.high %v4673, %v4673
  %v4682 = vcombine.high %v4619, %v4619
  %v4684 = vunpack.c.l.s4 1983009808
  %v4685 = vunpack.c.0.s8 %v4684
  %v4686 = vlaneseq
  %v4687 = vshrl.u32 %v4686, 7
  %v4688 = vsub.s32 %v4685, %v4687
  %v4689 = vrot.slane %v4619, %v4688
  %v4691 = vunpack.c.l.s4 1983009808
  %v4692 = vunpack.c.0.s8 %v4691
  %v4693 = vlaneseq
  %v4694 = vshrl.u32 %v4693, 7
  %v4695 = vsub.s32 %v4692, %v4694
  %v4696 = vrot.slane %v4682, %v4695
  %v4697 = vcombine.high %v4689, %v4689
  %v4698 = vcombine.high %v4696, %v4696
  %v4699 = vcombine.high %v4620, %v4620
  %v4701 = vunpack.c.l.s4 1983009808
  %v4702 = vunpack.c.0.s8 %v4701
  %v4703 = vlaneseq
  %v4704 = vshrl.u32 %v4703, 7
  %v4705 = vsub.s32 %v4702, %v4704
  %v4706 = vrot.slane %v4620, %v4705
  %v4708 = vunpack.c.l.s4 1983009808
  %v4709 = vunpack.c.0.s8 %v4708
  %v4710 = vlaneseq
  %v4711 = vshrl.u32 %v4710, 7
  %v4712 = vsub.s32 %v4709, %v4711
  %v4713 = vrot.slane %v4699, %v4712
  %v4714 = vcombine.high %v4706, %v4706
  %v4715 = vcombine.high %v4621, %v4621
  %v4717 = vunpack.c.l.s4 1983009808
  %v4718 = vunpack.c.0.s8 %v4717
  %v4719 = vlaneseq
  %v4720 = vshrl.u32 %v4719, 7
  %v4721 = vsub.s32 %v4718, %v4720
  %v4722 = vrot.slane %v4621, %v4721
  %v4724 = vunpack.c.l.s4 1983009808
  %v4725 = vunpack.c.0.s8 %v4724
  %v4726 = vlaneseq
  %v4727 = vshrl.u32 %v4726, 7
  %v4728 = vsub.s32 %v4725, %v4727
  %v4729 = vrot.slane %v4715, %v4728
  %v4730 = vcombine.high %v4722, %v4722
  %v4731 = vcombine.high %v4729, %v4729
  %v4732 = vcombine.high %v4622, %v4622
  %v4734 = vunpack.c.l.s4 1983009808
  %v4735 = vunpack.c.0.s8 %v4734
  %v4736 = vlaneseq
  %v4737 = vshrl.u32 %v4736, 7
  %v4738 = vsub.s32 %v4735, %v4737
  %v4739 = vrot.slane %v4622, %v4738
  %v4741 = vunpack.c.l.s4 1983009808
  %v4742 = vunpack.c.0.s8 %v4741
  %v4743 = vlaneseq
  %v4744 = vshrl.u32 %v4743, 7
  %v4745 = vsub.s32 %v4742, %v4744
  %v4746 = vrot.slane %v4732, %v4745
  %v4747 = vcombine.high %v4739, %v4739
  %v4748 = vcombine.high %v4623, %v4623
  %v4750 = vunpack.c.l.s4 1983009808
  %v4751 = vunpack.c.0.s8 %v4750
  %v4752 = vlaneseq
  %v4753 = vshrl.u32 %v4752, 7
  %v4754 = vsub.s32 %v4751, %v4753
  %v4755 = vrot.slane %v4623, %v4754
  %v4757 = vunpack.c.l.s4 1983009808
  %v4758 = vunpack.c.0.s8 %v4757
  %v4759 = vlaneseq
  %v4760 = vshrl.u32 %v4759, 7
  %v4761 = vsub.s32 %v4758, %v4760
  %v4762 = vrot.slane %v4748, %v4761
  %v4763 = vcombine.high %v4755, %v4755
  %v4764 = vcombine.high %v4762, %v4762
  %v4765 = vcombine.high %v4624, %v4624
  %v4767 = vunpack.c.l.s4 1983009808
  %v4768 = vunpack.c.0.s8 %v4767
  %v4769 = vlaneseq
  %v4770 = vshrl.u32 %v4769, 7
  %v4771 = vsub.s32 %v4768, %v4770
  %v4772 = vrot.slane %v4624, %v4771
  %v4774 = vunpack.c.l.s4 1983009808
  %v4775 = vunpack.c.0.s8 %v4774
  %v4776 = vlaneseq
  %v4777 = vshrl.u32 %v4776, 7
  %v4778 = vsub.s32 %v4775, %v4777
  %v4779 = vrot.slane %v4765, %v4778
  %v4780 = vcombine.high %v4772, %v4772
  %v4781 = vcombine.high %v4625, %v4625
  %v4783 = vunpack.c.l.s4 1983009808
  %v4784 = vunpack.c.0.s8 %v4783
  %v4785 = vlaneseq
  %v4786 = vshrl.u32 %v4785, 7
  %v4787 = vsub.s32 %v4784, %v4786
  %v4788 = vrot.slane %v4625, %v4787
  %v4790 = vunpack.c.l.s4 1983009808
  %v4791 = vunpack.c.0.s8 %v4790
  %v4792 = vlaneseq
  %v4793 = vshrl.u32 %v4792, 7
  %v4794 = vsub.s32 %v4791, %v4793
  %v4795 = vrot.slane %v4781, %v4794
  %v4796 = vcombine.high %v4788, %v4788
  %v4797 = vcombine.high %v4795, %v4795
  %v4798 = vcombine.high %v4626, %v4626
  %v4800 = vunpack.c.l.s4 1983009808
  %v4801 = vunpack.c.0.s8 %v4800
  %v4802 = vlaneseq
  %v4803 = vshrl.u32 %v4802, 7
  %v4804 = vsub.s32 %v4801, %v4803
  %v4805 = vrot.slane %v4626, %v4804
  %v4807 = vunpack.c.l.s4 1983009808
  %v4808 = vunpack.c.0.s8 %v4807
  %v4809 = vlaneseq
  %v4810 = vshrl.u32 %v4809, 7
  %v4811 = vsub.s32 %v4808, %v4810
  %v4812 = vrot.slane %v4798, %v4811
  %v4813 = vcombine.high %v4805, %v4805
  %v4814 = vcombine.high %v4627, %v4627
  %v4816 = vunpack.c.l.s4 1983009808
  %v4817 = vunpack.c.0.s8 %v4816
  %v4818 = vlaneseq
  %v4819 = vshrl.u32 %v4818, 7
  %v4820 = vsub.s32 %v4817, %v4819
  %v4821 = vrot.slane %v4627, %v4820
  %v4823 = vunpack.c.l.s4 1983009808
  %v4824 = vunpack.c.0.s8 %v4823
  %v4825 = vlaneseq
  %v4826 = vshrl.u32 %v4825, 7
  %v4827 = vsub.s32 %v4824, %v4826
  %v4828 = vrot.slane %v4814, %v4827
  %v4829 = vcombine.high %v4821, %v4821
  %v4830 = vcombine.high %v4828, %v4828
  %v4831 = vcombine.high %v4628, %v4628
  %v4833 = vunpack.c.l.s4 1983009808
  %v4834 = vunpack.c.0.s8 %v4833
  %v4835 = vlaneseq
  %v4836 = vshrl.u32 %v4835, 7
  %v4837 = vsub.s32 %v4834, %v4836
  %v4838 = vrot.slane %v4628, %v4837
  %v4840 = vunpack.c.l.s4 1983009808
  %v4841 = vunpack.c.0.s8 %v4840
  %v4842 = vlaneseq
  %v4843 = vshrl.u32 %v4842, 7
  %v4844 = vsub.s32 %v4841, %v4843
  %v4845 = vrot.slane %v4831, %v4844
  %v4846 = vcombine.high %v4838, %v4838
  %v4847 = vcombine.high %v4629, %v4629
  %v4849 = vunpack.c.l.s4 1983009808
  %v4850 = vunpack.c.0.s8 %v4849
  %v4851 = vlaneseq
  %v4852 = vshrl.u32 %v4851, 7
  %v4853 = vsub.s32 %v4850, %v4852
  %v4854 = vrot.slane %v4629, %v4853
  %v4856 = vunpack.c.l.s4 1983009808
  %v4857 = vunpack.c.0.s8 %v4856
  %v4858 = vlaneseq
  %v4859 = vshrl.u32 %v4858, 7
  %v4860 = vsub.s32 %v4857, %v4859
  %v4861 = vrot.slane %v4847, %v4860
  %v4862 = vcombine.high %v4854, %v4854
  %v4863 = vcombine.high %v4861, %v4861
  %v4864 = vcombine.high %v4630, %v4630
  %v4866 = vunpack.c.l.s4 1983009808
  %v4867 = vunpack.c.0.s8 %v4866
  %v4868 = vlaneseq
  %v4869 = vshrl.u32 %v4868, 7
  %v4870 = vsub.s32 %v4867, %v4869
  %v4871 = vrot.slane %v4630, %v4870
  %v4873 = vunpack.c.l.s4 1983009808
  %v4874 = vunpack.c.0.s8 %v4873
  %v4875 = vlaneseq
  %v4876 = vshrl.u32 %v4875, 7
  %v4877 = vsub.s32 %v4874, %v4876
  %v4878 = vrot.slane %v4864, %v4877
  %v4879 = vcombine.high %v4871, %v4871
  %v4880 = vcombine.high %v4631, %v4631
  %v4882 = vunpack.c.l.s4 1983009808
  %v4883 = vunpack.c.0.s8 %v4882
  %v4884 = vlaneseq
  %v4885 = vshrl.u32 %v4884, 7
  %v4886 = vsub.s32 %v4883, %v4885
  %v4887 = vrot.slane %v4631, %v4886
  %v4889 = vunpack.c.l.s4 1983009808
  %v4890 = vunpack.c.0.s8 %v4889
  %v4891 = vlaneseq
  %v4892 = vshrl.u32 %v4891, 7
  %v4893 = vsub.s32 %v4890, %v4892
  %v4894 = vrot.slane %v4880, %v4893
  %v4895 = vcombine.high %v4887, %v4887
  %v4896 = vcombine.high %v4894, %v4894
  %v4897 = vcombine.high %v4632, %v4632
  %v4899 = vunpack.c.l.s4 1983009808
  %v4900 = vunpack.c.0.s8 %v4899
  %v4901 = vlaneseq
  %v4902 = vshrl.u32 %v4901, 7
  %v4903 = vsub.s32 %v4900, %v4902
  %v4904 = vrot.slane %v4632, %v4903
  %v4906 = vunpack.c.l.s4 1983009808
  %v4907 = vunpack.c.0.s8 %v4906
  %v4908 = vlaneseq
  %v4909 = vshrl.u32 %v4908, 7
  %v4910 = vsub.s32 %v4907, %v4909
  %v4911 = vrot.slane %v4897, %v4910
  %v4912 = vcombine.high %v4904, %v4904
  %s4913 = scalar_lea.vmem %s3, 80
  %v4914 = vld [vmem:[%s4913] sm:$0xff]
  %v4915 = vld [vmem:[%s4913 + $0x8] sm:$0xff]
  %v4916 = vld [vmem:[%s4913 + $0x10] sm:$0xff]
  %v4917 = vld [vmem:[%s4913 + $0x18] sm:$0xff]
  %s4918 = scalar_lea.vmem %s4, 1
  %v4919 = vld [vmem:[%s4918] sm:$0x1]
  %v4921 = vlaneseq
  %v4922 = vshrl.u32 %v4921, 7
  %v4923 = vsub.s32 0, %v4922
  %v4924 = vrot.slane %v4919, %v4923
  %v4926 = vcombine.low %v4656, %v4664
  %v4927 = vcombine.low %v4663, %v4665
  %v4929 = vunpack.c.l.s4 1983009808
  %v4930 = vunpack.c.0.s8 %v4929
  %v4931 = vlaneseq
  %v4932 = vshrl.u32 %v4931, 7
  %v4933 = vsub.s32 %v4930, %v4932
  %v4934 = vrot.slane %v4926, %v4933
  %v4936 = vunpack.c.l.s4 1983009808
  %v4937 = vunpack.c.0.s8 %v4936
  %v4938 = vlaneseq
  %v4939 = vshrl.u32 %v4938, 7
  %v4940 = vsub.s32 %v4937, %v4939
  %v4941 = vrot.slane %v4927, %v4940
  %v4942 = vcombine.low %v4934, %v4941
  %v4943 = vcombine.low %v4673, %v4681
  %v4944 = vcombine.low %v4680, %v4689
  %v4946 = vunpack.c.l.s4 1983009808
  %v4947 = vunpack.c.0.s8 %v4946
  %v4948 = vlaneseq
  %v4949 = vshrl.u32 %v4948, 7
  %v4950 = vsub.s32 %v4947, %v4949
  %v4951 = vrot.slane %v4943, %v4950
  %v4953 = vunpack.c.l.s4 1983009808
  %v4954 = vunpack.c.0.s8 %v4953
  %v4955 = vlaneseq
  %v4956 = vshrl.u32 %v4955, 7
  %v4957 = vsub.s32 %v4954, %v4956
  %v4958 = vrot.slane %v4944, %v4957
  %v4959 = vcombine.low %v4951, %v4958
  %v4960 = vcombine.low %v4697, %v4696
  %v4961 = vcombine.low %v4698, %v4706
  %v4963 = vunpack.c.l.s4 1983009808
  %v4964 = vunpack.c.0.s8 %v4963
  %v4965 = vlaneseq
  %v4966 = vshrl.u32 %v4965, 7
  %v4967 = vsub.s32 %v4964, %v4966
  %v4968 = vrot.slane %v4960, %v4967
  %v4970 = vunpack.c.l.s4 1983009808
  %v4971 = vunpack.c.0.s8 %v4970
  %v4972 = vlaneseq
  %v4973 = vshrl.u32 %v4972, 7
  %v4974 = vsub.s32 %v4971, %v4973
  %v4975 = vrot.slane %v4961, %v4974
  %v4976 = vcombine.low %v4968, %v4975
  %v4977 = vcombine.low %v4714, %v4713
  %v4978 = vcombine.low %v4722, %v4730
  %v4980 = vunpack.c.l.s4 1983009808
  %v4981 = vunpack.c.0.s8 %v4980
  %v4982 = vlaneseq
  %v4983 = vshrl.u32 %v4982, 7
  %v4984 = vsub.s32 %v4981, %v4983
  %v4985 = vrot.slane %v4977, %v4984
  %v4987 = vunpack.c.l.s4 1983009808
  %v4988 = vunpack.c.0.s8 %v4987
  %v4989 = vlaneseq
  %v4990 = vshrl.u32 %v4989, 7
  %v4991 = vsub.s32 %v4988, %v4990
  %v4992 = vrot.slane %v4978, %v4991
  %v4993 = vcombine.low %v4985, %v4992
  %v4994 = vcombine.low %v4729, %v4731
  %v4995 = vcombine.low %v4739, %v4747
  %v4997 = vunpack.c.l.s4 1983009808
  %v4998 = vunpack.c.0.s8 %v4997
  %v4999 = vlaneseq
  %v5000 = vshrl.u32 %v4999, 7
  %v5001 = vsub.s32 %v4998, %v5000
  %v5002 = vrot.slane %v4994, %v5001
  %v5004 = vunpack.c.l.s4 1983009808
  %v5005 = vunpack.c.0.s8 %v5004
  %v5006 = vlaneseq
  %v5007 = vshrl.u32 %v5006, 7
  %v5008 = vsub.s32 %v5005, %v5007
  %v5009 = vrot.slane %v4995, %v5008
  %v5010 = vcombine.low %v5002, %v5009
  %v5011 = vcombine.low %v4746, %v4755
  %v5012 = vcombine.low %v4763, %v4762
  %v5014 = vunpack.c.l.s4 1983009808
  %v5015 = vunpack.c.0.s8 %v5014
  %v5016 = vlaneseq
  %v5017 = vshrl.u32 %v5016, 7
  %v5018 = vsub.s32 %v5015, %v5017
  %v5019 = vrot.slane %v5011, %v5018
  %v5021 = vunpack.c.l.s4 1983009808
  %v5022 = vunpack.c.0.s8 %v5021
  %v5023 = vlaneseq
  %v5024 = vshrl.u32 %v5023, 7
  %v5025 = vsub.s32 %v5022, %v5024
  %v5026 = vrot.slane %v5012, %v5025
  %v5027 = vcombine.low %v5019, %v5026
  %v5028 = vcombine.low %v4764, %v4772
  %v5029 = vcombine.low %v4780, %v4779
  %v5031 = vunpack.c.l.s4 1983009808
  %v5032 = vunpack.c.0.s8 %v5031
  %v5033 = vlaneseq
  %v5034 = vshrl.u32 %v5033, 7
  %v5035 = vsub.s32 %v5032, %v5034
  %v5036 = vrot.slane %v5028, %v5035
  %v5038 = vunpack.c.l.s4 1983009808
  %v5039 = vunpack.c.0.s8 %v5038
  %v5040 = vlaneseq
  %v5041 = vshrl.u32 %v5040, 7
  %v5042 = vsub.s32 %v5039, %v5041
  %v5043 = vrot.slane %v5029, %v5042
  %v5044 = vcombine.low %v5036, %v5043
  %v5045 = vcombine.low %v4788, %v4796
  %v5046 = vcombine.low %v4795, %v4797
  %v5048 = vunpack.c.l.s4 1983009808
  %v5049 = vunpack.c.0.s8 %v5048
  %v5050 = vlaneseq
  %v5051 = vshrl.u32 %v5050, 7
  %v5052 = vsub.s32 %v5049, %v5051
  %v5053 = vrot.slane %v5045, %v5052
  %v5055 = vunpack.c.l.s4 1983009808
  %v5056 = vunpack.c.0.s8 %v5055
  %v5057 = vlaneseq
  %v5058 = vshrl.u32 %v5057, 7
  %v5059 = vsub.s32 %v5056, %v5058
  %v5060 = vrot.slane %v5046, %v5059
  %v5061 = vcombine.low %v5053, %v5060
  %v5062 = vcombine.low %v4805, %v4813
  %v5063 = vcombine.low %v4812, %v4821
  %v5065 = vunpack.c.l.s4 1983009808
  %v5066 = vunpack.c.0.s8 %v5065
  %v5067 = vlaneseq
  %v5068 = vshrl.u32 %v5067, 7
  %v5069 = vsub.s32 %v5066, %v5068
  %v5070 = vrot.slane %v5062, %v5069
  %v5072 = vunpack.c.l.s4 1983009808
  %v5073 = vunpack.c.0.s8 %v5072
  %v5074 = vlaneseq
  %v5075 = vshrl.u32 %v5074, 7
  %v5076 = vsub.s32 %v5073, %v5075
  %v5077 = vrot.slane %v5063, %v5076
  %v5078 = vcombine.low %v5070, %v5077
  %v5079 = vcombine.low %v4829, %v4828
  %v5080 = vcombine.low %v4830, %v4838
  %v5082 = vunpack.c.l.s4 1983009808
  %v5083 = vunpack.c.0.s8 %v5082
  %v5084 = vlaneseq
  %v5085 = vshrl.u32 %v5084, 7
  %v5086 = vsub.s32 %v5083, %v5085
  %v5087 = vrot.slane %v5079, %v5086
  %v5089 = vunpack.c.l.s4 1983009808
  %v5090 = vunpack.c.0.s8 %v5089
  %v5091 = vlaneseq
  %v5092 = vshrl.u32 %v5091, 7
  %v5093 = vsub.s32 %v5090, %v5092
  %v5094 = vrot.slane %v5080, %v5093
  %v5095 = vcombine.low %v5087, %v5094
  %v5096 = vcombine.low %v4846, %v4845
  %v5097 = vcombine.low %v4854, %v4862
  %v5099 = vunpack.c.l.s4 1983009808
  %v5100 = vunpack.c.0.s8 %v5099
  %v5101 = vlaneseq
  %v5102 = vshrl.u32 %v5101, 7
  %v5103 = vsub.s32 %v5100, %v5102
  %v5104 = vrot.slane %v5096, %v5103
  %v5106 = vunpack.c.l.s4 1983009808
  %v5107 = vunpack.c.0.s8 %v5106
  %v5108 = vlaneseq
  %v5109 = vshrl.u32 %v5108, 7
  %v5110 = vsub.s32 %v5107, %v5109
  %v5111 = vrot.slane %v5097, %v5110
  %v5112 = vcombine.low %v5104, %v5111
  %v5113 = vcombine.low %v4861, %v4863
  %v5114 = vcombine.low %v4871, %v4879
  %v5116 = vunpack.c.l.s4 1983009808
  %v5117 = vunpack.c.0.s8 %v5116
  %v5118 = vlaneseq
  %v5119 = vshrl.u32 %v5118, 7
  %v5120 = vsub.s32 %v5117, %v5119
  %v5121 = vrot.slane %v5113, %v5120
  %v5123 = vunpack.c.l.s4 1983009808
  %v5124 = vunpack.c.0.s8 %v5123
  %v5125 = vlaneseq
  %v5126 = vshrl.u32 %v5125, 7
  %v5127 = vsub.s32 %v5124, %v5126
  %v5128 = vrot.slane %v5114, %v5127
  %v5129 = vcombine.low %v5121, %v5128
  %v5130 = vcombine.low %v4878, %v4887
  %v5131 = vcombine.low %v4895, %v4894
  %v5133 = vunpack.c.l.s4 1983009808
  %v5134 = vunpack.c.0.s8 %v5133
  %v5135 = vlaneseq
  %v5136 = vshrl.u32 %v5135, 7
  %v5137 = vsub.s32 %v5134, %v5136
  %v5138 = vrot.slane %v5130, %v5137
  %v5140 = vunpack.c.l.s4 1983009808
  %v5141 = vunpack.c.0.s8 %v5140
  %v5142 = vlaneseq
  %v5143 = vshrl.u32 %v5142, 7
  %v5144 = vsub.s32 %v5141, %v5143
  %v5145 = vrot.slane %v5131, %v5144
  %v5146 = vcombine.low %v5138, %v5145
  %v5147 = vcombine.low %v4896, %v4904
  %v5148 = vcombine.low %v4912, %v4911
  %v5150 = vunpack.c.l.s4 1983009808
  %v5151 = vunpack.c.0.s8 %v5150
  %v5152 = vlaneseq
  %v5153 = vshrl.u32 %v5152, 7
  %v5154 = vsub.s32 %v5151, %v5153
  %v5155 = vrot.slane %v5147, %v5154
  %v5157 = vunpack.c.l.s4 1983009808
  %v5158 = vunpack.c.0.s8 %v5157
  %v5159 = vlaneseq
  %v5160 = vshrl.u32 %v5159, 7
  %v5161 = vsub.s32 %v5158, %v5160
  %v5162 = vrot.slane %v5148, %v5161
  %v5163 = vcombine.low %v5155, %v5162
  %v5164 = vsel %vm59, %v4942, 0
  %v5166 = vsel %vm59, %v4959, 0
  %v5168 = vsel %vm59, %v4976, 0
  %v5170 = vsel %vm59, %v4993, 0
  %v5172 = vsel %vm59, %v5010, 0
  %v5174 = vsel %vm59, %v5027, 0
  %v5176 = vsel %vm59, %v5044, 0
  %v5178 = vsel %vm59, %v5061, 0
  %v5180 = vsel %vm59, %v5078, 0
  %v5182 = vsel %vm59, %v5095, 0
  %v5184 = vsel %vm59, %v5112, 0
  %v5186 = vsel %vm59, %v5129, 0
  %v5188 = vsel %vm59, %v5146, 0
  %v5190 = vsel %vm59, %v5163, 0
  %5192 = vmatprep.subr.mxu0 0.0
  %5193 = vmatpush1.msra.mxu0 %v4914
  %5194 = vmatprep.subr.mxu0 0.0
  %5195 = vmatpush1.msra.mxu0 %v4915
  %5196 = vmatprep.subr.mxu0 0.0
  %5197 = vmatpush1.msra.mxu0 %v4916
  %5198 = vmatprep.subr.mxu0 0.0
  %5199 = vmatpush1.msra.mxu0 %v4917
  %5200 = vmatprep.subr.mxu0 0.0
  %5201 = vmatpush1.msra.mxu0 0.0
  %5202 = vmatprep.subr.mxu0 0.0
  %5203 = vmatpush1.msra.mxu0 0.0
  %5204 = vmatprep.subr.mxu0 0.0
  %5205 = vmatpush1.msra.mxu0 0.0
  %5206 = vmatprep.subr.mxu0 0.0
  %5207 = vmatpush1.msra.mxu0 0.0
  %5208 = vmatprep.subr.mxu0 0.0
  %5209 = vmatpush1.msra.mxu0 0.0
  %5210 = vmatprep.subr.mxu0 0.0
  %5211 = vmatpush1.msra.mxu0 0.0
  %5212 = vmatprep.subr.mxu0 0.0
  %5213 = vmatpush1.msra.mxu0 0.0
  %5214 = vmatprep.subr.mxu0 0.0
  %5215 = vmatpush1.msra.mxu0 0.0
  %5216 = vmatprep.subr.mxu0 0.0
  %5217 = vmatpush1.msra.mxu0 0.0
  %5218 = vmatprep.subr.mxu0 0.0
  %5219 = vmatpush1.msra.mxu0 0.0
  %5220 = vmatprep.subr.mxu0 0.0
  %5221 = vmatpush1.msra.mxu0 0.0
  %5222 = vmatprep.subr.mxu0 0.0
  %5223 = vmatpush1.msra.mxu0 0.0
  %5224 = vmatprep.subr.mxu0 0.0
  %5225 = vmatpush1.msra.mxu0 0.0
  %5226 = vmatprep.subr.mxu0 0.0
  %5227 = vmatpush1.msra.mxu0 0.0
  %5228 = vmatprep.subr.mxu0 0.0
  %5229 = vmatpush1.msra.mxu0 0.0
  %5230 = vmatprep.subr.mxu0 0.0
  %5231 = vmatpush1.msra.mxu0 0.0
  %5232 = vmatprep.subr.mxu0 0.0
  %5233 = vmatpush1.msra.mxu0 0.0
  %5234 = vmatprep.subr.mxu0 0.0
  %5235 = vmatpush1.msra.mxu0 0.0
  %5236 = vmatprep.subr.mxu0 0.0
  %5237 = vmatpush1.msra.mxu0 0.0
  %5238 = vmatprep.subr.mxu0 0.0
  %5239 = vmatpush1.msra.mxu0 0.0
  %5240 = vmatprep.subr.mxu0 0.0
  %5241 = vmatpush1.msra.mxu0 0.0
  %5242 = vmatprep.subr.mxu0 0.0
  %5243 = vmatpush1.msra.mxu0 0.0
  %5244 = vmatprep.subr.mxu0 0.0
  %5245 = vmatpush1.msra.mxu0 0.0
  %5246 = vmatprep.subr.mxu0 0.0
  %5247 = vmatpush1.msra.mxu0 0.0
  %5248 = vmatprep.subr.mxu0 0.0
  %5249 = vmatpush1.msra.mxu0 0.0
  %5250 = vmatprep.subr.mxu0 0.0
  %5251 = vmatpush1.msra.mxu0 0.0
  %5252 = vmatprep.subr.mxu0 0.0
  %5253 = vmatpush1.msra.mxu0 0.0
  %5254 = vmatprep.subr.mxu0 0.0
  %5255 = vmatpush1.msra.mxu0 0.0
  %5256 = vmatprep.mubr.f32.mxu0 0.0
  %5257 = vmatmul.mubr.f32.gmra.mrb[0].mxu0 %v5164
  %v5258 = vpop.f32.mrb[0].mxu0
  %v5259 = vadd.f32 %v4924, %v5258
  %v5260 = vpop.f32.mrb[0].mxu0
  %5261 = vmatprep.mubr.f32.mxu0 0.0
  %5262 = vmatmul.mubr.f32.gmra.mrb[0].mxu0 %v5166
  %v5263 = vpop.f32.mrb[0].mxu0
  %v5264 = vadd.f32 %v4924, %v5263
  %v5265 = vpop.f32.mrb[0].mxu0
  %5266 = vmatprep.mubr.f32.mxu0 0.0
  %5267 = vmatmul.mubr.f32.gmra.mrb[0].mxu0 %v5168
  %v5268 = vpop.f32.mrb[0].mxu0
  %v5269 = vadd.f32 %v4924, %v5268
  %v5270 = vpop.f32.mrb[0].mxu0
  %5271 = vmatprep.mubr.f32.mxu0 0.0
  %5272 = vmatmul.mubr.f32.gmra.mrb[0].mxu0 %v5170
  %v5273 = vpop.f32.mrb[0].mxu0
  %v5274 = vadd.f32 %v4924, %v5273
  %v5275 = vpop.f32.mrb[0].mxu0
  %5276 = vmatprep.mubr.f32.mxu0 0.0
  %5277 = vmatmul.mubr.f32.gmra.mrb[0].mxu0 %v5172
  %v5278 = vpop.f32.mrb[0].mxu0
  %v5279 = vadd.f32 %v4924, %v5278
  %v5280 = vpop.f32.mrb[0].mxu0
  %5281 = vmatprep.mubr.f32.mxu0 0.0
  %5282 = vmatmul.mubr.f32.gmra.mrb[0].mxu0 %v5174
  %v5283 = vpop.f32.mrb[0].mxu0
  %v5284 = vadd.f32 %v4924, %v5283
  %v5285 = vpop.f32.mrb[0].mxu0
  %5286 = vmatprep.mubr.f32.mxu0 0.0
  %5287 = vmatmul.mubr.f32.gmra.mrb[0].mxu0 %v5176
  %v5288 = vpop.f32.mrb[0].mxu0
  %v5289 = vadd.f32 %v4924, %v5288
  %v5290 = vpop.f32.mrb[0].mxu0
  %5291 = vmatprep.mubr.f32.mxu0 0.0
  %5292 = vmatmul.mubr.f32.gmra.mrb[0].mxu0 %v5178
  %v5293 = vpop.f32.mrb[0].mxu0
  %v5294 = vadd.f32 %v4924, %v5293
  %v5295 = vpop.f32.mrb[0].mxu0
  %5296 = vmatprep.mubr.f32.mxu0 0.0
  %5297 = vmatmul.mubr.f32.gmra.mrb[0].mxu0 %v5180
  %v5298 = vpop.f32.mrb[0].mxu0
  %v5299 = vadd.f32 %v4924, %v5298
  %v5300 = vpop.f32.mrb[0].mxu0
  %5301 = vmatprep.mubr.f32.mxu0 0.0
  %5302 = vmatmul.mubr.f32.gmra.mrb[0].mxu0 %v5182
  %v5303 = vpop.f32.mrb[0].mxu0
  %v5304 = vadd.f32 %v4924, %v5303
  %v5305 = vpop.f32.mrb[0].mxu0
  %5306 = vmatprep.mubr.f32.mxu0 0.0
  %5307 = vmatmul.mubr.f32.gmra.mrb[0].mxu0 %v5184
  %v5308 = vpop.f32.mrb[0].mxu0
  %v5309 = vadd.f32 %v4924, %v5308
  %v5310 = vpop.f32.mrb[0].mxu0
  %5311 = vmatprep.mubr.f32.mxu0 0.0
  %5312 = vmatmul.mubr.f32.gmra.mrb[0].mxu0 %v5186
  %v5313 = vpop.f32.mrb[0].mxu0
  %v5314 = vadd.f32 %v4924, %v5313
  %v5315 = vpop.f32.mrb[0].mxu0
  %5316 = vmatprep.mubr.f32.mxu0 0.0
  %5317 = vmatmul.mubr.f32.gmra.mrb[0].mxu0 %v5188
  %v5318 = vpop.f32.mrb[0].mxu0
  %v5319 = vadd.f32 %v4924, %v5318
  %v5320 = vpop.f32.mrb[0].mxu0
  %5321 = vmatprep.mubr.f32.mxu0 0.0
  %5322 = vmatmul.mubr.f32.gmra.mrb[0].mxu0 %v5190
  %v5323 = vpop.f32.mrb[0].mxu0
  %v5324 = vadd.f32 %v4924, %v5323
  %v5325 = vpop.f32.mrb[0].mxu0
  %5326 = vdwg.mxu0
  %v5327 = vmax.f32 %v5259, 0.0
  %v5328 = vmax.f32 %v5264, 0.0
  %v5329 = vmax.f32 %v5269, 0.0
  %v5330 = vmax.f32 %v5274, 0.0
  %v5331 = vmax.f32 %v5279, 0.0
  %v5332 = vmax.f32 %v5284, 0.0
  %v5333 = vmax.f32 %v5289, 0.0
  %v5334 = vmax.f32 %v5294, 0.0
  %v5335 = vmax.f32 %v5299, 0.0
  %v5336 = vmax.f32 %v5304, 0.0
  %v5337 = vmax.f32 %v5309, 0.0
  %v5338 = vmax.f32 %v5314, 0.0
  %v5339 = vmax.f32 %v5319, 0.0
  %v5340 = vmax.f32 %v5324, 0.0
  %v5355 = vcombine.high %v5327, %v5327
  %v5357 = vunpack.c.l.s4 1983009808
  %v5358 = vunpack.c.0.s8 %v5357
  %v5359 = vlaneseq
  %v5360 = vshrl.u32 %v5359, 7
  %v5361 = vsub.s32 %v5358, %v5360
  %v5362 = vrot.slane %v5327, %v5361
  %v5364 = vunpack.c.l.s4 1983009808
  %v5365 = vunpack.c.0.s8 %v5364
  %v5366 = vlaneseq
  %v5367 = vshrl.u32 %v5366, 7
  %v5368 = vsub.s32 %v5365, %v5367
  %v5369 = vrot.slane %v5355, %v5368
  %v5370 = vcombine.high %v5362, %v5362
  %v5371 = vcombine.high %v5369, %v5369
  %v5372 = vcombine.high %v5328, %v5328
  %v5374 = vunpack.c.l.s4 1983009808
  %v5375 = vunpack.c.0.s8 %v5374
  %v5376 = vlaneseq
  %v5377 = vshrl.u32 %v5376, 7
  %v5378 = vsub.s32 %v5375, %v5377
  %v5379 = vrot.slane %v5328, %v5378
  %v5381 = vunpack.c.l.s4 1983009808
  %v5382 = vunpack.c.0.s8 %v5381
  %v5383 = vlaneseq
  %v5384 = vshrl.u32 %v5383, 7
  %v5385 = vsub.s32 %v5382, %v5384
  %v5386 = vrot.slane %v5372, %v5385
  %v5387 = vcombine.high %v5379, %v5379
  %v5388 = vcombine.high %v5386, %v5386
  %v5389 = vcombine.high %v5329, %v5329
  %v5391 = vunpack.c.l.s4 1983009808
  %v5392 = vunpack.c.0.s8 %v5391
  %v5393 = vlaneseq
  %v5394 = vshrl.u32 %v5393, 7
  %v5395 = vsub.s32 %v5392, %v5394
  %v5396 = vrot.slane %v5329, %v5395
  %v5398 = vunpack.c.l.s4 1983009808
  %v5399 = vunpack.c.0.s8 %v5398
  %v5400 = vlaneseq
  %v5401 = vshrl.u32 %v5400, 7
  %v5402 = vsub.s32 %v5399, %v5401
  %v5403 = vrot.slane %v5389, %v5402
  %v5404 = vcombine.high %v5396, %v5396
  %v5405 = vcombine.high %v5403, %v5403
  %v5406 = vcombine.high %v5330, %v5330
  %v5408 = vunpack.c.l.s4 1983009808
  %v5409 = vunpack.c.0.s8 %v5408
  %v5410 = vlaneseq
  %v5411 = vshrl.u32 %v5410, 7
  %v5412 = vsub.s32 %v5409, %v5411
  %v5413 = vrot.slane %v5330, %v5412
  %v5415 = vunpack.c.l.s4 1983009808
  %v5416 = vunpack.c.0.s8 %v5415
  %v5417 = vlaneseq
  %v5418 = vshrl.u32 %v5417, 7
  %v5419 = vsub.s32 %v5416, %v5418
  %v5420 = vrot.slane %v5406, %v5419
  %v5421 = vcombine.high %v5413, %v5413
  %v5422 = vcombine.high %v5420, %v5420
  %v5423 = vcombine.high %v5331, %v5331
  %v5425 = vunpack.c.l.s4 1983009808
  %v5426 = vunpack.c.0.s8 %v5425
  %v5427 = vlaneseq
  %v5428 = vshrl.u32 %v5427, 7
  %v5429 = vsub.s32 %v5426, %v5428
  %v5430 = vrot.slane %v5331, %v5429
  %v5432 = vunpack.c.l.s4 1983009808
  %v5433 = vunpack.c.0.s8 %v5432
  %v5434 = vlaneseq
  %v5435 = vshrl.u32 %v5434, 7
  %v5436 = vsub.s32 %v5433, %v5435
  %v5437 = vrot.slane %v5423, %v5436
  %v5438 = vcombine.high %v5430, %v5430
  %v5439 = vcombine.high %v5437, %v5437
  %v5440 = vcombine.high %v5332, %v5332
  %v5442 = vunpack.c.l.s4 1983009808
  %v5443 = vunpack.c.0.s8 %v5442
  %v5444 = vlaneseq
  %v5445 = vshrl.u32 %v5444, 7
  %v5446 = vsub.s32 %v5443, %v5445
  %v5447 = vrot.slane %v5332, %v5446
  %v5449 = vunpack.c.l.s4 1983009808
  %v5450 = vunpack.c.0.s8 %v5449
  %v5451 = vlaneseq
  %v5452 = vshrl.u32 %v5451, 7
  %v5453 = vsub.s32 %v5450, %v5452
  %v5454 = vrot.slane %v5440, %v5453
  %v5455 = vcombine.high %v5447, %v5447
  %v5456 = vcombine.high %v5454, %v5454
  %v5457 = vcombine.high %v5333, %v5333
  %v5459 = vunpack.c.l.s4 1983009808
  %v5460 = vunpack.c.0.s8 %v5459
  %v5461 = vlaneseq
  %v5462 = vshrl.u32 %v5461, 7
  %v5463 = vsub.s32 %v5460, %v5462
  %v5464 = vrot.slane %v5333, %v5463
  %v5466 = vunpack.c.l.s4 1983009808
  %v5467 = vunpack.c.0.s8 %v5466
  %v5468 = vlaneseq
  %v5469 = vshrl.u32 %v5468, 7
  %v5470 = vsub.s32 %v5467, %v5469
  %v5471 = vrot.slane %v5457, %v5470
  %v5472 = vcombine.high %v5464, %v5464
  %v5473 = vcombine.high %v5471, %v5471
  %v5474 = vcombine.high %v5334, %v5334
  %v5476 = vunpack.c.l.s4 1983009808
  %v5477 = vunpack.c.0.s8 %v5476
  %v5478 = vlaneseq
  %v5479 = vshrl.u32 %v5478, 7
  %v5480 = vsub.s32 %v5477, %v5479
  %v5481 = vrot.slane %v5334, %v5480
  %v5483 = vunpack.c.l.s4 1983009808
  %v5484 = vunpack.c.0.s8 %v5483
  %v5485 = vlaneseq
  %v5486 = vshrl.u32 %v5485, 7
  %v5487 = vsub.s32 %v5484, %v5486
  %v5488 = vrot.slane %v5474, %v5487
  %v5489 = vcombine.high %v5481, %v5481
  %v5490 = vcombine.high %v5488, %v5488
  %v5491 = vcombine.high %v5335, %v5335
  %v5493 = vunpack.c.l.s4 1983009808
  %v5494 = vunpack.c.0.s8 %v5493
  %v5495 = vlaneseq
  %v5496 = vshrl.u32 %v5495, 7
  %v5497 = vsub.s32 %v5494, %v5496
  %v5498 = vrot.slane %v5335, %v5497
  %v5500 = vunpack.c.l.s4 1983009808
  %v5501 = vunpack.c.0.s8 %v5500
  %v5502 = vlaneseq
  %v5503 = vshrl.u32 %v5502, 7
  %v5504 = vsub.s32 %v5501, %v5503
  %v5505 = vrot.slane %v5491, %v5504
  %v5506 = vcombine.high %v5498, %v5498
  %v5507 = vcombine.high %v5505, %v5505
  %v5508 = vcombine.high %v5336, %v5336
  %v5510 = vunpack.c.l.s4 1983009808
  %v5511 = vunpack.c.0.s8 %v5510
  %v5512 = vlaneseq
  %v5513 = vshrl.u32 %v5512, 7
  %v5514 = vsub.s32 %v5511, %v5513
  %v5515 = vrot.slane %v5336, %v5514
  %v5517 = vunpack.c.l.s4 1983009808
  %v5518 = vunpack.c.0.s8 %v5517
  %v5519 = vlaneseq
  %v5520 = vshrl.u32 %v5519, 7
  %v5521 = vsub.s32 %v5518, %v5520
  %v5522 = vrot.slane %v5508, %v5521
  %v5523 = vcombine.high %v5515, %v5515
  %v5524 = vcombine.high %v5522, %v5522
  %v5525 = vcombine.high %v5337, %v5337
  %v5527 = vunpack.c.l.s4 1983009808
  %v5528 = vunpack.c.0.s8 %v5527
  %v5529 = vlaneseq
  %v5530 = vshrl.u32 %v5529, 7
  %v5531 = vsub.s32 %v5528, %v5530
  %v5532 = vrot.slane %v5337, %v5531
  %v5534 = vunpack.c.l.s4 1983009808
  %v5535 = vunpack.c.0.s8 %v5534
  %v5536 = vlaneseq
  %v5537 = vshrl.u32 %v5536, 7
  %v5538 = vsub.s32 %v5535, %v5537
  %v5539 = vrot.slane %v5525, %v5538
  %v5540 = vcombine.high %v5532, %v5532
  %v5541 = vcombine.high %v5539, %v5539
  %v5542 = vcombine.high %v5338, %v5338
  %v5544 = vunpack.c.l.s4 1983009808
  %v5545 = vunpack.c.0.s8 %v5544
  %v5546 = vlaneseq
  %v5547 = vshrl.u32 %v5546, 7
  %v5548 = vsub.s32 %v5545, %v5547
  %v5549 = vrot.slane %v5338, %v5548
  %v5551 = vunpack.c.l.s4 1983009808
  %v5552 = vunpack.c.0.s8 %v5551
  %v5553 = vlaneseq
  %v5554 = vshrl.u32 %v5553, 7
  %v5555 = vsub.s32 %v5552, %v5554
  %v5556 = vrot.slane %v5542, %v5555
  %v5557 = vcombine.high %v5549, %v5549
  %v5558 = vcombine.high %v5556, %v5556
  %v5559 = vcombine.high %v5339, %v5339
  %v5561 = vunpack.c.l.s4 1983009808
  %v5562 = vunpack.c.0.s8 %v5561
  %v5563 = vlaneseq
  %v5564 = vshrl.u32 %v5563, 7
  %v5565 = vsub.s32 %v5562, %v5564
  %v5566 = vrot.slane %v5339, %v5565
  %v5568 = vunpack.c.l.s4 1983009808
  %v5569 = vunpack.c.0.s8 %v5568
  %v5570 = vlaneseq
  %v5571 = vshrl.u32 %v5570, 7
  %v5572 = vsub.s32 %v5569, %v5571
  %v5573 = vrot.slane %v5559, %v5572
  %v5574 = vcombine.high %v5566, %v5566
  %v5575 = vcombine.high %v5573, %v5573
  %v5576 = vcombine.high %v5340, %v5340
  %v5578 = vunpack.c.l.s4 1983009808
  %v5579 = vunpack.c.0.s8 %v5578
  %v5580 = vlaneseq
  %v5581 = vshrl.u32 %v5580, 7
  %v5582 = vsub.s32 %v5579, %v5581
  %v5583 = vrot.slane %v5340, %v5582
  %v5585 = vunpack.c.l.s4 1983009808
  %v5586 = vunpack.c.0.s8 %v5585
  %v5587 = vlaneseq
  %v5588 = vshrl.u32 %v5587, 7
  %v5589 = vsub.s32 %v5586, %v5588
  %v5590 = vrot.slane %v5576, %v5589
  %v5591 = vcombine.high %v5583, %v5583
  %v5592 = vcombine.high %v5590, %v5590
  %v5593 = vcombine.low %v5362, %v5370
  %v5594 = vcombine.low %v5369, %v5371
  %v5596 = vunpack.c.l.s4 1983009808
  %v5597 = vunpack.c.0.s8 %v5596
  %v5598 = vlaneseq
  %v5599 = vshrl.u32 %v5598, 7
  %v5600 = vsub.s32 %v5597, %v5599
  %v5601 = vrot.slane %v5593, %v5600
  %v5603 = vunpack.c.l.s4 1983009808
  %v5604 = vunpack.c.0.s8 %v5603
  %v5605 = vlaneseq
  %v5606 = vshrl.u32 %v5605, 7
  %v5607 = vsub.s32 %v5604, %v5606
  %v5608 = vrot.slane %v5594, %v5607
  %v5609 = vcombine.low %v5601, %v5608
  %v5610 = vcombine.low %v5379, %v5387
  %v5612 = vunpack.c.l.s4 1983009808
  %v5613 = vunpack.c.0.s8 %v5612
  %v5614 = vlaneseq
  %v5615 = vshrl.u32 %v5614, 7
  %v5616 = vsub.s32 %v5613, %v5615
  %v5617 = vrot.slane %v5610, %v5616
  %v5619 = vunpack.c.l.s4 1983009808
  %v5620 = vunpack.c.0.s8 %v5619
  %v5621 = vlaneseq
  %v5622 = vshrl.u32 %v5621, 7
  %v5623 = vsub.s32 %v5620, %v5622
  %v5624 = vrot.slane %v5386, %v5623
  %v5625 = vcombine.low %v5617, %v5624
  %v5626 = vcombine.low %v5388, %v5396
  %v5627 = vcombine.low %v5404, %v5403
  %v5629 = vunpack.c.l.s4 1983009808
  %v5630 = vunpack.c.0.s8 %v5629
  %v5631 = vlaneseq
  %v5632 = vshrl.u32 %v5631, 7
  %v5633 = vsub.s32 %v5630, %v5632
  %v5634 = vrot.slane %v5626, %v5633
  %v5636 = vunpack.c.l.s4 1983009808
  %v5637 = vunpack.c.0.s8 %v5636
  %v5638 = vlaneseq
  %v5639 = vshrl.u32 %v5638, 7
  %v5640 = vsub.s32 %v5637, %v5639
  %v5641 = vrot.slane %v5627, %v5640
  %v5642 = vcombine.low %v5634, %v5641
  %v5643 = vcombine.low %v5405, %v5413
  %v5645 = vunpack.c.l.s4 1983009808
  %v5646 = vunpack.c.0.s8 %v5645
  %v5647 = vlaneseq
  %v5648 = vshrl.u32 %v5647, 7
  %v5649 = vsub.s32 %v5646, %v5648
  %v5650 = vrot.slane %v5643, %v5649
  %v5652 = vunpack.c.l.s4 1983009808
  %v5653 = vunpack.c.0.s8 %v5652
  %v5654 = vlaneseq
  %v5655 = vshrl.u32 %v5654, 7
  %v5656 = vsub.s32 %v5653, %v5655
  %v5657 = vrot.slane %v5421, %v5656
  %v5658 = vcombine.low %v5650, %v5657
  %v5659 = vcombine.low %v5420, %v5422
  %v5660 = vcombine.low %v5430, %v5438
  %v5662 = vunpack.c.l.s4 1983009808
  %v5663 = vunpack.c.0.s8 %v5662
  %v5664 = vlaneseq
  %v5665 = vshrl.u32 %v5664, 7
  %v5666 = vsub.s32 %v5663, %v5665
  %v5667 = vrot.slane %v5659, %v5666
  %v5669 = vunpack.c.l.s4 1983009808
  %v5670 = vunpack.c.0.s8 %v5669
  %v5671 = vlaneseq
  %v5672 = vshrl.u32 %v5671, 7
  %v5673 = vsub.s32 %v5670, %v5672
  %v5674 = vrot.slane %v5660, %v5673
  %v5675 = vcombine.low %v5667, %v5674
  %v5676 = vcombine.low %v5437, %v5439
  %v5678 = vunpack.c.l.s4 1983009808
  %v5679 = vunpack.c.0.s8 %v5678
  %v5680 = vlaneseq
  %v5681 = vshrl.u32 %v5680, 7
  %v5682 = vsub.s32 %v5679, %v5681
  %v5683 = vrot.slane %v5676, %v5682
  %v5685 = vunpack.c.l.s4 1983009808
  %v5686 = vunpack.c.0.s8 %v5685
  %v5687 = vlaneseq
  %v5688 = vshrl.u32 %v5687, 7
  %v5689 = vsub.s32 %v5686, %v5688
  %v5690 = vrot.slane %v5447, %v5689
  %v5691 = vcombine.low %v5683, %v5690
  %v5692 = vcombine.low %v5455, %v5454
  %v5693 = vcombine.low %v5456, %v5464
  %v5695 = vunpack.c.l.s4 1983009808
  %v5696 = vunpack.c.0.s8 %v5695
  %v5697 = vlaneseq
  %v5698 = vshrl.u32 %v5697, 7
  %v5699 = vsub.s32 %v5696, %v5698
  %v5700 = vrot.slane %v5692, %v5699
  %v5702 = vunpack.c.l.s4 1983009808
  %v5703 = vunpack.c.0.s8 %v5702
  %v5704 = vlaneseq
  %v5705 = vshrl.u32 %v5704, 7
  %v5706 = vsub.s32 %v5703, %v5705
  %v5707 = vrot.slane %v5693, %v5706
  %v5708 = vcombine.low %v5700, %v5707
  %v5709 = vcombine.low %v5472, %v5471
  %v5711 = vunpack.c.l.s4 1983009808
  %v5712 = vunpack.c.0.s8 %v5711
  %v5713 = vlaneseq
  %v5714 = vshrl.u32 %v5713, 7
  %v5715 = vsub.s32 %v5712, %v5714
  %v5716 = vrot.slane %v5709, %v5715
  %v5718 = vunpack.c.l.s4 1983009808
  %v5719 = vunpack.c.0.s8 %v5718
  %v5720 = vlaneseq
  %v5721 = vshrl.u32 %v5720, 7
  %v5722 = vsub.s32 %v5719, %v5721
  %v5723 = vrot.slane %v5473, %v5722
  %v5724 = vcombine.low %v5716, %v5723
  %v5725 = vcombine.low %v5481, %v5489
  %v5726 = vcombine.low %v5488, %v5490
  %v5728 = vunpack.c.l.s4 1983009808
  %v5729 = vunpack.c.0.s8 %v5728
  %v5730 = vlaneseq
  %v5731 = vshrl.u32 %v5730, 7
  %v5732 = vsub.s32 %v5729, %v5731
  %v5733 = vrot.slane %v5725, %v5732
  %v5735 = vunpack.c.l.s4 1983009808
  %v5736 = vunpack.c.0.s8 %v5735
  %v5737 = vlaneseq
  %v5738 = vshrl.u32 %v5737, 7
  %v5739 = vsub.s32 %v5736, %v5738
  %v5740 = vrot.slane %v5726, %v5739
  %v5741 = vcombine.low %v5733, %v5740
  %v5742 = vcombine.low %v5498, %v5506
  %v5744 = vunpack.c.l.s4 1983009808
  %v5745 = vunpack.c.0.s8 %v5744
  %v5746 = vlaneseq
  %v5747 = vshrl.u32 %v5746, 7
  %v5748 = vsub.s32 %v5745, %v5747
  %v5749 = vrot.slane %v5742, %v5748
  %v5751 = vunpack.c.l.s4 1983009808
  %v5752 = vunpack.c.0.s8 %v5751
  %v5753 = vlaneseq
  %v5754 = vshrl.u32 %v5753, 7
  %v5755 = vsub.s32 %v5752, %v5754
  %v5756 = vrot.slane %v5505, %v5755
  %v5757 = vcombine.low %v5749, %v5756
  %v5758 = vcombine.low %v5507, %v5515
  %v5759 = vcombine.low %v5523, %v5522
  %v5761 = vunpack.c.l.s4 1983009808
  %v5762 = vunpack.c.0.s8 %v5761
  %v5763 = vlaneseq
  %v5764 = vshrl.u32 %v5763, 7
  %v5765 = vsub.s32 %v5762, %v5764
  %v5766 = vrot.slane %v5758, %v5765
  %v5768 = vunpack.c.l.s4 1983009808
  %v5769 = vunpack.c.0.s8 %v5768
  %v5770 = vlaneseq
  %v5771 = vshrl.u32 %v5770, 7
  %v5772 = vsub.s32 %v5769, %v5771
  %v5773 = vrot.slane %v5759, %v5772
  %v5774 = vcombine.low %v5766, %v5773
  %v5775 = vcombine.low %v5524, %v5532
  %v5777 = vunpack.c.l.s4 1983009808
  %v5778 = vunpack.c.0.s8 %v5777
  %v5779 = vlaneseq
  %v5780 = vshrl.u32 %v5779, 7
  %v5781 = vsub.s32 %v5778, %v5780
  %v5782 = vrot.slane %v5775, %v5781
  %v5784 = vunpack.c.l.s4 1983009808
  %v5785 = vunpack.c.0.s8 %v5784
  %v5786 = vlaneseq
  %v5787 = vshrl.u32 %v5786, 7
  %v5788 = vsub.s32 %v5785, %v5787
  %v5789 = vrot.slane %v5540, %v5788
  %v5790 = vcombine.low %v5782, %v5789
  %v5791 = vcombine.low %v5539, %v5541
  %v5792 = vcombine.low %v5549, %v5557
  %v5794 = vunpack.c.l.s4 1983009808
  %v5795 = vunpack.c.0.s8 %v5794
  %v5796 = vlaneseq
  %v5797 = vshrl.u32 %v5796, 7
  %v5798 = vsub.s32 %v5795, %v5797
  %v5799 = vrot.slane %v5791, %v5798
  %v5801 = vunpack.c.l.s4 1983009808
  %v5802 = vunpack.c.0.s8 %v5801
  %v5803 = vlaneseq
  %v5804 = vshrl.u32 %v5803, 7
  %v5805 = vsub.s32 %v5802, %v5804
  %v5806 = vrot.slane %v5792, %v5805
  %v5807 = vcombine.low %v5799, %v5806
  %v5808 = vcombine.low %v5556, %v5558
  %v5810 = vunpack.c.l.s4 1983009808
  %v5811 = vunpack.c.0.s8 %v5810
  %v5812 = vlaneseq
  %v5813 = vshrl.u32 %v5812, 7
  %v5814 = vsub.s32 %v5811, %v5813
  %v5815 = vrot.slane %v5808, %v5814
  %v5817 = vunpack.c.l.s4 1983009808
  %v5818 = vunpack.c.0.s8 %v5817
  %v5819 = vlaneseq
  %v5820 = vshrl.u32 %v5819, 7
  %v5821 = vsub.s32 %v5818, %v5820
  %v5822 = vrot.slane %v5566, %v5821
  %v5823 = vcombine.low %v5815, %v5822
  %v5824 = vcombine.low %v5574, %v5573
  %v5825 = vcombine.low %v5575, %v5583
  %v5827 = vunpack.c.l.s4 1983009808
  %v5828 = vunpack.c.0.s8 %v5827
  %v5829 = vlaneseq
  %v5830 = vshrl.u32 %v5829, 7
  %v5831 = vsub.s32 %v5828, %v5830
  %v5832 = vrot.slane %v5824, %v5831
  %v5834 = vunpack.c.l.s4 1983009808
  %v5835 = vunpack.c.0.s8 %v5834
  %v5836 = vlaneseq
  %v5837 = vshrl.u32 %v5836, 7
  %v5838 = vsub.s32 %v5835, %v5837
  %v5839 = vrot.slane %v5825, %v5838
  %v5840 = vcombine.low %v5832, %v5839
  %v5841 = vcombine.low %v5591, %v5590
  %v5843 = vunpack.c.l.s4 1983009808
  %v5844 = vunpack.c.0.s8 %v5843
  %v5845 = vlaneseq
  %v5846 = vshrl.u32 %v5845, 7
  %v5847 = vsub.s32 %v5844, %v5846
  %v5848 = vrot.slane %v5841, %v5847
  %v5850 = vunpack.c.l.s4 1983009808
  %v5851 = vunpack.c.0.s8 %v5850
  %v5852 = vlaneseq
  %v5853 = vshrl.u32 %v5852, 7
  %v5854 = vsub.s32 %v5851, %v5853
  %v5855 = vrot.slane %v5592, %v5854
  %v5856 = vcombine.low %v5848, %v5855
  %v5873 = vsel %vm278, %v5609, -inf
  %vm5874 = vcmask 128000
  %v5875 = vsel %vm5874, %v5625, -inf
  %v5876 = vmax.f32 %v5873, %v5875
  %v5877 = vrot.slane %v5876, 4
  %v5878 = vmax.f32 %v5876, %v5877
  %v5879 = vrot.slane %v5878, 2
  %v5880 = vmax.f32 %v5878, %v5879
  %v5881 = vrot.slane %v5880, 1
  %v5882 = vmax.f32 %v5880, %v5881
  %v5883 = vsel %vm278, %v5642, -inf
  %v5884 = vsel %vm5874, %v5658, -inf
  %v5885 = vmax.f32 %v5883, %v5884
  %v5886 = vrot.slane %v5885, 4
  %v5887 = vmax.f32 %v5885, %v5886
  %v5888 = vrot.slane %v5887, 2
  %v5889 = vmax.f32 %v5887, %v5888
  %v5890 = vrot.slane %v5889, 1
  %v5891 = vmax.f32 %v5889, %v5890
  %v5892 = vsel %vm278, %v5675, -inf
  %v5893 = vsel %vm5874, %v5691, -inf
  %v5894 = vmax.f32 %v5892, %v5893
  %v5895 = vrot.slane %v5894, 4
  %v5896 = vmax.f32 %v5894, %v5895
  %v5897 = vrot.slane %v5896, 2
  %v5898 = vmax.f32 %v5896, %v5897
  %v5899 = vrot.slane %v5898, 1
  %v5900 = vmax.f32 %v5898, %v5899
  %v5901 = vsel %vm278, %v5708, -inf
  %v5902 = vsel %vm5874, %v5724, -inf
  %v5903 = vmax.f32 %v5901, %v5902
  %v5904 = vrot.slane %v5903, 4
  %v5905 = vmax.f32 %v5903, %v5904
  %v5906 = vrot.slane %v5905, 2
  %v5907 = vmax.f32 %v5905, %v5906
  %v5908 = vrot.slane %v5907, 1
  %v5909 = vmax.f32 %v5907, %v5908
  %v5910 = vsel %vm278, %v5741, -inf
  %v5911 = vsel %vm5874, %v5757, -inf
  %v5912 = vmax.f32 %v5910, %v5911
  %v5913 = vrot.slane %v5912, 4
  %v5914 = vmax.f32 %v5912, %v5913
  %v5915 = vrot.slane %v5914, 2
  %v5916 = vmax.f32 %v5914, %v5915
  %v5917 = vrot.slane %v5916, 1
  %v5918 = vmax.f32 %v5916, %v5917
  %v5919 = vsel %vm278, %v5774, -inf
  %v5920 = vsel %vm5874, %v5790, -inf
  %v5921 = vmax.f32 %v5919, %v5920
  %v5922 = vrot.slane %v5921, 4
  %v5923 = vmax.f32 %v5921, %v5922
  %v5924 = vrot.slane %v5923, 2
  %v5925 = vmax.f32 %v5923, %v5924
  %v5926 = vrot.slane %v5925, 1
  %v5927 = vmax.f32 %v5925, %v5926
  %v5928 = vsel %vm278, %v5807, -inf
  %v5929 = vsel %vm5874, %v5823, -inf
  %v5930 = vmax.f32 %v5928, %v5929
  %v5931 = vrot.slane %v5930, 4
  %v5932 = vmax.f32 %v5930, %v5931
  %v5933 = vrot.slane %v5932, 2
  %v5934 = vmax.f32 %v5932, %v5933
  %v5935 = vrot.slane %v5934, 1
  %v5936 = vmax.f32 %v5934, %v5935
  %v5937 = vsel %vm278, %v5840, -inf
  %v5938 = vsel %vm5874, %v5856, -inf
  %v5939 = vmax.f32 %v5937, %v5938
  %v5940 = vrot.slane %v5939, 4
  %v5941 = vmax.f32 %v5939, %v5940
  %v5942 = vrot.slane %v5941, 2
  %v5943 = vmax.f32 %v5941, %v5942
  %v5944 = vrot.slane %v5943, 1
  %v5945 = vmax.f32 %v5943, %v5944
  %vm5946 = vcmask 1045504
  %v5947 = vrot.slane %v32, 2
  %v5948 = vrot.slane %v33, 2
  %v5949 = vsel %vm5946, %v5947, %v5948
  %v5950 = vrot.slane %v34, 2
  %v5951 = vrot.slane %v35, 2
  %v5952 = vsel %vm5946, %v5950, %v5951
  %v5953 = vrot.slane %v36, 2
  %v5954 = vrot.slane %v37, 2
  %v5955 = vsel %vm5946, %v5953, %v5954
  %v5956 = vrot.slane %v38, 2
  %v5957 = vrot.slane %v39, 2
  %v5958 = vsel %vm5946, %v5956, %v5957
  %v5959 = vrot.slane %v40, 2
  %v5960 = vrot.slane %v41, 2
  %v5961 = vsel %vm5946, %v5959, %v5960
  %v5962 = vrot.slane %v42, 2
  %v5963 = vrot.slane %v43, 2
  %v5964 = vsel %vm5946, %v5962, %v5963
  %v5965 = vrot.slane %v44, 2
  %v5966 = vrot.slane %v45, 2
  %v5967 = vsel %vm5946, %v5965, %v5966
  %v5968 = vrot.slane %v46, 2
  %v5969 = vrot.slane %v47, 2
  %v5970 = vsel %vm5946, %v5968, %v5969
  %5971 = vrot.lane.b32.xlu0 %v5949, 64
  %v5972 = vpop.permute.xlu0 %5971
  %5973 = vrot.lane.b32.xlu0 %v5948, 64
  %v5974 = vpop.permute.xlu0 %5973
  %5975 = vrot.lane.b32.xlu0 %v5952, 64
  %v5976 = vpop.permute.xlu0 %5975
  %5977 = vrot.lane.b32.xlu0 %v5951, 64
  %v5978 = vpop.permute.xlu0 %5977
  %5979 = vrot.lane.b32.xlu0 %v5955, 64
  %v5980 = vpop.permute.xlu0 %5979
  %5981 = vrot.lane.b32.xlu0 %v5954, 64
  %v5982 = vpop.permute.xlu0 %5981
  %5983 = vrot.lane.b32.xlu0 %v5958, 64
  %v5984 = vpop.permute.xlu0 %5983
  %5985 = vrot.lane.b32.xlu0 %v5957, 64
  %v5986 = vpop.permute.xlu0 %5985
  %5987 = vrot.lane.b32.xlu0 %v5961, 64
  %v5988 = vpop.permute.xlu0 %5987
  %5989 = vrot.lane.b32.xlu0 %v5960, 64
  %v5990 = vpop.permute.xlu0 %5989
  %5991 = vrot.lane.b32.xlu0 %v5964, 64
  %v5992 = vpop.permute.xlu0 %5991
  %5993 = vrot.lane.b32.xlu0 %v5963, 64
  %v5994 = vpop.permute.xlu0 %5993
  %5995 = vrot.lane.b32.xlu0 %v5967, 64
  %v5996 = vpop.permute.xlu0 %5995
  %5997 = vrot.lane.b32.xlu0 %v5966, 64
  %v5998 = vpop.permute.xlu0 %5997
  %5999 = vrot.lane.b32.xlu0 %v5970, 64
  %v6000 = vpop.permute.xlu0 %5999
  %6001 = vrot.lane.b32.xlu0 %v5969, 64
  %v6002 = vpop.permute.xlu0 %6001
  %v6019 = vsel %vm2193, %v633, %v5972
  %v6020 = vsel %vm2193, %v634, %v5974
  %v6021 = vsel %vm2193, %v635, %v5976
  %v6022 = vsel %vm2193, %v636, %v5978
  %v6023 = vsel %vm2193, %v637, %v5980
  %v6024 = vsel %vm2193, %v638, %v5982
  %v6025 = vsel %vm2193, %v639, %v5984
  %v6026 = vsel %vm2193, %v640, %v5986
  %v6027 = vsel %vm2193, %v641, %v5988
  %v6028 = vsel %vm2193, %v642, %v5990
  %v6029 = vsel %vm2193, %v643, %v5992
  %v6030 = vsel %vm2193, %v644, %v5994
  %v6031 = vsel %vm2193, %v645, %v5996
  %v6032 = vsel %vm2193, %v646, %v5998
  %v6033 = vsel %vm2193, %v647, %v6000
  %v6034 = vsel %vm2193, %v648, %v6002
  %v6051 = vcombine.high %v6019, %v6019
  %v6053 = vunpack.c.l.s4 1983009808
  %v6054 = vunpack.c.0.s8 %v6053
  %v6055 = vlaneseq
  %v6056 = vshrl.u32 %v6055, 7
  %v6057 = vsub.s32 %v6054, %v6056
  %v6058 = vrot.slane %v6019, %v6057
  %v6060 = vunpack.c.l.s4 1983009808
  %v6061 = vunpack.c.0.s8 %v6060
  %v6062 = vlaneseq
  %v6063 = vshrl.u32 %v6062, 7
  %v6064 = vsub.s32 %v6061, %v6063
  %v6065 = vrot.slane %v6051, %v6064
  %v6066 = vcombine.high %v6058, %v6058
  %v6067 = vcombine.high %v6065, %v6065
  %v6068 = vcombine.high %v6020, %v6020
  %v6070 = vunpack.c.l.s4 1983009808
  %v6071 = vunpack.c.0.s8 %v6070
  %v6072 = vlaneseq
  %v6073 = vshrl.u32 %v6072, 7
  %v6074 = vsub.s32 %v6071, %v6073
  %v6075 = vrot.slane %v6020, %v6074
  %v6077 = vunpack.c.l.s4 1983009808
  %v6078 = vunpack.c.0.s8 %v6077
  %v6079 = vlaneseq
  %v6080 = vshrl.u32 %v6079, 7
  %v6081 = vsub.s32 %v6078, %v6080
  %v6082 = vrot.slane %v6068, %v6081
  %v6083 = vcombine.high %v6075, %v6075
  %v6084 = vcombine.high %v6021, %v6021
  %v6086 = vunpack.c.l.s4 1983009808
  %v6087 = vunpack.c.0.s8 %v6086
  %v6088 = vlaneseq
  %v6089 = vshrl.u32 %v6088, 7
  %v6090 = vsub.s32 %v6087, %v6089
  %v6091 = vrot.slane %v6021, %v6090
  %v6093 = vunpack.c.l.s4 1983009808
  %v6094 = vunpack.c.0.s8 %v6093
  %v6095 = vlaneseq
  %v6096 = vshrl.u32 %v6095, 7
  %v6097 = vsub.s32 %v6094, %v6096
  %v6098 = vrot.slane %v6084, %v6097
  %v6099 = vcombine.high %v6091, %v6091
  %v6100 = vcombine.high %v6098, %v6098
  %v6101 = vcombine.high %v6022, %v6022
  %v6103 = vunpack.c.l.s4 1983009808
  %v6104 = vunpack.c.0.s8 %v6103
  %v6105 = vlaneseq
  %v6106 = vshrl.u32 %v6105, 7
  %v6107 = vsub.s32 %v6104, %v6106
  %v6108 = vrot.slane %v6022, %v6107
  %v6110 = vunpack.c.l.s4 1983009808
  %v6111 = vunpack.c.0.s8 %v6110
  %v6112 = vlaneseq
  %v6113 = vshrl.u32 %v6112, 7
  %v6114 = vsub.s32 %v6111, %v6113
  %v6115 = vrot.slane %v6101, %v6114
  %v6116 = vcombine.high %v6108, %v6108
  %v6117 = vcombine.high %v6023, %v6023
  %v6119 = vunpack.c.l.s4 1983009808
  %v6120 = vunpack.c.0.s8 %v6119
  %v6121 = vlaneseq
  %v6122 = vshrl.u32 %v6121, 7
  %v6123 = vsub.s32 %v6120, %v6122
  %v6124 = vrot.slane %v6023, %v6123
  %v6126 = vunpack.c.l.s4 1983009808
  %v6127 = vunpack.c.0.s8 %v6126
  %v6128 = vlaneseq
  %v6129 = vshrl.u32 %v6128, 7
  %v6130 = vsub.s32 %v6127, %v6129
  %v6131 = vrot.slane %v6117, %v6130
  %v6132 = vcombine.high %v6124, %v6124
  %v6133 = vcombine.high %v6131, %v6131
  %v6134 = vcombine.high %v6024, %v6024
  %v6136 = vunpack.c.l.s4 1983009808
  %v6137 = vunpack.c.0.s8 %v6136
  %v6138 = vlaneseq
  %v6139 = vshrl.u32 %v6138, 7
  %v6140 = vsub.s32 %v6137, %v6139
  %v6141 = vrot.slane %v6024, %v6140
  %v6143 = vunpack.c.l.s4 1983009808
  %v6144 = vunpack.c.0.s8 %v6143
  %v6145 = vlaneseq
  %v6146 = vshrl.u32 %v6145, 7
  %v6147 = vsub.s32 %v6144, %v6146
  %v6148 = vrot.slane %v6134, %v6147
  %v6149 = vcombine.high %v6141, %v6141
  %v6150 = vcombine.high %v6025, %v6025
  %v6152 = vunpack.c.l.s4 1983009808
  %v6153 = vunpack.c.0.s8 %v6152
  %v6154 = vlaneseq
  %v6155 = vshrl.u32 %v6154, 7
  %v6156 = vsub.s32 %v6153, %v6155
  %v6157 = vrot.slane %v6025, %v6156
  %v6159 = vunpack.c.l.s4 1983009808
  %v6160 = vunpack.c.0.s8 %v6159
  %v6161 = vlaneseq
  %v6162 = vshrl.u32 %v6161, 7
  %v6163 = vsub.s32 %v6160, %v6162
  %v6164 = vrot.slane %v6150, %v6163
  %v6165 = vcombine.high %v6157, %v6157
  %v6166 = vcombine.high %v6164, %v6164
  %v6167 = vcombine.high %v6026, %v6026
  %v6169 = vunpack.c.l.s4 1983009808
  %v6170 = vunpack.c.0.s8 %v6169
  %v6171 = vlaneseq
  %v6172 = vshrl.u32 %v6171, 7
  %v6173 = vsub.s32 %v6170, %v6172
  %v6174 = vrot.slane %v6026, %v6173
  %v6176 = vunpack.c.l.s4 1983009808
  %v6177 = vunpack.c.0.s8 %v6176
  %v6178 = vlaneseq
  %v6179 = vshrl.u32 %v6178, 7
  %v6180 = vsub.s32 %v6177, %v6179
  %v6181 = vrot.slane %v6167, %v6180
  %v6182 = vcombine.high %v6174, %v6174
  %v6183 = vcombine.high %v6027, %v6027
  %v6185 = vunpack.c.l.s4 1983009808
  %v6186 = vunpack.c.0.s8 %v6185
  %v6187 = vlaneseq
  %v6188 = vshrl.u32 %v6187, 7
  %v6189 = vsub.s32 %v6186, %v6188
  %v6190 = vrot.slane %v6027, %v6189
  %v6192 = vunpack.c.l.s4 1983009808
  %v6193 = vunpack.c.0.s8 %v6192
  %v6194 = vlaneseq
  %v6195 = vshrl.u32 %v6194, 7
  %v6196 = vsub.s32 %v6193, %v6195
  %v6197 = vrot.slane %v6183, %v6196
  %v6198 = vcombine.high %v6190, %v6190
  %v6199 = vcombine.high %v6197, %v6197
  %v6200 = vcombine.high %v6028, %v6028
  %v6202 = vunpack.c.l.s4 1983009808
  %v6203 = vunpack.c.0.s8 %v6202
  %v6204 = vlaneseq
  %v6205 = vshrl.u32 %v6204, 7
  %v6206 = vsub.s32 %v6203, %v6205
  %v6207 = vrot.slane %v6028, %v6206
  %v6209 = vunpack.c.l.s4 1983009808
  %v6210 = vunpack.c.0.s8 %v6209
  %v6211 = vlaneseq
  %v6212 = vshrl.u32 %v6211, 7
  %v6213 = vsub.s32 %v6210, %v6212
  %v6214 = vrot.slane %v6200, %v6213
  %v6215 = vcombine.high %v6207, %v6207
  %v6216 = vcombine.high %v6029, %v6029
  %v6218 = vunpack.c.l.s4 1983009808
  %v6219 = vunpack.c.0.s8 %v6218
  %v6220 = vlaneseq
  %v6221 = vshrl.u32 %v6220, 7
  %v6222 = vsub.s32 %v6219, %v6221
  %v6223 = vrot.slane %v6029, %v6222
  %v6225 = vunpack.c.l.s4 1983009808
  %v6226 = vunpack.c.0.s8 %v6225
  %v6227 = vlaneseq
  %v6228 = vshrl.u32 %v6227, 7
  %v6229 = vsub.s32 %v6226, %v6228
  %v6230 = vrot.slane %v6216, %v6229
  %v6231 = vcombine.high %v6223, %v6223
  %v6232 = vcombine.high %v6230, %v6230
  %v6233 = vcombine.high %v6030, %v6030
  %v6235 = vunpack.c.l.s4 1983009808
  %v6236 = vunpack.c.0.s8 %v6235
  %v6237 = vlaneseq
  %v6238 = vshrl.u32 %v6237, 7
  %v6239 = vsub.s32 %v6236, %v6238
  %v6240 = vrot.slane %v6030, %v6239
  %v6242 = vunpack.c.l.s4 1983009808
  %v6243 = vunpack.c.0.s8 %v6242
  %v6244 = vlaneseq
  %v6245 = vshrl.u32 %v6244, 7
  %v6246 = vsub.s32 %v6243, %v6245
  %v6247 = vrot.slane %v6233, %v6246
  %v6248 = vcombine.high %v6240, %v6240
  %v6249 = vcombine.high %v6031, %v6031
  %v6251 = vunpack.c.l.s4 1983009808
  %v6252 = vunpack.c.0.s8 %v6251
  %v6253 = vlaneseq
  %v6254 = vshrl.u32 %v6253, 7
  %v6255 = vsub.s32 %v6252, %v6254
  %v6256 = vrot.slane %v6031, %v6255
  %v6258 = vunpack.c.l.s4 1983009808
  %v6259 = vunpack.c.0.s8 %v6258
  %v6260 = vlaneseq
  %v6261 = vshrl.u32 %v6260, 7
  %v6262 = vsub.s32 %v6259, %v6261
  %v6263 = vrot.slane %v6249, %v6262
  %v6264 = vcombine.high %v6256, %v6256
  %v6265 = vcombine.high %v6263, %v6263
  %v6266 = vcombine.high %v6032, %v6032
  %v6268 = vunpack.c.l.s4 1983009808
  %v6269 = vunpack.c.0.s8 %v6268
  %v6270 = vlaneseq
  %v6271 = vshrl.u32 %v6270, 7
  %v6272 = vsub.s32 %v6269, %v6271
  %v6273 = vrot.slane %v6032, %v6272
  %v6275 = vunpack.c.l.s4 1983009808
  %v6276 = vunpack.c.0.s8 %v6275
  %v6277 = vlaneseq
  %v6278 = vshrl.u32 %v6277, 7
  %v6279 = vsub.s32 %v6276, %v6278
  %v6280 = vrot.slane %v6266, %v6279
  %v6281 = vcombine.high %v6273, %v6273
  %v6282 = vcombine.high %v6033, %v6033
  %v6284 = vunpack.c.l.s4 1983009808
  %v6285 = vunpack.c.0.s8 %v6284
  %v6286 = vlaneseq
  %v6287 = vshrl.u32 %v6286, 7
  %v6288 = vsub.s32 %v6285, %v6287
  %v6289 = vrot.slane %v6033, %v6288
  %v6291 = vunpack.c.l.s4 1983009808
  %v6292 = vunpack.c.0.s8 %v6291
  %v6293 = vlaneseq
  %v6294 = vshrl.u32 %v6293, 7
  %v6295 = vsub.s32 %v6292, %v6294
  %v6296 = vrot.slane %v6282, %v6295
  %v6297 = vcombine.high %v6289, %v6289
  %v6298 = vcombine.high %v6296, %v6296
  %v6299 = vcombine.high %v6034, %v6034
  %v6301 = vunpack.c.l.s4 1983009808
  %v6302 = vunpack.c.0.s8 %v6301
  %v6303 = vlaneseq
  %v6304 = vshrl.u32 %v6303, 7
  %v6305 = vsub.s32 %v6302, %v6304
  %v6306 = vrot.slane %v6034, %v6305
  %v6308 = vunpack.c.l.s4 1983009808
  %v6309 = vunpack.c.0.s8 %v6308
  %v6310 = vlaneseq
  %v6311 = vshrl.u32 %v6310, 7
  %v6312 = vsub.s32 %v6309, %v6311
  %v6313 = vrot.slane %v6299, %v6312
  %v6314 = vcombine.high %v6306, %v6306
  %s6315 = scalar_lea.vmem %s1, 320
  %v6316 = vld [vmem:[%s6315] sm:$0xff]
  %v6317 = vld [vmem:[%s6315 + $0x8] sm:$0xff]
  %v6318 = vld [vmem:[%s6315 + $0x10] sm:$0xff]
  %v6319 = vld [vmem:[%s6315 + $0x18] sm:$0xff]
  %v6320 = vld [vmem:[%s6315 + $0x20] sm:$0xff]
  %v6321 = vld [vmem:[%s6315 + $0x28] sm:$0xff]
  %v6322 = vld [vmem:[%s6315 + $0x30] sm:$0xff]
  %v6323 = vld [vmem:[%s6315 + $0x38] sm:$0xff]
  %v6324 = vld [vmem:[%s6315 + $0x40] sm:$0xff]
  %v6325 = vld [vmem:[%s6315 + $0x48] sm:$0xff]
  %v6326 = vld [vmem:[%s6315 + $0x50] sm:$0xff]
  %v6327 = vld [vmem:[%s6315 + $0x58] sm:$0xff]
  %s6328 = scalar_lea.vmem %s2, 2
  %v6329 = vld [vmem:[%s6328] sm:$0x1]
  %v6331 = vlaneseq
  %v6332 = vshrl.u32 %v6331, 7
  %v6333 = vsub.s32 0, %v6332
  %v6334 = vrot.slane %v6329, %v6333
  %v6336 = vcombine.low %v6058, %v6066
  %v6337 = vcombine.low %v6065, %v6067
  %v6339 = vunpack.c.l.s4 1983009808
  %v6340 = vunpack.c.0.s8 %v6339
  %v6341 = vlaneseq
  %v6342 = vshrl.u32 %v6341, 7
  %v6343 = vsub.s32 %v6340, %v6342
  %v6344 = vrot.slane %v6336, %v6343
  %v6346 = vunpack.c.l.s4 1983009808
  %v6347 = vunpack.c.0.s8 %v6346
  %v6348 = vlaneseq
  %v6349 = vshrl.u32 %v6348, 7
  %v6350 = vsub.s32 %v6347, %v6349
  %v6351 = vrot.slane %v6337, %v6350
  %v6352 = vcombine.low %v6344, %v6351
  %v6353 = vcombine.low %v6075, %v6083
  %v6354 = vcombine.low %v6082, %v6091
  %v6356 = vunpack.c.l.s4 1983009808
  %v6357 = vunpack.c.0.s8 %v6356
  %v6358 = vlaneseq
  %v6359 = vshrl.u32 %v6358, 7
  %v6360 = vsub.s32 %v6357, %v6359
  %v6361 = vrot.slane %v6353, %v6360
  %v6363 = vunpack.c.l.s4 1983009808
  %v6364 = vunpack.c.0.s8 %v6363
  %v6365 = vlaneseq
  %v6366 = vshrl.u32 %v6365, 7
  %v6367 = vsub.s32 %v6364, %v6366
  %v6368 = vrot.slane %v6354, %v6367
  %v6369 = vcombine.low %v6361, %v6368
  %v6370 = vcombine.low %v6099, %v6098
  %v6371 = vcombine.low %v6100, %v6108
  %v6373 = vunpack.c.l.s4 1983009808
  %v6374 = vunpack.c.0.s8 %v6373
  %v6375 = vlaneseq
  %v6376 = vshrl.u32 %v6375, 7
  %v6377 = vsub.s32 %v6374, %v6376
  %v6378 = vrot.slane %v6370, %v6377
  %v6380 = vunpack.c.l.s4 1983009808
  %v6381 = vunpack.c.0.s8 %v6380
  %v6382 = vlaneseq
  %v6383 = vshrl.u32 %v6382, 7
  %v6384 = vsub.s32 %v6381, %v6383
  %v6385 = vrot.slane %v6371, %v6384
  %v6386 = vcombine.low %v6378, %v6385
  %v6387 = vcombine.low %v6116, %v6115
  %v6388 = vcombine.low %v6124, %v6132
  %v6390 = vunpack.c.l.s4 1983009808
  %v6391 = vunpack.c.0.s8 %v6390
  %v6392 = vlaneseq
  %v6393 = vshrl.u32 %v6392, 7
  %v6394 = vsub.s32 %v6391, %v6393
  %v6395 = vrot.slane %v6387, %v6394
  %v6397 = vunpack.c.l.s4 1983009808
  %v6398 = vunpack.c.0.s8 %v6397
  %v6399 = vlaneseq
  %v6400 = vshrl.u32 %v6399, 7
  %v6401 = vsub.s32 %v6398, %v6400
  %v6402 = vrot.slane %v6388, %v6401
  %v6403 = vcombine.low %v6395, %v6402
  %v6404 = vcombine.low %v6131, %v6133
  %v6405 = vcombine.low %v6141, %v6149
  %v6407 = vunpack.c.l.s4 1983009808
  %v6408 = vunpack.c.0.s8 %v6407
  %v6409 = vlaneseq
  %v6410 = vshrl.u32 %v6409, 7
  %v6411 = vsub.s32 %v6408, %v6410
  %v6412 = vrot.slane %v6404, %v6411
  %v6414 = vunpack.c.l.s4 1983009808
  %v6415 = vunpack.c.0.s8 %v6414
  %v6416 = vlaneseq
  %v6417 = vshrl.u32 %v6416, 7
  %v6418 = vsub.s32 %v6415, %v6417
  %v6419 = vrot.slane %v6405, %v6418
  %v6420 = vcombine.low %v6412, %v6419
  %v6421 = vcombine.low %v6148, %v6157
  %v6422 = vcombine.low %v6165, %v6164
  %v6424 = vunpack.c.l.s4 1983009808
  %v6425 = vunpack.c.0.s8 %v6424
  %v6426 = vlaneseq
  %v6427 = vshrl.u32 %v6426, 7
  %v6428 = vsub.s32 %v6425, %v6427
  %v6429 = vrot.slane %v6421, %v6428
  %v6431 = vunpack.c.l.s4 1983009808
  %v6432 = vunpack.c.0.s8 %v6431
  %v6433 = vlaneseq
  %v6434 = vshrl.u32 %v6433, 7
  %v6435 = vsub.s32 %v6432, %v6434
  %v6436 = vrot.slane %v6422, %v6435
  %v6437 = vcombine.low %v6429, %v6436
  %v6438 = vcombine.low %v6166, %v6174
  %v6439 = vcombine.low %v6182, %v6181
  %v6441 = vunpack.c.l.s4 1983009808
  %v6442 = vunpack.c.0.s8 %v6441
  %v6443 = vlaneseq
  %v6444 = vshrl.u32 %v6443, 7
  %v6445 = vsub.s32 %v6442, %v6444
  %v6446 = vrot.slane %v6438, %v6445
  %v6448 = vunpack.c.l.s4 1983009808
  %v6449 = vunpack.c.0.s8 %v6448
  %v6450 = vlaneseq
  %v6451 = vshrl.u32 %v6450, 7
  %v6452 = vsub.s32 %v6449, %v6451
  %v6453 = vrot.slane %v6439, %v6452
  %v6454 = vcombine.low %v6446, %v6453
  %v6455 = vcombine.low %v6190, %v6198
  %v6456 = vcombine.low %v6197, %v6199
  %v6458 = vunpack.c.l.s4 1983009808
  %v6459 = vunpack.c.0.s8 %v6458
  %v6460 = vlaneseq
  %v6461 = vshrl.u32 %v6460, 7
  %v6462 = vsub.s32 %v6459, %v6461
  %v6463 = vrot.slane %v6455, %v6462
  %v6465 = vunpack.c.l.s4 1983009808
  %v6466 = vunpack.c.0.s8 %v6465
  %v6467 = vlaneseq
  %v6468 = vshrl.u32 %v6467, 7
  %v6469 = vsub.s32 %v6466, %v6468
  %v6470 = vrot.slane %v6456, %v6469
  %v6471 = vcombine.low %v6463, %v6470
  %v6472 = vcombine.low %v6207, %v6215
  %v6473 = vcombine.low %v6214, %v6223
  %v6475 = vunpack.c.l.s4 1983009808
  %v6476 = vunpack.c.0.s8 %v6475
  %v6477 = vlaneseq
  %v6478 = vshrl.u32 %v6477, 7
  %v6479 = vsub.s32 %v6476, %v6478
  %v6480 = vrot.slane %v6472, %v6479
  %v6482 = vunpack.c.l.s4 1983009808
  %v6483 = vunpack.c.0.s8 %v6482
  %v6484 = vlaneseq
  %v6485 = vshrl.u32 %v6484, 7
  %v6486 = vsub.s32 %v6483, %v6485
  %v6487 = vrot.slane %v6473, %v6486
  %v6488 = vcombine.low %v6480, %v6487
  %v6489 = vcombine.low %v6231, %v6230
  %v6490 = vcombine.low %v6232, %v6240
  %v6492 = vunpack.c.l.s4 1983009808
  %v6493 = vunpack.c.0.s8 %v6492
  %v6494 = vlaneseq
  %v6495 = vshrl.u32 %v6494, 7
  %v6496 = vsub.s32 %v6493, %v6495
  %v6497 = vrot.slane %v6489, %v6496
  %v6499 = vunpack.c.l.s4 1983009808
  %v6500 = vunpack.c.0.s8 %v6499
  %v6501 = vlaneseq
  %v6502 = vshrl.u32 %v6501, 7
  %v6503 = vsub.s32 %v6500, %v6502
  %v6504 = vrot.slane %v6490, %v6503
  %v6505 = vcombine.low %v6497, %v6504
  %v6506 = vcombine.low %v6248, %v6247
  %v6507 = vcombine.low %v6256, %v6264
  %v6509 = vunpack.c.l.s4 1983009808
  %v6510 = vunpack.c.0.s8 %v6509
  %v6511 = vlaneseq
  %v6512 = vshrl.u32 %v6511, 7
  %v6513 = vsub.s32 %v6510, %v6512
  %v6514 = vrot.slane %v6506, %v6513
  %v6516 = vunpack.c.l.s4 1983009808
  %v6517 = vunpack.c.0.s8 %v6516
  %v6518 = vlaneseq
  %v6519 = vshrl.u32 %v6518, 7
  %v6520 = vsub.s32 %v6517, %v6519
  %v6521 = vrot.slane %v6507, %v6520
  %v6522 = vcombine.low %v6514, %v6521
  %v6523 = vcombine.low %v6263, %v6265
  %v6524 = vcombine.low %v6273, %v6281
  %v6526 = vunpack.c.l.s4 1983009808
  %v6527 = vunpack.c.0.s8 %v6526
  %v6528 = vlaneseq
  %v6529 = vshrl.u32 %v6528, 7
  %v6530 = vsub.s32 %v6527, %v6529
  %v6531 = vrot.slane %v6523, %v6530
  %v6533 = vunpack.c.l.s4 1983009808
  %v6534 = vunpack.c.0.s8 %v6533
  %v6535 = vlaneseq
  %v6536 = vshrl.u32 %v6535, 7
  %v6537 = vsub.s32 %v6534, %v6536
  %v6538 = vrot.slane %v6524, %v6537
  %v6539 = vcombine.low %v6531, %v6538
  %v6540 = vcombine.low %v6280, %v6289
  %v6541 = vcombine.low %v6297, %v6296
  %v6543 = vunpack.c.l.s4 1983009808
  %v6544 = vunpack.c.0.s8 %v6543
  %v6545 = vlaneseq
  %v6546 = vshrl.u32 %v6545, 7
  %v6547 = vsub.s32 %v6544, %v6546
  %v6548 = vrot.slane %v6540, %v6547
  %v6550 = vunpack.c.l.s4 1983009808
  %v6551 = vunpack.c.0.s8 %v6550
  %v6552 = vlaneseq
  %v6553 = vshrl.u32 %v6552, 7
  %v6554 = vsub.s32 %v6551, %v6553
  %v6555 = vrot.slane %v6541, %v6554
  %v6556 = vcombine.low %v6548, %v6555
  %v6557 = vcombine.low %v6298, %v6306
  %v6558 = vcombine.low %v6314, %v6313
  %v6560 = vunpack.c.l.s4 1983009808
  %v6561 = vunpack.c.0.s8 %v6560
  %v6562 = vlaneseq
  %v6563 = vshrl.u32 %v6562, 7
  %v6564 = vsub.s32 %v6561, %v6563
  %v6565 = vrot.slane %v6557, %v6564
  %v6567 = vunpack.c.l.s4 1983009808
  %v6568 = vunpack.c.0.s8 %v6567
  %v6569 = vlaneseq
  %v6570 = vshrl.u32 %v6569, 7
  %v6571 = vsub.s32 %v6568, %v6570
  %v6572 = vrot.slane %v6558, %v6571
  %v6573 = vcombine.low %v6565, %v6572
  %vm6574 = vcmask 785408
  %v6575 = vsel %vm6574, %v6352, 0
  %v6577 = vsel %vm6574, %v6369, 0
  %v6579 = vsel %vm6574, %v6386, 0
  %v6581 = vsel %vm6574, %v6403, 0
  %v6583 = vsel %vm6574, %v6420, 0
  %v6585 = vsel %vm6574, %v6437, 0
  %v6587 = vsel %vm6574, %v6454, 0
  %v6589 = vsel %vm6574, %v6471, 0
  %v6591 = vsel %vm6574, %v6488, 0
  %v6593 = vsel %vm6574, %v6505, 0
  %v6595 = vsel %vm6574, %v6522, 0
  %v6597 = vsel %vm6574, %v6539, 0
  %v6599 = vsel %vm6574, %v6556, 0
  %v6601 = vsel %vm6574, %v6573, 0
  %6603 = vmatprep.subr.mxu0 0.0
  %6604 = vmatpush1.msra.mxu0 %v6316
  %6605 = vmatprep.subr.mxu0 0.0
  %6606 = vmatpush1.msra.mxu0 %v6317
  %6607 = vmatprep.subr.mxu0 0.0
  %6608 = vmatpush1.msra.mxu0 %v6318
  %6609 = vmatprep.subr.mxu0 0.0
  %6610 = vmatpush1.msra.mxu0 %v6319
  %6611 = vmatprep.subr.mxu0 0.0
  %6612 = vmatpush1.msra.mxu0 %v6320
  %6613 = vmatprep.subr.mxu0 0.0
  %6614 = vmatpush1.msra.mxu0 %v6321
  %6615 = vmatprep.subr.mxu0 0.0
  %6616 = vmatpush1.msra.mxu0 %v6322
  %6617 = vmatprep.subr.mxu0 0.0
  %6618 = vmatpush1.msra.mxu0 %v6323
  %6619 = vmatprep.subr.mxu0 0.0
  %6620 = vmatpush1.msra.mxu0 %v6324
  %6621 = vmatprep.subr.mxu0 0.0
  %6622 = vmatpush1.msra.mxu0 %v6325
  %6623 = vmatprep.subr.mxu0 0.0
  %6624 = vmatpush1.msra.mxu0 %v6326
  %6625 = vmatprep.subr.mxu0 0.0
  %6626 = vmatpush1.msra.mxu0 %v6327
  %6627 = vmatprep.subr.mxu0 0.0
  %6628 = vmatpush1.msra.mxu0 0.0
  %6629 = vmatprep.subr.mxu0 0.0
  %6630 = vmatpush1.msra.mxu0 0.0
  %6631 = vmatprep.subr.mxu0 0.0
  %6632 = vmatpush1.msra.mxu0 0.0
  %6633 = vmatprep.subr.mxu0 0.0
  %6634 = vmatpush1.msra.mxu0 0.0
  %6635 = vmatprep.subr.mxu0 0.0
  %6636 = vmatpush1.msra.mxu0 0.0
  %6637 = vmatprep.subr.mxu0 0.0
  %6638 = vmatpush1.msra.mxu0 0.0
  %6639 = vmatprep.subr.mxu0 0.0
  %6640 = vmatpush1.msra.mxu0 0.0
  %6641 = vmatprep.subr.mxu0 0.0
  %6642 = vmatpush1.msra.mxu0 0.0
  %6643 = vmatprep.subr.mxu0 0.0
  %6644 = vmatpush1.msra.mxu0 0.0
  %6645 = vmatprep.subr.mxu0 0.0
  %6646 = vmatpush1.msra.mxu0 0.0
  %6647 = vmatprep.subr.mxu0 0.0
  %6648 = vmatpush1.msra.mxu0 0.0
  %6649 = vmatprep.subr.mxu0 0.0
  %6650 = vmatpush1.msra.mxu0 0.0
  %6651 = vmatprep.subr.mxu0 0.0
  %6652 = vmatpush1.msra.mxu0 0.0
  %6653 = vmatprep.subr.mxu0 0.0
  %6654 = vmatpush1.msra.mxu0 0.0
  %6655 = vmatprep.subr.mxu0 0.0
  %6656 = vmatpush1.msra.mxu0 0.0
  %6657 = vmatprep.subr.mxu0 0.0
  %6658 = vmatpush1.msra.mxu0 0.0
  %6659 = vmatprep.subr.mxu0 0.0
  %6660 = vmatpush1.msra.mxu0 0.0
  %6661 = vmatprep.subr.mxu0 0.0
  %6662 = vmatpush1.msra.mxu0 0.0
  %6663 = vmatprep.subr.mxu0 0.0
  %6664 = vmatpush1.msra.mxu0 0.0
  %6665 = vmatprep.subr.mxu0 0.0
  %6666 = vmatpush1.msra.mxu0 0.0
  %6667 = vmatprep.mubr.f32.mxu0 0.0
  %6668 = vmatmul.mubr.f32.gmra.mrb[0].mxu0 %v6575
  %v6669 = vpop.f32.mrb[0].mxu0
  %v6670 = vadd.f32 %v6334, %v6669
  %v6671 = vpop.f32.mrb[0].mxu0
  %6672 = vmatprep.mubr.f32.mxu0 0.0
  %6673 = vmatmul.mubr.f32.gmra.mrb[0].mxu0 %v6577
  %v6674 = vpop.f32.mrb[0].mxu0
  %v6675 = vadd.f32 %v6334, %v6674
  %v6676 = vpop.f32.mrb[0].mxu0
  %6677 = vmatprep.mubr.f32.mxu0 0.0
  %6678 = vmatmul.mubr.f32.gmra.mrb[0].mxu0 %v6579
  %v6679 = vpop.f32.mrb[0].mxu0
  %v6680 = vadd.f32 %v6334, %v6679
  %v6681 = vpop.f32.mrb[0].mxu0
  %6682 = vmatprep.mubr.f32.mxu0 0.0
  %6683 = vmatmul.mubr.f32.gmra.mrb[0].mxu0 %v6581
  %v6684 = vpop.f32.mrb[0].mxu0
  %v6685 = vadd.f32 %v6334, %v6684
  %v6686 = vpop.f32.mrb[0].mxu0
  %6687 = vmatprep.mubr.f32.mxu0 0.0
  %6688 = vmatmul.mubr.f32.gmra.mrb[0].mxu0 %v6583
  %v6689 = vpop.f32.mrb[0].mxu0
  %v6690 = vadd.f32 %v6334, %v6689
  %v6691 = vpop.f32.mrb[0].mxu0
  %6692 = vmatprep.mubr.f32.mxu0 0.0
  %6693 = vmatmul.mubr.f32.gmra.mrb[0].mxu0 %v6585
  %v6694 = vpop.f32.mrb[0].mxu0
  %v6695 = vadd.f32 %v6334, %v6694
  %v6696 = vpop.f32.mrb[0].mxu0
  %6697 = vmatprep.mubr.f32.mxu0 0.0
  %6698 = vmatmul.mubr.f32.gmra.mrb[0].mxu0 %v6587
  %v6699 = vpop.f32.mrb[0].mxu0
  %v6700 = vadd.f32 %v6334, %v6699
  %v6701 = vpop.f32.mrb[0].mxu0
  %6702 = vmatprep.mubr.f32.mxu0 0.0
  %6703 = vmatmul.mubr.f32.gmra.mrb[0].mxu0 %v6589
  %v6704 = vpop.f32.mrb[0].mxu0
  %v6705 = vadd.f32 %v6334, %v6704
  %v6706 = vpop.f32.mrb[0].mxu0
  %6707 = vmatprep.mubr.f32.mxu0 0.0
  %6708 = vmatmul.mubr.f32.gmra.mrb[0].mxu0 %v6591
  %v6709 = vpop.f32.mrb[0].mxu0
  %v6710 = vadd.f32 %v6334, %v6709
  %v6711 = vpop.f32.mrb[0].mxu0
  %6712 = vmatprep.mubr.f32.mxu0 0.0
  %6713 = vmatmul.mubr.f32.gmra.mrb[0].mxu0 %v6593
  %v6714 = vpop.f32.mrb[0].mxu0
  %v6715 = vadd.f32 %v6334, %v6714
  %v6716 = vpop.f32.mrb[0].mxu0
  %6717 = vmatprep.mubr.f32.mxu0 0.0
  %6718 = vmatmul.mubr.f32.gmra.mrb[0].mxu0 %v6595
  %v6719 = vpop.f32.mrb[0].mxu0
  %v6720 = vadd.f32 %v6334, %v6719
  %v6721 = vpop.f32.mrb[0].mxu0
  %6722 = vmatprep.mubr.f32.mxu0 0.0
  %6723 = vmatmul.mubr.f32.gmra.mrb[0].mxu0 %v6597
  %v6724 = vpop.f32.mrb[0].mxu0
  %v6725 = vadd.f32 %v6334, %v6724
  %v6726 = vpop.f32.mrb[0].mxu0
  %6727 = vmatprep.mubr.f32.mxu0 0.0
  %6728 = vmatmul.mubr.f32.gmra.mrb[0].mxu0 %v6599
  %v6729 = vpop.f32.mrb[0].mxu0
  %v6730 = vadd.f32 %v6334, %v6729
  %v6731 = vpop.f32.mrb[0].mxu0
  %6732 = vmatprep.mubr.f32.mxu0 0.0
  %6733 = vmatmul.mubr.f32.gmra.mrb[0].mxu0 %v6601
  %v6734 = vpop.f32.mrb[0].mxu0
  %v6735 = vadd.f32 %v6334, %v6734
  %v6736 = vpop.f32.mrb[0].mxu0
  %6737 = vdwg.mxu0
  %v6738 = vmax.f32 %v6670, 0.0
  %v6739 = vmax.f32 %v6675, 0.0
  %v6740 = vmax.f32 %v6680, 0.0
  %v6741 = vmax.f32 %v6685, 0.0
  %v6742 = vmax.f32 %v6690, 0.0
  %v6743 = vmax.f32 %v6695, 0.0
  %v6744 = vmax.f32 %v6700, 0.0
  %v6745 = vmax.f32 %v6705, 0.0
  %v6746 = vmax.f32 %v6710, 0.0
  %v6747 = vmax.f32 %v6715, 0.0
  %v6748 = vmax.f32 %v6720, 0.0
  %v6749 = vmax.f32 %v6725, 0.0
  %v6750 = vmax.f32 %v6730, 0.0
  %v6751 = vmax.f32 %v6735, 0.0
  %v6766 = vcombine.high %v6738, %v6738
  %v6768 = vunpack.c.l.s4 1983009808
  %v6769 = vunpack.c.0.s8 %v6768
  %v6770 = vlaneseq
  %v6771 = vshrl.u32 %v6770, 7
  %v6772 = vsub.s32 %v6769, %v6771
  %v6773 = vrot.slane %v6738, %v6772
  %v6775 = vunpack.c.l.s4 1983009808
  %v6776 = vunpack.c.0.s8 %v6775
  %v6777 = vlaneseq
  %v6778 = vshrl.u32 %v6777, 7
  %v6779 = vsub.s32 %v6776, %v6778
  %v6780 = vrot.slane %v6766, %v6779
  %v6781 = vcombine.high %v6773, %v6773
  %v6782 = vcombine.high %v6780, %v6780
  %v6783 = vcombine.high %v6739, %v6739
  %v6785 = vunpack.c.l.s4 1983009808
  %v6786 = vunpack.c.0.s8 %v6785
  %v6787 = vlaneseq
  %v6788 = vshrl.u32 %v6787, 7
  %v6789 = vsub.s32 %v6786, %v6788
  %v6790 = vrot.slane %v6739, %v6789
  %v6792 = vunpack.c.l.s4 1983009808
  %v6793 = vunpack.c.0.s8 %v6792
  %v6794 = vlaneseq
  %v6795 = vshrl.u32 %v6794, 7
  %v6796 = vsub.s32 %v6793, %v6795
  %v6797 = vrot.slane %v6783, %v6796
  %v6798 = vcombine.high %v6790, %v6790
  %v6799 = vcombine.high %v6797, %v6797
  %v6800 = vcombine.high %v6740, %v6740
  %v6802 = vunpack.c.l.s4 1983009808
  %v6803 = vunpack.c.0.s8 %v6802
  %v6804 = vlaneseq
  %v6805 = vshrl.u32 %v6804, 7
  %v6806 = vsub.s32 %v6803, %v6805
  %v6807 = vrot.slane %v6740, %v6806
  %v6809 = vunpack.c.l.s4 1983009808
  %v6810 = vunpack.c.0.s8 %v6809
  %v6811 = vlaneseq
  %v6812 = vshrl.u32 %v6811, 7
  %v6813 = vsub.s32 %v6810, %v6812
  %v6814 = vrot.slane %v6800, %v6813
  %v6815 = vcombine.high %v6807, %v6807
  %v6816 = vcombine.high %v6814, %v6814
  %v6817 = vcombine.high %v6741, %v6741
  %v6819 = vunpack.c.l.s4 1983009808
  %v6820 = vunpack.c.0.s8 %v6819
  %v6821 = vlaneseq
  %v6822 = vshrl.u32 %v6821, 7
  %v6823 = vsub.s32 %v6820, %v6822
  %v6824 = vrot.slane %v6741, %v6823
  %v6826 = vunpack.c.l.s4 1983009808
  %v6827 = vunpack.c.0.s8 %v6826
  %v6828 = vlaneseq
  %v6829 = vshrl.u32 %v6828, 7
  %v6830 = vsub.s32 %v6827, %v6829
  %v6831 = vrot.slane %v6817, %v6830
  %v6832 = vcombine.high %v6824, %v6824
  %v6833 = vcombine.high %v6831, %v6831
  %v6834 = vcombine.high %v6742, %v6742
  %v6836 = vunpack.c.l.s4 1983009808
  %v6837 = vunpack.c.0.s8 %v6836
  %v6838 = vlaneseq
  %v6839 = vshrl.u32 %v6838, 7
  %v6840 = vsub.s32 %v6837, %v6839
  %v6841 = vrot.slane %v6742, %v6840
  %v6843 = vunpack.c.l.s4 1983009808
  %v6844 = vunpack.c.0.s8 %v6843
  %v6845 = vlaneseq
  %v6846 = vshrl.u32 %v6845, 7
  %v6847 = vsub.s32 %v6844, %v6846
  %v6848 = vrot.slane %v6834, %v6847
  %v6849 = vcombine.high %v6841, %v6841
  %v6850 = vcombine.high %v6848, %v6848
  %v6851 = vcombine.high %v6743, %v6743
  %v6853 = vunpack.c.l.s4 1983009808
  %v6854 = vunpack.c.0.s8 %v6853
  %v6855 = vlaneseq
  %v6856 = vshrl.u32 %v6855, 7
  %v6857 = vsub.s32 %v6854, %v6856
  %v6858 = vrot.slane %v6743, %v6857
  %v6860 = vunpack.c.l.s4 1983009808
  %v6861 = vunpack.c.0.s8 %v6860
  %v6862 = vlaneseq
  %v6863 = vshrl.u32 %v6862, 7
  %v6864 = vsub.s32 %v6861, %v6863
  %v6865 = vrot.slane %v6851, %v6864
  %v6866 = vcombine.high %v6858, %v6858
  %v6867 = vcombine.high %v6865, %v6865
  %v6868 = vcombine.high %v6744, %v6744
  %v6870 = vunpack.c.l.s4 1983009808
  %v6871 = vunpack.c.0.s8 %v6870
  %v6872 = vlaneseq
  %v6873 = vshrl.u32 %v6872, 7
  %v6874 = vsub.s32 %v6871, %v6873
  %v6875 = vrot.slane %v6744, %v6874
  %v6877 = vunpack.c.l.s4 1983009808
  %v6878 = vunpack.c.0.s8 %v6877
  %v6879 = vlaneseq
  %v6880 = vshrl.u32 %v6879, 7
  %v6881 = vsub.s32 %v6878, %v6880
  %v6882 = vrot.slane %v6868, %v6881
  %v6883 = vcombine.high %v6875, %v6875
  %v6884 = vcombine.high %v6882, %v6882
  %v6885 = vcombine.high %v6745, %v6745
  %v6887 = vunpack.c.l.s4 1983009808
  %v6888 = vunpack.c.0.s8 %v6887
  %v6889 = vlaneseq
  %v6890 = vshrl.u32 %v6889, 7
  %v6891 = vsub.s32 %v6888, %v6890
  %v6892 = vrot.slane %v6745, %v6891
  %v6894 = vunpack.c.l.s4 1983009808
  %v6895 = vunpack.c.0.s8 %v6894
  %v6896 = vlaneseq
  %v6897 = vshrl.u32 %v6896, 7
  %v6898 = vsub.s32 %v6895, %v6897
  %v6899 = vrot.slane %v6885, %v6898
  %v6900 = vcombine.high %v6892, %v6892
  %v6901 = vcombine.high %v6899, %v6899
  %v6902 = vcombine.high %v6746, %v6746
  %v6904 = vunpack.c.l.s4 1983009808
  %v6905 = vunpack.c.0.s8 %v6904
  %v6906 = vlaneseq
  %v6907 = vshrl.u32 %v6906, 7
  %v6908 = vsub.s32 %v6905, %v6907
  %v6909 = vrot.slane %v6746, %v6908
  %v6911 = vunpack.c.l.s4 1983009808
  %v6912 = vunpack.c.0.s8 %v6911
  %v6913 = vlaneseq
  %v6914 = vshrl.u32 %v6913, 7
  %v6915 = vsub.s32 %v6912, %v6914
  %v6916 = vrot.slane %v6902, %v6915
  %v6917 = vcombine.high %v6909, %v6909
  %v6918 = vcombine.high %v6916, %v6916
  %v6919 = vcombine.high %v6747, %v6747
  %v6921 = vunpack.c.l.s4 1983009808
  %v6922 = vunpack.c.0.s8 %v6921
  %v6923 = vlaneseq
  %v6924 = vshrl.u32 %v6923, 7
  %v6925 = vsub.s32 %v6922, %v6924
  %v6926 = vrot.slane %v6747, %v6925
  %v6928 = vunpack.c.l.s4 1983009808
  %v6929 = vunpack.c.0.s8 %v6928
  %v6930 = vlaneseq
  %v6931 = vshrl.u32 %v6930, 7
  %v6932 = vsub.s32 %v6929, %v6931
  %v6933 = vrot.slane %v6919, %v6932
  %v6934 = vcombine.high %v6926, %v6926
  %v6935 = vcombine.high %v6933, %v6933
  %v6936 = vcombine.high %v6748, %v6748
  %v6938 = vunpack.c.l.s4 1983009808
  %v6939 = vunpack.c.0.s8 %v6938
  %v6940 = vlaneseq
  %v6941 = vshrl.u32 %v6940, 7
  %v6942 = vsub.s32 %v6939, %v6941
  %v6943 = vrot.slane %v6748, %v6942
  %v6945 = vunpack.c.l.s4 1983009808
  %v6946 = vunpack.c.0.s8 %v6945
  %v6947 = vlaneseq
  %v6948 = vshrl.u32 %v6947, 7
  %v6949 = vsub.s32 %v6946, %v6948
  %v6950 = vrot.slane %v6936, %v6949
  %v6951 = vcombine.high %v6943, %v6943
  %v6952 = vcombine.high %v6950, %v6950
  %v6953 = vcombine.high %v6749, %v6749
  %v6955 = vunpack.c.l.s4 1983009808
  %v6956 = vunpack.c.0.s8 %v6955
  %v6957 = vlaneseq
  %v6958 = vshrl.u32 %v6957, 7
  %v6959 = vsub.s32 %v6956, %v6958
  %v6960 = vrot.slane %v6749, %v6959
  %v6962 = vunpack.c.l.s4 1983009808
  %v6963 = vunpack.c.0.s8 %v6962
  %v6964 = vlaneseq
  %v6965 = vshrl.u32 %v6964, 7
  %v6966 = vsub.s32 %v6963, %v6965
  %v6967 = vrot.slane %v6953, %v6966
  %v6968 = vcombine.high %v6960, %v6960
  %v6969 = vcombine.high %v6967, %v6967
  %v6970 = vcombine.high %v6750, %v6750
  %v6972 = vunpack.c.l.s4 1983009808
  %v6973 = vunpack.c.0.s8 %v6972
  %v6974 = vlaneseq
  %v6975 = vshrl.u32 %v6974, 7
  %v6976 = vsub.s32 %v6973, %v6975
  %v6977 = vrot.slane %v6750, %v6976
  %v6979 = vunpack.c.l.s4 1983009808
  %v6980 = vunpack.c.0.s8 %v6979
  %v6981 = vlaneseq
  %v6982 = vshrl.u32 %v6981, 7
  %v6983 = vsub.s32 %v6980, %v6982
  %v6984 = vrot.slane %v6970, %v6983
  %v6985 = vcombine.high %v6977, %v6977
  %v6986 = vcombine.high %v6984, %v6984
  %v6987 = vcombine.high %v6751, %v6751
  %v6989 = vunpack.c.l.s4 1983009808
  %v6990 = vunpack.c.0.s8 %v6989
  %v6991 = vlaneseq
  %v6992 = vshrl.u32 %v6991, 7
  %v6993 = vsub.s32 %v6990, %v6992
  %v6994 = vrot.slane %v6751, %v6993
  %v6996 = vunpack.c.l.s4 1983009808
  %v6997 = vunpack.c.0.s8 %v6996
  %v6998 = vlaneseq
  %v6999 = vshrl.u32 %v6998, 7
  %v7000 = vsub.s32 %v6997, %v6999
  %v7001 = vrot.slane %v6987, %v7000
  %v7002 = vcombine.high %v6994, %v6994
  %v7003 = vcombine.high %v7001, %v7001
  %v7004 = vcombine.low %v6773, %v6781
  %v7005 = vcombine.low %v6780, %v6782
  %v7007 = vunpack.c.l.s4 1983009808
  %v7008 = vunpack.c.0.s8 %v7007
  %v7009 = vlaneseq
  %v7010 = vshrl.u32 %v7009, 7
  %v7011 = vsub.s32 %v7008, %v7010
  %v7012 = vrot.slane %v7004, %v7011
  %v7014 = vunpack.c.l.s4 1983009808
  %v7015 = vunpack.c.0.s8 %v7014
  %v7016 = vlaneseq
  %v7017 = vshrl.u32 %v7016, 7
  %v7018 = vsub.s32 %v7015, %v7017
  %v7019 = vrot.slane %v7005, %v7018
  %v7020 = vcombine.low %v7012, %v7019
  %v7021 = vcombine.low %v6790, %v6798
  %v7023 = vunpack.c.l.s4 1983009808
  %v7024 = vunpack.c.0.s8 %v7023
  %v7025 = vlaneseq
  %v7026 = vshrl.u32 %v7025, 7
  %v7027 = vsub.s32 %v7024, %v7026
  %v7028 = vrot.slane %v7021, %v7027
  %v7029 = vcombine.low %v6799, %v6807
  %v7030 = vcombine.low %v6815, %v6814
  %v7032 = vunpack.c.l.s4 1983009808
  %v7033 = vunpack.c.0.s8 %v7032
  %v7034 = vlaneseq
  %v7035 = vshrl.u32 %v7034, 7
  %v7036 = vsub.s32 %v7033, %v7035
  %v7037 = vrot.slane %v7029, %v7036
  %v7039 = vunpack.c.l.s4 1983009808
  %v7040 = vunpack.c.0.s8 %v7039
  %v7041 = vlaneseq
  %v7042 = vshrl.u32 %v7041, 7
  %v7043 = vsub.s32 %v7040, %v7042
  %v7044 = vrot.slane %v7030, %v7043
  %v7045 = vcombine.low %v7037, %v7044
  %v7046 = vcombine.low %v6816, %v6824
  %v7048 = vunpack.c.l.s4 1983009808
  %v7049 = vunpack.c.0.s8 %v7048
  %v7050 = vlaneseq
  %v7051 = vshrl.u32 %v7050, 7
  %v7052 = vsub.s32 %v7049, %v7051
  %v7053 = vrot.slane %v7046, %v7052
  %v7054 = vcombine.low %v6831, %v6833
  %v7055 = vcombine.low %v6841, %v6849
  %v7057 = vunpack.c.l.s4 1983009808
  %v7058 = vunpack.c.0.s8 %v7057
  %v7059 = vlaneseq
  %v7060 = vshrl.u32 %v7059, 7
  %v7061 = vsub.s32 %v7058, %v7060
  %v7062 = vrot.slane %v7054, %v7061
  %v7064 = vunpack.c.l.s4 1983009808
  %v7065 = vunpack.c.0.s8 %v7064
  %v7066 = vlaneseq
  %v7067 = vshrl.u32 %v7066, 7
  %v7068 = vsub.s32 %v7065, %v7067
  %v7069 = vrot.slane %v7055, %v7068
  %v7070 = vcombine.low %v7062, %v7069
  %v7071 = vcombine.low %v6848, %v6850
  %v7073 = vunpack.c.l.s4 1983009808
  %v7074 = vunpack.c.0.s8 %v7073
  %v7075 = vlaneseq
  %v7076 = vshrl.u32 %v7075, 7
  %v7077 = vsub.s32 %v7074, %v7076
  %v7078 = vrot.slane %v7071, %v7077
  %v7079 = vcombine.low %v6866, %v6865
  %v7080 = vcombine.low %v6867, %v6875
  %v7082 = vunpack.c.l.s4 1983009808
  %v7083 = vunpack.c.0.s8 %v7082
  %v7084 = vlaneseq
  %v7085 = vshrl.u32 %v7084, 7
  %v7086 = vsub.s32 %v7083, %v7085
  %v7087 = vrot.slane %v7079, %v7086
  %v7089 = vunpack.c.l.s4 1983009808
  %v7090 = vunpack.c.0.s8 %v7089
  %v7091 = vlaneseq
  %v7092 = vshrl.u32 %v7091, 7
  %v7093 = vsub.s32 %v7090, %v7092
  %v7094 = vrot.slane %v7080, %v7093
  %v7095 = vcombine.low %v7087, %v7094
  %v7096 = vcombine.low %v6883, %v6882
  %v7098 = vunpack.c.l.s4 1983009808
  %v7099 = vunpack.c.0.s8 %v7098
  %v7100 = vlaneseq
  %v7101 = vshrl.u32 %v7100, 7
  %v7102 = vsub.s32 %v7099, %v7101
  %v7103 = vrot.slane %v7096, %v7102
  %v7104 = vcombine.low %v6892, %v6900
  %v7105 = vcombine.low %v6899, %v6901
  %v7107 = vunpack.c.l.s4 1983009808
  %v7108 = vunpack.c.0.s8 %v7107
  %v7109 = vlaneseq
  %v7110 = vshrl.u32 %v7109, 7
  %v7111 = vsub.s32 %v7108, %v7110
  %v7112 = vrot.slane %v7104, %v7111
  %v7114 = vunpack.c.l.s4 1983009808
  %v7115 = vunpack.c.0.s8 %v7114
  %v7116 = vlaneseq
  %v7117 = vshrl.u32 %v7116, 7
  %v7118 = vsub.s32 %v7115, %v7117
  %v7119 = vrot.slane %v7105, %v7118
  %v7120 = vcombine.low %v7112, %v7119
  %v7121 = vcombine.low %v6909, %v6917
  %v7123 = vunpack.c.l.s4 1983009808
  %v7124 = vunpack.c.0.s8 %v7123
  %v7125 = vlaneseq
  %v7126 = vshrl.u32 %v7125, 7
  %v7127 = vsub.s32 %v7124, %v7126
  %v7128 = vrot.slane %v7121, %v7127
  %v7129 = vcombine.low %v6918, %v6926
  %v7130 = vcombine.low %v6934, %v6933
  %v7132 = vunpack.c.l.s4 1983009808
  %v7133 = vunpack.c.0.s8 %v7132
  %v7134 = vlaneseq
  %v7135 = vshrl.u32 %v7134, 7
  %v7136 = vsub.s32 %v7133, %v7135
  %v7137 = vrot.slane %v7129, %v7136
  %v7139 = vunpack.c.l.s4 1983009808
  %v7140 = vunpack.c.0.s8 %v7139
  %v7141 = vlaneseq
  %v7142 = vshrl.u32 %v7141, 7
  %v7143 = vsub.s32 %v7140, %v7142
  %v7144 = vrot.slane %v7130, %v7143
  %v7145 = vcombine.low %v7137, %v7144
  %v7146 = vcombine.low %v6935, %v6943
  %v7148 = vunpack.c.l.s4 1983009808
  %v7149 = vunpack.c.0.s8 %v7148
  %v7150 = vlaneseq
  %v7151 = vshrl.u32 %v7150, 7
  %v7152 = vsub.s32 %v7149, %v7151
  %v7153 = vrot.slane %v7146, %v7152
  %v7154 = vcombine.low %v6950, %v6952
  %v7155 = vcombine.low %v6960, %v6968
  %v7157 = vunpack.c.l.s4 1983009808
  %v7158 = vunpack.c.0.s8 %v7157
  %v7159 = vlaneseq
  %v7160 = vshrl.u32 %v7159, 7
  %v7161 = vsub.s32 %v7158, %v7160
  %v7162 = vrot.slane %v7154, %v7161
  %v7164 = vunpack.c.l.s4 1983009808
  %v7165 = vunpack.c.0.s8 %v7164
  %v7166 = vlaneseq
  %v7167 = vshrl.u32 %v7166, 7
  %v7168 = vsub.s32 %v7165, %v7167
  %v7169 = vrot.slane %v7155, %v7168
  %v7170 = vcombine.low %v7162, %v7169
  %v7171 = vcombine.low %v6967, %v6969
  %v7173 = vunpack.c.l.s4 1983009808
  %v7174 = vunpack.c.0.s8 %v7173
  %v7175 = vlaneseq
  %v7176 = vshrl.u32 %v7175, 7
  %v7177 = vsub.s32 %v7174, %v7176
  %v7178 = vrot.slane %v7171, %v7177
  %v7179 = vcombine.low %v6985, %v6984
  %v7180 = vcombine.low %v6986, %v6994
  %v7182 = vunpack.c.l.s4 1983009808
  %v7183 = vunpack.c.0.s8 %v7182
  %v7184 = vlaneseq
  %v7185 = vshrl.u32 %v7184, 7
  %v7186 = vsub.s32 %v7183, %v7185
  %v7187 = vrot.slane %v7179, %v7186
  %v7189 = vunpack.c.l.s4 1983009808
  %v7190 = vunpack.c.0.s8 %v7189
  %v7191 = vlaneseq
  %v7192 = vshrl.u32 %v7191, 7
  %v7193 = vsub.s32 %v7190, %v7192
  %v7194 = vrot.slane %v7180, %v7193
  %v7195 = vcombine.low %v7187, %v7194
  %v7196 = vcombine.low %v7002, %v7001
  %v7198 = vunpack.c.l.s4 1983009808
  %v7199 = vunpack.c.0.s8 %v7198
  %v7200 = vlaneseq
  %v7201 = vshrl.u32 %v7200, 7
  %v7202 = vsub.s32 %v7199, %v7201
  %v7203 = vrot.slane %v7196, %v7202
  %v7221 = vunpack.c.l.s4 1983009808
  %v7222 = vunpack.c.0.s8 %v7221
  %v7223 = vlaneseq
  %v7224 = vshrl.u32 %v7223, 7
  %v7225 = vsub.s32 %v7222, %v7224
  %v7226 = vrot.slane %v6797, %v7225
  %v7227 = vcombine.low %v7028, %v7226
  %v7229 = vunpack.c.l.s4 1983009808
  %v7230 = vunpack.c.0.s8 %v7229
  %v7231 = vlaneseq
  %v7232 = vshrl.u32 %v7231, 7
  %v7233 = vsub.s32 %v7230, %v7232
  %v7234 = vrot.slane %v6832, %v7233
  %v7235 = vcombine.low %v7053, %v7234
  %v7237 = vunpack.c.l.s4 1983009808
  %v7238 = vunpack.c.0.s8 %v7237
  %v7239 = vlaneseq
  %v7240 = vshrl.u32 %v7239, 7
  %v7241 = vsub.s32 %v7238, %v7240
  %v7242 = vrot.slane %v6858, %v7241
  %v7243 = vcombine.low %v7078, %v7242
  %v7245 = vunpack.c.l.s4 1983009808
  %v7246 = vunpack.c.0.s8 %v7245
  %v7247 = vlaneseq
  %v7248 = vshrl.u32 %v7247, 7
  %v7249 = vsub.s32 %v7246, %v7248
  %v7250 = vrot.slane %v6884, %v7249
  %v7251 = vcombine.low %v7103, %v7250
  %v7253 = vunpack.c.l.s4 1983009808
  %v7254 = vunpack.c.0.s8 %v7253
  %v7255 = vlaneseq
  %v7256 = vshrl.u32 %v7255, 7
  %v7257 = vsub.s32 %v7254, %v7256
  %v7258 = vrot.slane %v6916, %v7257
  %v7259 = vcombine.low %v7128, %v7258
  %v7261 = vunpack.c.l.s4 1983009808
  %v7262 = vunpack.c.0.s8 %v7261
  %v7263 = vlaneseq
  %v7264 = vshrl.u32 %v7263, 7
  %v7265 = vsub.s32 %v7262, %v7264
  %v7266 = vrot.slane %v6951, %v7265
  %v7267 = vcombine.low %v7153, %v7266
  %v7269 = vunpack.c.l.s4 1983009808
  %v7270 = vunpack.c.0.s8 %v7269
  %v7271 = vlaneseq
  %v7272 = vshrl.u32 %v7271, 7
  %v7273 = vsub.s32 %v7270, %v7272
  %v7274 = vrot.slane %v6977, %v7273
  %v7275 = vcombine.low %v7178, %v7274
  %v7277 = vunpack.c.l.s4 1983009808
  %v7278 = vunpack.c.0.s8 %v7277
  %v7279 = vlaneseq
  %v7280 = vshrl.u32 %v7279, 7
  %v7281 = vsub.s32 %v7278, %v7280
  %v7282 = vrot.slane %v7003, %v7281
  %v7283 = vcombine.low %v7203, %v7282
  %v7284 = vrot.slane %v7020, 1
  %v7285 = vrot.slane %v7227, 1
  %v7286 = vsel %vm560, %v7284, %v7285
  %v7287 = vrot.slane %v7045, 1
  %v7288 = vrot.slane %v7235, 1
  %v7289 = vsel %vm560, %v7287, %v7288
  %v7290 = vrot.slane %v7070, 1
  %v7291 = vrot.slane %v7243, 1
  %v7292 = vsel %vm560, %v7290, %v7291
  %v7293 = vrot.slane %v7095, 1
  %v7294 = vrot.slane %v7251, 1
  %v7295 = vsel %vm560, %v7293, %v7294
  %v7296 = vrot.slane %v7120, 1
  %v7297 = vrot.slane %v7259, 1
  %v7298 = vsel %vm560, %v7296, %v7297
  %v7299 = vrot.slane %v7145, 1
  %v7300 = vrot.slane %v7267, 1
  %v7301 = vsel %vm560, %v7299, %v7300
  %v7302 = vrot.slane %v7170, 1
  %v7303 = vrot.slane %v7275, 1
  %v7304 = vsel %vm560, %v7302, %v7303
  %v7305 = vrot.slane %v7195, 1
  %v7306 = vrot.slane %v7283, 1
  %v7307 = vsel %vm560, %v7305, %v7306
  %7308 = vrot.lane.b32.xlu0 %v7286, 16
  %v7309 = vpop.permute.xlu0 %7308
  %7310 = vrot.lane.b32.xlu0 %v7285, 16
  %v7311 = vpop.permute.xlu0 %7310
  %7312 = vrot.lane.b32.xlu0 %v7289, 16
  %v7313 = vpop.permute.xlu0 %7312
  %7314 = vrot.lane.b32.xlu0 %v7288, 16
  %v7315 = vpop.permute.xlu0 %7314
  %7316 = vrot.lane.b32.xlu0 %v7292, 16
  %v7317 = vpop.permute.xlu0 %7316
  %7318 = vrot.lane.b32.xlu0 %v7291, 16
  %v7319 = vpop.permute.xlu0 %7318
  %7320 = vrot.lane.b32.xlu0 %v7295, 16
  %v7321 = vpop.permute.xlu0 %7320
  %7322 = vrot.lane.b32.xlu0 %v7294, 16
  %v7323 = vpop.permute.xlu0 %7322
  %7324 = vrot.lane.b32.xlu0 %v7298, 16
  %v7325 = vpop.permute.xlu0 %7324
  %7326 = vrot.lane.b32.xlu0 %v7297, 16
  %v7327 = vpop.permute.xlu0 %7326
  %7328 = vrot.lane.b32.xlu0 %v7301, 16
  %v7329 = vpop.permute.xlu0 %7328
  %7330 = vrot.lane.b32.xlu0 %v7300, 16
  %v7331 = vpop.permute.xlu0 %7330
  %7332 = vrot.lane.b32.xlu0 %v7304, 16
  %v7333 = vpop.permute.xlu0 %7332
  %7334 = vrot.lane.b32.xlu0 %v7303, 16
  %v7335 = vpop.permute.xlu0 %7334
  %7336 = vrot.lane.b32.xlu0 %v7307, 16
  %v7337 = vpop.permute.xlu0 %7336
  %7338 = vrot.lane.b32.xlu0 %v7306, 16
  %v7339 = vpop.permute.xlu0 %7338
  %v7356 = vcombine.low %v6781, %v6780
  %v7357 = vcombine.low %v6782, %v6790
  %v7359 = vunpack.c.l.s4 1983009808
  %v7360 = vunpack.c.0.s8 %v7359
  %v7361 = vlaneseq
  %v7362 = vshrl.u32 %v7361, 7
  %v7363 = vsub.s32 %v7360, %v7362
  %v7364 = vrot.slane %v7356, %v7363
  %v7366 = vunpack.c.l.s4 1983009808
  %v7367 = vunpack.c.0.s8 %v7366
  %v7368 = vlaneseq
  %v7369 = vshrl.u32 %v7368, 7
  %v7370 = vsub.s32 %v7367, %v7369
  %v7371 = vrot.slane %v7357, %v7370
  %v7372 = vcombine.low %v7364, %v7371
  %v7373 = vcombine.low %v6798, %v6797
  %v7375 = vunpack.c.l.s4 1983009808
  %v7376 = vunpack.c.0.s8 %v7375
  %v7377 = vlaneseq
  %v7378 = vshrl.u32 %v7377, 7
  %v7379 = vsub.s32 %v7376, %v7378
  %v7380 = vrot.slane %v7373, %v7379
  %v7381 = vcombine.low %v6807, %v6815
  %v7382 = vcombine.low %v6814, %v6816
  %v7384 = vunpack.c.l.s4 1983009808
  %v7385 = vunpack.c.0.s8 %v7384
  %v7386 = vlaneseq
  %v7387 = vshrl.u32 %v7386, 7
  %v7388 = vsub.s32 %v7385, %v7387
  %v7389 = vrot.slane %v7381, %v7388
  %v7391 = vunpack.c.l.s4 1983009808
  %v7392 = vunpack.c.0.s8 %v7391
  %v7393 = vlaneseq
  %v7394 = vshrl.u32 %v7393, 7
  %v7395 = vsub.s32 %v7392, %v7394
  %v7396 = vrot.slane %v7382, %v7395
  %v7397 = vcombine.low %v7389, %v7396
  %v7398 = vcombine.low %v6824, %v6832
  %v7400 = vunpack.c.l.s4 1983009808
  %v7401 = vunpack.c.0.s8 %v7400
  %v7402 = vlaneseq
  %v7403 = vshrl.u32 %v7402, 7
  %v7404 = vsub.s32 %v7401, %v7403
  %v7405 = vrot.slane %v7398, %v7404
  %v7406 = vcombine.low %v6833, %v6841
  %v7407 = vcombine.low %v6849, %v6848
  %v7409 = vunpack.c.l.s4 1983009808
  %v7410 = vunpack.c.0.s8 %v7409
  %v7411 = vlaneseq
  %v7412 = vshrl.u32 %v7411, 7
  %v7413 = vsub.s32 %v7410, %v7412
  %v7414 = vrot.slane %v7406, %v7413
  %v7416 = vunpack.c.l.s4 1983009808
  %v7417 = vunpack.c.0.s8 %v7416
  %v7418 = vlaneseq
  %v7419 = vshrl.u32 %v7418, 7
  %v7420 = vsub.s32 %v7417, %v7419
  %v7421 = vrot.slane %v7407, %v7420
  %v7422 = vcombine.low %v7414, %v7421
  %v7423 = vcombine.low %v6850, %v6858
  %v7425 = vunpack.c.l.s4 1983009808
  %v7426 = vunpack.c.0.s8 %v7425
  %v7427 = vlaneseq
  %v7428 = vshrl.u32 %v7427, 7
  %v7429 = vsub.s32 %v7426, %v7428
  %v7430 = vrot.slane %v7423, %v7429
  %v7431 = vcombine.low %v6865, %v6867
  %v7432 = vcombine.low %v6875, %v6883
  %v7434 = vunpack.c.l.s4 1983009808
  %v7435 = vunpack.c.0.s8 %v7434
  %v7436 = vlaneseq
  %v7437 = vshrl.u32 %v7436, 7
  %v7438 = vsub.s32 %v7435, %v7437
  %v7439 = vrot.slane %v7431, %v7438
  %v7441 = vunpack.c.l.s4 1983009808
  %v7442 = vunpack.c.0.s8 %v7441
  %v7443 = vlaneseq
  %v7444 = vshrl.u32 %v7443, 7
  %v7445 = vsub.s32 %v7442, %v7444
  %v7446 = vrot.slane %v7432, %v7445
  %v7447 = vcombine.low %v7439, %v7446
  %v7448 = vcombine.low %v6882, %v6884
  %v7450 = vunpack.c.l.s4 1983009808
  %v7451 = vunpack.c.0.s8 %v7450
  %v7452 = vlaneseq
  %v7453 = vshrl.u32 %v7452, 7
  %v7454 = vsub.s32 %v7451, %v7453
  %v7455 = vrot.slane %v7448, %v7454
  %v7456 = vcombine.low %v6900, %v6899
  %v7457 = vcombine.low %v6901, %v6909
  %v7459 = vunpack.c.l.s4 1983009808
  %v7460 = vunpack.c.0.s8 %v7459
  %v7461 = vlaneseq
  %v7462 = vshrl.u32 %v7461, 7
  %v7463 = vsub.s32 %v7460, %v7462
  %v7464 = vrot.slane %v7456, %v7463
  %v7466 = vunpack.c.l.s4 1983009808
  %v7467 = vunpack.c.0.s8 %v7466
  %v7468 = vlaneseq
  %v7469 = vshrl.u32 %v7468, 7
  %v7470 = vsub.s32 %v7467, %v7469
  %v7471 = vrot.slane %v7457, %v7470
  %v7472 = vcombine.low %v7464, %v7471
  %v7473 = vcombine.low %v6917, %v6916
  %v7475 = vunpack.c.l.s4 1983009808
  %v7476 = vunpack.c.0.s8 %v7475
  %v7477 = vlaneseq
  %v7478 = vshrl.u32 %v7477, 7
  %v7479 = vsub.s32 %v7476, %v7478
  %v7480 = vrot.slane %v7473, %v7479
  %v7481 = vcombine.low %v6926, %v6934
  %v7482 = vcombine.low %v6933, %v6935
  %v7484 = vunpack.c.l.s4 1983009808
  %v7485 = vunpack.c.0.s8 %v7484
  %v7486 = vlaneseq
  %v7487 = vshrl.u32 %v7486, 7
  %v7488 = vsub.s32 %v7485, %v7487
  %v7489 = vrot.slane %v7481, %v7488
  %v7491 = vunpack.c.l.s4 1983009808
  %v7492 = vunpack.c.0.s8 %v7491
  %v7493 = vlaneseq
  %v7494 = vshrl.u32 %v7493, 7
  %v7495 = vsub.s32 %v7492, %v7494
  %v7496 = vrot.slane %v7482, %v7495
  %v7497 = vcombine.low %v7489, %v7496
  %v7498 = vcombine.low %v6943, %v6951
  %v7500 = vunpack.c.l.s4 1983009808
  %v7501 = vunpack.c.0.s8 %v7500
  %v7502 = vlaneseq
  %v7503 = vshrl.u32 %v7502, 7
  %v7504 = vsub.s32 %v7501, %v7503
  %v7505 = vrot.slane %v7498, %v7504
  %v7506 = vcombine.low %v6952, %v6960
  %v7507 = vcombine.low %v6968, %v6967
  %v7509 = vunpack.c.l.s4 1983009808
  %v7510 = vunpack.c.0.s8 %v7509
  %v7511 = vlaneseq
  %v7512 = vshrl.u32 %v7511, 7
  %v7513 = vsub.s32 %v7510, %v7512
  %v7514 = vrot.slane %v7506, %v7513
  %v7516 = vunpack.c.l.s4 1983009808
  %v7517 = vunpack.c.0.s8 %v7516
  %v7518 = vlaneseq
  %v7519 = vshrl.u32 %v7518, 7
  %v7520 = vsub.s32 %v7517, %v7519
  %v7521 = vrot.slane %v7507, %v7520
  %v7522 = vcombine.low %v7514, %v7521
  %v7523 = vcombine.low %v6969, %v6977
  %v7525 = vunpack.c.l.s4 1983009808
  %v7526 = vunpack.c.0.s8 %v7525
  %v7527 = vlaneseq
  %v7528 = vshrl.u32 %v7527, 7
  %v7529 = vsub.s32 %v7526, %v7528
  %v7530 = vrot.slane %v7523, %v7529
  %v7531 = vcombine.low %v6984, %v6986
  %v7532 = vcombine.low %v6994, %v7002
  %v7534 = vunpack.c.l.s4 1983009808
  %v7535 = vunpack.c.0.s8 %v7534
  %v7536 = vlaneseq
  %v7537 = vshrl.u32 %v7536, 7
  %v7538 = vsub.s32 %v7535, %v7537
  %v7539 = vrot.slane %v7531, %v7538
  %v7541 = vunpack.c.l.s4 1983009808
  %v7542 = vunpack.c.0.s8 %v7541
  %v7543 = vlaneseq
  %v7544 = vshrl.u32 %v7543, 7
  %v7545 = vsub.s32 %v7542, %v7544
  %v7546 = vrot.slane %v7532, %v7545
  %v7547 = vcombine.low %v7539, %v7546
  %v7548 = vcombine.low %v7001, %v7003
  %v7550 = vunpack.c.l.s4 1983009808
  %v7551 = vunpack.c.0.s8 %v7550
  %v7552 = vlaneseq
  %v7553 = vshrl.u32 %v7552, 7
  %v7554 = vsub.s32 %v7551, %v7553
  %v7555 = vrot.slane %v7548, %v7554
  %7556 = vrot.lane.b32.xlu0 %v7372, 32
  %v7557 = vpop.permute.xlu0 %7556
  %7558 = vrot.lane.b32.xlu0 %v7380, 32
  %v7559 = vpop.permute.xlu0 %7558
  %7560 = vrot.lane.b32.xlu0 %v7397, 32
  %v7561 = vpop.permute.xlu0 %7560
  %7562 = vrot.lane.b32.xlu0 %v7405, 32
  %v7563 = vpop.permute.xlu0 %7562
  %7564 = vrot.lane.b32.xlu0 %v7422, 32
  %v7565 = vpop.permute.xlu0 %7564
  %7566 = vrot.lane.b32.xlu0 %v7430, 32
  %v7567 = vpop.permute.xlu0 %7566
  %7568 = vrot.lane.b32.xlu0 %v7447, 32
  %v7569 = vpop.permute.xlu0 %7568
  %7570 = vrot.lane.b32.xlu0 %v7455, 32
  %v7571 = vpop.permute.xlu0 %7570
  %7572 = vrot.lane.b32.xlu0 %v7472, 32
  %v7573 = vpop.permute.xlu0 %7572
  %7574 = vrot.lane.b32.xlu0 %v7480, 32
  %v7575 = vpop.permute.xlu0 %7574
  %7576 = vrot.lane.b32.xlu0 %v7497, 32
  %v7577 = vpop.permute.xlu0 %7576
  %7578 = vrot.lane.b32.xlu0 %v7505, 32
  %v7579 = vpop.permute.xlu0 %7578
  %7580 = vrot.lane.b32.xlu0 %v7522, 32
  %v7581 = vpop.permute.xlu0 %7580
  %7582 = vrot.lane.b32.xlu0 %v7530, 32
  %v7583 = vpop.permute.xlu0 %7582
  %7584 = vrot.lane.b32.xlu0 %v7547, 32
  %v7585 = vpop.permute.xlu0 %7584
  %7586 = vrot.lane.b32.xlu0 %v7555, 32
  %v7587 = vpop.permute.xlu0 %7586
  %v7604 = vsel %vm278, %v7020, %v7309
  %v7605 = vsel %vm278, %v7028, %v7311
  %v7606 = vsel %vm278, %v7045, %v7313
  %v7607 = vsel %vm278, %v7053, %v7315
  %v7608 = vsel %vm278, %v7070, %v7317
  %v7609 = vsel %vm278, %v7078, %v7319
  %v7610 = vsel %vm278, %v7095, %v7321
  %v7611 = vsel %vm278, %v7103, %v7323
  %v7612 = vsel %vm278, %v7120, %v7325
  %v7613 = vsel %vm278, %v7128, %v7327
  %v7614 = vsel %vm278, %v7145, %v7329
  %v7615 = vsel %vm278, %v7153, %v7331
  %v7616 = vsel %vm278, %v7170, %v7333
  %v7617 = vsel %vm278, %v7178, %v7335
  %v7618 = vsel %vm278, %v7195, %v7337
  %v7619 = vsel %vm278, %v7203, %v7339
  %v7620 = vsel %vm59, %v7604, %v7557
  %v7621 = vsel %vm59, %v7605, %v7559
  %v7622 = vsel %vm59, %v7606, %v7561
  %v7623 = vsel %vm59, %v7607, %v7563
  %v7624 = vsel %vm59, %v7608, %v7565
  %v7625 = vsel %vm59, %v7609, %v7567
  %v7626 = vsel %vm59, %v7610, %v7569
  %v7627 = vsel %vm59, %v7611, %v7571
  %v7628 = vsel %vm59, %v7612, %v7573
  %v7629 = vsel %vm59, %v7613, %v7575
  %v7630 = vsel %vm59, %v7614, %v7577
  %v7631 = vsel %vm59, %v7615, %v7579
  %v7632 = vsel %vm59, %v7616, %v7581
  %v7633 = vsel %vm59, %v7617, %v7583
  %v7634 = vsel %vm59, %v7618, %v7585
  %v7635 = vsel %vm59, %v7619, %v7587
  %v7652 = vcombine.high %v7620, %v7620
  %v7653 = vcombine.high %v7622, %v7622
  %v7654 = vcombine.high %v7624, %v7624
  %v7655 = vcombine.high %v7626, %v7626
  %v7656 = vcombine.high %v7628, %v7628
  %v7657 = vcombine.high %v7630, %v7630
  %v7658 = vcombine.high %v7632, %v7632
  %v7659 = vcombine.high %v7634, %v7634
  %s7660 = scalar_lea.vmem %s3, 160
  %v7661 = vld [vmem:[%s7660] sm:$0xff]
  %v7662 = vld [vmem:[%s7660 + $0x8] sm:$0xff]
  %v7663 = vld [vmem:[%s7660 + $0x10] sm:$0xff]
  %v7664 = vld [vmem:[%s7660 + $0x18] sm:$0xff]
  %v7665 = vld [vmem:[%s7660 + $0x20] sm:$0xff]
  %v7666 = vld [vmem:[%s7660 + $0x28] sm:$0xff]
  %s7667 = scalar_lea.vmem %s4, 2
  %v7668 = vld [vmem:[%s7667] sm:$0x1]
  %v7670 = vlaneseq
  %v7671 = vshrl.u32 %v7670, 7
  %v7672 = vsub.s32 0, %v7671
  %v7673 = vrot.slane %v7668, %v7672
  %v7675 = vcombine.low %v7620, %v7652
  %v7676 = vcombine.low %v7621, %v7622
  %v7677 = vcombine.low %v7653, %v7623
  %v7678 = vcombine.low %v7624, %v7654
  %v7679 = vcombine.low %v7625, %v7626
  %v7680 = vcombine.low %v7655, %v7627
  %v7681 = vcombine.low %v7628, %v7656
  %v7682 = vcombine.low %v7629, %v7630
  %v7683 = vcombine.low %v7657, %v7631
  %v7684 = vcombine.low %v7632, %v7658
  %v7685 = vcombine.low %v7633, %v7634
  %v7686 = vcombine.low %v7659, %v7635
  %vm7687 = vcmask 392192
  %v7688 = vsel %vm7687, %v7675, 0
  %v7690 = vsel %vm7687, %v7676, 0
  %v7692 = vsel %vm7687, %v7677, 0
  %v7694 = vsel %vm7687, %v7678, 0
  %v7696 = vsel %vm7687, %v7679, 0
  %v7698 = vsel %vm7687, %v7680, 0
  %v7700 = vsel %vm7687, %v7681, 0
  %v7702 = vsel %vm7687, %v7682, 0
  %v7704 = vsel %vm7687, %v7683, 0
  %v7706 = vsel %vm7687, %v7684, 0
  %v7708 = vsel %vm7687, %v7685, 0
  %v7710 = vsel %vm7687, %v7686, 0
  %7712 = vmatprep.subr.mxu0 0.0
  %7713 = vmatpush1.msra.mxu0 %v7661
  %7714 = vmatprep.subr.mxu0 0.0
  %7715 = vmatpush1.msra.mxu0 %v7662
  %7716 = vmatprep.subr.mxu0 0.0
  %7717 = vmatpush1.msra.mxu0 %v7663
  %7718 = vmatprep.subr.mxu0 0.0
  %7719 = vmatpush1.msra.mxu0 %v7664
  %7720 = vmatprep.subr.mxu0 0.0
  %7721 = vmatpush1.msra.mxu0 %v7665
  %7722 = vmatprep.subr.mxu0 0.0
  %7723 = vmatpush1.msra.mxu0 %v7666
  %7724 = vmatprep.subr.mxu0 0.0
  %7725 = vmatpush1.msra.mxu0 0.0
  %7726 = vmatprep.subr.mxu0 0.0
  %7727 = vmatpush1.msra.mxu0 0.0
  %7728 = vmatprep.subr.mxu0 0.0
  %7729 = vmatpush1.msra.mxu0 0.0
  %7730 = vmatprep.subr.mxu0 0.0
  %7731 = vmatpush1.msra.mxu0 0.0
  %7732 = vmatprep.subr.mxu0 0.0
  %7733 = vmatpush1.msra.mxu0 0.0
  %7734 = vmatprep.subr.mxu0 0.0
  %7735 = vmatpush1.msra.mxu0 0.0
  %7736 = vmatprep.subr.mxu0 0.0
  %7737 = vmatpush1.msra.mxu0 0.0
  %7738 = vmatprep.subr.mxu0 0.0
  %7739 = vmatpush1.msra.mxu0 0.0
  %7740 = vmatprep.subr.mxu0 0.0
  %7741 = vmatpush1.msra.mxu0 0.0
  %7742 = vmatprep.subr.mxu0 0.0
  %7743 = vmatpush1.msra.mxu0 0.0
  %7744 = vmatprep.subr.mxu0 0.0
  %7745 = vmatpush1.msra.mxu0 0.0
  %7746 = vmatprep.subr.mxu0 0.0
  %7747 = vmatpush1.msra.mxu0 0.0
  %7748 = vmatprep.subr.mxu0 0.0
  %7749 = vmatpush1.msra.mxu0 0.0
  %7750 = vmatprep.subr.mxu0 0.0
  %7751 = vmatpush1.msra.mxu0 0.0
  %7752 = vmatprep.subr.mxu0 0.0
  %7753 = vmatpush1.msra.mxu0 0.0
  %7754 = vmatprep.subr.mxu0 0.0
  %7755 = vmatpush1.msra.mxu0 0.0
  %7756 = vmatprep.subr.mxu0 0.0
  %7757 = vmatpush1.msra.mxu0 0.0
  %7758 = vmatprep.subr.mxu0 0.0
  %7759 = vmatpush1.msra.mxu0 0.0
  %7760 = vmatprep.subr.mxu0 0.0
  %7761 = vmatpush1.msra.mxu0 0.0
  %7762 = vmatprep.subr.mxu0 0.0
  %7763 = vmatpush1.msra.mxu0 0.0
  %7764 = vmatprep.subr.mxu0 0.0
  %7765 = vmatpush1.msra.mxu0 0.0
  %7766 = vmatprep.subr.mxu0 0.0
  %7767 = vmatpush1.msra.mxu0 0.0
  %7768 = vmatprep.subr.mxu0 0.0
  %7769 = vmatpush1.msra.mxu0 0.0
  %7770 = vmatprep.subr.mxu0 0.0
  %7771 = vmatpush1.msra.mxu0 0.0
  %7772 = vmatprep.subr.mxu0 0.0
  %7773 = vmatpush1.msra.mxu0 0.0
  %7774 = vmatprep.subr.mxu0 0.0
  %7775 = vmatpush1.msra.mxu0 0.0
  %7776 = vmatprep.mubr.f32.mxu0 0.0
  %7777 = vmatmul.mubr.f32.gmra.mrb[0].mxu0 %v7688
  %v7778 = vpop.f32.mrb[0].mxu0
  %v7779 = vadd.f32 %v7673, %v7778
  %v7780 = vpop.f32.mrb[0].mxu0
  %7781 = vmatprep.mubr.f32.mxu0 0.0
  %7782 = vmatmul.mubr.f32.gmra.mrb[0].mxu0 %v7690
  %v7783 = vpop.f32.mrb[0].mxu0
  %v7784 = vadd.f32 %v7673, %v7783
  %v7785 = vpop.f32.mrb[0].mxu0
  %7786 = vmatprep.mubr.f32.mxu0 0.0
  %7787 = vmatmul.mubr.f32.gmra.mrb[0].mxu0 %v7692
  %v7788 = vpop.f32.mrb[0].mxu0
  %v7789 = vadd.f32 %v7673, %v7788
  %v7790 = vpop.f32.mrb[0].mxu0
  %7791 = vmatprep.mubr.f32.mxu0 0.0
  %7792 = vmatmul.mubr.f32.gmra.mrb[0].mxu0 %v7694
  %v7793 = vpop.f32.mrb[0].mxu0
  %v7794 = vadd.f32 %v7673, %v7793
  %v7795 = vpop.f32.mrb[0].mxu0
  %7796 = vmatprep.mubr.f32.mxu0 0.0
  %7797 = vmatmul.mubr.f32.gmra.mrb[0].mxu0 %v7696
  %v7798 = vpop.f32.mrb[0].mxu0
  %v7799 = vadd.f32 %v7673, %v7798
  %v7800 = vpop.f32.mrb[0].mxu0
  %7801 = vmatprep.mubr.f32.mxu0 0.0
  %7802 = vmatmul.mubr.f32.gmra.mrb[0].mxu0 %v7698
  %v7803 = vpop.f32.mrb[0].mxu0
  %v7804 = vadd.f32 %v7673, %v7803
  %v7805 = vpop.f32.mrb[0].mxu0
  %7806 = vmatprep.mubr.f32.mxu0 0.0
  %7807 = vmatmul.mubr.f32.gmra.mrb[0].mxu0 %v7700
  %v7808 = vpop.f32.mrb[0].mxu0
  %v7809 = vadd.f32 %v7673, %v7808
  %v7810 = vpop.f32.mrb[0].mxu0
  %7811 = vmatprep.mubr.f32.mxu0 0.0
  %7812 = vmatmul.mubr.f32.gmra.mrb[0].mxu0 %v7702
  %v7813 = vpop.f32.mrb[0].mxu0
  %v7814 = vadd.f32 %v7673, %v7813
  %v7815 = vpop.f32.mrb[0].mxu0
  %7816 = vmatprep.mubr.f32.mxu0 0.0
  %7817 = vmatmul.mubr.f32.gmra.mrb[0].mxu0 %v7704
  %v7818 = vpop.f32.mrb[0].mxu0
  %v7819 = vadd.f32 %v7673, %v7818
  %v7820 = vpop.f32.mrb[0].mxu0
  %7821 = vmatprep.mubr.f32.mxu0 0.0
  %7822 = vmatmul.mubr.f32.gmra.mrb[0].mxu0 %v7706
  %v7823 = vpop.f32.mrb[0].mxu0
  %v7824 = vadd.f32 %v7673, %v7823
  %v7825 = vpop.f32.mrb[0].mxu0
  %7826 = vmatprep.mubr.f32.mxu0 0.0
  %7827 = vmatmul.mubr.f32.gmra.mrb[0].mxu0 %v7708
  %v7828 = vpop.f32.mrb[0].mxu0
  %v7829 = vadd.f32 %v7673, %v7828
  %v7830 = vpop.f32.mrb[0].mxu0
  %7831 = vmatprep.mubr.f32.mxu0 0.0
  %7832 = vmatmul.mubr.f32.gmra.mrb[0].mxu0 %v7710
  %v7833 = vpop.f32.mrb[0].mxu0
  %v7834 = vadd.f32 %v7673, %v7833
  %v7835 = vpop.f32.mrb[0].mxu0
  %7836 = vdwg.mxu0
  %v7837 = vmax.f32 %v7779, 0.0
  %v7838 = vmax.f32 %v7784, 0.0
  %v7839 = vmax.f32 %v7789, 0.0
  %v7840 = vmax.f32 %v7794, 0.0
  %v7841 = vmax.f32 %v7799, 0.0
  %v7842 = vmax.f32 %v7804, 0.0
  %v7843 = vmax.f32 %v7809, 0.0
  %v7844 = vmax.f32 %v7814, 0.0
  %v7845 = vmax.f32 %v7819, 0.0
  %v7846 = vmax.f32 %v7824, 0.0
  %v7847 = vmax.f32 %v7829, 0.0
  %v7848 = vmax.f32 %v7834, 0.0
  %v7861 = vcombine.high %v7837, %v7837
  %v7862 = vcombine.high %v7838, %v7838
  %v7863 = vcombine.high %v7839, %v7839
  %v7864 = vcombine.high %v7840, %v7840
  %v7865 = vcombine.high %v7841, %v7841
  %v7866 = vcombine.high %v7842, %v7842
  %v7867 = vcombine.high %v7843, %v7843
  %v7868 = vcombine.high %v7844, %v7844
  %v7869 = vcombine.high %v7845, %v7845
  %v7870 = vcombine.high %v7846, %v7846
  %v7871 = vcombine.high %v7847, %v7847
  %v7872 = vcombine.high %v7848, %v7848
  %v7877 = vcombine.low %v7837, %v7861
  %v7878 = vcombine.low %v7862, %v7839
  %v7879 = vcombine.low %v7840, %v7864
  %v7880 = vcombine.low %v7865, %v7842
  %v7881 = vcombine.low %v7843, %v7867
  %v7882 = vcombine.low %v7868, %v7845
  %v7883 = vcombine.low %v7846, %v7870
  %v7884 = vcombine.low %v7871, %v7848
  %v7893 = vsel %vm278, %v7877, -inf
  %vm7894 = vcmask 125952
  %v7895 = vsel %vm7894, %v7838, -inf
  %v7896 = vmax.f32 %v7893, %v7895
  %v7897 = vrot.slane %v7896, 4
  %v7898 = vmax.f32 %v7896, %v7897
  %v7899 = vrot.slane %v7898, 2
  %v7900 = vmax.f32 %v7898, %v7899
  %v7901 = vrot.slane %v7900, 1
  %v7902 = vmax.f32 %v7900, %v7901
  %v7903 = vsel %vm278, %v7878, -inf
  %v7904 = vsel %vm7894, %v7863, -inf
  %v7905 = vmax.f32 %v7903, %v7904
  %v7906 = vrot.slane %v7905, 4
  %v7907 = vmax.f32 %v7905, %v7906
  %v7908 = vrot.slane %v7907, 2
  %v7909 = vmax.f32 %v7907, %v7908
  %v7910 = vrot.slane %v7909, 1
  %v7911 = vmax.f32 %v7909, %v7910
  %v7912 = vsel %vm278, %v7879, -inf
  %v7913 = vsel %vm7894, %v7841, -inf
  %v7914 = vmax.f32 %v7912, %v7913
  %v7915 = vrot.slane %v7914, 4
  %v7916 = vmax.f32 %v7914, %v7915
  %v7917 = vrot.slane %v7916, 2
  %v7918 = vmax.f32 %v7916, %v7917
  %v7919 = vrot.slane %v7918, 1
  %v7920 = vmax.f32 %v7918, %v7919
  %v7921 = vsel %vm278, %v7880, -inf
  %v7922 = vsel %vm7894, %v7866, -inf
  %v7923 = vmax.f32 %v7921, %v7922
  %v7924 = vrot.slane %v7923, 4
  %v7925 = vmax.f32 %v7923, %v7924
  %v7926 = vrot.slane %v7925, 2
  %v7927 = vmax.f32 %v7925, %v7926
  %v7928 = vrot.slane %v7927, 1
  %v7929 = vmax.f32 %v7927, %v7928
  %v7930 = vsel %vm278, %v7881, -inf
  %v7931 = vsel %vm7894, %v7844, -inf
  %v7932 = vmax.f32 %v7930, %v7931
  %v7933 = vrot.slane %v7932, 4
  %v7934 = vmax.f32 %v7932, %v7933
  %v7935 = vrot.slane %v7934, 2
  %v7936 = vmax.f32 %v7934, %v7935
  %v7937 = vrot.slane %v7936, 1
  %v7938 = vmax.f32 %v7936, %v7937
  %v7939 = vsel %vm278, %v7882, -inf
  %v7940 = vsel %vm7894, %v7869, -inf
  %v7941 = vmax.f32 %v7939, %v7940
  %v7942 = vrot.slane %v7941, 4
  %v7943 = vmax.f32 %v7941, %v7942
  %v7944 = vrot.slane %v7943, 2
  %v7945 = vmax.f32 %v7943, %v7944
  %v7946 = vrot.slane %v7945, 1
  %v7947 = vmax.f32 %v7945, %v7946
  %v7948 = vsel %vm278, %v7883, -inf
  %v7949 = vsel %vm7894, %v7847, -inf
  %v7950 = vmax.f32 %v7948, %v7949
  %v7951 = vrot.slane %v7950, 4
  %v7952 = vmax.f32 %v7950, %v7951
  %v7953 = vrot.slane %v7952, 2
  %v7954 = vmax.f32 %v7952, %v7953
  %v7955 = vrot.slane %v7954, 1
  %v7956 = vmax.f32 %v7954, %v7955
  %v7957 = vsel %vm278, %v7884, -inf
  %v7958 = vsel %vm7894, %v7872, -inf
  %v7959 = vmax.f32 %v7957, %v7958
  %v7960 = vrot.slane %v7959, 4
  %v7961 = vmax.f32 %v7959, %v7960
  %v7962 = vrot.slane %v7961, 2
  %v7963 = vmax.f32 %v7961, %v7962
  %v7964 = vrot.slane %v7963, 1
  %v7965 = vmax.f32 %v7963, %v7964
  %vm7966 = vcmask 1044480
  %v7967 = vrot.slane %v32, 3
  %v7968 = vrot.slane %v33, 3
  %v7969 = vsel %vm7966, %v7967, %v7968
  %v7970 = vrot.slane %v34, 3
  %v7971 = vrot.slane %v35, 3
  %v7972 = vsel %vm7966, %v7970, %v7971
  %v7973 = vrot.slane %v36, 3
  %v7974 = vrot.slane %v37, 3
  %v7975 = vsel %vm7966, %v7973, %v7974
  %v7976 = vrot.slane %v38, 3
  %v7977 = vrot.slane %v39, 3
  %v7978 = vsel %vm7966, %v7976, %v7977
  %v7979 = vrot.slane %v40, 3
  %v7980 = vrot.slane %v41, 3
  %v7981 = vsel %vm7966, %v7979, %v7980
  %v7982 = vrot.slane %v42, 3
  %v7983 = vrot.slane %v43, 3
  %v7984 = vsel %vm7966, %v7982, %v7983
  %v7985 = vrot.slane %v44, 3
  %v7986 = vrot.slane %v45, 3
  %v7987 = vsel %vm7966, %v7985, %v7986
  %v7988 = vrot.slane %v46, 3
  %v7989 = vrot.slane %v47, 3
  %v7990 = vsel %vm7966, %v7988, %v7989
  %7991 = vrot.lane.b32.xlu0 %v7969, 96
  %v7992 = vpop.permute.xlu0 %7991
  %7993 = vrot.lane.b32.xlu0 %v7968, 96
  %v7994 = vpop.permute.xlu0 %7993
  %7995 = vrot.lane.b32.xlu0 %v7972, 96
  %v7996 = vpop.permute.xlu0 %7995
  %7997 = vrot.lane.b32.xlu0 %v7971, 96
  %v7998 = vpop.permute.xlu0 %7997
  %7999 = vrot.lane.b32.xlu0 %v7975, 96
  %v8000 = vpop.permute.xlu0 %7999
  %8001 = vrot.lane.b32.xlu0 %v7974, 96
  %v8002 = vpop.permute.xlu0 %8001
  %8003 = vrot.lane.b32.xlu0 %v7978, 96
  %v8004 = vpop.permute.xlu0 %8003
  %8005 = vrot.lane.b32.xlu0 %v7977, 96
  %v8006 = vpop.permute.xlu0 %8005
  %8007 = vrot.lane.b32.xlu0 %v7981, 96
  %v8008 = vpop.permute.xlu0 %8007
  %8009 = vrot.lane.b32.xlu0 %v7980, 96
  %v8010 = vpop.permute.xlu0 %8009
  %8011 = vrot.lane.b32.xlu0 %v7984, 96
  %v8012 = vpop.permute.xlu0 %8011
  %8013 = vrot.lane.b32.xlu0 %v7983, 96
  %v8014 = vpop.permute.xlu0 %8013
  %8015 = vrot.lane.b32.xlu0 %v7987, 96
  %v8016 = vpop.permute.xlu0 %8015
  %8017 = vrot.lane.b32.xlu0 %v7986, 96
  %v8018 = vpop.permute.xlu0 %8017
  %8019 = vrot.lane.b32.xlu0 %v7990, 96
  %v8020 = vpop.permute.xlu0 %8019
  %8021 = vrot.lane.b32.xlu0 %v7989, 96
  %v8022 = vpop.permute.xlu0 %8021
  %v8039 = vsel %vm6574, %v6019, %v7992
  %v8040 = vsel %vm6574, %v6020, %v7994
  %v8041 = vsel %vm6574, %v6021, %v7996
  %v8042 = vsel %vm6574, %v6022, %v7998
  %v8043 = vsel %vm6574, %v6023, %v8000
  %v8044 = vsel %vm6574, %v6024, %v8002
  %v8045 = vsel %vm6574, %v6025, %v8004
  %v8046 = vsel %vm6574, %v6026, %v8006
  %v8047 = vsel %vm6574, %v6027, %v8008
  %v8048 = vsel %vm6574, %v6028, %v8010
  %v8049 = vsel %vm6574, %v6029, %v8012
  %v8050 = vsel %vm6574, %v6030, %v8014
  %v8051 = vsel %vm6574, %v6031, %v8016
  %v8052 = vsel %vm6574, %v6032, %v8018
  %v8053 = vsel %vm6574, %v6033, %v8020
  %v8054 = vsel %vm6574, %v6034, %v8022
  %v8071 = vcombine.high %v8039, %v8039
  %v8073 = vunpack.c.l.s4 1966171168
  %v8074 = vunpack.c.0.s8 %v8073
  %v8075 = vlaneseq
  %v8076 = vshrl.u32 %v8075, 7
  %v8077 = vsub.s32 %v8074, %v8076
  %v8078 = vrot.slane %v8039, %v8077
  %v8080 = vunpack.c.l.s4 1966171168
  %v8081 = vunpack.c.0.s8 %v8080
  %v8082 = vlaneseq
  %v8083 = vshrl.u32 %v8082, 7
  %v8084 = vsub.s32 %v8081, %v8083
  %v8085 = vrot.slane %v8071, %v8084
  %v8086 = vcombine.high %v8078, %v8078
  %v8087 = vcombine.high %v8085, %v8085
  %v8089 = vunpack.c.l.s4 1966171168
  %v8090 = vunpack.c.0.s8 %v8089
  %v8091 = vlaneseq
  %v8092 = vshrl.u32 %v8091, 7
  %v8093 = vsub.s32 %v8090, %v8092
  %v8094 = vrot.slane %v8078, %v8093
  %v8096 = vunpack.c.l.s4 1966171168
  %v8097 = vunpack.c.0.s8 %v8096
  %v8098 = vlaneseq
  %v8099 = vshrl.u32 %v8098, 7
  %v8100 = vsub.s32 %v8097, %v8099
  %v8101 = vrot.slane %v8085, %v8100
  %v8103 = vunpack.c.l.s4 1966171168
  %v8104 = vunpack.c.0.s8 %v8103
  %v8105 = vlaneseq
  %v8106 = vshrl.u32 %v8105, 7
  %v8107 = vsub.s32 %v8104, %v8106
  %v8108 = vrot.slane %v8086, %v8107
  %v8110 = vunpack.c.l.s4 1966171168
  %v8111 = vunpack.c.0.s8 %v8110
  %v8112 = vlaneseq
  %v8113 = vshrl.u32 %v8112, 7
  %v8114 = vsub.s32 %v8111, %v8113
  %v8115 = vrot.slane %v8087, %v8114
  %v8116 = vcombine.high %v8094, %v8094
  %v8117 = vcombine.high %v8101, %v8101
  %v8118 = vcombine.high %v8108, %v8108
  %v8119 = vcombine.high %v8115, %v8115
  %v8120 = vcombine.high %v8040, %v8040
  %v8122 = vunpack.c.l.s4 1966171168
  %v8123 = vunpack.c.0.s8 %v8122
  %v8124 = vlaneseq
  %v8125 = vshrl.u32 %v8124, 7
  %v8126 = vsub.s32 %v8123, %v8125
  %v8127 = vrot.slane %v8040, %v8126
  %v8129 = vunpack.c.l.s4 1966171168
  %v8130 = vunpack.c.0.s8 %v8129
  %v8131 = vlaneseq
  %v8132 = vshrl.u32 %v8131, 7
  %v8133 = vsub.s32 %v8130, %v8132
  %v8134 = vrot.slane %v8120, %v8133
  %v8135 = vcombine.high %v8127, %v8127
  %v8137 = vunpack.c.l.s4 1966171168
  %v8138 = vunpack.c.0.s8 %v8137
  %v8139 = vlaneseq
  %v8140 = vshrl.u32 %v8139, 7
  %v8141 = vsub.s32 %v8138, %v8140
  %v8142 = vrot.slane %v8127, %v8141
  %v8144 = vunpack.c.l.s4 1966171168
  %v8145 = vunpack.c.0.s8 %v8144
  %v8146 = vlaneseq
  %v8147 = vshrl.u32 %v8146, 7
  %v8148 = vsub.s32 %v8145, %v8147
  %v8149 = vrot.slane %v8134, %v8148
  %v8151 = vunpack.c.l.s4 1966171168
  %v8152 = vunpack.c.0.s8 %v8151
  %v8153 = vlaneseq
  %v8154 = vshrl.u32 %v8153, 7
  %v8155 = vsub.s32 %v8152, %v8154
  %v8156 = vrot.slane %v8135, %v8155
  %v8157 = vcombine.high %v8142, %v8142
  %v8158 = vcombine.high %v8156, %v8156
  %v8159 = vcombine.high %v8041, %v8041
  %v8161 = vunpack.c.l.s4 1966171168
  %v8162 = vunpack.c.0.s8 %v8161
  %v8163 = vlaneseq
  %v8164 = vshrl.u32 %v8163, 7
  %v8165 = vsub.s32 %v8162, %v8164
  %v8166 = vrot.slane %v8041, %v8165
  %v8168 = vunpack.c.l.s4 1966171168
  %v8169 = vunpack.c.0.s8 %v8168
  %v8170 = vlaneseq
  %v8171 = vshrl.u32 %v8170, 7
  %v8172 = vsub.s32 %v8169, %v8171
  %v8173 = vrot.slane %v8159, %v8172
  %v8174 = vcombine.high %v8166, %v8166
  %v8175 = vcombine.high %v8173, %v8173
  %v8177 = vunpack.c.l.s4 1966171168
  %v8178 = vunpack.c.0.s8 %v8177
  %v8179 = vlaneseq
  %v8180 = vshrl.u32 %v8179, 7
  %v8181 = vsub.s32 %v8178, %v8180
  %v8182 = vrot.slane %v8166, %v8181
  %v8184 = vunpack.c.l.s4 1966171168
  %v8185 = vunpack.c.0.s8 %v8184
  %v8186 = vlaneseq
  %v8187 = vshrl.u32 %v8186, 7
  %v8188 = vsub.s32 %v8185, %v8187
  %v8189 = vrot.slane %v8173, %v8188
  %v8191 = vunpack.c.l.s4 1966171168
  %v8192 = vunpack.c.0.s8 %v8191
  %v8193 = vlaneseq
  %v8194 = vshrl.u32 %v8193, 7
  %v8195 = vsub.s32 %v8192, %v8194
  %v8196 = vrot.slane %v8174, %v8195
  %v8198 = vunpack.c.l.s4 1966171168
  %v8199 = vunpack.c.0.s8 %v8198
  %v8200 = vlaneseq
  %v8201 = vshrl.u32 %v8200, 7
  %v8202 = vsub.s32 %v8199, %v8201
  %v8203 = vrot.slane %v8175, %v8202
  %v8204 = vcombine.high %v8182, %v8182
  %v8205 = vcombine.high %v8189, %v8189
  %v8206 = vcombine.high %v8196, %v8196
  %v8207 = vcombine.high %v8203, %v8203
  %v8208 = vcombine.high %v8042, %v8042
  %v8210 = vunpack.c.l.s4 1966171168
  %v8211 = vunpack.c.0.s8 %v8210
  %v8212 = vlaneseq
  %v8213 = vshrl.u32 %v8212, 7
  %v8214 = vsub.s32 %v8211, %v8213
  %v8215 = vrot.slane %v8042, %v8214
  %v8217 = vunpack.c.l.s4 1966171168
  %v8218 = vunpack.c.0.s8 %v8217
  %v8219 = vlaneseq
  %v8220 = vshrl.u32 %v8219, 7
  %v8221 = vsub.s32 %v8218, %v8220
  %v8222 = vrot.slane %v8208, %v8221
  %v8223 = vcombine.high %v8215, %v8215
  %v8225 = vunpack.c.l.s4 1966171168
  %v8226 = vunpack.c.0.s8 %v8225
  %v8227 = vlaneseq
  %v8228 = vshrl.u32 %v8227, 7
  %v8229 = vsub.s32 %v8226, %v8228
  %v8230 = vrot.slane %v8215, %v8229
  %v8232 = vunpack.c.l.s4 1966171168
  %v8233 = vunpack.c.0.s8 %v8232
  %v8234 = vlaneseq
  %v8235 = vshrl.u32 %v8234, 7
  %v8236 = vsub.s32 %v8233, %v8235
  %v8237 = vrot.slane %v8222, %v8236
  %v8239 = vunpack.c.l.s4 1966171168
  %v8240 = vunpack.c.0.s8 %v8239
  %v8241 = vlaneseq
  %v8242 = vshrl.u32 %v8241, 7
  %v8243 = vsub.s32 %v8240, %v8242
  %v8244 = vrot.slane %v8223, %v8243
  %v8245 = vcombine.high %v8230, %v8230
  %v8246 = vcombine.high %v8244, %v8244
  %v8247 = vcombine.high %v8043, %v8043
  %v8249 = vunpack.c.l.s4 1966171168
  %v8250 = vunpack.c.0.s8 %v8249
  %v8251 = vlaneseq
  %v8252 = vshrl.u32 %v8251, 7
  %v8253 = vsub.s32 %v8250, %v8252
  %v8254 = vrot.slane %v8043, %v8253
  %v8256 = vunpack.c.l.s4 1966171168
  %v8257 = vunpack.c.0.s8 %v8256
  %v8258 = vlaneseq
  %v8259 = vshrl.u32 %v8258, 7
  %v8260 = vsub.s32 %v8257, %v8259
  %v8261 = vrot.slane %v8247, %v8260
  %v8262 = vcombine.high %v8254, %v8254
  %v8263 = vcombine.high %v8261, %v8261
  %v8265 = vunpack.c.l.s4 1966171168
  %v8266 = vunpack.c.0.s8 %v8265
  %v8267 = vlaneseq
  %v8268 = vshrl.u32 %v8267, 7
  %v8269 = vsub.s32 %v8266, %v8268
  %v8270 = vrot.slane %v8254, %v8269
  %v8272 = vunpack.c.l.s4 1966171168
  %v8273 = vunpack.c.0.s8 %v8272
  %v8274 = vlaneseq
  %v8275 = vshrl.u32 %v8274, 7
  %v8276 = vsub.s32 %v8273, %v8275
  %v8277 = vrot.slane %v8261, %v8276
  %v8279 = vunpack.c.l.s4 1966171168
  %v8280 = vunpack.c.0.s8 %v8279
  %v8281 = vlaneseq
  %v8282 = vshrl.u32 %v8281, 7
  %v8283 = vsub.s32 %v8280, %v8282
  %v8284 = vrot.slane %v8262, %v8283
  %v8286 = vunpack.c.l.s4 1966171168
  %v8287 = vunpack.c.0.s8 %v8286
  %v8288 = vlaneseq
  %v8289 = vshrl.u32 %v8288, 7
  %v8290 = vsub.s32 %v8287, %v8289
  %v8291 = vrot.slane %v8263, %v8290
  %v8292 = vcombine.high %v8270, %v8270
  %v8293 = vcombine.high %v8277, %v8277
  %v8294 = vcombine.high %v8284, %v8284
  %v8295 = vcombine.high %v8291, %v8291
  %v8296 = vcombine.high %v8044, %v8044
  %v8298 = vunpack.c.l.s4 1966171168
  %v8299 = vunpack.c.0.s8 %v8298
  %v8300 = vlaneseq
  %v8301 = vshrl.u32 %v8300, 7
  %v8302 = vsub.s32 %v8299, %v8301
  %v8303 = vrot.slane %v8044, %v8302
  %v8305 = vunpack.c.l.s4 1966171168
  %v8306 = vunpack.c.0.s8 %v8305
  %v8307 = vlaneseq
  %v8308 = vshrl.u32 %v8307, 7
  %v8309 = vsub.s32 %v8306, %v8308
  %v8310 = vrot.slane %v8296, %v8309
  %v8311 = vcombine.high %v8303, %v8303
  %v8313 = vunpack.c.l.s4 1966171168
  %v8314 = vunpack.c.0.s8 %v8313
  %v8315 = vlaneseq
  %v8316 = vshrl.u32 %v8315, 7
  %v8317 = vsub.s32 %v8314, %v8316
  %v8318 = vrot.slane %v8303, %v8317
  %v8320 = vunpack.c.l.s4 1966171168
  %v8321 = vunpack.c.0.s8 %v8320
  %v8322 = vlaneseq
  %v8323 = vshrl.u32 %v8322, 7
  %v8324 = vsub.s32 %v8321, %v8323
  %v8325 = vrot.slane %v8310, %v8324
  %v8327 = vunpack.c.l.s4 1966171168
  %v8328 = vunpack.c.0.s8 %v8327
  %v8329 = vlaneseq
  %v8330 = vshrl.u32 %v8329, 7
  %v8331 = vsub.s32 %v8328, %v8330
  %v8332 = vrot.slane %v8311, %v8331
  %v8333 = vcombine.high %v8318, %v8318
  %v8334 = vcombine.high %v8332, %v8332
  %v8335 = vcombine.high %v8045, %v8045
  %v8337 = vunpack.c.l.s4 1966171168
  %v8338 = vunpack.c.0.s8 %v8337
  %v8339 = vlaneseq
  %v8340 = vshrl.u32 %v8339, 7
  %v8341 = vsub.s32 %v8338, %v8340
  %v8342 = vrot.slane %v8045, %v8341
  %v8344 = vunpack.c.l.s4 1966171168
  %v8345 = vunpack.c.0.s8 %v8344
  %v8346 = vlaneseq
  %v8347 = vshrl.u32 %v8346, 7
  %v8348 = vsub.s32 %v8345, %v8347
  %v8349 = vrot.slane %v8335, %v8348
  %v8350 = vcombine.high %v8342, %v8342
  %v8351 = vcombine.high %v8349, %v8349
  %v8353 = vunpack.c.l.s4 1966171168
  %v8354 = vunpack.c.0.s8 %v8353
  %v8355 = vlaneseq
  %v8356 = vshrl.u32 %v8355, 7
  %v8357 = vsub.s32 %v8354, %v8356
  %v8358 = vrot.slane %v8342, %v8357
  %v8360 = vunpack.c.l.s4 1966171168
  %v8361 = vunpack.c.0.s8 %v8360
  %v8362 = vlaneseq
  %v8363 = vshrl.u32 %v8362, 7
  %v8364 = vsub.s32 %v8361, %v8363
  %v8365 = vrot.slane %v8349, %v8364
  %v8367 = vunpack.c.l.s4 1966171168
  %v8368 = vunpack.c.0.s8 %v8367
  %v8369 = vlaneseq
  %v8370 = vshrl.u32 %v8369, 7
  %v8371 = vsub.s32 %v8368, %v8370
  %v8372 = vrot.slane %v8350, %v8371
  %v8374 = vunpack.c.l.s4 1966171168
  %v8375 = vunpack.c.0.s8 %v8374
  %v8376 = vlaneseq
  %v8377 = vshrl.u32 %v8376, 7
  %v8378 = vsub.s32 %v8375, %v8377
  %v8379 = vrot.slane %v8351, %v8378
  %v8380 = vcombine.high %v8358, %v8358
  %v8381 = vcombine.high %v8365, %v8365
  %v8382 = vcombine.high %v8372, %v8372
  %v8383 = vcombine.high %v8379, %v8379
  %v8384 = vcombine.high %v8046, %v8046
  %v8386 = vunpack.c.l.s4 1966171168
  %v8387 = vunpack.c.0.s8 %v8386
  %v8388 = vlaneseq
  %v8389 = vshrl.u32 %v8388, 7
  %v8390 = vsub.s32 %v8387, %v8389
  %v8391 = vrot.slane %v8046, %v8390
  %v8393 = vunpack.c.l.s4 1966171168
  %v8394 = vunpack.c.0.s8 %v8393
  %v8395 = vlaneseq
  %v8396 = vshrl.u32 %v8395, 7
  %v8397 = vsub.s32 %v8394, %v8396
  %v8398 = vrot.slane %v8384, %v8397
  %v8399 = vcombine.high %v8391, %v8391
  %v8401 = vunpack.c.l.s4 1966171168
  %v8402 = vunpack.c.0.s8 %v8401
  %v8403 = vlaneseq
  %v8404 = vshrl.u32 %v8403, 7
  %v8405 = vsub.s32 %v8402, %v8404
  %v8406 = vrot.slane %v8391, %v8405
  %v8408 = vunpack.c.l.s4 1966171168
  %v8409 = vunpack.c.0.s8 %v8408
  %v8410 = vlaneseq
  %v8411 = vshrl.u32 %v8410, 7
  %v8412 = vsub.s32 %v8409, %v8411
  %v8413 = vrot.slane %v8398, %v8412
  %v8415 = vunpack.c.l.s4 1966171168
  %v8416 = vunpack.c.0.s8 %v8415
  %v8417 = vlaneseq
  %v8418 = vshrl.u32 %v8417, 7
  %v8419 = vsub.s32 %v8416, %v8418
  %v8420 = vrot.slane %v8399, %v8419
  %v8421 = vcombine.high %v8406, %v8406
  %v8422 = vcombine.high %v8420, %v8420
  %v8423 = vcombine.high %v8047, %v8047
  %v8425 = vunpack.c.l.s4 1966171168
  %v8426 = vunpack.c.0.s8 %v8425
  %v8427 = vlaneseq
  %v8428 = vshrl.u32 %v8427, 7
  %v8429 = vsub.s32 %v8426, %v8428
  %v8430 = vrot.slane %v8047, %v8429
  %v8432 = vunpack.c.l.s4 1966171168
  %v8433 = vunpack.c.0.s8 %v8432
  %v8434 = vlaneseq
  %v8435 = vshrl.u32 %v8434, 7
  %v8436 = vsub.s32 %v8433, %v8435
  %v8437 = vrot.slane %v8423, %v8436
  %v8438 = vcombine.high %v8430, %v8430
  %v8439 = vcombine.high %v8437, %v8437
  %v8441 = vunpack.c.l.s4 1966171168
  %v8442 = vunpack.c.0.s8 %v8441
  %v8443 = vlaneseq
  %v8444 = vshrl.u32 %v8443, 7
  %v8445 = vsub.s32 %v8442, %v8444
  %v8446 = vrot.slane %v8430, %v8445
  %v8448 = vunpack.c.l.s4 1966171168
  %v8449 = vunpack.c.0.s8 %v8448
  %v8450 = vlaneseq
  %v8451 = vshrl.u32 %v8450, 7
  %v8452 = vsub.s32 %v8449, %v8451
  %v8453 = vrot.slane %v8437, %v8452
  %v8455 = vunpack.c.l.s4 1966171168
  %v8456 = vunpack.c.0.s8 %v8455
  %v8457 = vlaneseq
  %v8458 = vshrl.u32 %v8457, 7
  %v8459 = vsub.s32 %v8456, %v8458
  %v8460 = vrot.slane %v8438, %v8459
  %v8462 = vunpack.c.l.s4 1966171168
  %v8463 = vunpack.c.0.s8 %v8462
  %v8464 = vlaneseq
  %v8465 = vshrl.u32 %v8464, 7
  %v8466 = vsub.s32 %v8463, %v8465
  %v8467 = vrot.slane %v8439, %v8466
  %v8468 = vcombine.high %v8446, %v8446
  %v8469 = vcombine.high %v8453, %v8453
  %v8470 = vcombine.high %v8460, %v8460
  %v8471 = vcombine.high %v8467, %v8467
  %v8472 = vcombine.high %v8048, %v8048
  %v8474 = vunpack.c.l.s4 1966171168
  %v8475 = vunpack.c.0.s8 %v8474
  %v8476 = vlaneseq
  %v8477 = vshrl.u32 %v8476, 7
  %v8478 = vsub.s32 %v8475, %v8477
  %v8479 = vrot.slane %v8048, %v8478
  %v8481 = vunpack.c.l.s4 1966171168
  %v8482 = vunpack.c.0.s8 %v8481
  %v8483 = vlaneseq
  %v8484 = vshrl.u32 %v8483, 7
  %v8485 = vsub.s32 %v8482, %v8484
  %v8486 = vrot.slane %v8472, %v8485
  %v8487 = vcombine.high %v8479, %v8479
  %v8489 = vunpack.c.l.s4 1966171168
  %v8490 = vunpack.c.0.s8 %v8489
  %v8491 = vlaneseq
  %v8492 = vshrl.u32 %v8491, 7
  %v8493 = vsub.s32 %v8490, %v8492
  %v8494 = vrot.slane %v8479, %v8493
  %v8496 = vunpack.c.l.s4 1966171168
  %v8497 = vunpack.c.0.s8 %v8496
  %v8498 = vlaneseq
  %v8499 = vshrl.u32 %v8498, 7
  %v8500 = vsub.s32 %v8497, %v8499
  %v8501 = vrot.slane %v8486, %v8500
  %v8503 = vunpack.c.l.s4 1966171168
  %v8504 = vunpack.c.0.s8 %v8503
  %v8505 = vlaneseq
  %v8506 = vshrl.u32 %v8505, 7
  %v8507 = vsub.s32 %v8504, %v8506
  %v8508 = vrot.slane %v8487, %v8507
  %v8509 = vcombine.high %v8494, %v8494
  %v8510 = vcombine.high %v8508, %v8508
  %v8511 = vcombine.high %v8049, %v8049
  %v8513 = vunpack.c.l.s4 1966171168
  %v8514 = vunpack.c.0.s8 %v8513
  %v8515 = vlaneseq
  %v8516 = vshrl.u32 %v8515, 7
  %v8517 = vsub.s32 %v8514, %v8516
  %v8518 = vrot.slane %v8049, %v8517
  %v8520 = vunpack.c.l.s4 1966171168
  %v8521 = vunpack.c.0.s8 %v8520
  %v8522 = vlaneseq
  %v8523 = vshrl.u32 %v8522, 7
  %v8524 = vsub.s32 %v8521, %v8523
  %v8525 = vrot.slane %v8511, %v8524
  %v8526 = vcombine.high %v8518, %v8518
  %v8527 = vcombine.high %v8525, %v8525
  %v8529 = vunpack.c.l.s4 1966171168
  %v8530 = vunpack.c.0.s8 %v8529
  %v8531 = vlaneseq
  %v8532 = vshrl.u32 %v8531, 7
  %v8533 = vsub.s32 %v8530, %v8532
  %v8534 = vrot.slane %v8518, %v8533
  %v8536 = vunpack.c.l.s4 1966171168
  %v8537 = vunpack.c.0.s8 %v8536
  %v8538 = vlaneseq
  %v8539 = vshrl.u32 %v8538, 7
  %v8540 = vsub.s32 %v8537, %v8539
  %v8541 = vrot.slane %v8525, %v8540
  %v8543 = vunpack.c.l.s4 1966171168
  %v8544 = vunpack.c.0.s8 %v8543
  %v8545 = vlaneseq
  %v8546 = vshrl.u32 %v8545, 7
  %v8547 = vsub.s32 %v8544, %v8546
  %v8548 = vrot.slane %v8526, %v8547
  %v8550 = vunpack.c.l.s4 1966171168
  %v8551 = vunpack.c.0.s8 %v8550
  %v8552 = vlaneseq
  %v8553 = vshrl.u32 %v8552, 7
  %v8554 = vsub.s32 %v8551, %v8553
  %v8555 = vrot.slane %v8527, %v8554
  %v8556 = vcombine.high %v8534, %v8534
  %v8557 = vcombine.high %v8541, %v8541
  %v8558 = vcombine.high %v8548, %v8548
  %v8559 = vcombine.high %v8555, %v8555
  %v8560 = vcombine.high %v8050, %v8050
  %v8562 = vunpack.c.l.s4 1966171168
  %v8563 = vunpack.c.0.s8 %v8562
  %v8564 = vlaneseq
  %v8565 = vshrl.u32 %v8564, 7
  %v8566 = vsub.s32 %v8563, %v8565
  %v8567 = vrot.slane %v8050, %v8566
  %v8569 = vunpack.c.l.s4 1966171168
  %v8570 = vunpack.c.0.s8 %v8569
  %v8571 = vlaneseq
  %v8572 = vshrl.u32 %v8571, 7
  %v8573 = vsub.s32 %v8570, %v8572
  %v8574 = vrot.slane %v8560, %v8573
  %v8575 = vcombine.high %v8567, %v8567
  %v8577 = vunpack.c.l.s4 1966171168
  %v8578 = vunpack.c.0.s8 %v8577
  %v8579 = vlaneseq
  %v8580 = vshrl.u32 %v8579, 7
  %v8581 = vsub.s32 %v8578, %v8580
  %v8582 = vrot.slane %v8567, %v8581
  %v8584 = vunpack.c.l.s4 1966171168
  %v8585 = vunpack.c.0.s8 %v8584
  %v8586 = vlaneseq
  %v8587 = vshrl.u32 %v8586, 7
  %v8588 = vsub.s32 %v8585, %v8587
  %v8589 = vrot.slane %v8574, %v8588
  %v8591 = vunpack.c.l.s4 1966171168
  %v8592 = vunpack.c.0.s8 %v8591
  %v8593 = vlaneseq
  %v8594 = vshrl.u32 %v8593, 7
  %v8595 = vsub.s32 %v8592, %v8594
  %v8596 = vrot.slane %v8575, %v8595
  %v8597 = vcombine.high %v8582, %v8582
  %v8598 = vcombine.high %v8596, %v8596
  %v8599 = vcombine.high %v8051, %v8051
  %v8601 = vunpack.c.l.s4 1966171168
  %v8602 = vunpack.c.0.s8 %v8601
  %v8603 = vlaneseq
  %v8604 = vshrl.u32 %v8603, 7
  %v8605 = vsub.s32 %v8602, %v8604
  %v8606 = vrot.slane %v8051, %v8605
  %v8608 = vunpack.c.l.s4 1966171168
  %v8609 = vunpack.c.0.s8 %v8608
  %v8610 = vlaneseq
  %v8611 = vshrl.u32 %v8610, 7
  %v8612 = vsub.s32 %v8609, %v8611
  %v8613 = vrot.slane %v8599, %v8612
  %v8614 = vcombine.high %v8606, %v8606
  %v8615 = vcombine.high %v8613, %v8613
  %v8617 = vunpack.c.l.s4 1966171168
  %v8618 = vunpack.c.0.s8 %v8617
  %v8619 = vlaneseq
  %v8620 = vshrl.u32 %v8619, 7
  %v8621 = vsub.s32 %v8618, %v8620
  %v8622 = vrot.slane %v8606, %v8621
  %v8624 = vunpack.c.l.s4 1966171168
  %v8625 = vunpack.c.0.s8 %v8624
  %v8626 = vlaneseq
  %v8627 = vshrl.u32 %v8626, 7
  %v8628 = vsub.s32 %v8625, %v8627
  %v8629 = vrot.slane %v8613, %v8628
  %v8631 = vunpack.c.l.s4 1966171168
  %v8632 = vunpack.c.0.s8 %v8631
  %v8633 = vlaneseq
  %v8634 = vshrl.u32 %v8633, 7
  %v8635 = vsub.s32 %v8632, %v8634
  %v8636 = vrot.slane %v8614, %v8635
  %v8638 = vunpack.c.l.s4 1966171168
  %v8639 = vunpack.c.0.s8 %v8638
  %v8640 = vlaneseq
  %v8641 = vshrl.u32 %v8640, 7
  %v8642 = vsub.s32 %v8639, %v8641
  %v8643 = vrot.slane %v8615, %v8642
  %v8644 = vcombine.high %v8622, %v8622
  %v8645 = vcombine.high %v8629, %v8629
  %v8646 = vcombine.high %v8636, %v8636
  %v8647 = vcombine.high %v8643, %v8643
  %v8648 = vcombine.high %v8052, %v8052
  %v8650 = vunpack.c.l.s4 1966171168
  %v8651 = vunpack.c.0.s8 %v8650
  %v8652 = vlaneseq
  %v8653 = vshrl.u32 %v8652, 7
  %v8654 = vsub.s32 %v8651, %v8653
  %v8655 = vrot.slane %v8052, %v8654
  %v8657 = vunpack.c.l.s4 1966171168
  %v8658 = vunpack.c.0.s8 %v8657
  %v8659 = vlaneseq
  %v8660 = vshrl.u32 %v8659, 7
  %v8661 = vsub.s32 %v8658, %v8660
  %v8662 = vrot.slane %v8648, %v8661
  %v8663 = vcombine.high %v8655, %v8655
  %v8665 = vunpack.c.l.s4 1966171168
  %v8666 = vunpack.c.0.s8 %v8665
  %v8667 = vlaneseq
  %v8668 = vshrl.u32 %v8667, 7
  %v8669 = vsub.s32 %v8666, %v8668
  %v8670 = vrot.slane %v8655, %v8669
  %v8672 = vunpack.c.l.s4 1966171168
  %v8673 = vunpack.c.0.s8 %v8672
  %v8674 = vlaneseq
  %v8675 = vshrl.u32 %v8674, 7
  %v8676 = vsub.s32 %v8673, %v8675
  %v8677 = vrot.slane %v8662, %v8676
  %v8679 = vunpack.c.l.s4 1966171168
  %v8680 = vunpack.c.0.s8 %v8679
  %v8681 = vlaneseq
  %v8682 = vshrl.u32 %v8681, 7
  %v8683 = vsub.s32 %v8680, %v8682
  %v8684 = vrot.slane %v8663, %v8683
  %v8685 = vcombine.high %v8670, %v8670
  %v8686 = vcombine.high %v8684, %v8684
  %v8687 = vcombine.high %v8053, %v8053
  %v8689 = vunpack.c.l.s4 1966171168
  %v8690 = vunpack.c.0.s8 %v8689
  %v8691 = vlaneseq
  %v8692 = vshrl.u32 %v8691, 7
  %v8693 = vsub.s32 %v8690, %v8692
  %v8694 = vrot.slane %v8053, %v8693
  %v8696 = vunpack.c.l.s4 1966171168
  %v8697 = vunpack.c.0.s8 %v8696
  %v8698 = vlaneseq
  %v8699 = vshrl.u32 %v8698, 7
  %v8700 = vsub.s32 %v8697, %v8699
  %v8701 = vrot.slane %v8687, %v8700
  %v8702 = vcombine.high %v8694, %v8694
  %v8703 = vcombine.high %v8701, %v8701
  %v8705 = vunpack.c.l.s4 1966171168
  %v8706 = vunpack.c.0.s8 %v8705
  %v8707 = vlaneseq
  %v8708 = vshrl.u32 %v8707, 7
  %v8709 = vsub.s32 %v8706, %v8708
  %v8710 = vrot.slane %v8694, %v8709
  %v8712 = vunpack.c.l.s4 1966171168
  %v8713 = vunpack.c.0.s8 %v8712
  %v8714 = vlaneseq
  %v8715 = vshrl.u32 %v8714, 7
  %v8716 = vsub.s32 %v8713, %v8715
  %v8717 = vrot.slane %v8701, %v8716
  %v8719 = vunpack.c.l.s4 1966171168
  %v8720 = vunpack.c.0.s8 %v8719
  %v8721 = vlaneseq
  %v8722 = vshrl.u32 %v8721, 7
  %v8723 = vsub.s32 %v8720, %v8722
  %v8724 = vrot.slane %v8702, %v8723
  %v8726 = vunpack.c.l.s4 1966171168
  %v8727 = vunpack.c.0.s8 %v8726
  %v8728 = vlaneseq
  %v8729 = vshrl.u32 %v8728, 7
  %v8730 = vsub.s32 %v8727, %v8729
  %v8731 = vrot.slane %v8703, %v8730
  %v8732 = vcombine.high %v8710, %v8710
  %v8733 = vcombine.high %v8717, %v8717
  %v8734 = vcombine.high %v8724, %v8724
  %v8735 = vcombine.high %v8731, %v8731
  %v8736 = vcombine.high %v8054, %v8054
  %v8738 = vunpack.c.l.s4 1966171168
  %v8739 = vunpack.c.0.s8 %v8738
  %v8740 = vlaneseq
  %v8741 = vshrl.u32 %v8740, 7
  %v8742 = vsub.s32 %v8739, %v8741
  %v8743 = vrot.slane %v8054, %v8742
  %v8745 = vunpack.c.l.s4 1966171168
  %v8746 = vunpack.c.0.s8 %v8745
  %v8747 = vlaneseq
  %v8748 = vshrl.u32 %v8747, 7
  %v8749 = vsub.s32 %v8746, %v8748
  %v8750 = vrot.slane %v8736, %v8749
  %v8751 = vcombine.high %v8743, %v8743
  %v8753 = vunpack.c.l.s4 1966171168
  %v8754 = vunpack.c.0.s8 %v8753
  %v8755 = vlaneseq
  %v8756 = vshrl.u32 %v8755, 7
  %v8757 = vsub.s32 %v8754, %v8756
  %v8758 = vrot.slane %v8743, %v8757
  %v8760 = vunpack.c.l.s4 1966171168
  %v8761 = vunpack.c.0.s8 %v8760
  %v8762 = vlaneseq
  %v8763 = vshrl.u32 %v8762, 7
  %v8764 = vsub.s32 %v8761, %v8763
  %v8765 = vrot.slane %v8750, %v8764
  %v8767 = vunpack.c.l.s4 1966171168
  %v8768 = vunpack.c.0.s8 %v8767
  %v8769 = vlaneseq
  %v8770 = vshrl.u32 %v8769, 7
  %v8771 = vsub.s32 %v8768, %v8770
  %v8772 = vrot.slane %v8751, %v8771
  %v8773 = vcombine.high %v8758, %v8758
  %v8774 = vcombine.high %v8772, %v8772
  %s8775 = scalar_lea.vmem %s1, 480
  %v8776 = vld [vmem:[%s8775] sm:$0xff]
  %v8777 = vld [vmem:[%s8775 + $0x8] sm:$0xff]
  %v8778 = vld [vmem:[%s8775 + $0x10] sm:$0xff]
  %v8779 = vld [vmem:[%s8775 + $0x18] sm:$0xff]
  %v8780 = vld [vmem:[%s8775 + $0x20] sm:$0xff]
  %v8781 = vld [vmem:[%s8775 + $0x28] sm:$0xff]
  %v8782 = vld [vmem:[%s8775 + $0x30] sm:$0xff]
  %v8783 = vld [vmem:[%s8775 + $0x38] sm:$0xff]
  %v8784 = vld [vmem:[%s8775 + $0x40] sm:$0xff]
  %v8785 = vld [vmem:[%s8775 + $0x48] sm:$0xff]
  %v8786 = vld [vmem:[%s8775 + $0x50] sm:$0xff]
  %v8787 = vld [vmem:[%s8775 + $0x58] sm:$0xff]
  %v8788 = vld [vmem:[%s8775 + $0x60] sm:$0xff]
  %v8789 = vld [vmem:[%s8775 + $0x68] sm:$0xff]
  %v8790 = vld [vmem:[%s8775 + $0x70] sm:$0xff]
  %v8791 = vld [vmem:[%s8775 + $0x78] sm:$0xff]
  %s8792 = scalar_lea.vmem %s2, 3
  %v8793 = vld [vmem:[%s8792] sm:$0x1]
  %v8795 = vlaneseq
  %v8796 = vshrl.u32 %v8795, 7
  %v8797 = vsub.s32 0, %v8796
  %v8798 = vrot.slane %v8793, %v8797
  %v8800 = vcombine.low %v8094, %v8108
  %v8801 = vcombine.low %v8116, %v8118
  %v8802 = vcombine.low %v8101, %v8115
  %v8803 = vcombine.low %v8117, %v8119
  %v8805 = vunpack.c.l.s4 1966171168
  %v8806 = vunpack.c.0.s8 %v8805
  %v8807 = vlaneseq
  %v8808 = vshrl.u32 %v8807, 7
  %v8809 = vsub.s32 %v8806, %v8808
  %v8810 = vrot.slane %v8800, %v8809
  %v8812 = vunpack.c.l.s4 1966171168
  %v8813 = vunpack.c.0.s8 %v8812
  %v8814 = vlaneseq
  %v8815 = vshrl.u32 %v8814, 7
  %v8816 = vsub.s32 %v8813, %v8815
  %v8817 = vrot.slane %v8801, %v8816
  %v8819 = vunpack.c.l.s4 1966171168
  %v8820 = vunpack.c.0.s8 %v8819
  %v8821 = vlaneseq
  %v8822 = vshrl.u32 %v8821, 7
  %v8823 = vsub.s32 %v8820, %v8822
  %v8824 = vrot.slane %v8802, %v8823
  %v8826 = vunpack.c.l.s4 1966171168
  %v8827 = vunpack.c.0.s8 %v8826
  %v8828 = vlaneseq
  %v8829 = vshrl.u32 %v8828, 7
  %v8830 = vsub.s32 %v8827, %v8829
  %v8831 = vrot.slane %v8803, %v8830
  %v8832 = vcombine.low %v8810, %v8817
  %v8833 = vcombine.low %v8824, %v8831
  %v8835 = vunpack.c.l.s4 1966171168
  %v8836 = vunpack.c.0.s8 %v8835
  %v8837 = vlaneseq
  %v8838 = vshrl.u32 %v8837, 7
  %v8839 = vsub.s32 %v8836, %v8838
  %v8840 = vrot.slane %v8832, %v8839
  %v8842 = vunpack.c.l.s4 1966171168
  %v8843 = vunpack.c.0.s8 %v8842
  %v8844 = vlaneseq
  %v8845 = vshrl.u32 %v8844, 7
  %v8846 = vsub.s32 %v8843, %v8845
  %v8847 = vrot.slane %v8833, %v8846
  %v8848 = vcombine.low %v8840, %v8847
  %v8849 = vcombine.low %v8142, %v8156
  %v8850 = vcombine.low %v8157, %v8158
  %v8851 = vcombine.low %v8149, %v8182
  %v8852 = vcombine.low %v8196, %v8204
  %v8854 = vunpack.c.l.s4 1966171168
  %v8855 = vunpack.c.0.s8 %v8854
  %v8856 = vlaneseq
  %v8857 = vshrl.u32 %v8856, 7
  %v8858 = vsub.s32 %v8855, %v8857
  %v8859 = vrot.slane %v8849, %v8858
  %v8861 = vunpack.c.l.s4 1966171168
  %v8862 = vunpack.c.0.s8 %v8861
  %v8863 = vlaneseq
  %v8864 = vshrl.u32 %v8863, 7
  %v8865 = vsub.s32 %v8862, %v8864
  %v8866 = vrot.slane %v8850, %v8865
  %v8868 = vunpack.c.l.s4 1966171168
  %v8869 = vunpack.c.0.s8 %v8868
  %v8870 = vlaneseq
  %v8871 = vshrl.u32 %v8870, 7
  %v8872 = vsub.s32 %v8869, %v8871
  %v8873 = vrot.slane %v8851, %v8872
  %v8875 = vunpack.c.l.s4 1966171168
  %v8876 = vunpack.c.0.s8 %v8875
  %v8877 = vlaneseq
  %v8878 = vshrl.u32 %v8877, 7
  %v8879 = vsub.s32 %v8876, %v8878
  %v8880 = vrot.slane %v8852, %v8879
  %v8881 = vcombine.low %v8859, %v8866
  %v8882 = vcombine.low %v8873, %v8880
  %v8884 = vunpack.c.l.s4 1966171168
  %v8885 = vunpack.c.0.s8 %v8884
  %v8886 = vlaneseq
  %v8887 = vshrl.u32 %v8886, 7
  %v8888 = vsub.s32 %v8885, %v8887
  %v8889 = vrot.slane %v8881, %v8888
  %v8891 = vunpack.c.l.s4 1966171168
  %v8892 = vunpack.c.0.s8 %v8891
  %v8893 = vlaneseq
  %v8894 = vshrl.u32 %v8893, 7
  %v8895 = vsub.s32 %v8892, %v8894
  %v8896 = vrot.slane %v8882, %v8895
  %v8897 = vcombine.low %v8889, %v8896
  %v8898 = vcombine.low %v8206, %v8189
  %v8899 = vcombine.low %v8203, %v8205
  %v8900 = vcombine.low %v8207, %v8230
  %v8901 = vcombine.low %v8244, %v8245
  %v8903 = vunpack.c.l.s4 1966171168
  %v8904 = vunpack.c.0.s8 %v8903
  %v8905 = vlaneseq
  %v8906 = vshrl.u32 %v8905, 7
  %v8907 = vsub.s32 %v8904, %v8906
  %v8908 = vrot.slane %v8898, %v8907
  %v8910 = vunpack.c.l.s4 1966171168
  %v8911 = vunpack.c.0.s8 %v8910
  %v8912 = vlaneseq
  %v8913 = vshrl.u32 %v8912, 7
  %v8914 = vsub.s32 %v8911, %v8913
  %v8915 = vrot.slane %v8899, %v8914
  %v8917 = vunpack.c.l.s4 1966171168
  %v8918 = vunpack.c.0.s8 %v8917
  %v8919 = vlaneseq
  %v8920 = vshrl.u32 %v8919, 7
  %v8921 = vsub.s32 %v8918, %v8920
  %v8922 = vrot.slane %v8900, %v8921
  %v8924 = vunpack.c.l.s4 1966171168
  %v8925 = vunpack.c.0.s8 %v8924
  %v8926 = vlaneseq
  %v8927 = vshrl.u32 %v8926, 7
  %v8928 = vsub.s32 %v8925, %v8927
  %v8929 = vrot.slane %v8901, %v8928
  %v8930 = vcombine.low %v8908, %v8915
  %v8931 = vcombine.low %v8922, %v8929
  %v8933 = vunpack.c.l.s4 1966171168
  %v8934 = vunpack.c.0.s8 %v8933
  %v8935 = vlaneseq
  %v8936 = vshrl.u32 %v8935, 7
  %v8937 = vsub.s32 %v8934, %v8936
  %v8938 = vrot.slane %v8930, %v8937
  %v8940 = vunpack.c.l.s4 1966171168
  %v8941 = vunpack.c.0.s8 %v8940
  %v8942 = vlaneseq
  %v8943 = vshrl.u32 %v8942, 7
  %v8944 = vsub.s32 %v8941, %v8943
  %v8945 = vrot.slane %v8931, %v8944
  %v8946 = vcombine.low %v8938, %v8945
  %v8947 = vcombine.low %v8246, %v8237
  %v8948 = vcombine.low %v8270, %v8284
  %v8949 = vcombine.low %v8292, %v8294
  %v8950 = vcombine.low %v8277, %v8291
  %v8952 = vunpack.c.l.s4 1966171168
  %v8953 = vunpack.c.0.s8 %v8952
  %v8954 = vlaneseq
  %v8955 = vshrl.u32 %v8954, 7
  %v8956 = vsub.s32 %v8953, %v8955
  %v8957 = vrot.slane %v8947, %v8956
  %v8959 = vunpack.c.l.s4 1966171168
  %v8960 = vunpack.c.0.s8 %v8959
  %v8961 = vlaneseq
  %v8962 = vshrl.u32 %v8961, 7
  %v8963 = vsub.s32 %v8960, %v8962
  %v8964 = vrot.slane %v8948, %v8963
  %v8966 = vunpack.c.l.s4 1966171168
  %v8967 = vunpack.c.0.s8 %v8966
  %v8968 = vlaneseq
  %v8969 = vshrl.u32 %v8968, 7
  %v8970 = vsub.s32 %v8967, %v8969
  %v8971 = vrot.slane %v8949, %v8970
  %v8973 = vunpack.c.l.s4 1966171168
  %v8974 = vunpack.c.0.s8 %v8973
  %v8975 = vlaneseq
  %v8976 = vshrl.u32 %v8975, 7
  %v8977 = vsub.s32 %v8974, %v8976
  %v8978 = vrot.slane %v8950, %v8977
  %v8979 = vcombine.low %v8957, %v8964
  %v8980 = vcombine.low %v8971, %v8978
  %v8982 = vunpack.c.l.s4 1966171168
  %v8983 = vunpack.c.0.s8 %v8982
  %v8984 = vlaneseq
  %v8985 = vshrl.u32 %v8984, 7
  %v8986 = vsub.s32 %v8983, %v8985
  %v8987 = vrot.slane %v8979, %v8986
  %v8989 = vunpack.c.l.s4 1966171168
  %v8990 = vunpack.c.0.s8 %v8989
  %v8991 = vlaneseq
  %v8992 = vshrl.u32 %v8991, 7
  %v8993 = vsub.s32 %v8990, %v8992
  %v8994 = vrot.slane %v8980, %v8993
  %v8995 = vcombine.low %v8987, %v8994
  %v8996 = vcombine.low %v8293, %v8295
  %v8997 = vcombine.low %v8318, %v8332
  %v8998 = vcombine.low %v8333, %v8334
  %v8999 = vcombine.low %v8325, %v8358
  %v9001 = vunpack.c.l.s4 1966171168
  %v9002 = vunpack.c.0.s8 %v9001
  %v9003 = vlaneseq
  %v9004 = vshrl.u32 %v9003, 7
  %v9005 = vsub.s32 %v9002, %v9004
  %v9006 = vrot.slane %v8996, %v9005
  %v9008 = vunpack.c.l.s4 1966171168
  %v9009 = vunpack.c.0.s8 %v9008
  %v9010 = vlaneseq
  %v9011 = vshrl.u32 %v9010, 7
  %v9012 = vsub.s32 %v9009, %v9011
  %v9013 = vrot.slane %v8997, %v9012
  %v9015 = vunpack.c.l.s4 1966171168
  %v9016 = vunpack.c.0.s8 %v9015
  %v9017 = vlaneseq
  %v9018 = vshrl.u32 %v9017, 7
  %v9019 = vsub.s32 %v9016, %v9018
  %v9020 = vrot.slane %v8998, %v9019
  %v9022 = vunpack.c.l.s4 1966171168
  %v9023 = vunpack.c.0.s8 %v9022
  %v9024 = vlaneseq
  %v9025 = vshrl.u32 %v9024, 7
  %v9026 = vsub.s32 %v9023, %v9025
  %v9027 = vrot.slane %v8999, %v9026
  %v9028 = vcombine.low %v9006, %v9013
  %v9029 = vcombine.low %v9020, %v9027
  %v9031 = vunpack.c.l.s4 1966171168
  %v9032 = vunpack.c.0.s8 %v9031
  %v9033 = vlaneseq
  %v9034 = vshrl.u32 %v9033, 7
  %v9035 = vsub.s32 %v9032, %v9034
  %v9036 = vrot.slane %v9028, %v9035
  %v9038 = vunpack.c.l.s4 1966171168
  %v9039 = vunpack.c.0.s8 %v9038
  %v9040 = vlaneseq
  %v9041 = vshrl.u32 %v9040, 7
  %v9042 = vsub.s32 %v9039, %v9041
  %v9043 = vrot.slane %v9029, %v9042
  %v9044 = vcombine.low %v9036, %v9043
  %v9045 = vcombine.low %v8372, %v8380
  %v9046 = vcombine.low %v8382, %v8365
  %v9047 = vcombine.low %v8379, %v8381
  %v9048 = vcombine.low %v8383, %v8406
  %v9050 = vunpack.c.l.s4 1966171168
  %v9051 = vunpack.c.0.s8 %v9050
  %v9052 = vlaneseq
  %v9053 = vshrl.u32 %v9052, 7
  %v9054 = vsub.s32 %v9051, %v9053
  %v9055 = vrot.slane %v9045, %v9054
  %v9057 = vunpack.c.l.s4 1966171168
  %v9058 = vunpack.c.0.s8 %v9057
  %v9059 = vlaneseq
  %v9060 = vshrl.u32 %v9059, 7
  %v9061 = vsub.s32 %v9058, %v9060
  %v9062 = vrot.slane %v9046, %v9061
  %v9064 = vunpack.c.l.s4 1966171168
  %v9065 = vunpack.c.0.s8 %v9064
  %v9066 = vlaneseq
  %v9067 = vshrl.u32 %v9066, 7
  %v9068 = vsub.s32 %v9065, %v9067
  %v9069 = vrot.slane %v9047, %v9068
  %v9071 = vunpack.c.l.s4 1966171168
  %v9072 = vunpack.c.0.s8 %v9071
  %v9073 = vlaneseq
  %v9074 = vshrl.u32 %v9073, 7
  %v9075 = vsub.s32 %v9072, %v9074
  %v9076 = vrot.slane %v9048, %v9075
  %v9077 = vcombine.low %v9055, %v9062
  %v9078 = vcombine.low %v9069, %v9076
  %v9080 = vunpack.c.l.s4 1966171168
  %v9081 = vunpack.c.0.s8 %v9080
  %v9082 = vlaneseq
  %v9083 = vshrl.u32 %v9082, 7
  %v9084 = vsub.s32 %v9081, %v9083
  %v9085 = vrot.slane %v9077, %v9084
  %v9087 = vunpack.c.l.s4 1966171168
  %v9088 = vunpack.c.0.s8 %v9087
  %v9089 = vlaneseq
  %v9090 = vshrl.u32 %v9089, 7
  %v9091 = vsub.s32 %v9088, %v9090
  %v9092 = vrot.slane %v9078, %v9091
  %v9093 = vcombine.low %v9085, %v9092
  %v9094 = vcombine.low %v8420, %v8421
  %v9095 = vcombine.low %v8422, %v8413
  %v9096 = vcombine.low %v8446, %v8460
  %v9097 = vcombine.low %v8468, %v8470
  %v9099 = vunpack.c.l.s4 1966171168
  %v9100 = vunpack.c.0.s8 %v9099
  %v9101 = vlaneseq
  %v9102 = vshrl.u32 %v9101, 7
  %v9103 = vsub.s32 %v9100, %v9102
  %v9104 = vrot.slane %v9094, %v9103
  %v9106 = vunpack.c.l.s4 1966171168
  %v9107 = vunpack.c.0.s8 %v9106
  %v9108 = vlaneseq
  %v9109 = vshrl.u32 %v9108, 7
  %v9110 = vsub.s32 %v9107, %v9109
  %v9111 = vrot.slane %v9095, %v9110
  %v9113 = vunpack.c.l.s4 1966171168
  %v9114 = vunpack.c.0.s8 %v9113
  %v9115 = vlaneseq
  %v9116 = vshrl.u32 %v9115, 7
  %v9117 = vsub.s32 %v9114, %v9116
  %v9118 = vrot.slane %v9096, %v9117
  %v9120 = vunpack.c.l.s4 1966171168
  %v9121 = vunpack.c.0.s8 %v9120
  %v9122 = vlaneseq
  %v9123 = vshrl.u32 %v9122, 7
  %v9124 = vsub.s32 %v9121, %v9123
  %v9125 = vrot.slane %v9097, %v9124
  %v9126 = vcombine.low %v9104, %v9111
  %v9127 = vcombine.low %v9118, %v9125
  %v9129 = vunpack.c.l.s4 1966171168
  %v9130 = vunpack.c.0.s8 %v9129
  %v9131 = vlaneseq
  %v9132 = vshrl.u32 %v9131, 7
  %v9133 = vsub.s32 %v9130, %v9132
  %v9134 = vrot.slane %v9126, %v9133
  %v9136 = vunpack.c.l.s4 1966171168
  %v9137 = vunpack.c.0.s8 %v9136
  %v9138 = vlaneseq
  %v9139 = vshrl.u32 %v9138, 7
  %v9140 = vsub.s32 %v9137, %v9139
  %v9141 = vrot.slane %v9127, %v9140
  %v9142 = vcombine.low %v9134, %v9141
  %v9143 = vcombine.low %v8453, %v8467
  %v9144 = vcombine.low %v8469, %v8471
  %v9145 = vcombine.low %v8494, %v8508
  %v9146 = vcombine.low %v8509, %v8510
  %v9148 = vunpack.c.l.s4 1966171168
  %v9149 = vunpack.c.0.s8 %v9148
  %v9150 = vlaneseq
  %v9151 = vshrl.u32 %v9150, 7
  %v9152 = vsub.s32 %v9149, %v9151
  %v9153 = vrot.slane %v9143, %v9152
  %v9155 = vunpack.c.l.s4 1966171168
  %v9156 = vunpack.c.0.s8 %v9155
  %v9157 = vlaneseq
  %v9158 = vshrl.u32 %v9157, 7
  %v9159 = vsub.s32 %v9156, %v9158
  %v9160 = vrot.slane %v9144, %v9159
  %v9162 = vunpack.c.l.s4 1966171168
  %v9163 = vunpack.c.0.s8 %v9162
  %v9164 = vlaneseq
  %v9165 = vshrl.u32 %v9164, 7
  %v9166 = vsub.s32 %v9163, %v9165
  %v9167 = vrot.slane %v9145, %v9166
  %v9169 = vunpack.c.l.s4 1966171168
  %v9170 = vunpack.c.0.s8 %v9169
  %v9171 = vlaneseq
  %v9172 = vshrl.u32 %v9171, 7
  %v9173 = vsub.s32 %v9170, %v9172
  %v9174 = vrot.slane %v9146, %v9173
  %v9175 = vcombine.low %v9153, %v9160
  %v9176 = vcombine.low %v9167, %v9174
  %v9178 = vunpack.c.l.s4 1966171168
  %v9179 = vunpack.c.0.s8 %v9178
  %v9180 = vlaneseq
  %v9181 = vshrl.u32 %v9180, 7
  %v9182 = vsub.s32 %v9179, %v9181
  %v9183 = vrot.slane %v9175, %v9182
  %v9185 = vunpack.c.l.s4 1966171168
  %v9186 = vunpack.c.0.s8 %v9185
  %v9187 = vlaneseq
  %v9188 = vshrl.u32 %v9187, 7
  %v9189 = vsub.s32 %v9186, %v9188
  %v9190 = vrot.slane %v9176, %v9189
  %v9191 = vcombine.low %v9183, %v9190
  %v9192 = vcombine.low %v8501, %v8534
  %v9193 = vcombine.low %v8548, %v8556
  %v9194 = vcombine.low %v8558, %v8541
  %v9195 = vcombine.low %v8555, %v8557
  %v9197 = vunpack.c.l.s4 1966171168
  %v9198 = vunpack.c.0.s8 %v9197
  %v9199 = vlaneseq
  %v9200 = vshrl.u32 %v9199, 7
  %v9201 = vsub.s32 %v9198, %v9200
  %v9202 = vrot.slane %v9192, %v9201
  %v9204 = vunpack.c.l.s4 1966171168
  %v9205 = vunpack.c.0.s8 %v9204
  %v9206 = vlaneseq
  %v9207 = vshrl.u32 %v9206, 7
  %v9208 = vsub.s32 %v9205, %v9207
  %v9209 = vrot.slane %v9193, %v9208
  %v9211 = vunpack.c.l.s4 1966171168
  %v9212 = vunpack.c.0.s8 %v9211
  %v9213 = vlaneseq
  %v9214 = vshrl.u32 %v9213, 7
  %v9215 = vsub.s32 %v9212, %v9214
  %v9216 = vrot.slane %v9194, %v9215
  %v9218 = vunpack.c.l.s4 1966171168
  %v9219 = vunpack.c.0.s8 %v9218
  %v9220 = vlaneseq
  %v9221 = vshrl.u32 %v9220, 7
  %v9222 = vsub.s32 %v9219, %v9221
  %v9223 = vrot.slane %v9195, %v9222
  %v9224 = vcombine.low %v9202, %v9209
  %v9225 = vcombine.low %v9216, %v9223
  %v9227 = vunpack.c.l.s4 1966171168
  %v9228 = vunpack.c.0.s8 %v9227
  %v9229 = vlaneseq
  %v9230 = vshrl.u32 %v9229, 7
  %v9231 = vsub.s32 %v9228, %v9230
  %v9232 = vrot.slane %v9224, %v9231
  %v9234 = vunpack.c.l.s4 1966171168
  %v9235 = vunpack.c.0.s8 %v9234
  %v9236 = vlaneseq
  %v9237 = vshrl.u32 %v9236, 7
  %v9238 = vsub.s32 %v9235, %v9237
  %v9239 = vrot.slane %v9225, %v9238
  %v9240 = vcombine.low %v9232, %v9239
  %v9241 = vcombine.low %v8559, %v8582
  %v9242 = vcombine.low %v8596, %v8597
  %v9243 = vcombine.low %v8598, %v8589
  %v9244 = vcombine.low %v8622, %v8636
  %v9246 = vunpack.c.l.s4 1966171168
  %v9247 = vunpack.c.0.s8 %v9246
  %v9248 = vlaneseq
  %v9249 = vshrl.u32 %v9248, 7
  %v9250 = vsub.s32 %v9247, %v9249
  %v9251 = vrot.slane %v9241, %v9250
  %v9253 = vunpack.c.l.s4 1966171168
  %v9254 = vunpack.c.0.s8 %v9253
  %v9255 = vlaneseq
  %v9256 = vshrl.u32 %v9255, 7
  %v9257 = vsub.s32 %v9254, %v9256
  %v9258 = vrot.slane %v9242, %v9257
  %v9260 = vunpack.c.l.s4 1966171168
  %v9261 = vunpack.c.0.s8 %v9260
  %v9262 = vlaneseq
  %v9263 = vshrl.u32 %v9262, 7
  %v9264 = vsub.s32 %v9261, %v9263
  %v9265 = vrot.slane %v9243, %v9264
  %v9267 = vunpack.c.l.s4 1966171168
  %v9268 = vunpack.c.0.s8 %v9267
  %v9269 = vlaneseq
  %v9270 = vshrl.u32 %v9269, 7
  %v9271 = vsub.s32 %v9268, %v9270
  %v9272 = vrot.slane %v9244, %v9271
  %v9273 = vcombine.low %v9251, %v9258
  %v9274 = vcombine.low %v9265, %v9272
  %v9276 = vunpack.c.l.s4 1966171168
  %v9277 = vunpack.c.0.s8 %v9276
  %v9278 = vlaneseq
  %v9279 = vshrl.u32 %v9278, 7
  %v9280 = vsub.s32 %v9277, %v9279
  %v9281 = vrot.slane %v9273, %v9280
  %v9283 = vunpack.c.l.s4 1966171168
  %v9284 = vunpack.c.0.s8 %v9283
  %v9285 = vlaneseq
  %v9286 = vshrl.u32 %v9285, 7
  %v9287 = vsub.s32 %v9284, %v9286
  %v9288 = vrot.slane %v9274, %v9287
  %v9289 = vcombine.low %v9281, %v9288
  %v9290 = vcombine.low %v8644, %v8646
  %v9291 = vcombine.low %v8629, %v8643
  %v9292 = vcombine.low %v8645, %v8647
  %v9293 = vcombine.low %v8670, %v8684
  %v9295 = vunpack.c.l.s4 1966171168
  %v9296 = vunpack.c.0.s8 %v9295
  %v9297 = vlaneseq
  %v9298 = vshrl.u32 %v9297, 7
  %v9299 = vsub.s32 %v9296, %v9298
  %v9300 = vrot.slane %v9290, %v9299
  %v9302 = vunpack.c.l.s4 1966171168
  %v9303 = vunpack.c.0.s8 %v9302
  %v9304 = vlaneseq
  %v9305 = vshrl.u32 %v9304, 7
  %v9306 = vsub.s32 %v9303, %v9305
  %v9307 = vrot.slane %v9291, %v9306
  %v9309 = vunpack.c.l.s4 1966171168
  %v9310 = vunpack.c.0.s8 %v9309
  %v9311 = vlaneseq
  %v9312 = vshrl.u32 %v9311, 7
  %v9313 = vsub.s32 %v9310, %v9312
  %v9314 = vrot.slane %v9292, %v9313
  %v9316 = vunpack.c.l.s4 1966171168
  %v9317 = vunpack.c.0.s8 %v9316
  %v9318 = vlaneseq
  %v9319 = vshrl.u32 %v9318, 7
  %v9320 = vsub.s32 %v9317, %v9319
  %v9321 = vrot.slane %v9293, %v9320
  %v9322 = vcombine.low %v9300, %v9307
  %v9323 = vcombine.low %v9314, %v9321
  %v9325 = vunpack.c.l.s4 1966171168
  %v9326 = vunpack.c.0.s8 %v9325
  %v9327 = vlaneseq
  %v9328 = vshrl.u32 %v9327, 7
  %v9329 = vsub.s32 %v9326, %v9328
  %v9330 = vrot.slane %v9322, %v9329
  %v9332 = vunpack.c.l.s4 1966171168
  %v9333 = vunpack.c.0.s8 %v9332
  %v9334 = vlaneseq
  %v9335 = vshrl.u32 %v9334, 7
  %v9336 = vsub.s32 %v9333, %v9335
  %v9337 = vrot.slane %v9323, %v9336
  %v9338 = vcombine.low %v9330, %v9337
  %v9339 = vcombine.low %v8685, %v8686
  %v9340 = vcombine.low %v8677, %v8710
  %v9341 = vcombine.low %v8724, %v8732
  %v9342 = vcombine.low %v8734, %v8717
  %v9344 = vunpack.c.l.s4 1966171168
  %v9345 = vunpack.c.0.s8 %v9344
  %v9346 = vlaneseq
  %v9347 = vshrl.u32 %v9346, 7
  %v9348 = vsub.s32 %v9345, %v9347
  %v9349 = vrot.slane %v9339, %v9348
  %v9351 = vunpack.c.l.s4 1966171168
  %v9352 = vunpack.c.0.s8 %v9351
  %v9353 = vlaneseq
  %v9354 = vshrl.u32 %v9353, 7
  %v9355 = vsub.s32 %v9352, %v9354
  %v9356 = vrot.slane %v9340, %v9355
  %v9358 = vunpack.c.l.s4 1966171168
  %v9359 = vunpack.c.0.s8 %v9358
  %v9360 = vlaneseq
  %v9361 = vshrl.u32 %v9360, 7
  %v9362 = vsub.s32 %v9359, %v9361
  %v9363 = vrot.slane %v9341, %v9362
  %v9365 = vunpack.c.l.s4 1966171168
  %v9366 = vunpack.c.0.s8 %v9365
  %v9367 = vlaneseq
  %v9368 = vshrl.u32 %v9367, 7
  %v9369 = vsub.s32 %v9366, %v9368
  %v9370 = vrot.slane %v9342, %v9369
  %v9371 = vcombine.low %v9349, %v9356
  %v9372 = vcombine.low %v9363, %v9370
  %v9374 = vunpack.c.l.s4 1966171168
  %v9375 = vunpack.c.0.s8 %v9374
  %v9376 = vlaneseq
  %v9377 = vshrl.u32 %v9376, 7
  %v9378 = vsub.s32 %v9375, %v9377
  %v9379 = vrot.slane %v9371, %v9378
  %v9381 = vunpack.c.l.s4 1966171168
  %v9382 = vunpack.c.0.s8 %v9381
  %v9383 = vlaneseq
  %v9384 = vshrl.u32 %v9383, 7
  %v9385 = vsub.s32 %v9382, %v9384
  %v9386 = vrot.slane %v9372, %v9385
  %v9387 = vcombine.low %v9379, %v9386
  %v9388 = vcombine.low %v8731, %v8733
  %v9389 = vcombine.low %v8735, %v8758
  %v9390 = vcombine.low %v8772, %v8773
  %v9391 = vcombine.low %v8774, %v8765
  %v9393 = vunpack.c.l.s4 1966171168
  %v9394 = vunpack.c.0.s8 %v9393
  %v9395 = vlaneseq
  %v9396 = vshrl.u32 %v9395, 7
  %v9397 = vsub.s32 %v9394, %v9396
  %v9398 = vrot.slane %v9388, %v9397
  %v9400 = vunpack.c.l.s4 1966171168
  %v9401 = vunpack.c.0.s8 %v9400
  %v9402 = vlaneseq
  %v9403 = vshrl.u32 %v9402, 7
  %v9404 = vsub.s32 %v9401, %v9403
  %v9405 = vrot.slane %v9389, %v9404
  %v9407 = vunpack.c.l.s4 1966171168
  %v9408 = vunpack.c.0.s8 %v9407
  %v9409 = vlaneseq
  %v9410 = vshrl.u32 %v9409, 7
  %v9411 = vsub.s32 %v9408, %v9410
  %v9412 = vrot.slane %v9390, %v9411
  %v9414 = vunpack.c.l.s4 1966171168
  %v9415 = vunpack.c.0.s8 %v9414
  %v9416 = vlaneseq
  %v9417 = vshrl.u32 %v9416, 7
  %v9418 = vsub.s32 %v9415, %v9417
  %v9419 = vrot.slane %v9391, %v9418
  %v9420 = vcombine.low %v9398, %v9405
  %v9421 = vcombine.low %v9412, %v9419
  %v9423 = vunpack.c.l.s4 1966171168
  %v9424 = vunpack.c.0.s8 %v9423
  %v9425 = vlaneseq
  %v9426 = vshrl.u32 %v9425, 7
  %v9427 = vsub.s32 %v9424, %v9426
  %v9428 = vrot.slane %v9420, %v9427
  %v9430 = vunpack.c.l.s4 1966171168
  %v9431 = vunpack.c.0.s8 %v9430
  %v9432 = vlaneseq
  %v9433 = vshrl.u32 %v9432, 7
  %v9434 = vsub.s32 %v9431, %v9433
  %v9435 = vrot.slane %v9421, %v9434
  %v9436 = vcombine.low %v9428, %v9435
  %9450 = vmatprep.subr.mxu0 0.0
  %9451 = vmatpush1.msra.mxu0 %v8776
  %9452 = vmatprep.subr.mxu0 0.0
  %9453 = vmatpush1.msra.mxu0 %v8777
  %9454 = vmatprep.subr.mxu0 0.0
  %9455 = vmatpush1.msra.mxu0 %v8778
  %9456 = vmatprep.subr.mxu0 0.0
  %9457 = vmatpush1.msra.mxu0 %v8779
  %9458 = vmatprep.subr.mxu0 0.0
  %9459 = vmatpush1.msra.mxu0 %v8780
  %9460 = vmatprep.subr.mxu0 0.0
  %9461 = vmatpush1.msra.mxu0 %v8781
  %9462 = vmatprep.subr.mxu0 0.0
  %9463 = vmatpush1.msra.mxu0 %v8782
  %9464 = vmatprep.subr.mxu0 0.0
  %9465 = vmatpush1.msra.mxu0 %v8783
  %9466 = vmatprep.subr.mxu0 0.0
  %9467 = vmatpush1.msra.mxu0 %v8784
  %9468 = vmatprep.subr.mxu0 0.0
  %9469 = vmatpush1.msra.mxu0 %v8785
  %9470 = vmatprep.subr.mxu0 0.0
  %9471 = vmatpush1.msra.mxu0 %v8786
  %9472 = vmatprep.subr.mxu0 0.0
  %9473 = vmatpush1.msra.mxu0 %v8787
  %9474 = vmatprep.subr.mxu0 0.0
  %9475 = vmatpush1.msra.mxu0 %v8788
  %9476 = vmatprep.subr.mxu0 0.0
  %9477 = vmatpush1.msra.mxu0 %v8789
  %9478 = vmatprep.subr.mxu0 0.0
  %9479 = vmatpush1.msra.mxu0 %v8790
  %9480 = vmatprep.subr.mxu0 0.0
  %9481 = vmatpush1.msra.mxu0 %v8791
  %9482 = vmatprep.subr.mxu0 0.0
  %9483 = vmatpush1.msra.mxu0 0.0
  %9484 = vmatprep.subr.mxu0 0.0
  %9485 = vmatpush1.msra.mxu0 0.0
  %9486 = vmatprep.subr.mxu0 0.0
  %9487 = vmatpush1.msra.mxu0 0.0
  %9488 = vmatprep.subr.mxu0 0.0
  %9489 = vmatpush1.msra.mxu0 0.0
  %9490 = vmatprep.subr.mxu0 0.0
  %9491 = vmatpush1.msra.mxu0 0.0
  %9492 = vmatprep.subr.mxu0 0.0
  %9493 = vmatpush1.msra.mxu0 0.0
  %9494 = vmatprep.subr.mxu0 0.0
  %9495 = vmatpush1.msra.mxu0 0.0
  %9496 = vmatprep.subr.mxu0 0.0
  %9497 = vmatpush1.msra.mxu0 0.0
  %9498 = vmatprep.subr.mxu0 0.0
  %9499 = vmatpush1.msra.mxu0 0.0
  %9500 = vmatprep.subr.mxu0 0.0
  %9501 = vmatpush1.msra.mxu0 0.0
  %9502 = vmatprep.subr.mxu0 0.0
  %9503 = vmatpush1.msra.mxu0 0.0
  %9504 = vmatprep.subr.mxu0 0.0
  %9505 = vmatpush1.msra.mxu0 0.0
  %9506 = vmatprep.subr.mxu0 0.0
  %9507 = vmatpush1.msra.mxu0 0.0
  %9508 = vmatprep.subr.mxu0 0.0
  %9509 = vmatpush1.msra.mxu0 0.0
  %9510 = vmatprep.subr.mxu0 0.0
  %9511 = vmatpush1.msra.mxu0 0.0
  %9512 = vmatprep.subr.mxu0 0.0
  %9513 = vmatpush1.msra.mxu0 0.0
  %9514 = vmatprep.mubr.f32.mxu0 0.0
  %9515 = vmatmul.mubr.f32.gmra.mrb[0].mxu0 %v8848
  %v9516 = vpop.f32.mrb[0].mxu0
  %v9517 = vadd.f32 %v8798, %v9516
  %v9518 = vpop.f32.mrb[0].mxu0
  %9519 = vmatprep.mubr.f32.mxu0 0.0
  %9520 = vmatmul.mubr.f32.gmra.mrb[0].mxu0 %v8897
  %v9521 = vpop.f32.mrb[0].mxu0
  %v9522 = vadd.f32 %v8798, %v9521
  %v9523 = vpop.f32.mrb[0].mxu0
  %9524 = vmatprep.mubr.f32.mxu0 0.0
  %9525 = vmatmul.mubr.f32.gmra.mrb[0].mxu0 %v8946
  %v9526 = vpop.f32.mrb[0].mxu0
  %v9527 = vadd.f32 %v8798, %v9526
  %v9528 = vpop.f32.mrb[0].mxu0
  %9529 = vmatprep.mubr.f32.mxu0 0.0
  %9530 = vmatmul.mubr.f32.gmra.mrb[0].mxu0 %v8995
  %v9531 = vpop.f32.mrb[0].mxu0
  %v9532 = vadd.f32 %v8798, %v9531
  %v9533 = vpop.f32.mrb[0].mxu0
  %9534 = vmatprep.mubr.f32.mxu0 0.0
  %9535 = vmatmul.mubr.f32.gmra.mrb[0].mxu0 %v9044
  %v9536 = vpop.f32.mrb[0].mxu0
  %v9537 = vadd.f32 %v8798, %v9536
  %v9538 = vpop.f32.mrb[0].mxu0
  %9539 = vmatprep.mubr.f32.mxu0 0.0
  %9540 = vmatmul.mubr.f32.gmra.mrb[0].mxu0 %v9093
  %v9541 = vpop.f32.mrb[0].mxu0
  %v9542 = vadd.f32 %v8798, %v9541
  %v9543 = vpop.f32.mrb[0].mxu0
  %9544 = vmatprep.mubr.f32.mxu0 0.0
  %9545 = vmatmul.mubr.f32.gmra.mrb[0].mxu0 %v9142
  %v9546 = vpop.f32.mrb[0].mxu0
  %v9547 = vadd.f32 %v8798, %v9546
  %v9548 = vpop.f32.mrb[0].mxu0
  %9549 = vmatprep.mubr.f32.mxu0 0.0
  %9550 = vmatmul.mubr.f32.gmra.mrb[0].mxu0 %v9191
  %v9551 = vpop.f32.mrb[0].mxu0
  %v9552 = vadd.f32 %v8798, %v9551
  %v9553 = vpop.f32.mrb[0].mxu0
  %9554 = vmatprep.mubr.f32.mxu0 0.0
  %9555 = vmatmul.mubr.f32.gmra.mrb[0].mxu0 %v9240
  %v9556 = vpop.f32.mrb[0].mxu0
  %v9557 = vadd.f32 %v8798, %v9556
  %v9558 = vpop.f32.mrb[0].mxu0
  %9559 = vmatprep.mubr.f32.mxu0 0.0
  %9560 = vmatmul.mubr.f32.gmra.mrb[0].mxu0 %v9289
  %v9561 = vpop.f32.mrb[0].mxu0
  %v9562 = vadd.f32 %v8798, %v9561
  %v9563 = vpop.f32.mrb[0].mxu0
  %9564 = vmatprep.mubr.f32.mxu0 0.0
  %9565 = vmatmul.mubr.f32.gmra.mrb[0].mxu0 %v9338
  %v9566 = vpop.f32.mrb[0].mxu0
  %v9567 = vadd.f32 %v8798, %v9566
  %v9568 = vpop.f32.mrb[0].mxu0
  %9569 = vmatprep.mubr.f32.mxu0 0.0
  %9570 = vmatmul.mubr.f32.gmra.mrb[0].mxu0 %v9387
  %v9571 = vpop.f32.mrb[0].mxu0
  %v9572 = vadd.f32 %v8798, %v9571
  %v9573 = vpop.f32.mrb[0].mxu0
  %9574 = vmatprep.mubr.f32.mxu0 0.0
  %9575 = vmatmul.mubr.f32.gmra.mrb[0].mxu0 %v9436
  %v9576 = vpop.f32.mrb[0].mxu0
  %v9577 = vadd.f32 %v8798, %v9576
  %v9578 = vpop.f32.mrb[0].mxu0
  %9579 = vdwg.mxu0
  %v9580 = vmax.f32 %v9517, 0.0
  %v9581 = vmax.f32 %v9522, 0.0
  %v9582 = vmax.f32 %v9527, 0.0
  %v9583 = vmax.f32 %v9532, 0.0
  %v9584 = vmax.f32 %v9537, 0.0
  %v9585 = vmax.f32 %v9542, 0.0
  %v9586 = vmax.f32 %v9547, 0.0
  %v9587 = vmax.f32 %v9552, 0.0
  %v9588 = vmax.f32 %v9557, 0.0
  %v9589 = vmax.f32 %v9562, 0.0
  %v9590 = vmax.f32 %v9567, 0.0
  %v9591 = vmax.f32 %v9572, 0.0
  %v9592 = vmax.f32 %v9577, 0.0
  %v9606 = vcombine.high %v9580, %v9580
  %v9608 = vunpack.c.l.s4 1966171168
  %v9609 = vunpack.c.0.s8 %v9608
  %v9610 = vlaneseq
  %v9611 = vshrl.u32 %v9610, 7
  %v9612 = vsub.s32 %v9609, %v9611
  %v9613 = vrot.slane %v9580, %v9612
  %v9615 = vunpack.c.l.s4 1966171168
  %v9616 = vunpack.c.0.s8 %v9615
  %v9617 = vlaneseq
  %v9618 = vshrl.u32 %v9617, 7
  %v9619 = vsub.s32 %v9616, %v9618
  %v9620 = vrot.slane %v9606, %v9619
  %v9621 = vcombine.high %v9613, %v9613
  %v9622 = vcombine.high %v9620, %v9620
  %v9624 = vunpack.c.l.s4 1966171168
  %v9625 = vunpack.c.0.s8 %v9624
  %v9626 = vlaneseq
  %v9627 = vshrl.u32 %v9626, 7
  %v9628 = vsub.s32 %v9625, %v9627
  %v9629 = vrot.slane %v9613, %v9628
  %v9631 = vunpack.c.l.s4 1966171168
  %v9632 = vunpack.c.0.s8 %v9631
  %v9633 = vlaneseq
  %v9634 = vshrl.u32 %v9633, 7
  %v9635 = vsub.s32 %v9632, %v9634
  %v9636 = vrot.slane %v9620, %v9635
  %v9638 = vunpack.c.l.s4 1966171168
  %v9639 = vunpack.c.0.s8 %v9638
  %v9640 = vlaneseq
  %v9641 = vshrl.u32 %v9640, 7
  %v9642 = vsub.s32 %v9639, %v9641
  %v9643 = vrot.slane %v9621, %v9642
  %v9645 = vunpack.c.l.s4 1966171168
  %v9646 = vunpack.c.0.s8 %v9645
  %v9647 = vlaneseq
  %v9648 = vshrl.u32 %v9647, 7
  %v9649 = vsub.s32 %v9646, %v9648
  %v9650 = vrot.slane %v9622, %v9649
  %v9651 = vcombine.high %v9629, %v9629
  %v9652 = vcombine.high %v9636, %v9636
  %v9653 = vcombine.high %v9643, %v9643
  %v9654 = vcombine.high %v9650, %v9650
  %v9655 = vcombine.high %v9581, %v9581
  %v9657 = vunpack.c.l.s4 1966171168
  %v9658 = vunpack.c.0.s8 %v9657
  %v9659 = vlaneseq
  %v9660 = vshrl.u32 %v9659, 7
  %v9661 = vsub.s32 %v9658, %v9660
  %v9662 = vrot.slane %v9581, %v9661
  %v9664 = vunpack.c.l.s4 1966171168
  %v9665 = vunpack.c.0.s8 %v9664
  %v9666 = vlaneseq
  %v9667 = vshrl.u32 %v9666, 7
  %v9668 = vsub.s32 %v9665, %v9667
  %v9669 = vrot.slane %v9655, %v9668
  %v9670 = vcombine.high %v9662, %v9662
  %v9671 = vcombine.high %v9669, %v9669
  %v9673 = vunpack.c.l.s4 1966171168
  %v9674 = vunpack.c.0.s8 %v9673
  %v9675 = vlaneseq
  %v9676 = vshrl.u32 %v9675, 7
  %v9677 = vsub.s32 %v9674, %v9676
  %v9678 = vrot.slane %v9662, %v9677
  %v9680 = vunpack.c.l.s4 1966171168
  %v9681 = vunpack.c.0.s8 %v9680
  %v9682 = vlaneseq
  %v9683 = vshrl.u32 %v9682, 7
  %v9684 = vsub.s32 %v9681, %v9683
  %v9685 = vrot.slane %v9669, %v9684
  %v9687 = vunpack.c.l.s4 1966171168
  %v9688 = vunpack.c.0.s8 %v9687
  %v9689 = vlaneseq
  %v9690 = vshrl.u32 %v9689, 7
  %v9691 = vsub.s32 %v9688, %v9690
  %v9692 = vrot.slane %v9670, %v9691
  %v9694 = vunpack.c.l.s4 1966171168
  %v9695 = vunpack.c.0.s8 %v9694
  %v9696 = vlaneseq
  %v9697 = vshrl.u32 %v9696, 7
  %v9698 = vsub.s32 %v9695, %v9697
  %v9699 = vrot.slane %v9671, %v9698
  %v9700 = vcombine.high %v9678, %v9678
  %v9701 = vcombine.high %v9685, %v9685
  %v9702 = vcombine.high %v9692, %v9692
  %v9703 = vcombine.high %v9699, %v9699
  %v9704 = vcombine.high %v9582, %v9582
  %v9706 = vunpack.c.l.s4 1966171168
  %v9707 = vunpack.c.0.s8 %v9706
  %v9708 = vlaneseq
  %v9709 = vshrl.u32 %v9708, 7
  %v9710 = vsub.s32 %v9707, %v9709
  %v9711 = vrot.slane %v9582, %v9710
  %v9713 = vunpack.c.l.s4 1966171168
  %v9714 = vunpack.c.0.s8 %v9713
  %v9715 = vlaneseq
  %v9716 = vshrl.u32 %v9715, 7
  %v9717 = vsub.s32 %v9714, %v9716
  %v9718 = vrot.slane %v9704, %v9717
  %v9719 = vcombine.high %v9711, %v9711
  %v9720 = vcombine.high %v9718, %v9718
  %v9722 = vunpack.c.l.s4 1966171168
  %v9723 = vunpack.c.0.s8 %v9722
  %v9724 = vlaneseq
  %v9725 = vshrl.u32 %v9724, 7
  %v9726 = vsub.s32 %v9723, %v9725
  %v9727 = vrot.slane %v9711, %v9726
  %v9729 = vunpack.c.l.s4 1966171168
  %v9730 = vunpack.c.0.s8 %v9729
  %v9731 = vlaneseq
  %v9732 = vshrl.u32 %v9731, 7
  %v9733 = vsub.s32 %v9730, %v9732
  %v9734 = vrot.slane %v9718, %v9733
  %v9736 = vunpack.c.l.s4 1966171168
  %v9737 = vunpack.c.0.s8 %v9736
  %v9738 = vlaneseq
  %v9739 = vshrl.u32 %v9738, 7
  %v9740 = vsub.s32 %v9737, %v9739
  %v9741 = vrot.slane %v9719, %v9740
  %v9743 = vunpack.c.l.s4 1966171168
  %v9744 = vunpack.c.0.s8 %v9743
  %v9745 = vlaneseq
  %v9746 = vshrl.u32 %v9745, 7
  %v9747 = vsub.s32 %v9744, %v9746
  %v9748 = vrot.slane %v9720, %v9747
  %v9749 = vcombine.high %v9727, %v9727
  %v9750 = vcombine.high %v9734, %v9734
  %v9751 = vcombine.high %v9741, %v9741
  %v9752 = vcombine.high %v9748, %v9748
  %v9753 = vcombine.high %v9583, %v9583
  %v9755 = vunpack.c.l.s4 1966171168
  %v9756 = vunpack.c.0.s8 %v9755
  %v9757 = vlaneseq
  %v9758 = vshrl.u32 %v9757, 7
  %v9759 = vsub.s32 %v9756, %v9758
  %v9760 = vrot.slane %v9583, %v9759
  %v9762 = vunpack.c.l.s4 1966171168
  %v9763 = vunpack.c.0.s8 %v9762
  %v9764 = vlaneseq
  %v9765 = vshrl.u32 %v9764, 7
  %v9766 = vsub.s32 %v9763, %v9765
  %v9767 = vrot.slane %v9753, %v9766
  %v9768 = vcombine.high %v9760, %v9760
  %v9769 = vcombine.high %v9767, %v9767
  %v9771 = vunpack.c.l.s4 1966171168
  %v9772 = vunpack.c.0.s8 %v9771
  %v9773 = vlaneseq
  %v9774 = vshrl.u32 %v9773, 7
  %v9775 = vsub.s32 %v9772, %v9774
  %v9776 = vrot.slane %v9760, %v9775
  %v9778 = vunpack.c.l.s4 1966171168
  %v9779 = vunpack.c.0.s8 %v9778
  %v9780 = vlaneseq
  %v9781 = vshrl.u32 %v9780, 7
  %v9782 = vsub.s32 %v9779, %v9781
  %v9783 = vrot.slane %v9767, %v9782
  %v9785 = vunpack.c.l.s4 1966171168
  %v9786 = vunpack.c.0.s8 %v9785
  %v9787 = vlaneseq
  %v9788 = vshrl.u32 %v9787, 7
  %v9789 = vsub.s32 %v9786, %v9788
  %v9790 = vrot.slane %v9768, %v9789
  %v9792 = vunpack.c.l.s4 1966171168
  %v9793 = vunpack.c.0.s8 %v9792
  %v9794 = vlaneseq
  %v9795 = vshrl.u32 %v9794, 7
  %v9796 = vsub.s32 %v9793, %v9795
  %v9797 = vrot.slane %v9769, %v9796
  %v9798 = vcombine.high %v9776, %v9776
  %v9799 = vcombine.high %v9783, %v9783
  %v9800 = vcombine.high %v9790, %v9790
  %v9801 = vcombine.high %v9797, %v9797
  %v9802 = vcombine.high %v9584, %v9584
  %v9804 = vunpack.c.l.s4 1966171168
  %v9805 = vunpack.c.0.s8 %v9804
  %v9806 = vlaneseq
  %v9807 = vshrl.u32 %v9806, 7
  %v9808 = vsub.s32 %v9805, %v9807
  %v9809 = vrot.slane %v9584, %v9808
  %v9811 = vunpack.c.l.s4 1966171168
  %v9812 = vunpack.c.0.s8 %v9811
  %v9813 = vlaneseq
  %v9814 = vshrl.u32 %v9813, 7
  %v9815 = vsub.s32 %v9812, %v9814
  %v9816 = vrot.slane %v9802, %v9815
  %v9817 = vcombine.high %v9809, %v9809
  %v9818 = vcombine.high %v9816, %v9816
  %v9820 = vunpack.c.l.s4 1966171168
  %v9821 = vunpack.c.0.s8 %v9820
  %v9822 = vlaneseq
  %v9823 = vshrl.u32 %v9822, 7
  %v9824 = vsub.s32 %v9821, %v9823
  %v9825 = vrot.slane %v9809, %v9824
  %v9827 = vunpack.c.l.s4 1966171168
  %v9828 = vunpack.c.0.s8 %v9827
  %v9829 = vlaneseq
  %v9830 = vshrl.u32 %v9829, 7
  %v9831 = vsub.s32 %v9828, %v9830
  %v9832 = vrot.slane %v9816, %v9831
  %v9834 = vunpack.c.l.s4 1966171168
  %v9835 = vunpack.c.0.s8 %v9834
  %v9836 = vlaneseq
  %v9837 = vshrl.u32 %v9836, 7
  %v9838 = vsub.s32 %v9835, %v9837
  %v9839 = vrot.slane %v9817, %v9838
  %v9841 = vunpack.c.l.s4 1966171168
  %v9842 = vunpack.c.0.s8 %v9841
  %v9843 = vlaneseq
  %v9844 = vshrl.u32 %v9843, 7
  %v9845 = vsub.s32 %v9842, %v9844
  %v9846 = vrot.slane %v9818, %v9845
  %v9847 = vcombine.high %v9825, %v9825
  %v9848 = vcombine.high %v9832, %v9832
  %v9849 = vcombine.high %v9839, %v9839
  %v9850 = vcombine.high %v9846, %v9846
  %v9851 = vcombine.high %v9585, %v9585
  %v9853 = vunpack.c.l.s4 1966171168
  %v9854 = vunpack.c.0.s8 %v9853
  %v9855 = vlaneseq
  %v9856 = vshrl.u32 %v9855, 7
  %v9857 = vsub.s32 %v9854, %v9856
  %v9858 = vrot.slane %v9585, %v9857
  %v9860 = vunpack.c.l.s4 1966171168
  %v9861 = vunpack.c.0.s8 %v9860
  %v9862 = vlaneseq
  %v9863 = vshrl.u32 %v9862, 7
  %v9864 = vsub.s32 %v9861, %v9863
  %v9865 = vrot.slane %v9851, %v9864
  %v9866 = vcombine.high %v9858, %v9858
  %v9867 = vcombine.high %v9865, %v9865
  %v9869 = vunpack.c.l.s4 1966171168
  %v9870 = vunpack.c.0.s8 %v9869
  %v9871 = vlaneseq
  %v9872 = vshrl.u32 %v9871, 7
  %v9873 = vsub.s32 %v9870, %v9872
  %v9874 = vrot.slane %v9858, %v9873
  %v9876 = vunpack.c.l.s4 1966171168
  %v9877 = vunpack.c.0.s8 %v9876
  %v9878 = vlaneseq
  %v9879 = vshrl.u32 %v9878, 7
  %v9880 = vsub.s32 %v9877, %v9879
  %v9881 = vrot.slane %v9865, %v9880
  %v9883 = vunpack.c.l.s4 1966171168
  %v9884 = vunpack.c.0.s8 %v9883
  %v9885 = vlaneseq
  %v9886 = vshrl.u32 %v9885, 7
  %v9887 = vsub.s32 %v9884, %v9886
  %v9888 = vrot.slane %v9866, %v9887
  %v9890 = vunpack.c.l.s4 1966171168
  %v9891 = vunpack.c.0.s8 %v9890
  %v9892 = vlaneseq
  %v9893 = vshrl.u32 %v9892, 7
  %v9894 = vsub.s32 %v9891, %v9893
  %v9895 = vrot.slane %v9867, %v9894
  %v9896 = vcombine.high %v9874, %v9874
  %v9897 = vcombine.high %v9881, %v9881
  %v9898 = vcombine.high %v9888, %v9888
  %v9899 = vcombine.high %v9895, %v9895
  %v9900 = vcombine.high %v9586, %v9586
  %v9902 = vunpack.c.l.s4 1966171168
  %v9903 = vunpack.c.0.s8 %v9902
  %v9904 = vlaneseq
  %v9905 = vshrl.u32 %v9904, 7
  %v9906 = vsub.s32 %v9903, %v9905
  %v9907 = vrot.slane %v9586, %v9906
  %v9909 = vunpack.c.l.s4 1966171168
  %v9910 = vunpack.c.0.s8 %v9909
  %v9911 = vlaneseq
  %v9912 = vshrl.u32 %v9911, 7
  %v9913 = vsub.s32 %v9910, %v9912
  %v9914 = vrot.slane %v9900, %v9913
  %v9915 = vcombine.high %v9907, %v9907
  %v9916 = vcombine.high %v9914, %v9914
  %v9918 = vunpack.c.l.s4 1966171168
  %v9919 = vunpack.c.0.s8 %v9918
  %v9920 = vlaneseq
  %v9921 = vshrl.u32 %v9920, 7
  %v9922 = vsub.s32 %v9919, %v9921
  %v9923 = vrot.slane %v9907, %v9922
  %v9925 = vunpack.c.l.s4 1966171168
  %v9926 = vunpack.c.0.s8 %v9925
  %v9927 = vlaneseq
  %v9928 = vshrl.u32 %v9927, 7
  %v9929 = vsub.s32 %v9926, %v9928
  %v9930 = vrot.slane %v9914, %v9929
  %v9932 = vunpack.c.l.s4 1966171168
  %v9933 = vunpack.c.0.s8 %v9932
  %v9934 = vlaneseq
  %v9935 = vshrl.u32 %v9934, 7
  %v9936 = vsub.s32 %v9933, %v9935
  %v9937 = vrot.slane %v9915, %v9936
  %v9939 = vunpack.c.l.s4 1966171168
  %v9940 = vunpack.c.0.s8 %v9939
  %v9941 = vlaneseq
  %v9942 = vshrl.u32 %v9941, 7
  %v9943 = vsub.s32 %v9940, %v9942
  %v9944 = vrot.slane %v9916, %v9943
  %v9945 = vcombine.high %v9923, %v9923
  %v9946 = vcombine.high %v9930, %v9930
  %v9947 = vcombine.high %v9937, %v9937
  %v9948 = vcombine.high %v9944, %v9944
  %v9949 = vcombine.high %v9587, %v9587
  %v9951 = vunpack.c.l.s4 1966171168
  %v9952 = vunpack.c.0.s8 %v9951
  %v9953 = vlaneseq
  %v9954 = vshrl.u32 %v9953, 7
  %v9955 = vsub.s32 %v9952, %v9954
  %v9956 = vrot.slane %v9587, %v9955
  %v9958 = vunpack.c.l.s4 1966171168
  %v9959 = vunpack.c.0.s8 %v9958
  %v9960 = vlaneseq
  %v9961 = vshrl.u32 %v9960, 7
  %v9962 = vsub.s32 %v9959, %v9961
  %v9963 = vrot.slane %v9949, %v9962
  %v9964 = vcombine.high %v9956, %v9956
  %v9965 = vcombine.high %v9963, %v9963
  %v9967 = vunpack.c.l.s4 1966171168
  %v9968 = vunpack.c.0.s8 %v9967
  %v9969 = vlaneseq
  %v9970 = vshrl.u32 %v9969, 7
  %v9971 = vsub.s32 %v9968, %v9970
  %v9972 = vrot.slane %v9956, %v9971
  %v9974 = vunpack.c.l.s4 1966171168
  %v9975 = vunpack.c.0.s8 %v9974
  %v9976 = vlaneseq
  %v9977 = vshrl.u32 %v9976, 7
  %v9978 = vsub.s32 %v9975, %v9977
  %v9979 = vrot.slane %v9963, %v9978
  %v9981 = vunpack.c.l.s4 1966171168
  %v9982 = vunpack.c.0.s8 %v9981
  %v9983 = vlaneseq
  %v9984 = vshrl.u32 %v9983, 7
  %v9985 = vsub.s32 %v9982, %v9984
  %v9986 = vrot.slane %v9964, %v9985
  %v9988 = vunpack.c.l.s4 1966171168
  %v9989 = vunpack.c.0.s8 %v9988
  %v9990 = vlaneseq
  %v9991 = vshrl.u32 %v9990, 7
  %v9992 = vsub.s32 %v9989, %v9991
  %v9993 = vrot.slane %v9965, %v9992
  %v9994 = vcombine.high %v9972, %v9972
  %v9995 = vcombine.high %v9979, %v9979
  %v9996 = vcombine.high %v9986, %v9986
  %v9997 = vcombine.high %v9993, %v9993
  %v9998 = vcombine.high %v9588, %v9588
  %v10000 = vunpack.c.l.s4 1966171168
  %v10001 = vunpack.c.0.s8 %v10000
  %v10002 = vlaneseq
  %v10003 = vshrl.u32 %v10002, 7
  %v10004 = vsub.s32 %v10001, %v10003
  %v10005 = vrot.slane %v9588, %v10004
  %v10007 = vunpack.c.l.s4 1966171168
  %v10008 = vunpack.c.0.s8 %v10007
  %v10009 = vlaneseq
  %v10010 = vshrl.u32 %v10009, 7
  %v10011 = vsub.s32 %v10008, %v10010
  %v10012 = vrot.slane %v9998, %v10011
  %v10013 = vcombine.high %v10005, %v10005
  %v10014 = vcombine.high %v10012, %v10012
  %v10016 = vunpack.c.l.s4 1966171168
  %v10017 = vunpack.c.0.s8 %v10016
  %v10018 = vlaneseq
  %v10019 = vshrl.u32 %v10018, 7
  %v10020 = vsub.s32 %v10017, %v10019
  %v10021 = vrot.slane %v10005, %v10020
  %v10023 = vunpack.c.l.s4 1966171168
  %v10024 = vunpack.c.0.s8 %v10023
  %v10025 = vlaneseq
  %v10026 = vshrl.u32 %v10025, 7
  %v10027 = vsub.s32 %v10024, %v10026
  %v10028 = vrot.slane %v10012, %v10027
  %v10030 = vunpack.c.l.s4 1966171168
  %v10031 = vunpack.c.0.s8 %v10030
  %v10032 = vlaneseq
  %v10033 = vshrl.u32 %v10032, 7
  %v10034 = vsub.s32 %v10031, %v10033
  %v10035 = vrot.slane %v10013, %v10034
  %v10037 = vunpack.c.l.s4 1966171168
  %v10038 = vunpack.c.0.s8 %v10037
  %v10039 = vlaneseq
  %v10040 = vshrl.u32 %v10039, 7
  %v10041 = vsub.s32 %v10038, %v10040
  %v10042 = vrot.slane %v10014, %v10041
  %v10043 = vcombine.high %v10021, %v10021
  %v10044 = vcombine.high %v10028, %v10028
  %v10045 = vcombine.high %v10035, %v10035
  %v10046 = vcombine.high %v10042, %v10042
  %v10047 = vcombine.high %v9589, %v9589
  %v10049 = vunpack.c.l.s4 1966171168
  %v10050 = vunpack.c.0.s8 %v10049
  %v10051 = vlaneseq
  %v10052 = vshrl.u32 %v10051, 7
  %v10053 = vsub.s32 %v10050, %v10052
  %v10054 = vrot.slane %v9589, %v10053
  %v10056 = vunpack.c.l.s4 1966171168
  %v10057 = vunpack.c.0.s8 %v10056
  %v10058 = vlaneseq
  %v10059 = vshrl.u32 %v10058, 7
  %v10060 = vsub.s32 %v10057, %v10059
  %v10061 = vrot.slane %v10047, %v10060
  %v10062 = vcombine.high %v10054, %v10054
  %v10063 = vcombine.high %v10061, %v10061
  %v10065 = vunpack.c.l.s4 1966171168
  %v10066 = vunpack.c.0.s8 %v10065
  %v10067 = vlaneseq
  %v10068 = vshrl.u32 %v10067, 7
  %v10069 = vsub.s32 %v10066, %v10068
  %v10070 = vrot.slane %v10054, %v10069
  %v10072 = vunpack.c.l.s4 1966171168
  %v10073 = vunpack.c.0.s8 %v10072
  %v10074 = vlaneseq
  %v10075 = vshrl.u32 %v10074, 7
  %v10076 = vsub.s32 %v10073, %v10075
  %v10077 = vrot.slane %v10061, %v10076
  %v10079 = vunpack.c.l.s4 1966171168
  %v10080 = vunpack.c.0.s8 %v10079
  %v10081 = vlaneseq
  %v10082 = vshrl.u32 %v10081, 7
  %v10083 = vsub.s32 %v10080, %v10082
  %v10084 = vrot.slane %v10062, %v10083
  %v10086 = vunpack.c.l.s4 1966171168
  %v10087 = vunpack.c.0.s8 %v10086
  %v10088 = vlaneseq
  %v10089 = vshrl.u32 %v10088, 7
  %v10090 = vsub.s32 %v10087, %v10089
  %v10091 = vrot.slane %v10063, %v10090
  %v10092 = vcombine.high %v10070, %v10070
  %v10093 = vcombine.high %v10077, %v10077
  %v10094 = vcombine.high %v10084, %v10084
  %v10095 = vcombine.high %v10091, %v10091
  %v10096 = vcombine.high %v9590, %v9590
  %v10098 = vunpack.c.l.s4 1966171168
  %v10099 = vunpack.c.0.s8 %v10098
  %v10100 = vlaneseq
  %v10101 = vshrl.u32 %v10100, 7
  %v10102 = vsub.s32 %v10099, %v10101
  %v10103 = vrot.slane %v9590, %v10102
  %v10105 = vunpack.c.l.s4 1966171168
  %v10106 = vunpack.c.0.s8 %v10105
  %v10107 = vlaneseq
  %v10108 = vshrl.u32 %v10107, 7
  %v10109 = vsub.s32 %v10106, %v10108
  %v10110 = vrot.slane %v10096, %v10109
  %v10111 = vcombine.high %v10103, %v10103
  %v10112 = vcombine.high %v10110, %v10110
  %v10114 = vunpack.c.l.s4 1966171168
  %v10115 = vunpack.c.0.s8 %v10114
  %v10116 = vlaneseq
  %v10117 = vshrl.u32 %v10116, 7
  %v10118 = vsub.s32 %v10115, %v10117
  %v10119 = vrot.slane %v10103, %v10118
  %v10121 = vunpack.c.l.s4 1966171168
  %v10122 = vunpack.c.0.s8 %v10121
  %v10123 = vlaneseq
  %v10124 = vshrl.u32 %v10123, 7
  %v10125 = vsub.s32 %v10122, %v10124
  %v10126 = vrot.slane %v10110, %v10125
  %v10128 = vunpack.c.l.s4 1966171168
  %v10129 = vunpack.c.0.s8 %v10128
  %v10130 = vlaneseq
  %v10131 = vshrl.u32 %v10130, 7
  %v10132 = vsub.s32 %v10129, %v10131
  %v10133 = vrot.slane %v10111, %v10132
  %v10135 = vunpack.c.l.s4 1966171168
  %v10136 = vunpack.c.0.s8 %v10135
  %v10137 = vlaneseq
  %v10138 = vshrl.u32 %v10137, 7
  %v10139 = vsub.s32 %v10136, %v10138
  %v10140 = vrot.slane %v10112, %v10139
  %v10141 = vcombine.high %v10119, %v10119
  %v10142 = vcombine.high %v10126, %v10126
  %v10143 = vcombine.high %v10133, %v10133
  %v10144 = vcombine.high %v10140, %v10140
  %v10145 = vcombine.high %v9591, %v9591
  %v10147 = vunpack.c.l.s4 1966171168
  %v10148 = vunpack.c.0.s8 %v10147
  %v10149 = vlaneseq
  %v10150 = vshrl.u32 %v10149, 7
  %v10151 = vsub.s32 %v10148, %v10150
  %v10152 = vrot.slane %v9591, %v10151
  %v10154 = vunpack.c.l.s4 1966171168
  %v10155 = vunpack.c.0.s8 %v10154
  %v10156 = vlaneseq
  %v10157 = vshrl.u32 %v10156, 7
  %v10158 = vsub.s32 %v10155, %v10157
  %v10159 = vrot.slane %v10145, %v10158
  %v10160 = vcombine.high %v10152, %v10152
  %v10161 = vcombine.high %v10159, %v10159
  %v10163 = vunpack.c.l.s4 1966171168
  %v10164 = vunpack.c.0.s8 %v10163
  %v10165 = vlaneseq
  %v10166 = vshrl.u32 %v10165, 7
  %v10167 = vsub.s32 %v10164, %v10166
  %v10168 = vrot.slane %v10152, %v10167
  %v10170 = vunpack.c.l.s4 1966171168
  %v10171 = vunpack.c.0.s8 %v10170
  %v10172 = vlaneseq
  %v10173 = vshrl.u32 %v10172, 7
  %v10174 = vsub.s32 %v10171, %v10173
  %v10175 = vrot.slane %v10159, %v10174
  %v10177 = vunpack.c.l.s4 1966171168
  %v10178 = vunpack.c.0.s8 %v10177
  %v10179 = vlaneseq
  %v10180 = vshrl.u32 %v10179, 7
  %v10181 = vsub.s32 %v10178, %v10180
  %v10182 = vrot.slane %v10160, %v10181
  %v10184 = vunpack.c.l.s4 1966171168
  %v10185 = vunpack.c.0.s8 %v10184
  %v10186 = vlaneseq
  %v10187 = vshrl.u32 %v10186, 7
  %v10188 = vsub.s32 %v10185, %v10187
  %v10189 = vrot.slane %v10161, %v10188
  %v10190 = vcombine.high %v10168, %v10168
  %v10191 = vcombine.high %v10175, %v10175
  %v10192 = vcombine.high %v10182, %v10182
  %v10193 = vcombine.high %v10189, %v10189
  %v10194 = vcombine.high %v9592, %v9592
  %v10196 = vunpack.c.l.s4 1966171168
  %v10197 = vunpack.c.0.s8 %v10196
  %v10198 = vlaneseq
  %v10199 = vshrl.u32 %v10198, 7
  %v10200 = vsub.s32 %v10197, %v10199
  %v10201 = vrot.slane %v9592, %v10200
  %v10203 = vunpack.c.l.s4 1966171168
  %v10204 = vunpack.c.0.s8 %v10203
  %v10205 = vlaneseq
  %v10206 = vshrl.u32 %v10205, 7
  %v10207 = vsub.s32 %v10204, %v10206
  %v10208 = vrot.slane %v10194, %v10207
  %v10209 = vcombine.high %v10201, %v10201
  %v10210 = vcombine.high %v10208, %v10208
  %v10212 = vunpack.c.l.s4 1966171168
  %v10213 = vunpack.c.0.s8 %v10212
  %v10214 = vlaneseq
  %v10215 = vshrl.u32 %v10214, 7
  %v10216 = vsub.s32 %v10213, %v10215
  %v10217 = vrot.slane %v10201, %v10216
  %v10219 = vunpack.c.l.s4 1966171168
  %v10220 = vunpack.c.0.s8 %v10219
  %v10221 = vlaneseq
  %v10222 = vshrl.u32 %v10221, 7
  %v10223 = vsub.s32 %v10220, %v10222
  %v10224 = vrot.slane %v10208, %v10223
  %v10226 = vunpack.c.l.s4 1966171168
  %v10227 = vunpack.c.0.s8 %v10226
  %v10228 = vlaneseq
  %v10229 = vshrl.u32 %v10228, 7
  %v10230 = vsub.s32 %v10227, %v10229
  %v10231 = vrot.slane %v10209, %v10230
  %v10233 = vunpack.c.l.s4 1966171168
  %v10234 = vunpack.c.0.s8 %v10233
  %v10235 = vlaneseq
  %v10236 = vshrl.u32 %v10235, 7
  %v10237 = vsub.s32 %v10234, %v10236
  %v10238 = vrot.slane %v10210, %v10237
  %v10239 = vcombine.high %v10217, %v10217
  %v10240 = vcombine.high %v10224, %v10224
  %v10241 = vcombine.high %v10231, %v10231
  %v10242 = vcombine.high %v10238, %v10238
  %v10243 = vcombine.low %v9629, %v9643
  %v10244 = vcombine.low %v9651, %v9653
  %v10245 = vcombine.low %v9636, %v9650
  %v10246 = vcombine.low %v9652, %v9654
  %v10248 = vunpack.c.l.s4 1966171168
  %v10249 = vunpack.c.0.s8 %v10248
  %v10250 = vlaneseq
  %v10251 = vshrl.u32 %v10250, 7
  %v10252 = vsub.s32 %v10249, %v10251
  %v10253 = vrot.slane %v10243, %v10252
  %v10255 = vunpack.c.l.s4 1966171168
  %v10256 = vunpack.c.0.s8 %v10255
  %v10257 = vlaneseq
  %v10258 = vshrl.u32 %v10257, 7
  %v10259 = vsub.s32 %v10256, %v10258
  %v10260 = vrot.slane %v10244, %v10259
  %v10262 = vunpack.c.l.s4 1966171168
  %v10263 = vunpack.c.0.s8 %v10262
  %v10264 = vlaneseq
  %v10265 = vshrl.u32 %v10264, 7
  %v10266 = vsub.s32 %v10263, %v10265
  %v10267 = vrot.slane %v10245, %v10266
  %v10269 = vunpack.c.l.s4 1966171168
  %v10270 = vunpack.c.0.s8 %v10269
  %v10271 = vlaneseq
  %v10272 = vshrl.u32 %v10271, 7
  %v10273 = vsub.s32 %v10270, %v10272
  %v10274 = vrot.slane %v10246, %v10273
  %v10275 = vcombine.low %v10253, %v10260
  %v10276 = vcombine.low %v10267, %v10274
  %v10278 = vunpack.c.l.s4 1966171168
  %v10279 = vunpack.c.0.s8 %v10278
  %v10280 = vlaneseq
  %v10281 = vshrl.u32 %v10280, 7
  %v10282 = vsub.s32 %v10279, %v10281
  %v10283 = vrot.slane %v10275, %v10282
  %v10285 = vunpack.c.l.s4 1966171168
  %v10286 = vunpack.c.0.s8 %v10285
  %v10287 = vlaneseq
  %v10288 = vshrl.u32 %v10287, 7
  %v10289 = vsub.s32 %v10286, %v10288
  %v10290 = vrot.slane %v10276, %v10289
  %v10291 = vcombine.low %v10283, %v10290
  %v10292 = vcombine.low %v9678, %v9692
  %v10294 = vunpack.c.l.s4 1966171168
  %v10295 = vunpack.c.0.s8 %v10294
  %v10296 = vlaneseq
  %v10297 = vshrl.u32 %v10296, 7
  %v10298 = vsub.s32 %v10295, %v10297
  %v10299 = vrot.slane %v10292, %v10298
  %v10301 = vunpack.c.l.s4 1966171168
  %v10302 = vunpack.c.0.s8 %v10301
  %v10303 = vlaneseq
  %v10304 = vshrl.u32 %v10303, 7
  %v10305 = vsub.s32 %v10302, %v10304
  %v10306 = vrot.slane %v10299, %v10305
  %v10307 = vcombine.low %v9699, %v9701
  %v10308 = vcombine.low %v9703, %v9727
  %v10309 = vcombine.low %v9741, %v9749
  %v10310 = vcombine.low %v9751, %v9734
  %v10312 = vunpack.c.l.s4 1966171168
  %v10313 = vunpack.c.0.s8 %v10312
  %v10314 = vlaneseq
  %v10315 = vshrl.u32 %v10314, 7
  %v10316 = vsub.s32 %v10313, %v10315
  %v10317 = vrot.slane %v10307, %v10316
  %v10319 = vunpack.c.l.s4 1966171168
  %v10320 = vunpack.c.0.s8 %v10319
  %v10321 = vlaneseq
  %v10322 = vshrl.u32 %v10321, 7
  %v10323 = vsub.s32 %v10320, %v10322
  %v10324 = vrot.slane %v10308, %v10323
  %v10326 = vunpack.c.l.s4 1966171168
  %v10327 = vunpack.c.0.s8 %v10326
  %v10328 = vlaneseq
  %v10329 = vshrl.u32 %v10328, 7
  %v10330 = vsub.s32 %v10327, %v10329
  %v10331 = vrot.slane %v10309, %v10330
  %v10333 = vunpack.c.l.s4 1966171168
  %v10334 = vunpack.c.0.s8 %v10333
  %v10335 = vlaneseq
  %v10336 = vshrl.u32 %v10335, 7
  %v10337 = vsub.s32 %v10334, %v10336
  %v10338 = vrot.slane %v10310, %v10337
  %v10339 = vcombine.low %v10317, %v10324
  %v10340 = vcombine.low %v10331, %v10338
  %v10342 = vunpack.c.l.s4 1966171168
  %v10343 = vunpack.c.0.s8 %v10342
  %v10344 = vlaneseq
  %v10345 = vshrl.u32 %v10344, 7
  %v10346 = vsub.s32 %v10343, %v10345
  %v10347 = vrot.slane %v10339, %v10346
  %v10349 = vunpack.c.l.s4 1966171168
  %v10350 = vunpack.c.0.s8 %v10349
  %v10351 = vlaneseq
  %v10352 = vshrl.u32 %v10351, 7
  %v10353 = vsub.s32 %v10350, %v10352
  %v10354 = vrot.slane %v10340, %v10353
  %v10355 = vcombine.low %v10347, %v10354
  %v10356 = vcombine.low %v9748, %v9750
  %v10358 = vunpack.c.l.s4 1966171168
  %v10359 = vunpack.c.0.s8 %v10358
  %v10360 = vlaneseq
  %v10361 = vshrl.u32 %v10360, 7
  %v10362 = vsub.s32 %v10359, %v10361
  %v10363 = vrot.slane %v10356, %v10362
  %v10365 = vunpack.c.l.s4 1966171168
  %v10366 = vunpack.c.0.s8 %v10365
  %v10367 = vlaneseq
  %v10368 = vshrl.u32 %v10367, 7
  %v10369 = vsub.s32 %v10366, %v10368
  %v10370 = vrot.slane %v10363, %v10369
  %v10371 = vcombine.low %v9798, %v9800
  %v10372 = vcombine.low %v9783, %v9797
  %v10373 = vcombine.low %v9799, %v9801
  %v10374 = vcombine.low %v9825, %v9839
  %v10376 = vunpack.c.l.s4 1966171168
  %v10377 = vunpack.c.0.s8 %v10376
  %v10378 = vlaneseq
  %v10379 = vshrl.u32 %v10378, 7
  %v10380 = vsub.s32 %v10377, %v10379
  %v10381 = vrot.slane %v10371, %v10380
  %v10383 = vunpack.c.l.s4 1966171168
  %v10384 = vunpack.c.0.s8 %v10383
  %v10385 = vlaneseq
  %v10386 = vshrl.u32 %v10385, 7
  %v10387 = vsub.s32 %v10384, %v10386
  %v10388 = vrot.slane %v10372, %v10387
  %v10390 = vunpack.c.l.s4 1966171168
  %v10391 = vunpack.c.0.s8 %v10390
  %v10392 = vlaneseq
  %v10393 = vshrl.u32 %v10392, 7
  %v10394 = vsub.s32 %v10391, %v10393
  %v10395 = vrot.slane %v10373, %v10394
  %v10397 = vunpack.c.l.s4 1966171168
  %v10398 = vunpack.c.0.s8 %v10397
  %v10399 = vlaneseq
  %v10400 = vshrl.u32 %v10399, 7
  %v10401 = vsub.s32 %v10398, %v10400
  %v10402 = vrot.slane %v10374, %v10401
  %v10403 = vcombine.low %v10381, %v10388
  %v10404 = vcombine.low %v10395, %v10402
  %v10406 = vunpack.c.l.s4 1966171168
  %v10407 = vunpack.c.0.s8 %v10406
  %v10408 = vlaneseq
  %v10409 = vshrl.u32 %v10408, 7
  %v10410 = vsub.s32 %v10407, %v10409
  %v10411 = vrot.slane %v10403, %v10410
  %v10413 = vunpack.c.l.s4 1966171168
  %v10414 = vunpack.c.0.s8 %v10413
  %v10415 = vlaneseq
  %v10416 = vshrl.u32 %v10415, 7
  %v10417 = vsub.s32 %v10414, %v10416
  %v10418 = vrot.slane %v10404, %v10417
  %v10419 = vcombine.low %v10411, %v10418
  %v10420 = vcombine.low %v9847, %v9849
  %v10422 = vunpack.c.l.s4 1966171168
  %v10423 = vunpack.c.0.s8 %v10422
  %v10424 = vlaneseq
  %v10425 = vshrl.u32 %v10424, 7
  %v10426 = vsub.s32 %v10423, %v10425
  %v10427 = vrot.slane %v10420, %v10426
  %v10429 = vunpack.c.l.s4 1966171168
  %v10430 = vunpack.c.0.s8 %v10429
  %v10431 = vlaneseq
  %v10432 = vshrl.u32 %v10431, 7
  %v10433 = vsub.s32 %v10430, %v10432
  %v10434 = vrot.slane %v10427, %v10433
  %v10435 = vcombine.low %v9850, %v9874
  %v10436 = vcombine.low %v9888, %v9896
  %v10437 = vcombine.low %v9898, %v9881
  %v10438 = vcombine.low %v9895, %v9897
  %v10440 = vunpack.c.l.s4 1966171168
  %v10441 = vunpack.c.0.s8 %v10440
  %v10442 = vlaneseq
  %v10443 = vshrl.u32 %v10442, 7
  %v10444 = vsub.s32 %v10441, %v10443
  %v10445 = vrot.slane %v10435, %v10444
  %v10447 = vunpack.c.l.s4 1966171168
  %v10448 = vunpack.c.0.s8 %v10447
  %v10449 = vlaneseq
  %v10450 = vshrl.u32 %v10449, 7
  %v10451 = vsub.s32 %v10448, %v10450
  %v10452 = vrot.slane %v10436, %v10451
  %v10454 = vunpack.c.l.s4 1966171168
  %v10455 = vunpack.c.0.s8 %v10454
  %v10456 = vlaneseq
  %v10457 = vshrl.u32 %v10456, 7
  %v10458 = vsub.s32 %v10455, %v10457
  %v10459 = vrot.slane %v10437, %v10458
  %v10461 = vunpack.c.l.s4 1966171168
  %v10462 = vunpack.c.0.s8 %v10461
  %v10463 = vlaneseq
  %v10464 = vshrl.u32 %v10463, 7
  %v10465 = vsub.s32 %v10462, %v10464
  %v10466 = vrot.slane %v10438, %v10465
  %v10467 = vcombine.low %v10445, %v10452
  %v10468 = vcombine.low %v10459, %v10466
  %v10470 = vunpack.c.l.s4 1966171168
  %v10471 = vunpack.c.0.s8 %v10470
  %v10472 = vlaneseq
  %v10473 = vshrl.u32 %v10472, 7
  %v10474 = vsub.s32 %v10471, %v10473
  %v10475 = vrot.slane %v10467, %v10474
  %v10477 = vunpack.c.l.s4 1966171168
  %v10478 = vunpack.c.0.s8 %v10477
  %v10479 = vlaneseq
  %v10480 = vshrl.u32 %v10479, 7
  %v10481 = vsub.s32 %v10478, %v10480
  %v10482 = vrot.slane %v10468, %v10481
  %v10483 = vcombine.low %v10475, %v10482
  %v10484 = vcombine.low %v9899, %v9923
  %v10486 = vunpack.c.l.s4 1966171168
  %v10487 = vunpack.c.0.s8 %v10486
  %v10488 = vlaneseq
  %v10489 = vshrl.u32 %v10488, 7
  %v10490 = vsub.s32 %v10487, %v10489
  %v10491 = vrot.slane %v10484, %v10490
  %v10493 = vunpack.c.l.s4 1966171168
  %v10494 = vunpack.c.0.s8 %v10493
  %v10495 = vlaneseq
  %v10496 = vshrl.u32 %v10495, 7
  %v10497 = vsub.s32 %v10494, %v10496
  %v10498 = vrot.slane %v10491, %v10497
  %v10499 = vcombine.low %v9930, %v9944
  %v10500 = vcombine.low %v9946, %v9948
  %v10501 = vcombine.low %v9972, %v9986
  %v10502 = vcombine.low %v9994, %v9996
  %v10504 = vunpack.c.l.s4 1966171168
  %v10505 = vunpack.c.0.s8 %v10504
  %v10506 = vlaneseq
  %v10507 = vshrl.u32 %v10506, 7
  %v10508 = vsub.s32 %v10505, %v10507
  %v10509 = vrot.slane %v10499, %v10508
  %v10511 = vunpack.c.l.s4 1966171168
  %v10512 = vunpack.c.0.s8 %v10511
  %v10513 = vlaneseq
  %v10514 = vshrl.u32 %v10513, 7
  %v10515 = vsub.s32 %v10512, %v10514
  %v10516 = vrot.slane %v10500, %v10515
  %v10518 = vunpack.c.l.s4 1966171168
  %v10519 = vunpack.c.0.s8 %v10518
  %v10520 = vlaneseq
  %v10521 = vshrl.u32 %v10520, 7
  %v10522 = vsub.s32 %v10519, %v10521
  %v10523 = vrot.slane %v10501, %v10522
  %v10525 = vunpack.c.l.s4 1966171168
  %v10526 = vunpack.c.0.s8 %v10525
  %v10527 = vlaneseq
  %v10528 = vshrl.u32 %v10527, 7
  %v10529 = vsub.s32 %v10526, %v10528
  %v10530 = vrot.slane %v10502, %v10529
  %v10531 = vcombine.low %v10509, %v10516
  %v10532 = vcombine.low %v10523, %v10530
  %v10534 = vunpack.c.l.s4 1966171168
  %v10535 = vunpack.c.0.s8 %v10534
  %v10536 = vlaneseq
  %v10537 = vshrl.u32 %v10536, 7
  %v10538 = vsub.s32 %v10535, %v10537
  %v10539 = vrot.slane %v10531, %v10538
  %v10541 = vunpack.c.l.s4 1966171168
  %v10542 = vunpack.c.0.s8 %v10541
  %v10543 = vlaneseq
  %v10544 = vshrl.u32 %v10543, 7
  %v10545 = vsub.s32 %v10542, %v10544
  %v10546 = vrot.slane %v10532, %v10545
  %v10547 = vcombine.low %v10539, %v10546
  %v10548 = vcombine.low %v9979, %v9993
  %v10550 = vunpack.c.l.s4 1966171168
  %v10551 = vunpack.c.0.s8 %v10550
  %v10552 = vlaneseq
  %v10553 = vshrl.u32 %v10552, 7
  %v10554 = vsub.s32 %v10551, %v10553
  %v10555 = vrot.slane %v10548, %v10554
  %v10557 = vunpack.c.l.s4 1966171168
  %v10558 = vunpack.c.0.s8 %v10557
  %v10559 = vlaneseq
  %v10560 = vshrl.u32 %v10559, 7
  %v10561 = vsub.s32 %v10558, %v10560
  %v10562 = vrot.slane %v10555, %v10561
  %v10563 = vcombine.low %v10035, %v10043
  %v10564 = vcombine.low %v10045, %v10028
  %v10565 = vcombine.low %v10042, %v10044
  %v10566 = vcombine.low %v10046, %v10070
  %v10568 = vunpack.c.l.s4 1966171168
  %v10569 = vunpack.c.0.s8 %v10568
  %v10570 = vlaneseq
  %v10571 = vshrl.u32 %v10570, 7
  %v10572 = vsub.s32 %v10569, %v10571
  %v10573 = vrot.slane %v10563, %v10572
  %v10575 = vunpack.c.l.s4 1966171168
  %v10576 = vunpack.c.0.s8 %v10575
  %v10577 = vlaneseq
  %v10578 = vshrl.u32 %v10577, 7
  %v10579 = vsub.s32 %v10576, %v10578
  %v10580 = vrot.slane %v10564, %v10579
  %v10582 = vunpack.c.l.s4 1966171168
  %v10583 = vunpack.c.0.s8 %v10582
  %v10584 = vlaneseq
  %v10585 = vshrl.u32 %v10584, 7
  %v10586 = vsub.s32 %v10583, %v10585
  %v10587 = vrot.slane %v10565, %v10586
  %v10589 = vunpack.c.l.s4 1966171168
  %v10590 = vunpack.c.0.s8 %v10589
  %v10591 = vlaneseq
  %v10592 = vshrl.u32 %v10591, 7
  %v10593 = vsub.s32 %v10590, %v10592
  %v10594 = vrot.slane %v10566, %v10593
  %v10595 = vcombine.low %v10573, %v10580
  %v10596 = vcombine.low %v10587, %v10594
  %v10598 = vunpack.c.l.s4 1966171168
  %v10599 = vunpack.c.0.s8 %v10598
  %v10600 = vlaneseq
  %v10601 = vshrl.u32 %v10600, 7
  %v10602 = vsub.s32 %v10599, %v10601
  %v10603 = vrot.slane %v10595, %v10602
  %v10605 = vunpack.c.l.s4 1966171168
  %v10606 = vunpack.c.0.s8 %v10605
  %v10607 = vlaneseq
  %v10608 = vshrl.u32 %v10607, 7
  %v10609 = vsub.s32 %v10606, %v10608
  %v10610 = vrot.slane %v10596, %v10609
  %v10611 = vcombine.low %v10603, %v10610
  %v10612 = vcombine.low %v10084, %v10092
  %v10614 = vunpack.c.l.s4 1966171168
  %v10615 = vunpack.c.0.s8 %v10614
  %v10616 = vlaneseq
  %v10617 = vshrl.u32 %v10616, 7
  %v10618 = vsub.s32 %v10615, %v10617
  %v10619 = vrot.slane %v10612, %v10618
  %v10621 = vunpack.c.l.s4 1966171168
  %v10622 = vunpack.c.0.s8 %v10621
  %v10623 = vlaneseq
  %v10624 = vshrl.u32 %v10623, 7
  %v10625 = vsub.s32 %v10622, %v10624
  %v10626 = vrot.slane %v10619, %v10625
  %v10627 = vcombine.low %v10093, %v10095
  %v10628 = vcombine.low %v10119, %v10133
  %v10629 = vcombine.low %v10141, %v10143
  %v10630 = vcombine.low %v10126, %v10140
  %v10632 = vunpack.c.l.s4 1966171168
  %v10633 = vunpack.c.0.s8 %v10632
  %v10634 = vlaneseq
  %v10635 = vshrl.u32 %v10634, 7
  %v10636 = vsub.s32 %v10633, %v10635
  %v10637 = vrot.slane %v10627, %v10636
  %v10639 = vunpack.c.l.s4 1966171168
  %v10640 = vunpack.c.0.s8 %v10639
  %v10641 = vlaneseq
  %v10642 = vshrl.u32 %v10641, 7
  %v10643 = vsub.s32 %v10640, %v10642
  %v10644 = vrot.slane %v10628, %v10643
  %v10646 = vunpack.c.l.s4 1966171168
  %v10647 = vunpack.c.0.s8 %v10646
  %v10648 = vlaneseq
  %v10649 = vshrl.u32 %v10648, 7
  %v10650 = vsub.s32 %v10647, %v10649
  %v10651 = vrot.slane %v10629, %v10650
  %v10653 = vunpack.c.l.s4 1966171168
  %v10654 = vunpack.c.0.s8 %v10653
  %v10655 = vlaneseq
  %v10656 = vshrl.u32 %v10655, 7
  %v10657 = vsub.s32 %v10654, %v10656
  %v10658 = vrot.slane %v10630, %v10657
  %v10659 = vcombine.low %v10637, %v10644
  %v10660 = vcombine.low %v10651, %v10658
  %v10662 = vunpack.c.l.s4 1966171168
  %v10663 = vunpack.c.0.s8 %v10662
  %v10664 = vlaneseq
  %v10665 = vshrl.u32 %v10664, 7
  %v10666 = vsub.s32 %v10663, %v10665
  %v10667 = vrot.slane %v10659, %v10666
  %v10669 = vunpack.c.l.s4 1966171168
  %v10670 = vunpack.c.0.s8 %v10669
  %v10671 = vlaneseq
  %v10672 = vshrl.u32 %v10671, 7
  %v10673 = vsub.s32 %v10670, %v10672
  %v10674 = vrot.slane %v10660, %v10673
  %v10675 = vcombine.low %v10667, %v10674
  %v10676 = vcombine.low %v10142, %v10144
  %v10678 = vunpack.c.l.s4 1966171168
  %v10679 = vunpack.c.0.s8 %v10678
  %v10680 = vlaneseq
  %v10681 = vshrl.u32 %v10680, 7
  %v10682 = vsub.s32 %v10679, %v10681
  %v10683 = vrot.slane %v10676, %v10682
  %v10685 = vunpack.c.l.s4 1966171168
  %v10686 = vunpack.c.0.s8 %v10685
  %v10687 = vlaneseq
  %v10688 = vshrl.u32 %v10687, 7
  %v10689 = vsub.s32 %v10686, %v10688
  %v10690 = vrot.slane %v10683, %v10689
  %v10691 = vcombine.low %v10192, %v10175
  %v10692 = vcombine.low %v10189, %v10191
  %v10693 = vcombine.low %v10193, %v10217
  %v10694 = vcombine.low %v10231, %v10239
  %v10696 = vunpack.c.l.s4 1966171168
  %v10697 = vunpack.c.0.s8 %v10696
  %v10698 = vlaneseq
  %v10699 = vshrl.u32 %v10698, 7
  %v10700 = vsub.s32 %v10697, %v10699
  %v10701 = vrot.slane %v10691, %v10700
  %v10703 = vunpack.c.l.s4 1966171168
  %v10704 = vunpack.c.0.s8 %v10703
  %v10705 = vlaneseq
  %v10706 = vshrl.u32 %v10705, 7
  %v10707 = vsub.s32 %v10704, %v10706
  %v10708 = vrot.slane %v10692, %v10707
  %v10710 = vunpack.c.l.s4 1966171168
  %v10711 = vunpack.c.0.s8 %v10710
  %v10712 = vlaneseq
  %v10713 = vshrl.u32 %v10712, 7
  %v10714 = vsub.s32 %v10711, %v10713
  %v10715 = vrot.slane %v10693, %v10714
  %v10717 = vunpack.c.l.s4 1966171168
  %v10718 = vunpack.c.0.s8 %v10717
  %v10719 = vlaneseq
  %v10720 = vshrl.u32 %v10719, 7
  %v10721 = vsub.s32 %v10718, %v10720
  %v10722 = vrot.slane %v10694, %v10721
  %v10723 = vcombine.low %v10701, %v10708
  %v10724 = vcombine.low %v10715, %v10722
  %v10726 = vunpack.c.l.s4 1966171168
  %v10727 = vunpack.c.0.s8 %v10726
  %v10728 = vlaneseq
  %v10729 = vshrl.u32 %v10728, 7
  %v10730 = vsub.s32 %v10727, %v10729
  %v10731 = vrot.slane %v10723, %v10730
  %v10733 = vunpack.c.l.s4 1966171168
  %v10734 = vunpack.c.0.s8 %v10733
  %v10735 = vlaneseq
  %v10736 = vshrl.u32 %v10735, 7
  %v10737 = vsub.s32 %v10734, %v10736
  %v10738 = vrot.slane %v10724, %v10737
  %v10739 = vcombine.low %v10731, %v10738
  %v10740 = vcombine.low %v10241, %v10224
  %v10742 = vunpack.c.l.s4 1966171168
  %v10743 = vunpack.c.0.s8 %v10742
  %v10744 = vlaneseq
  %v10745 = vshrl.u32 %v10744, 7
  %v10746 = vsub.s32 %v10743, %v10745
  %v10747 = vrot.slane %v10740, %v10746
  %v10749 = vunpack.c.l.s4 1966171168
  %v10750 = vunpack.c.0.s8 %v10749
  %v10751 = vlaneseq
  %v10752 = vshrl.u32 %v10751, 7
  %v10753 = vsub.s32 %v10750, %v10752
  %v10754 = vrot.slane %v10747, %v10753
  %v10771 = vcombine.low %v9643, %v9651
  %v10772 = vcombine.low %v9653, %v9636
  %v10773 = vcombine.low %v9650, %v9652
  %v10774 = vcombine.low %v9654, %v9678
  %v10776 = vunpack.c.l.s4 1966171168
  %v10777 = vunpack.c.0.s8 %v10776
  %v10778 = vlaneseq
  %v10779 = vshrl.u32 %v10778, 7
  %v10780 = vsub.s32 %v10777, %v10779
  %v10781 = vrot.slane %v10771, %v10780
  %v10783 = vunpack.c.l.s4 1966171168
  %v10784 = vunpack.c.0.s8 %v10783
  %v10785 = vlaneseq
  %v10786 = vshrl.u32 %v10785, 7
  %v10787 = vsub.s32 %v10784, %v10786
  %v10788 = vrot.slane %v10772, %v10787
  %v10790 = vunpack.c.l.s4 1966171168
  %v10791 = vunpack.c.0.s8 %v10790
  %v10792 = vlaneseq
  %v10793 = vshrl.u32 %v10792, 7
  %v10794 = vsub.s32 %v10791, %v10793
  %v10795 = vrot.slane %v10773, %v10794
  %v10797 = vunpack.c.l.s4 1966171168
  %v10798 = vunpack.c.0.s8 %v10797
  %v10799 = vlaneseq
  %v10800 = vshrl.u32 %v10799, 7
  %v10801 = vsub.s32 %v10798, %v10800
  %v10802 = vrot.slane %v10774, %v10801
  %v10803 = vcombine.low %v10781, %v10788
  %v10804 = vcombine.low %v10795, %v10802
  %v10806 = vunpack.c.l.s4 1966171168
  %v10807 = vunpack.c.0.s8 %v10806
  %v10808 = vlaneseq
  %v10809 = vshrl.u32 %v10808, 7
  %v10810 = vsub.s32 %v10807, %v10809
  %v10811 = vrot.slane %v10803, %v10810
  %v10813 = vunpack.c.l.s4 1966171168
  %v10814 = vunpack.c.0.s8 %v10813
  %v10815 = vlaneseq
  %v10816 = vshrl.u32 %v10815, 7
  %v10817 = vsub.s32 %v10814, %v10816
  %v10818 = vrot.slane %v10804, %v10817
  %v10819 = vcombine.low %v10811, %v10818
  %v10820 = vcombine.low %v9692, %v9700
  %v10822 = vunpack.c.l.s4 1966171168
  %v10823 = vunpack.c.0.s8 %v10822
  %v10824 = vlaneseq
  %v10825 = vshrl.u32 %v10824, 7
  %v10826 = vsub.s32 %v10823, %v10825
  %v10827 = vrot.slane %v10820, %v10826
  %v10829 = vunpack.c.l.s4 1966171168
  %v10830 = vunpack.c.0.s8 %v10829
  %v10831 = vlaneseq
  %v10832 = vshrl.u32 %v10831, 7
  %v10833 = vsub.s32 %v10830, %v10832
  %v10834 = vrot.slane %v10827, %v10833
  %v10835 = vcombine.low %v9701, %v9703
  %v10836 = vcombine.low %v9727, %v9741
  %v10837 = vcombine.low %v9749, %v9751
  %v10838 = vcombine.low %v9734, %v9748
  %v10840 = vunpack.c.l.s4 1966171168
  %v10841 = vunpack.c.0.s8 %v10840
  %v10842 = vlaneseq
  %v10843 = vshrl.u32 %v10842, 7
  %v10844 = vsub.s32 %v10841, %v10843
  %v10845 = vrot.slane %v10835, %v10844
  %v10847 = vunpack.c.l.s4 1966171168
  %v10848 = vunpack.c.0.s8 %v10847
  %v10849 = vlaneseq
  %v10850 = vshrl.u32 %v10849, 7
  %v10851 = vsub.s32 %v10848, %v10850
  %v10852 = vrot.slane %v10836, %v10851
  %v10854 = vunpack.c.l.s4 1966171168
  %v10855 = vunpack.c.0.s8 %v10854
  %v10856 = vlaneseq
  %v10857 = vshrl.u32 %v10856, 7
  %v10858 = vsub.s32 %v10855, %v10857
  %v10859 = vrot.slane %v10837, %v10858
  %v10861 = vunpack.c.l.s4 1966171168
  %v10862 = vunpack.c.0.s8 %v10861
  %v10863 = vlaneseq
  %v10864 = vshrl.u32 %v10863, 7
  %v10865 = vsub.s32 %v10862, %v10864
  %v10866 = vrot.slane %v10838, %v10865
  %v10867 = vcombine.low %v10845, %v10852
  %v10868 = vcombine.low %v10859, %v10866
  %v10870 = vunpack.c.l.s4 1966171168
  %v10871 = vunpack.c.0.s8 %v10870
  %v10872 = vlaneseq
  %v10873 = vshrl.u32 %v10872, 7
  %v10874 = vsub.s32 %v10871, %v10873
  %v10875 = vrot.slane %v10867, %v10874
  %v10877 = vunpack.c.l.s4 1966171168
  %v10878 = vunpack.c.0.s8 %v10877
  %v10879 = vlaneseq
  %v10880 = vshrl.u32 %v10879, 7
  %v10881 = vsub.s32 %v10878, %v10880
  %v10882 = vrot.slane %v10868, %v10881
  %v10883 = vcombine.low %v10875, %v10882
  %v10884 = vcombine.low %v9750, %v9752
  %v10886 = vunpack.c.l.s4 1966171168
  %v10887 = vunpack.c.0.s8 %v10886
  %v10888 = vlaneseq
  %v10889 = vshrl.u32 %v10888, 7
  %v10890 = vsub.s32 %v10887, %v10889
  %v10891 = vrot.slane %v10884, %v10890
  %v10893 = vunpack.c.l.s4 1966171168
  %v10894 = vunpack.c.0.s8 %v10893
  %v10895 = vlaneseq
  %v10896 = vshrl.u32 %v10895, 7
  %v10897 = vsub.s32 %v10894, %v10896
  %v10898 = vrot.slane %v10891, %v10897
  %v10899 = vcombine.low %v9800, %v9783
  %v10900 = vcombine.low %v9797, %v9799
  %v10901 = vcombine.low %v9801, %v9825
  %v10902 = vcombine.low %v9839, %v9847
  %v10904 = vunpack.c.l.s4 1966171168
  %v10905 = vunpack.c.0.s8 %v10904
  %v10906 = vlaneseq
  %v10907 = vshrl.u32 %v10906, 7
  %v10908 = vsub.s32 %v10905, %v10907
  %v10909 = vrot.slane %v10899, %v10908
  %v10911 = vunpack.c.l.s4 1966171168
  %v10912 = vunpack.c.0.s8 %v10911
  %v10913 = vlaneseq
  %v10914 = vshrl.u32 %v10913, 7
  %v10915 = vsub.s32 %v10912, %v10914
  %v10916 = vrot.slane %v10900, %v10915
  %v10918 = vunpack.c.l.s4 1966171168
  %v10919 = vunpack.c.0.s8 %v10918
  %v10920 = vlaneseq
  %v10921 = vshrl.u32 %v10920, 7
  %v10922 = vsub.s32 %v10919, %v10921
  %v10923 = vrot.slane %v10901, %v10922
  %v10925 = vunpack.c.l.s4 1966171168
  %v10926 = vunpack.c.0.s8 %v10925
  %v10927 = vlaneseq
  %v10928 = vshrl.u32 %v10927, 7
  %v10929 = vsub.s32 %v10926, %v10928
  %v10930 = vrot.slane %v10902, %v10929
  %v10931 = vcombine.low %v10909, %v10916
  %v10932 = vcombine.low %v10923, %v10930
  %v10934 = vunpack.c.l.s4 1966171168
  %v10935 = vunpack.c.0.s8 %v10934
  %v10936 = vlaneseq
  %v10937 = vshrl.u32 %v10936, 7
  %v10938 = vsub.s32 %v10935, %v10937
  %v10939 = vrot.slane %v10931, %v10938
  %v10941 = vunpack.c.l.s4 1966171168
  %v10942 = vunpack.c.0.s8 %v10941
  %v10943 = vlaneseq
  %v10944 = vshrl.u32 %v10943, 7
  %v10945 = vsub.s32 %v10942, %v10944
  %v10946 = vrot.slane %v10932, %v10945
  %v10947 = vcombine.low %v10939, %v10946
  %v10948 = vcombine.low %v9849, %v9832
  %v10950 = vunpack.c.l.s4 1966171168
  %v10951 = vunpack.c.0.s8 %v10950
  %v10952 = vlaneseq
  %v10953 = vshrl.u32 %v10952, 7
  %v10954 = vsub.s32 %v10951, %v10953
  %v10955 = vrot.slane %v10948, %v10954
  %v10957 = vunpack.c.l.s4 1966171168
  %v10958 = vunpack.c.0.s8 %v10957
  %v10959 = vlaneseq
  %v10960 = vshrl.u32 %v10959, 7
  %v10961 = vsub.s32 %v10958, %v10960
  %v10962 = vrot.slane %v10955, %v10961
  %v10963 = vcombine.low %v9874, %v9888
  %v10964 = vcombine.low %v9896, %v9898
  %v10965 = vcombine.low %v9881, %v9895
  %v10966 = vcombine.low %v9897, %v9899
  %v10968 = vunpack.c.l.s4 1966171168
  %v10969 = vunpack.c.0.s8 %v10968
  %v10970 = vlaneseq
  %v10971 = vshrl.u32 %v10970, 7
  %v10972 = vsub.s32 %v10969, %v10971
  %v10973 = vrot.slane %v10963, %v10972
  %v10975 = vunpack.c.l.s4 1966171168
  %v10976 = vunpack.c.0.s8 %v10975
  %v10977 = vlaneseq
  %v10978 = vshrl.u32 %v10977, 7
  %v10979 = vsub.s32 %v10976, %v10978
  %v10980 = vrot.slane %v10964, %v10979
  %v10982 = vunpack.c.l.s4 1966171168
  %v10983 = vunpack.c.0.s8 %v10982
  %v10984 = vlaneseq
  %v10985 = vshrl.u32 %v10984, 7
  %v10986 = vsub.s32 %v10983, %v10985
  %v10987 = vrot.slane %v10965, %v10986
  %v10989 = vunpack.c.l.s4 1966171168
  %v10990 = vunpack.c.0.s8 %v10989
  %v10991 = vlaneseq
  %v10992 = vshrl.u32 %v10991, 7
  %v10993 = vsub.s32 %v10990, %v10992
  %v10994 = vrot.slane %v10966, %v10993
  %v10995 = vcombine.low %v10973, %v10980
  %v10996 = vcombine.low %v10987, %v10994
  %v10998 = vunpack.c.l.s4 1966171168
  %v10999 = vunpack.c.0.s8 %v10998
  %v11000 = vlaneseq
  %v11001 = vshrl.u32 %v11000, 7
  %v11002 = vsub.s32 %v10999, %v11001
  %v11003 = vrot.slane %v10995, %v11002
  %v11005 = vunpack.c.l.s4 1966171168
  %v11006 = vunpack.c.0.s8 %v11005
  %v11007 = vlaneseq
  %v11008 = vshrl.u32 %v11007, 7
  %v11009 = vsub.s32 %v11006, %v11008
  %v11010 = vrot.slane %v10996, %v11009
  %v11011 = vcombine.low %v11003, %v11010
  %v11012 = vcombine.low %v9923, %v9937
  %v11014 = vunpack.c.l.s4 1966171168
  %v11015 = vunpack.c.0.s8 %v11014
  %v11016 = vlaneseq
  %v11017 = vshrl.u32 %v11016, 7
  %v11018 = vsub.s32 %v11015, %v11017
  %v11019 = vrot.slane %v11012, %v11018
  %v11021 = vunpack.c.l.s4 1966171168
  %v11022 = vunpack.c.0.s8 %v11021
  %v11023 = vlaneseq
  %v11024 = vshrl.u32 %v11023, 7
  %v11025 = vsub.s32 %v11022, %v11024
  %v11026 = vrot.slane %v11019, %v11025
  %v11027 = vcombine.low %v9944, %v9946
  %v11028 = vcombine.low %v9948, %v9972
  %v11029 = vcombine.low %v9986, %v9994
  %v11030 = vcombine.low %v9996, %v9979
  %v11032 = vunpack.c.l.s4 1966171168
  %v11033 = vunpack.c.0.s8 %v11032
  %v11034 = vlaneseq
  %v11035 = vshrl.u32 %v11034, 7
  %v11036 = vsub.s32 %v11033, %v11035
  %v11037 = vrot.slane %v11027, %v11036
  %v11039 = vunpack.c.l.s4 1966171168
  %v11040 = vunpack.c.0.s8 %v11039
  %v11041 = vlaneseq
  %v11042 = vshrl.u32 %v11041, 7
  %v11043 = vsub.s32 %v11040, %v11042
  %v11044 = vrot.slane %v11028, %v11043
  %v11046 = vunpack.c.l.s4 1966171168
  %v11047 = vunpack.c.0.s8 %v11046
  %v11048 = vlaneseq
  %v11049 = vshrl.u32 %v11048, 7
  %v11050 = vsub.s32 %v11047, %v11049
  %v11051 = vrot.slane %v11029, %v11050
  %v11053 = vunpack.c.l.s4 1966171168
  %v11054 = vunpack.c.0.s8 %v11053
  %v11055 = vlaneseq
  %v11056 = vshrl.u32 %v11055, 7
  %v11057 = vsub.s32 %v11054, %v11056
  %v11058 = vrot.slane %v11030, %v11057
  %v11059 = vcombine.low %v11037, %v11044
  %v11060 = vcombine.low %v11051, %v11058
  %v11062 = vunpack.c.l.s4 1966171168
  %v11063 = vunpack.c.0.s8 %v11062
  %v11064 = vlaneseq
  %v11065 = vshrl.u32 %v11064, 7
  %v11066 = vsub.s32 %v11063, %v11065
  %v11067 = vrot.slane %v11059, %v11066
  %v11069 = vunpack.c.l.s4 1966171168
  %v11070 = vunpack.c.0.s8 %v11069
  %v11071 = vlaneseq
  %v11072 = vshrl.u32 %v11071, 7
  %v11073 = vsub.s32 %v11070, %v11072
  %v11074 = vrot.slane %v11060, %v11073
  %v11075 = vcombine.low %v11067, %v11074
  %v11076 = vcombine.low %v9993, %v9995
  %v11078 = vunpack.c.l.s4 1966171168
  %v11079 = vunpack.c.0.s8 %v11078
  %v11080 = vlaneseq
  %v11081 = vshrl.u32 %v11080, 7
  %v11082 = vsub.s32 %v11079, %v11081
  %v11083 = vrot.slane %v11076, %v11082
  %v11085 = vunpack.c.l.s4 1966171168
  %v11086 = vunpack.c.0.s8 %v11085
  %v11087 = vlaneseq
  %v11088 = vshrl.u32 %v11087, 7
  %v11089 = vsub.s32 %v11086, %v11088
  %v11090 = vrot.slane %v11083, %v11089
  %v11091 = vcombine.low %v10043, %v10045
  %v11092 = vcombine.low %v10028, %v10042
  %v11093 = vcombine.low %v10044, %v10046
  %v11094 = vcombine.low %v10070, %v10084
  %v11096 = vunpack.c.l.s4 1966171168
  %v11097 = vunpack.c.0.s8 %v11096
  %v11098 = vlaneseq
  %v11099 = vshrl.u32 %v11098, 7
  %v11100 = vsub.s32 %v11097, %v11099
  %v11101 = vrot.slane %v11091, %v11100
  %v11103 = vunpack.c.l.s4 1966171168
  %v11104 = vunpack.c.0.s8 %v11103
  %v11105 = vlaneseq
  %v11106 = vshrl.u32 %v11105, 7
  %v11107 = vsub.s32 %v11104, %v11106
  %v11108 = vrot.slane %v11092, %v11107
  %v11110 = vunpack.c.l.s4 1966171168
  %v11111 = vunpack.c.0.s8 %v11110
  %v11112 = vlaneseq
  %v11113 = vshrl.u32 %v11112, 7
  %v11114 = vsub.s32 %v11111, %v11113
  %v11115 = vrot.slane %v11093, %v11114
  %v11117 = vunpack.c.l.s4 1966171168
  %v11118 = vunpack.c.0.s8 %v11117
  %v11119 = vlaneseq
  %v11120 = vshrl.u32 %v11119, 7
  %v11121 = vsub.s32 %v11118, %v11120
  %v11122 = vrot.slane %v11094, %v11121
  %v11123 = vcombine.low %v11101, %v11108
  %v11124 = vcombine.low %v11115, %v11122
  %v11126 = vunpack.c.l.s4 1966171168
  %v11127 = vunpack.c.0.s8 %v11126
  %v11128 = vlaneseq
  %v11129 = vshrl.u32 %v11128, 7
  %v11130 = vsub.s32 %v11127, %v11129
  %v11131 = vrot.slane %v11123, %v11130
  %v11133 = vunpack.c.l.s4 1966171168
  %v11134 = vunpack.c.0.s8 %v11133
  %v11135 = vlaneseq
  %v11136 = vshrl.u32 %v11135, 7
  %v11137 = vsub.s32 %v11134, %v11136
  %v11138 = vrot.slane %v11124, %v11137
  %v11139 = vcombine.low %v11131, %v11138
  %v11140 = vcombine.low %v10092, %v10094
  %v11142 = vunpack.c.l.s4 1966171168
  %v11143 = vunpack.c.0.s8 %v11142
  %v11144 = vlaneseq
  %v11145 = vshrl.u32 %v11144, 7
  %v11146 = vsub.s32 %v11143, %v11145
  %v11147 = vrot.slane %v11140, %v11146
  %v11149 = vunpack.c.l.s4 1966171168
  %v11150 = vunpack.c.0.s8 %v11149
  %v11151 = vlaneseq
  %v11152 = vshrl.u32 %v11151, 7
  %v11153 = vsub.s32 %v11150, %v11152
  %v11154 = vrot.slane %v11147, %v11153
  %v11155 = vcombine.low %v10095, %v10119
  %v11156 = vcombine.low %v10133, %v10141
  %v11157 = vcombine.low %v10143, %v10126
  %v11158 = vcombine.low %v10140, %v10142
  %v11160 = vunpack.c.l.s4 1966171168
  %v11161 = vunpack.c.0.s8 %v11160
  %v11162 = vlaneseq
  %v11163 = vshrl.u32 %v11162, 7
  %v11164 = vsub.s32 %v11161, %v11163
  %v11165 = vrot.slane %v11155, %v11164
  %v11167 = vunpack.c.l.s4 1966171168
  %v11168 = vunpack.c.0.s8 %v11167
  %v11169 = vlaneseq
  %v11170 = vshrl.u32 %v11169, 7
  %v11171 = vsub.s32 %v11168, %v11170
  %v11172 = vrot.slane %v11156, %v11171
  %v11174 = vunpack.c.l.s4 1966171168
  %v11175 = vunpack.c.0.s8 %v11174
  %v11176 = vlaneseq
  %v11177 = vshrl.u32 %v11176, 7
  %v11178 = vsub.s32 %v11175, %v11177
  %v11179 = vrot.slane %v11157, %v11178
  %v11181 = vunpack.c.l.s4 1966171168
  %v11182 = vunpack.c.0.s8 %v11181
  %v11183 = vlaneseq
  %v11184 = vshrl.u32 %v11183, 7
  %v11185 = vsub.s32 %v11182, %v11184
  %v11186 = vrot.slane %v11158, %v11185
  %v11187 = vcombine.low %v11165, %v11172
  %v11188 = vcombine.low %v11179, %v11186
  %v11190 = vunpack.c.l.s4 1966171168
  %v11191 = vunpack.c.0.s8 %v11190
  %v11192 = vlaneseq
  %v11193 = vshrl.u32 %v11192, 7
  %v11194 = vsub.s32 %v11191, %v11193
  %v11195 = vrot.slane %v11187, %v11194
  %v11197 = vunpack.c.l.s4 1966171168
  %v11198 = vunpack.c.0.s8 %v11197
  %v11199 = vlaneseq
  %v11200 = vshrl.u32 %v11199, 7
  %v11201 = vsub.s32 %v11198, %v11200
  %v11202 = vrot.slane %v11188, %v11201
  %v11203 = vcombine.low %v11195, %v11202
  %v11204 = vcombine.low %v10144, %v10168
  %v11206 = vunpack.c.l.s4 1966171168
  %v11207 = vunpack.c.0.s8 %v11206
  %v11208 = vlaneseq
  %v11209 = vshrl.u32 %v11208, 7
  %v11210 = vsub.s32 %v11207, %v11209
  %v11211 = vrot.slane %v11204, %v11210
  %v11213 = vunpack.c.l.s4 1966171168
  %v11214 = vunpack.c.0.s8 %v11213
  %v11215 = vlaneseq
  %v11216 = vshrl.u32 %v11215, 7
  %v11217 = vsub.s32 %v11214, %v11216
  %v11218 = vrot.slane %v11211, %v11217
  %v11219 = vcombine.low %v10175, %v10189
  %v11220 = vcombine.low %v10191, %v10193
  %v11221 = vcombine.low %v10217, %v10231
  %v11222 = vcombine.low %v10239, %v10241
  %v11224 = vunpack.c.l.s4 1966171168
  %v11225 = vunpack.c.0.s8 %v11224
  %v11226 = vlaneseq
  %v11227 = vshrl.u32 %v11226, 7
  %v11228 = vsub.s32 %v11225, %v11227
  %v11229 = vrot.slane %v11219, %v11228
  %v11231 = vunpack.c.l.s4 1966171168
  %v11232 = vunpack.c.0.s8 %v11231
  %v11233 = vlaneseq
  %v11234 = vshrl.u32 %v11233, 7
  %v11235 = vsub.s32 %v11232, %v11234
  %v11236 = vrot.slane %v11220, %v11235
  %v11238 = vunpack.c.l.s4 1966171168
  %v11239 = vunpack.c.0.s8 %v11238
  %v11240 = vlaneseq
  %v11241 = vshrl.u32 %v11240, 7
  %v11242 = vsub.s32 %v11239, %v11241
  %v11243 = vrot.slane %v11221, %v11242
  %v11245 = vunpack.c.l.s4 1966171168
  %v11246 = vunpack.c.0.s8 %v11245
  %v11247 = vlaneseq
  %v11248 = vshrl.u32 %v11247, 7
  %v11249 = vsub.s32 %v11246, %v11248
  %v11250 = vrot.slane %v11222, %v11249
  %v11251 = vcombine.low %v11229, %v11236
  %v11252 = vcombine.low %v11243, %v11250
  %v11254 = vunpack.c.l.s4 1966171168
  %v11255 = vunpack.c.0.s8 %v11254
  %v11256 = vlaneseq
  %v11257 = vshrl.u32 %v11256, 7
  %v11258 = vsub.s32 %v11255, %v11257
  %v11259 = vrot.slane %v11251, %v11258
  %v11261 = vunpack.c.l.s4 1966171168
  %v11262 = vunpack.c.0.s8 %v11261
  %v11263 = vlaneseq
  %v11264 = vshrl.u32 %v11263, 7
  %v11265 = vsub.s32 %v11262, %v11264
  %v11266 = vrot.slane %v11252, %v11265
  %v11267 = vcombine.low %v11259, %v11266
  %v11268 = vcombine.low %v10224, %v10238
  %v11270 = vunpack.c.l.s4 1966171168
  %v11271 = vunpack.c.0.s8 %v11270
  %v11272 = vlaneseq
  %v11273 = vshrl.u32 %v11272, 7
  %v11274 = vsub.s32 %v11271, %v11273
  %v11275 = vrot.slane %v11268, %v11274
  %v11277 = vunpack.c.l.s4 1966171168
  %v11278 = vunpack.c.0.s8 %v11277
  %v11279 = vlaneseq
  %v11280 = vshrl.u32 %v11279, 7
  %v11281 = vsub.s32 %v11278, %v11280
  %v11282 = vrot.slane %v11275, %v11281
  %11283 = vrot.lane.b32.xlu0 %v10819, 16
  %v11284 = vpop.permute.xlu0 %11283
  %11285 = vrot.lane.b32.xlu0 %v10834, 16
  %v11286 = vpop.permute.xlu0 %11285
  %11287 = vrot.lane.b32.xlu0 %v10883, 16
  %v11288 = vpop.permute.xlu0 %11287
  %11289 = vrot.lane.b32.xlu0 %v10898, 16
  %v11290 = vpop.permute.xlu0 %11289
  %11291 = vrot.lane.b32.xlu0 %v10947, 16
  %v11292 = vpop.permute.xlu0 %11291
  %11293 = vrot.lane.b32.xlu0 %v10962, 16
  %v11294 = vpop.permute.xlu0 %11293
  %11295 = vrot.lane.b32.xlu0 %v11011, 16
  %v11296 = vpop.permute.xlu0 %11295
  %11297 = vrot.lane.b32.xlu0 %v11026, 16
  %v11298 = vpop.permute.xlu0 %11297
  %11299 = vrot.lane.b32.xlu0 %v11075, 16
  %v11300 = vpop.permute.xlu0 %11299
  %11301 = vrot.lane.b32.xlu0 %v11090, 16
  %v11302 = vpop.permute.xlu0 %11301
  %11303 = vrot.lane.b32.xlu0 %v11139, 16
  %v11304 = vpop.permute.xlu0 %11303
  %11305 = vrot.lane.b32.xlu0 %v11154, 16
  %v11306 = vpop.permute.xlu0 %11305
  %11307 = vrot.lane.b32.xlu0 %v11203, 16
  %v11308 = vpop.permute.xlu0 %11307
  %11309 = vrot.lane.b32.xlu0 %v11218, 16
  %v11310 = vpop.permute.xlu0 %11309
  %11311 = vrot.lane.b32.xlu0 %v11267, 16
  %v11312 = vpop.permute.xlu0 %11311
  %11313 = vrot.lane.b32.xlu0 %v11282, 16
  %v11314 = vpop.permute.xlu0 %11313
  %v11331 = vcombine.low %v10260, %v10267
  %v11332 = vcombine.low %v10274, %v10299
  %v11334 = vunpack.c.l.s4 1966171168
  %v11335 = vunpack.c.0.s8 %v11334
  %v11336 = vlaneseq
  %v11337 = vshrl.u32 %v11336, 7
  %v11338 = vsub.s32 %v11335, %v11337
  %v11339 = vrot.slane %v11331, %v11338
  %v11341 = vunpack.c.l.s4 1966171168
  %v11342 = vunpack.c.0.s8 %v11341
  %v11343 = vlaneseq
  %v11344 = vshrl.u32 %v11343, 7
  %v11345 = vsub.s32 %v11342, %v11344
  %v11346 = vrot.slane %v11332, %v11345
  %v11347 = vcombine.low %v11339, %v11346
  %v11348 = vcombine.low %v9700, %v9702
  %v11350 = vunpack.c.l.s4 1966171168
  %v11351 = vunpack.c.0.s8 %v11350
  %v11352 = vlaneseq
  %v11353 = vshrl.u32 %v11352, 7
  %v11354 = vsub.s32 %v11351, %v11353
  %v11355 = vrot.slane %v11348, %v11354
  %v11357 = vunpack.c.l.s4 1966171168
  %v11358 = vunpack.c.0.s8 %v11357
  %v11359 = vlaneseq
  %v11360 = vshrl.u32 %v11359, 7
  %v11361 = vsub.s32 %v11358, %v11360
  %v11362 = vrot.slane %v11355, %v11361
  %v11363 = vcombine.low %v10324, %v10331
  %v11364 = vcombine.low %v10338, %v10363
  %v11366 = vunpack.c.l.s4 1966171168
  %v11367 = vunpack.c.0.s8 %v11366
  %v11368 = vlaneseq
  %v11369 = vshrl.u32 %v11368, 7
  %v11370 = vsub.s32 %v11367, %v11369
  %v11371 = vrot.slane %v11363, %v11370
  %v11373 = vunpack.c.l.s4 1966171168
  %v11374 = vunpack.c.0.s8 %v11373
  %v11375 = vlaneseq
  %v11376 = vshrl.u32 %v11375, 7
  %v11377 = vsub.s32 %v11374, %v11376
  %v11378 = vrot.slane %v11364, %v11377
  %v11379 = vcombine.low %v11371, %v11378
  %v11380 = vcombine.low %v9752, %v9776
  %v11382 = vunpack.c.l.s4 1966171168
  %v11383 = vunpack.c.0.s8 %v11382
  %v11384 = vlaneseq
  %v11385 = vshrl.u32 %v11384, 7
  %v11386 = vsub.s32 %v11383, %v11385
  %v11387 = vrot.slane %v11380, %v11386
  %v11389 = vunpack.c.l.s4 1966171168
  %v11390 = vunpack.c.0.s8 %v11389
  %v11391 = vlaneseq
  %v11392 = vshrl.u32 %v11391, 7
  %v11393 = vsub.s32 %v11390, %v11392
  %v11394 = vrot.slane %v11387, %v11393
  %v11395 = vcombine.low %v10388, %v10395
  %v11396 = vcombine.low %v10402, %v10427
  %v11398 = vunpack.c.l.s4 1966171168
  %v11399 = vunpack.c.0.s8 %v11398
  %v11400 = vlaneseq
  %v11401 = vshrl.u32 %v11400, 7
  %v11402 = vsub.s32 %v11399, %v11401
  %v11403 = vrot.slane %v11395, %v11402
  %v11405 = vunpack.c.l.s4 1966171168
  %v11406 = vunpack.c.0.s8 %v11405
  %v11407 = vlaneseq
  %v11408 = vshrl.u32 %v11407, 7
  %v11409 = vsub.s32 %v11406, %v11408
  %v11410 = vrot.slane %v11396, %v11409
  %v11411 = vcombine.low %v11403, %v11410
  %v11412 = vcombine.low %v9832, %v9846
  %v11414 = vunpack.c.l.s4 1966171168
  %v11415 = vunpack.c.0.s8 %v11414
  %v11416 = vlaneseq
  %v11417 = vshrl.u32 %v11416, 7
  %v11418 = vsub.s32 %v11415, %v11417
  %v11419 = vrot.slane %v11412, %v11418
  %v11421 = vunpack.c.l.s4 1966171168
  %v11422 = vunpack.c.0.s8 %v11421
  %v11423 = vlaneseq
  %v11424 = vshrl.u32 %v11423, 7
  %v11425 = vsub.s32 %v11422, %v11424
  %v11426 = vrot.slane %v11419, %v11425
  %v11427 = vcombine.low %v10452, %v10459
  %v11428 = vcombine.low %v10466, %v10491
  %v11430 = vunpack.c.l.s4 1966171168
  %v11431 = vunpack.c.0.s8 %v11430
  %v11432 = vlaneseq
  %v11433 = vshrl.u32 %v11432, 7
  %v11434 = vsub.s32 %v11431, %v11433
  %v11435 = vrot.slane %v11427, %v11434
  %v11437 = vunpack.c.l.s4 1966171168
  %v11438 = vunpack.c.0.s8 %v11437
  %v11439 = vlaneseq
  %v11440 = vshrl.u32 %v11439, 7
  %v11441 = vsub.s32 %v11438, %v11440
  %v11442 = vrot.slane %v11428, %v11441
  %v11443 = vcombine.low %v11435, %v11442
  %v11444 = vcombine.low %v9937, %v9945
  %v11446 = vunpack.c.l.s4 1966171168
  %v11447 = vunpack.c.0.s8 %v11446
  %v11448 = vlaneseq
  %v11449 = vshrl.u32 %v11448, 7
  %v11450 = vsub.s32 %v11447, %v11449
  %v11451 = vrot.slane %v11444, %v11450
  %v11453 = vunpack.c.l.s4 1966171168
  %v11454 = vunpack.c.0.s8 %v11453
  %v11455 = vlaneseq
  %v11456 = vshrl.u32 %v11455, 7
  %v11457 = vsub.s32 %v11454, %v11456
  %v11458 = vrot.slane %v11451, %v11457
  %v11459 = vcombine.low %v10516, %v10523
  %v11460 = vcombine.low %v10530, %v10555
  %v11462 = vunpack.c.l.s4 1966171168
  %v11463 = vunpack.c.0.s8 %v11462
  %v11464 = vlaneseq
  %v11465 = vshrl.u32 %v11464, 7
  %v11466 = vsub.s32 %v11463, %v11465
  %v11467 = vrot.slane %v11459, %v11466
  %v11469 = vunpack.c.l.s4 1966171168
  %v11470 = vunpack.c.0.s8 %v11469
  %v11471 = vlaneseq
  %v11472 = vshrl.u32 %v11471, 7
  %v11473 = vsub.s32 %v11470, %v11472
  %v11474 = vrot.slane %v11460, %v11473
  %v11475 = vcombine.low %v11467, %v11474
  %v11476 = vcombine.low %v9995, %v9997
  %v11478 = vunpack.c.l.s4 1966171168
  %v11479 = vunpack.c.0.s8 %v11478
  %v11480 = vlaneseq
  %v11481 = vshrl.u32 %v11480, 7
  %v11482 = vsub.s32 %v11479, %v11481
  %v11483 = vrot.slane %v11476, %v11482
  %v11485 = vunpack.c.l.s4 1966171168
  %v11486 = vunpack.c.0.s8 %v11485
  %v11487 = vlaneseq
  %v11488 = vshrl.u32 %v11487, 7
  %v11489 = vsub.s32 %v11486, %v11488
  %v11490 = vrot.slane %v11483, %v11489
  %v11491 = vcombine.low %v10580, %v10587
  %v11492 = vcombine.low %v10594, %v10619
  %v11494 = vunpack.c.l.s4 1966171168
  %v11495 = vunpack.c.0.s8 %v11494
  %v11496 = vlaneseq
  %v11497 = vshrl.u32 %v11496, 7
  %v11498 = vsub.s32 %v11495, %v11497
  %v11499 = vrot.slane %v11491, %v11498
  %v11501 = vunpack.c.l.s4 1966171168
  %v11502 = vunpack.c.0.s8 %v11501
  %v11503 = vlaneseq
  %v11504 = vshrl.u32 %v11503, 7
  %v11505 = vsub.s32 %v11502, %v11504
  %v11506 = vrot.slane %v11492, %v11505
  %v11507 = vcombine.low %v11499, %v11506
  %v11508 = vcombine.low %v10094, %v10077
  %v11510 = vunpack.c.l.s4 1966171168
  %v11511 = vunpack.c.0.s8 %v11510
  %v11512 = vlaneseq
  %v11513 = vshrl.u32 %v11512, 7
  %v11514 = vsub.s32 %v11511, %v11513
  %v11515 = vrot.slane %v11508, %v11514
  %v11517 = vunpack.c.l.s4 1966171168
  %v11518 = vunpack.c.0.s8 %v11517
  %v11519 = vlaneseq
  %v11520 = vshrl.u32 %v11519, 7
  %v11521 = vsub.s32 %v11518, %v11520
  %v11522 = vrot.slane %v11515, %v11521
  %v11523 = vcombine.low %v10644, %v10651
  %v11524 = vcombine.low %v10658, %v10683
  %v11526 = vunpack.c.l.s4 1966171168
  %v11527 = vunpack.c.0.s8 %v11526
  %v11528 = vlaneseq
  %v11529 = vshrl.u32 %v11528, 7
  %v11530 = vsub.s32 %v11527, %v11529
  %v11531 = vrot.slane %v11523, %v11530
  %v11533 = vunpack.c.l.s4 1966171168
  %v11534 = vunpack.c.0.s8 %v11533
  %v11535 = vlaneseq
  %v11536 = vshrl.u32 %v11535, 7
  %v11537 = vsub.s32 %v11534, %v11536
  %v11538 = vrot.slane %v11524, %v11537
  %v11539 = vcombine.low %v11531, %v11538
  %v11540 = vcombine.low %v10168, %v10182
  %v11542 = vunpack.c.l.s4 1966171168
  %v11543 = vunpack.c.0.s8 %v11542
  %v11544 = vlaneseq
  %v11545 = vshrl.u32 %v11544, 7
  %v11546 = vsub.s32 %v11543, %v11545
  %v11547 = vrot.slane %v11540, %v11546
  %v11549 = vunpack.c.l.s4 1966171168
  %v11550 = vunpack.c.0.s8 %v11549
  %v11551 = vlaneseq
  %v11552 = vshrl.u32 %v11551, 7
  %v11553 = vsub.s32 %v11550, %v11552
  %v11554 = vrot.slane %v11547, %v11553
  %v11555 = vcombine.low %v10708, %v10715
  %v11556 = vcombine.low %v10722, %v10747
  %v11558 = vunpack.c.l.s4 1966171168
  %v11559 = vunpack.c.0.s8 %v11558
  %v11560 = vlaneseq
  %v11561 = vshrl.u32 %v11560, 7
  %v11562 = vsub.s32 %v11559, %v11561
  %v11563 = vrot.slane %v11555, %v11562
  %v11565 = vunpack.c.l.s4 1966171168
  %v11566 = vunpack.c.0.s8 %v11565
  %v11567 = vlaneseq
  %v11568 = vshrl.u32 %v11567, 7
  %v11569 = vsub.s32 %v11566, %v11568
  %v11570 = vrot.slane %v11556, %v11569
  %v11571 = vcombine.low %v11563, %v11570
  %v11572 = vcombine.low %v10238, %v10240
  %v11574 = vunpack.c.l.s4 1966171168
  %v11575 = vunpack.c.0.s8 %v11574
  %v11576 = vlaneseq
  %v11577 = vshrl.u32 %v11576, 7
  %v11578 = vsub.s32 %v11575, %v11577
  %v11579 = vrot.slane %v11572, %v11578
  %v11581 = vunpack.c.l.s4 1966171168
  %v11582 = vunpack.c.0.s8 %v11581
  %v11583 = vlaneseq
  %v11584 = vshrl.u32 %v11583, 7
  %v11585 = vsub.s32 %v11582, %v11584
  %v11586 = vrot.slane %v11579, %v11585
  %11587 = vrot.lane.b32.xlu0 %v11347, 32
  %v11588 = vpop.permute.xlu0 %11587
  %11589 = vrot.lane.b32.xlu0 %v11362, 32
  %v11590 = vpop.permute.xlu0 %11589
  %11591 = vrot.lane.b32.xlu0 %v11379, 32
  %v11592 = vpop.permute.xlu0 %11591
  %11593 = vrot.lane.b32.xlu0 %v11394, 32
  %v11594 = vpop.permute.xlu0 %11593
  %11595 = vrot.lane.b32.xlu0 %v11411, 32
  %v11596 = vpop.permute.xlu0 %11595
  %11597 = vrot.lane.b32.xlu0 %v11426, 32
  %v11598 = vpop.permute.xlu0 %11597
  %11599 = vrot.lane.b32.xlu0 %v11443, 32
  %v11600 = vpop.permute.xlu0 %11599
  %11601 = vrot.lane.b32.xlu0 %v11458, 32
  %v11602 = vpop.permute.xlu0 %11601
  %11603 = vrot.lane.b32.xlu0 %v11475, 32
  %v11604 = vpop.permute.xlu0 %11603
  %11605 = vrot.lane.b32.xlu0 %v11490, 32
  %v11606 = vpop.permute.xlu0 %11605
  %11607 = vrot.lane.b32.xlu0 %v11507, 32
  %v11608 = vpop.permute.xlu0 %11607
  %11609 = vrot.lane.b32.xlu0 %v11522, 32
  %v11610 = vpop.permute.xlu0 %11609
  %11611 = vrot.lane.b32.xlu0 %v11539, 32
  %v11612 = vpop.permute.xlu0 %11611
  %11613 = vrot.lane.b32.xlu0 %v11554, 32
  %v11614 = vpop.permute.xlu0 %11613
  %11615 = vrot.lane.b32.xlu0 %v11571, 32
  %v11616 = vpop.permute.xlu0 %11615
  %11617 = vrot.lane.b32.xlu0 %v11586, 32
  %v11618 = vpop.permute.xlu0 %11617
  %v11635 = vcombine.low %v10788, %v10795
  %v11636 = vcombine.low %v10802, %v10827
  %v11638 = vunpack.c.l.s4 1966171168
  %v11639 = vunpack.c.0.s8 %v11638
  %v11640 = vlaneseq
  %v11641 = vshrl.u32 %v11640, 7
  %v11642 = vsub.s32 %v11639, %v11641
  %v11643 = vrot.slane %v11635, %v11642
  %v11645 = vunpack.c.l.s4 1966171168
  %v11646 = vunpack.c.0.s8 %v11645
  %v11647 = vlaneseq
  %v11648 = vshrl.u32 %v11647, 7
  %v11649 = vsub.s32 %v11646, %v11648
  %v11650 = vrot.slane %v11636, %v11649
  %v11651 = vcombine.low %v11643, %v11650
  %v11652 = vcombine.low %v9702, %v9685
  %v11654 = vunpack.c.l.s4 1966171168
  %v11655 = vunpack.c.0.s8 %v11654
  %v11656 = vlaneseq
  %v11657 = vshrl.u32 %v11656, 7
  %v11658 = vsub.s32 %v11655, %v11657
  %v11659 = vrot.slane %v11652, %v11658
  %v11661 = vunpack.c.l.s4 1966171168
  %v11662 = vunpack.c.0.s8 %v11661
  %v11663 = vlaneseq
  %v11664 = vshrl.u32 %v11663, 7
  %v11665 = vsub.s32 %v11662, %v11664
  %v11666 = vrot.slane %v11659, %v11665
  %v11667 = vcombine.low %v10852, %v10859
  %v11668 = vcombine.low %v10866, %v10891
  %v11670 = vunpack.c.l.s4 1966171168
  %v11671 = vunpack.c.0.s8 %v11670
  %v11672 = vlaneseq
  %v11673 = vshrl.u32 %v11672, 7
  %v11674 = vsub.s32 %v11671, %v11673
  %v11675 = vrot.slane %v11667, %v11674
  %v11677 = vunpack.c.l.s4 1966171168
  %v11678 = vunpack.c.0.s8 %v11677
  %v11679 = vlaneseq
  %v11680 = vshrl.u32 %v11679, 7
  %v11681 = vsub.s32 %v11678, %v11680
  %v11682 = vrot.slane %v11668, %v11681
  %v11683 = vcombine.low %v11675, %v11682
  %v11684 = vcombine.low %v9776, %v9790
  %v11686 = vunpack.c.l.s4 1966171168
  %v11687 = vunpack.c.0.s8 %v11686
  %v11688 = vlaneseq
  %v11689 = vshrl.u32 %v11688, 7
  %v11690 = vsub.s32 %v11687, %v11689
  %v11691 = vrot.slane %v11684, %v11690
  %v11693 = vunpack.c.l.s4 1966171168
  %v11694 = vunpack.c.0.s8 %v11693
  %v11695 = vlaneseq
  %v11696 = vshrl.u32 %v11695, 7
  %v11697 = vsub.s32 %v11694, %v11696
  %v11698 = vrot.slane %v11691, %v11697
  %v11699 = vcombine.low %v10916, %v10923
  %v11700 = vcombine.low %v10930, %v10955
  %v11702 = vunpack.c.l.s4 1966171168
  %v11703 = vunpack.c.0.s8 %v11702
  %v11704 = vlaneseq
  %v11705 = vshrl.u32 %v11704, 7
  %v11706 = vsub.s32 %v11703, %v11705
  %v11707 = vrot.slane %v11699, %v11706
  %v11709 = vunpack.c.l.s4 1966171168
  %v11710 = vunpack.c.0.s8 %v11709
  %v11711 = vlaneseq
  %v11712 = vshrl.u32 %v11711, 7
  %v11713 = vsub.s32 %v11710, %v11712
  %v11714 = vrot.slane %v11700, %v11713
  %v11715 = vcombine.low %v11707, %v11714
  %v11716 = vcombine.low %v9846, %v9848
  %v11718 = vunpack.c.l.s4 1966171168
  %v11719 = vunpack.c.0.s8 %v11718
  %v11720 = vlaneseq
  %v11721 = vshrl.u32 %v11720, 7
  %v11722 = vsub.s32 %v11719, %v11721
  %v11723 = vrot.slane %v11716, %v11722
  %v11725 = vunpack.c.l.s4 1966171168
  %v11726 = vunpack.c.0.s8 %v11725
  %v11727 = vlaneseq
  %v11728 = vshrl.u32 %v11727, 7
  %v11729 = vsub.s32 %v11726, %v11728
  %v11730 = vrot.slane %v11723, %v11729
  %v11731 = vcombine.low %v10980, %v10987
  %v11732 = vcombine.low %v10994, %v11019
  %v11734 = vunpack.c.l.s4 1966171168
  %v11735 = vunpack.c.0.s8 %v11734
  %v11736 = vlaneseq
  %v11737 = vshrl.u32 %v11736, 7
  %v11738 = vsub.s32 %v11735, %v11737
  %v11739 = vrot.slane %v11731, %v11738
  %v11741 = vunpack.c.l.s4 1966171168
  %v11742 = vunpack.c.0.s8 %v11741
  %v11743 = vlaneseq
  %v11744 = vshrl.u32 %v11743, 7
  %v11745 = vsub.s32 %v11742, %v11744
  %v11746 = vrot.slane %v11732, %v11745
  %v11747 = vcombine.low %v11739, %v11746
  %v11748 = vcombine.low %v9945, %v9947
  %v11750 = vunpack.c.l.s4 1966171168
  %v11751 = vunpack.c.0.s8 %v11750
  %v11752 = vlaneseq
  %v11753 = vshrl.u32 %v11752, 7
  %v11754 = vsub.s32 %v11751, %v11753
  %v11755 = vrot.slane %v11748, %v11754
  %v11757 = vunpack.c.l.s4 1966171168
  %v11758 = vunpack.c.0.s8 %v11757
  %v11759 = vlaneseq
  %v11760 = vshrl.u32 %v11759, 7
  %v11761 = vsub.s32 %v11758, %v11760
  %v11762 = vrot.slane %v11755, %v11761
  %v11763 = vcombine.low %v11044, %v11051
  %v11764 = vcombine.low %v11058, %v11083
  %v11766 = vunpack.c.l.s4 1966171168
  %v11767 = vunpack.c.0.s8 %v11766
  %v11768 = vlaneseq
  %v11769 = vshrl.u32 %v11768, 7
  %v11770 = vsub.s32 %v11767, %v11769
  %v11771 = vrot.slane %v11763, %v11770
  %v11773 = vunpack.c.l.s4 1966171168
  %v11774 = vunpack.c.0.s8 %v11773
  %v11775 = vlaneseq
  %v11776 = vshrl.u32 %v11775, 7
  %v11777 = vsub.s32 %v11774, %v11776
  %v11778 = vrot.slane %v11764, %v11777
  %v11779 = vcombine.low %v11771, %v11778
  %v11780 = vcombine.low %v9997, %v10021
  %v11782 = vunpack.c.l.s4 1966171168
  %v11783 = vunpack.c.0.s8 %v11782
  %v11784 = vlaneseq
  %v11785 = vshrl.u32 %v11784, 7
  %v11786 = vsub.s32 %v11783, %v11785
  %v11787 = vrot.slane %v11780, %v11786
  %v11789 = vunpack.c.l.s4 1966171168
  %v11790 = vunpack.c.0.s8 %v11789
  %v11791 = vlaneseq
  %v11792 = vshrl.u32 %v11791, 7
  %v11793 = vsub.s32 %v11790, %v11792
  %v11794 = vrot.slane %v11787, %v11793
  %v11795 = vcombine.low %v11108, %v11115
  %v11796 = vcombine.low %v11122, %v11147
  %v11798 = vunpack.c.l.s4 1966171168
  %v11799 = vunpack.c.0.s8 %v11798
  %v11800 = vlaneseq
  %v11801 = vshrl.u32 %v11800, 7
  %v11802 = vsub.s32 %v11799, %v11801
  %v11803 = vrot.slane %v11795, %v11802
  %v11805 = vunpack.c.l.s4 1966171168
  %v11806 = vunpack.c.0.s8 %v11805
  %v11807 = vlaneseq
  %v11808 = vshrl.u32 %v11807, 7
  %v11809 = vsub.s32 %v11806, %v11808
  %v11810 = vrot.slane %v11796, %v11809
  %v11811 = vcombine.low %v11803, %v11810
  %v11812 = vcombine.low %v10077, %v10091
  %v11814 = vunpack.c.l.s4 1966171168
  %v11815 = vunpack.c.0.s8 %v11814
  %v11816 = vlaneseq
  %v11817 = vshrl.u32 %v11816, 7
  %v11818 = vsub.s32 %v11815, %v11817
  %v11819 = vrot.slane %v11812, %v11818
  %v11821 = vunpack.c.l.s4 1966171168
  %v11822 = vunpack.c.0.s8 %v11821
  %v11823 = vlaneseq
  %v11824 = vshrl.u32 %v11823, 7
  %v11825 = vsub.s32 %v11822, %v11824
  %v11826 = vrot.slane %v11819, %v11825
  %v11827 = vcombine.low %v11172, %v11179
  %v11828 = vcombine.low %v11186, %v11211
  %v11830 = vunpack.c.l.s4 1966171168
  %v11831 = vunpack.c.0.s8 %v11830
  %v11832 = vlaneseq
  %v11833 = vshrl.u32 %v11832, 7
  %v11834 = vsub.s32 %v11831, %v11833
  %v11835 = vrot.slane %v11827, %v11834
  %v11837 = vunpack.c.l.s4 1966171168
  %v11838 = vunpack.c.0.s8 %v11837
  %v11839 = vlaneseq
  %v11840 = vshrl.u32 %v11839, 7
  %v11841 = vsub.s32 %v11838, %v11840
  %v11842 = vrot.slane %v11828, %v11841
  %v11843 = vcombine.low %v11835, %v11842
  %v11844 = vcombine.low %v10182, %v10190
  %v11846 = vunpack.c.l.s4 1966171168
  %v11847 = vunpack.c.0.s8 %v11846
  %v11848 = vlaneseq
  %v11849 = vshrl.u32 %v11848, 7
  %v11850 = vsub.s32 %v11847, %v11849
  %v11851 = vrot.slane %v11844, %v11850
  %v11853 = vunpack.c.l.s4 1966171168
  %v11854 = vunpack.c.0.s8 %v11853
  %v11855 = vlaneseq
  %v11856 = vshrl.u32 %v11855, 7
  %v11857 = vsub.s32 %v11854, %v11856
  %v11858 = vrot.slane %v11851, %v11857
  %v11859 = vcombine.low %v11236, %v11243
  %v11860 = vcombine.low %v11250, %v11275
  %v11862 = vunpack.c.l.s4 1966171168
  %v11863 = vunpack.c.0.s8 %v11862
  %v11864 = vlaneseq
  %v11865 = vshrl.u32 %v11864, 7
  %v11866 = vsub.s32 %v11863, %v11865
  %v11867 = vrot.slane %v11859, %v11866
  %v11869 = vunpack.c.l.s4 1966171168
  %v11870 = vunpack.c.0.s8 %v11869
  %v11871 = vlaneseq
  %v11872 = vshrl.u32 %v11871, 7
  %v11873 = vsub.s32 %v11870, %v11872
  %v11874 = vrot.slane %v11860, %v11873
  %v11875 = vcombine.low %v11867, %v11874
  %v11876 = vcombine.low %v10240, %v10242
  %v11878 = vunpack.c.l.s4 1966171168
  %v11879 = vunpack.c.0.s8 %v11878
  %v11880 = vlaneseq
  %v11881 = vshrl.u32 %v11880, 7
  %v11882 = vsub.s32 %v11879, %v11881
  %v11883 = vrot.slane %v11876, %v11882
  %v11885 = vunpack.c.l.s4 1966171168
  %v11886 = vunpack.c.0.s8 %v11885
  %v11887 = vlaneseq
  %v11888 = vshrl.u32 %v11887, 7
  %v11889 = vsub.s32 %v11886, %v11888
  %v11890 = vrot.slane %v11883, %v11889
  %11891 = vrot.lane.b32.xlu0 %v11651, 48
  %v11892 = vpop.permute.xlu0 %11891
  %11893 = vrot.lane.b32.xlu0 %v11666, 48
  %v11894 = vpop.permute.xlu0 %11893
  %11895 = vrot.lane.b32.xlu0 %v11683, 48
  %v11896 = vpop.permute.xlu0 %11895
  %11897 = vrot.lane.b32.xlu0 %v11698, 48
  %v11898 = vpop.permute.xlu0 %11897
  %11899 = vrot.lane.b32.xlu0 %v11715, 48
  %v11900 = vpop.permute.xlu0 %11899
  %11901 = vrot.lane.b32.xlu0 %v11730, 48
  %v11902 = vpop.permute.xlu0 %11901
  %11903 = vrot.lane.b32.xlu0 %v11747, 48
  %v11904 = vpop.permute.xlu0 %11903
  %11905 = vrot.lane.b32.xlu0 %v11762, 48
  %v11906 = vpop.permute.xlu0 %11905
  %11907 = vrot.lane.b32.xlu0 %v11779, 48
  %v11908 = vpop.permute.xlu0 %11907
  %11909 = vrot.lane.b32.xlu0 %v11794, 48
  %v11910 = vpop.permute.xlu0 %11909
  %11911 = vrot.lane.b32.xlu0 %v11811, 48
  %v11912 = vpop.permute.xlu0 %11911
  %11913 = vrot.lane.b32.xlu0 %v11826, 48
  %v11914 = vpop.permute.xlu0 %11913
  %11915 = vrot.lane.b32.xlu0 %v11843, 48
  %v11916 = vpop.permute.xlu0 %11915
  %11917 = vrot.lane.b32.xlu0 %v11858, 48
  %v11918 = vpop.permute.xlu0 %11917
  %11919 = vrot.lane.b32.xlu0 %v11875, 48
  %v11920 = vpop.permute.xlu0 %11919
  %11921 = vrot.lane.b32.xlu0 %v11890, 48
  %v11922 = vpop.permute.xlu0 %11921
  %v11939 = vsel %vm278, %v10291, %v11284
  %v11940 = vsel %vm278, %v10306, %v11286
  %v11941 = vsel %vm278, %v10355, %v11288
  %v11942 = vsel %vm278, %v10370, %v11290
  %v11943 = vsel %vm278, %v10419, %v11292
  %v11944 = vsel %vm278, %v10434, %v11294
  %v11945 = vsel %vm278, %v10483, %v11296
  %v11946 = vsel %vm278, %v10498, %v11298
  %v11947 = vsel %vm278, %v10547, %v11300
  %v11948 = vsel %vm278, %v10562, %v11302
  %v11949 = vsel %vm278, %v10611, %v11304
  %v11950 = vsel %vm278, %v10626, %v11306
  %v11951 = vsel %vm278, %v10675, %v11308
  %v11952 = vsel %vm278, %v10690, %v11310
  %v11953 = vsel %vm278, %v10739, %v11312
  %v11954 = vsel %vm278, %v10754, %v11314
  %v11955 = vsel %vm59, %v11939, %v11588
  %v11956 = vsel %vm59, %v11940, %v11590
  %v11957 = vsel %vm59, %v11941, %v11592
  %v11958 = vsel %vm59, %v11942, %v11594
  %v11959 = vsel %vm59, %v11943, %v11596
  %v11960 = vsel %vm59, %v11944, %v11598
  %v11961 = vsel %vm59, %v11945, %v11600
  %v11962 = vsel %vm59, %v11946, %v11602
  %v11963 = vsel %vm59, %v11947, %v11604
  %v11964 = vsel %vm59, %v11948, %v11606
  %v11965 = vsel %vm59, %v11949, %v11608
  %v11966 = vsel %vm59, %v11950, %v11610
  %v11967 = vsel %vm59, %v11951, %v11612
  %v11968 = vsel %vm59, %v11952, %v11614
  %v11969 = vsel %vm59, %v11953, %v11616
  %v11970 = vsel %vm59, %v11954, %v11618
  %v11971 = vsel %vm7687, %v11955, %v11892
  %v11972 = vsel %vm7687, %v11956, %v11894
  %v11973 = vsel %vm7687, %v11957, %v11896
  %v11974 = vsel %vm7687, %v11958, %v11898
  %v11975 = vsel %vm7687, %v11959, %v11900
  %v11976 = vsel %vm7687, %v11960, %v11902
  %v11977 = vsel %vm7687, %v11961, %v11904
  %v11978 = vsel %vm7687, %v11962, %v11906
  %v11979 = vsel %vm7687, %v11963, %v11908
  %v11980 = vsel %vm7687, %v11964, %v11910
  %v11981 = vsel %vm7687, %v11965, %v11912
  %v11982 = vsel %vm7687, %v11966, %v11914
  %v11983 = vsel %vm7687, %v11967, %v11916
  %v11984 = vsel %vm7687, %v11968, %v11918
  %v11985 = vsel %vm7687, %v11969, %v11920
  %v11986 = vsel %vm7687, %v11970, %v11922
  %v12003 = vcombine.high %v11971, %v11971
  %v12005 = vunpack.c.l.s4 1983009808
  %v12006 = vunpack.c.0.s8 %v12005
  %v12007 = vlaneseq
  %v12008 = vshrl.u32 %v12007, 7
  %v12009 = vsub.s32 %v12006, %v12008
  %v12010 = vrot.slane %v11971, %v12009
  %v12012 = vunpack.c.l.s4 1983009808
  %v12013 = vunpack.c.0.s8 %v12012
  %v12014 = vlaneseq
  %v12015 = vshrl.u32 %v12014, 7
  %v12016 = vsub.s32 %v12013, %v12015
  %v12017 = vrot.slane %v12003, %v12016
  %v12018 = vcombine.high %v12010, %v12010
  %v12019 = vcombine.high %v12017, %v12017
  %v12021 = vunpack.c.l.s4 1983009808
  %v12022 = vunpack.c.0.s8 %v12021
  %v12023 = vlaneseq
  %v12024 = vshrl.u32 %v12023, 7
  %v12025 = vsub.s32 %v12022, %v12024
  %v12026 = vrot.slane %v11972, %v12025
  %v12027 = vcombine.high %v11973, %v11973
  %v12029 = vunpack.c.l.s4 1983009808
  %v12030 = vunpack.c.0.s8 %v12029
  %v12031 = vlaneseq
  %v12032 = vshrl.u32 %v12031, 7
  %v12033 = vsub.s32 %v12030, %v12032
  %v12034 = vrot.slane %v11973, %v12033
  %v12036 = vunpack.c.l.s4 1983009808
  %v12037 = vunpack.c.0.s8 %v12036
  %v12038 = vlaneseq
  %v12039 = vshrl.u32 %v12038, 7
  %v12040 = vsub.s32 %v12037, %v12039
  %v12041 = vrot.slane %v12027, %v12040
  %v12042 = vcombine.high %v12034, %v12034
  %v12043 = vcombine.high %v12041, %v12041
  %v12045 = vunpack.c.l.s4 1983009808
  %v12046 = vunpack.c.0.s8 %v12045
  %v12047 = vlaneseq
  %v12048 = vshrl.u32 %v12047, 7
  %v12049 = vsub.s32 %v12046, %v12048
  %v12050 = vrot.slane %v11974, %v12049
  %v12051 = vcombine.high %v11975, %v11975
  %v12053 = vunpack.c.l.s4 1983009808
  %v12054 = vunpack.c.0.s8 %v12053
  %v12055 = vlaneseq
  %v12056 = vshrl.u32 %v12055, 7
  %v12057 = vsub.s32 %v12054, %v12056
  %v12058 = vrot.slane %v11975, %v12057
  %v12060 = vunpack.c.l.s4 1983009808
  %v12061 = vunpack.c.0.s8 %v12060
  %v12062 = vlaneseq
  %v12063 = vshrl.u32 %v12062, 7
  %v12064 = vsub.s32 %v12061, %v12063
  %v12065 = vrot.slane %v12051, %v12064
  %v12066 = vcombine.high %v12058, %v12058
  %v12067 = vcombine.high %v12065, %v12065
  %v12069 = vunpack.c.l.s4 1983009808
  %v12070 = vunpack.c.0.s8 %v12069
  %v12071 = vlaneseq
  %v12072 = vshrl.u32 %v12071, 7
  %v12073 = vsub.s32 %v12070, %v12072
  %v12074 = vrot.slane %v11976, %v12073
  %v12075 = vcombine.high %v11977, %v11977
  %v12077 = vunpack.c.l.s4 1983009808
  %v12078 = vunpack.c.0.s8 %v12077
  %v12079 = vlaneseq
  %v12080 = vshrl.u32 %v12079, 7
  %v12081 = vsub.s32 %v12078, %v12080
  %v12082 = vrot.slane %v11977, %v12081
  %v12084 = vunpack.c.l.s4 1983009808
  %v12085 = vunpack.c.0.s8 %v12084
  %v12086 = vlaneseq
  %v12087 = vshrl.u32 %v12086, 7
  %v12088 = vsub.s32 %v12085, %v12087
  %v12089 = vrot.slane %v12075, %v12088
  %v12090 = vcombine.high %v12082, %v12082
  %v12091 = vcombine.high %v12089, %v12089
  %v12093 = vunpack.c.l.s4 1983009808
  %v12094 = vunpack.c.0.s8 %v12093
  %v12095 = vlaneseq
  %v12096 = vshrl.u32 %v12095, 7
  %v12097 = vsub.s32 %v12094, %v12096
  %v12098 = vrot.slane %v11978, %v12097
  %v12099 = vcombine.high %v11979, %v11979
  %v12101 = vunpack.c.l.s4 1983009808
  %v12102 = vunpack.c.0.s8 %v12101
  %v12103 = vlaneseq
  %v12104 = vshrl.u32 %v12103, 7
  %v12105 = vsub.s32 %v12102, %v12104
  %v12106 = vrot.slane %v11979, %v12105
  %v12108 = vunpack.c.l.s4 1983009808
  %v12109 = vunpack.c.0.s8 %v12108
  %v12110 = vlaneseq
  %v12111 = vshrl.u32 %v12110, 7
  %v12112 = vsub.s32 %v12109, %v12111
  %v12113 = vrot.slane %v12099, %v12112
  %v12114 = vcombine.high %v12106, %v12106
  %v12115 = vcombine.high %v12113, %v12113
  %v12117 = vunpack.c.l.s4 1983009808
  %v12118 = vunpack.c.0.s8 %v12117
  %v12119 = vlaneseq
  %v12120 = vshrl.u32 %v12119, 7
  %v12121 = vsub.s32 %v12118, %v12120
  %v12122 = vrot.slane %v11980, %v12121
  %v12123 = vcombine.high %v11981, %v11981
  %v12125 = vunpack.c.l.s4 1983009808
  %v12126 = vunpack.c.0.s8 %v12125
  %v12127 = vlaneseq
  %v12128 = vshrl.u32 %v12127, 7
  %v12129 = vsub.s32 %v12126, %v12128
  %v12130 = vrot.slane %v11981, %v12129
  %v12132 = vunpack.c.l.s4 1983009808
  %v12133 = vunpack.c.0.s8 %v12132
  %v12134 = vlaneseq
  %v12135 = vshrl.u32 %v12134, 7
  %v12136 = vsub.s32 %v12133, %v12135
  %v12137 = vrot.slane %v12123, %v12136
  %v12138 = vcombine.high %v12130, %v12130
  %v12139 = vcombine.high %v12137, %v12137
  %v12141 = vunpack.c.l.s4 1983009808
  %v12142 = vunpack.c.0.s8 %v12141
  %v12143 = vlaneseq
  %v12144 = vshrl.u32 %v12143, 7
  %v12145 = vsub.s32 %v12142, %v12144
  %v12146 = vrot.slane %v11982, %v12145
  %v12147 = vcombine.high %v11983, %v11983
  %v12149 = vunpack.c.l.s4 1983009808
  %v12150 = vunpack.c.0.s8 %v12149
  %v12151 = vlaneseq
  %v12152 = vshrl.u32 %v12151, 7
  %v12153 = vsub.s32 %v12150, %v12152
  %v12154 = vrot.slane %v11983, %v12153
  %v12156 = vunpack.c.l.s4 1983009808
  %v12157 = vunpack.c.0.s8 %v12156
  %v12158 = vlaneseq
  %v12159 = vshrl.u32 %v12158, 7
  %v12160 = vsub.s32 %v12157, %v12159
  %v12161 = vrot.slane %v12147, %v12160
  %v12162 = vcombine.high %v12154, %v12154
  %v12163 = vcombine.high %v12161, %v12161
  %v12165 = vunpack.c.l.s4 1983009808
  %v12166 = vunpack.c.0.s8 %v12165
  %v12167 = vlaneseq
  %v12168 = vshrl.u32 %v12167, 7
  %v12169 = vsub.s32 %v12166, %v12168
  %v12170 = vrot.slane %v11984, %v12169
  %v12171 = vcombine.high %v11985, %v11985
  %v12173 = vunpack.c.l.s4 1983009808
  %v12174 = vunpack.c.0.s8 %v12173
  %v12175 = vlaneseq
  %v12176 = vshrl.u32 %v12175, 7
  %v12177 = vsub.s32 %v12174, %v12176
  %v12178 = vrot.slane %v11985, %v12177
  %v12180 = vunpack.c.l.s4 1983009808
  %v12181 = vunpack.c.0.s8 %v12180
  %v12182 = vlaneseq
  %v12183 = vshrl.u32 %v12182, 7
  %v12184 = vsub.s32 %v12181, %v12183
  %v12185 = vrot.slane %v12171, %v12184
  %v12186 = vcombine.high %v12178, %v12178
  %v12187 = vcombine.high %v12185, %v12185
  %v12189 = vunpack.c.l.s4 1983009808
  %v12190 = vunpack.c.0.s8 %v12189
  %v12191 = vlaneseq
  %v12192 = vshrl.u32 %v12191, 7
  %v12193 = vsub.s32 %v12190, %v12192
  %v12194 = vrot.slane %v11986, %v12193
  %s12195 = scalar_lea.vmem %s3, 240
  %v12196 = vld [vmem:[%s12195] sm:$0xff]
  %v12197 = vld [vmem:[%s12195 + $0x8] sm:$0xff]
  %v12198 = vld [vmem:[%s12195 + $0x10] sm:$0xff]
  %v12199 = vld [vmem:[%s12195 + $0x18] sm:$0xff]
  %v12200 = vld [vmem:[%s12195 + $0x20] sm:$0xff]
  %v12201 = vld [vmem:[%s12195 + $0x28] sm:$0xff]
  %v12202 = vld [vmem:[%s12195 + $0x30] sm:$0xff]
  %v12203 = vld [vmem:[%s12195 + $0x38] sm:$0xff]
  %s12204 = scalar_lea.vmem %s4, 3
  %v12205 = vld [vmem:[%s12204] sm:$0x1]
  %v12207 = vlaneseq
  %v12208 = vshrl.u32 %v12207, 7
  %v12209 = vsub.s32 0, %v12208
  %v12210 = vrot.slane %v12205, %v12209
  %v12212 = vcombine.low %v12010, %v12018
  %v12213 = vcombine.low %v12017, %v12019
  %v12215 = vunpack.c.l.s4 1983009808
  %v12216 = vunpack.c.0.s8 %v12215
  %v12217 = vlaneseq
  %v12218 = vshrl.u32 %v12217, 7
  %v12219 = vsub.s32 %v12216, %v12218
  %v12220 = vrot.slane %v12212, %v12219
  %v12222 = vunpack.c.l.s4 1983009808
  %v12223 = vunpack.c.0.s8 %v12222
  %v12224 = vlaneseq
  %v12225 = vshrl.u32 %v12224, 7
  %v12226 = vsub.s32 %v12223, %v12225
  %v12227 = vrot.slane %v12213, %v12226
  %v12228 = vcombine.low %v12220, %v12227
  %v12229 = vcombine.low %v12026, %v12034
  %v12230 = vcombine.low %v12042, %v12041
  %v12232 = vunpack.c.l.s4 1983009808
  %v12233 = vunpack.c.0.s8 %v12232
  %v12234 = vlaneseq
  %v12235 = vshrl.u32 %v12234, 7
  %v12236 = vsub.s32 %v12233, %v12235
  %v12237 = vrot.slane %v12229, %v12236
  %v12239 = vunpack.c.l.s4 1983009808
  %v12240 = vunpack.c.0.s8 %v12239
  %v12241 = vlaneseq
  %v12242 = vshrl.u32 %v12241, 7
  %v12243 = vsub.s32 %v12240, %v12242
  %v12244 = vrot.slane %v12230, %v12243
  %v12245 = vcombine.low %v12237, %v12244
  %v12246 = vcombine.low %v12043, %v12050
  %v12247 = vcombine.low %v12058, %v12066
  %v12249 = vunpack.c.l.s4 1983009808
  %v12250 = vunpack.c.0.s8 %v12249
  %v12251 = vlaneseq
  %v12252 = vshrl.u32 %v12251, 7
  %v12253 = vsub.s32 %v12250, %v12252
  %v12254 = vrot.slane %v12246, %v12253
  %v12256 = vunpack.c.l.s4 1983009808
  %v12257 = vunpack.c.0.s8 %v12256
  %v12258 = vlaneseq
  %v12259 = vshrl.u32 %v12258, 7
  %v12260 = vsub.s32 %v12257, %v12259
  %v12261 = vrot.slane %v12247, %v12260
  %v12262 = vcombine.low %v12254, %v12261
  %v12263 = vcombine.low %v12065, %v12067
  %v12264 = vcombine.low %v12074, %v12082
  %v12266 = vunpack.c.l.s4 1983009808
  %v12267 = vunpack.c.0.s8 %v12266
  %v12268 = vlaneseq
  %v12269 = vshrl.u32 %v12268, 7
  %v12270 = vsub.s32 %v12267, %v12269
  %v12271 = vrot.slane %v12263, %v12270
  %v12273 = vunpack.c.l.s4 1983009808
  %v12274 = vunpack.c.0.s8 %v12273
  %v12275 = vlaneseq
  %v12276 = vshrl.u32 %v12275, 7
  %v12277 = vsub.s32 %v12274, %v12276
  %v12278 = vrot.slane %v12264, %v12277
  %v12279 = vcombine.low %v12271, %v12278
  %v12280 = vcombine.low %v12090, %v12089
  %v12281 = vcombine.low %v12091, %v12098
  %v12283 = vunpack.c.l.s4 1983009808
  %v12284 = vunpack.c.0.s8 %v12283
  %v12285 = vlaneseq
  %v12286 = vshrl.u32 %v12285, 7
  %v12287 = vsub.s32 %v12284, %v12286
  %v12288 = vrot.slane %v12280, %v12287
  %v12290 = vunpack.c.l.s4 1983009808
  %v12291 = vunpack.c.0.s8 %v12290
  %v12292 = vlaneseq
  %v12293 = vshrl.u32 %v12292, 7
  %v12294 = vsub.s32 %v12291, %v12293
  %v12295 = vrot.slane %v12281, %v12294
  %v12296 = vcombine.low %v12288, %v12295
  %v12297 = vcombine.low %v12106, %v12114
  %v12298 = vcombine.low %v12113, %v12115
  %v12300 = vunpack.c.l.s4 1983009808
  %v12301 = vunpack.c.0.s8 %v12300
  %v12302 = vlaneseq
  %v12303 = vshrl.u32 %v12302, 7
  %v12304 = vsub.s32 %v12301, %v12303
  %v12305 = vrot.slane %v12297, %v12304
  %v12307 = vunpack.c.l.s4 1983009808
  %v12308 = vunpack.c.0.s8 %v12307
  %v12309 = vlaneseq
  %v12310 = vshrl.u32 %v12309, 7
  %v12311 = vsub.s32 %v12308, %v12310
  %v12312 = vrot.slane %v12298, %v12311
  %v12313 = vcombine.low %v12305, %v12312
  %v12314 = vcombine.low %v12122, %v12130
  %v12315 = vcombine.low %v12138, %v12137
  %v12317 = vunpack.c.l.s4 1983009808
  %v12318 = vunpack.c.0.s8 %v12317
  %v12319 = vlaneseq
  %v12320 = vshrl.u32 %v12319, 7
  %v12321 = vsub.s32 %v12318, %v12320
  %v12322 = vrot.slane %v12314, %v12321
  %v12324 = vunpack.c.l.s4 1983009808
  %v12325 = vunpack.c.0.s8 %v12324
  %v12326 = vlaneseq
  %v12327 = vshrl.u32 %v12326, 7
  %v12328 = vsub.s32 %v12325, %v12327
  %v12329 = vrot.slane %v12315, %v12328
  %v12330 = vcombine.low %v12322, %v12329
  %v12331 = vcombine.low %v12139, %v12146
  %v12332 = vcombine.low %v12154, %v12162
  %v12334 = vunpack.c.l.s4 1983009808
  %v12335 = vunpack.c.0.s8 %v12334
  %v12336 = vlaneseq
  %v12337 = vshrl.u32 %v12336, 7
  %v12338 = vsub.s32 %v12335, %v12337
  %v12339 = vrot.slane %v12331, %v12338
  %v12341 = vunpack.c.l.s4 1983009808
  %v12342 = vunpack.c.0.s8 %v12341
  %v12343 = vlaneseq
  %v12344 = vshrl.u32 %v12343, 7
  %v12345 = vsub.s32 %v12342, %v12344
  %v12346 = vrot.slane %v12332, %v12345
  %v12347 = vcombine.low %v12339, %v12346
  %v12348 = vcombine.low %v12161, %v12163
  %v12349 = vcombine.low %v12170, %v12178
  %v12351 = vunpack.c.l.s4 1983009808
  %v12352 = vunpack.c.0.s8 %v12351
  %v12353 = vlaneseq
  %v12354 = vshrl.u32 %v12353, 7
  %v12355 = vsub.s32 %v12352, %v12354
  %v12356 = vrot.slane %v12348, %v12355
  %v12358 = vunpack.c.l.s4 1983009808
  %v12359 = vunpack.c.0.s8 %v12358
  %v12360 = vlaneseq
  %v12361 = vshrl.u32 %v12360, 7
  %v12362 = vsub.s32 %v12359, %v12361
  %v12363 = vrot.slane %v12349, %v12362
  %v12364 = vcombine.low %v12356, %v12363
  %v12365 = vcombine.low %v12186, %v12185
  %v12366 = vcombine.low %v12187, %v12194
  %v12368 = vunpack.c.l.s4 1983009808
  %v12369 = vunpack.c.0.s8 %v12368
  %v12370 = vlaneseq
  %v12371 = vshrl.u32 %v12370, 7
  %v12372 = vsub.s32 %v12369, %v12371
  %v12373 = vrot.slane %v12365, %v12372
  %v12375 = vunpack.c.l.s4 1983009808
  %v12376 = vunpack.c.0.s8 %v12375
  %v12377 = vlaneseq
  %v12378 = vshrl.u32 %v12377, 7
  %v12379 = vsub.s32 %v12376, %v12378
  %v12380 = vrot.slane %v12366, %v12379
  %v12381 = vcombine.low %v12373, %v12380
  %v12382 = vsel %vm2193, %v12228, 0
  %v12384 = vsel %vm2193, %v12245, 0
  %v12386 = vsel %vm2193, %v12262, 0
  %v12388 = vsel %vm2193, %v12279, 0
  %v12390 = vsel %vm2193, %v12296, 0
  %v12392 = vsel %vm2193, %v12313, 0
  %v12394 = vsel %vm2193, %v12330, 0
  %v12396 = vsel %vm2193, %v12347, 0
  %v12398 = vsel %vm2193, %v12364, 0
  %v12400 = vsel %vm2193, %v12381, 0
  %12402 = vmatprep.subr.mxu0 0.0
  %12403 = vmatpush1.msra.mxu0 %v12196
  %12404 = vmatprep.subr.mxu0 0.0
  %12405 = vmatpush1.msra.mxu0 %v12197
  %12406 = vmatprep.subr.mxu0 0.0
  %12407 = vmatpush1.msra.mxu0 %v12198
  %12408 = vmatprep.subr.mxu0 0.0
  %12409 = vmatpush1.msra.mxu0 %v12199
  %12410 = vmatprep.subr.mxu0 0.0
  %12411 = vmatpush1.msra.mxu0 %v12200
  %12412 = vmatprep.subr.mxu0 0.0
  %12413 = vmatpush1.msra.mxu0 %v12201
  %12414 = vmatprep.subr.mxu0 0.0
  %12415 = vmatpush1.msra.mxu0 %v12202
  %12416 = vmatprep.subr.mxu0 0.0
  %12417 = vmatpush1.msra.mxu0 %v12203
  %12418 = vmatprep.subr.mxu0 0.0
  %12419 = vmatpush1.msra.mxu0 0.0
  %12420 = vmatprep.subr.mxu0 0.0
  %12421 = vmatpush1.msra.mxu0 0.0
  %12422 = vmatprep.subr.mxu0 0.0
  %12423 = vmatpush1.msra.mxu0 0.0
  %12424 = vmatprep.subr.mxu0 0.0
  %12425 = vmatpush1.msra.mxu0 0.0
  %12426 = vmatprep.subr.mxu0 0.0
  %12427 = vmatpush1.msra.mxu0 0.0
  %12428 = vmatprep.subr.mxu0 0.0
  %12429 = vmatpush1.msra.mxu0 0.0
  %12430 = vmatprep.subr.mxu0 0.0
  %12431 = vmatpush1.msra.mxu0 0.0
  %12432 = vmatprep.subr.mxu0 0.0
  %12433 = vmatpush1.msra.mxu0 0.0
  %12434 = vmatprep.subr.mxu0 0.0
  %12435 = vmatpush1.msra.mxu0 0.0
  %12436 = vmatprep.subr.mxu0 0.0
  %12437 = vmatpush1.msra.mxu0 0.0
  %12438 = vmatprep.subr.mxu0 0.0
  %12439 = vmatpush1.msra.mxu0 0.0
  %12440 = vmatprep.subr.mxu0 0.0
  %12441 = vmatpush1.msra.mxu0 0.0
  %12442 = vmatprep.subr.mxu0 0.0
  %12443 = vmatpush1.msra.mxu0 0.0
  %12444 = vmatprep.subr.mxu0 0.0
  %12445 = vmatpush1.msra.mxu0 0.0
  %12446 = vmatprep.subr.mxu0 0.0
  %12447 = vmatpush1.msra.mxu0 0.0
  %12448 = vmatprep.subr.mxu0 0.0
  %12449 = vmatpush1.msra.mxu0 0.0
  %12450 = vmatprep.subr.mxu0 0.0
  %12451 = vmatpush1.msra.mxu0 0.0
  %12452 = vmatprep.subr.mxu0 0.0
  %12453 = vmatpush1.msra.mxu0 0.0
  %12454 = vmatprep.subr.mxu0 0.0
  %12455 = vmatpush1.msra.mxu0 0.0
  %12456 = vmatprep.subr.mxu0 0.0
  %12457 = vmatpush1.msra.mxu0 0.0
  %12458 = vmatprep.subr.mxu0 0.0
  %12459 = vmatpush1.msra.mxu0 0.0
  %12460 = vmatprep.subr.mxu0 0.0
  %12461 = vmatpush1.msra.mxu0 0.0
  %12462 = vmatprep.subr.mxu0 0.0
  %12463 = vmatpush1.msra.mxu0 0.0
  %12464 = vmatprep.subr.mxu0 0.0
  %12465 = vmatpush1.msra.mxu0 0.0
  %12466 = vmatprep.mubr.f32.mxu0 0.0
  %12467 = vmatmul.mubr.f32.gmra.mrb[0].mxu0 %v12382
  %v12468 = vpop.f32.mrb[0].mxu0
  %v12469 = vadd.f32 %v12210, %v12468
  %v12470 = vpop.f32.mrb[0].mxu0
  %12471 = vmatprep.mubr.f32.mxu0 0.0
  %12472 = vmatmul.mubr.f32.gmra.mrb[0].mxu0 %v12384
  %v12473 = vpop.f32.mrb[0].mxu0
  %v12474 = vadd.f32 %v12210, %v12473
  %v12475 = vpop.f32.mrb[0].mxu0
  %12476 = vmatprep.mubr.f32.mxu0 0.0
  %12477 = vmatmul.mubr.f32.gmra.mrb[0].mxu0 %v12386
  %v12478 = vpop.f32.mrb[0].mxu0
  %v12479 = vadd.f32 %v12210, %v12478
  %v12480 = vpop.f32.mrb[0].mxu0
  %12481 = vmatprep.mubr.f32.mxu0 0.0
  %12482 = vmatmul.mubr.f32.gmra.mrb[0].mxu0 %v12388
  %v12483 = vpop.f32.mrb[0].mxu0
  %v12484 = vadd.f32 %v12210, %v12483
  %v12485 = vpop.f32.mrb[0].mxu0
  %12486 = vmatprep.mubr.f32.mxu0 0.0
  %12487 = vmatmul.mubr.f32.gmra.mrb[0].mxu0 %v12390
  %v12488 = vpop.f32.mrb[0].mxu0
  %v12489 = vadd.f32 %v12210, %v12488
  %v12490 = vpop.f32.mrb[0].mxu0
  %12491 = vmatprep.mubr.f32.mxu0 0.0
  %12492 = vmatmul.mubr.f32.gmra.mrb[0].mxu0 %v12392
  %v12493 = vpop.f32.mrb[0].mxu0
  %v12494 = vadd.f32 %v12210, %v12493
  %v12495 = vpop.f32.mrb[0].mxu0
  %12496 = vmatprep.mubr.f32.mxu0 0.0
  %12497 = vmatmul.mubr.f32.gmra.mrb[0].mxu0 %v12394
  %v12498 = vpop.f32.mrb[0].mxu0
  %v12499 = vadd.f32 %v12210, %v12498
  %v12500 = vpop.f32.mrb[0].mxu0
  %12501 = vmatprep.mubr.f32.mxu0 0.0
  %12502 = vmatmul.mubr.f32.gmra.mrb[0].mxu0 %v12396
  %v12503 = vpop.f32.mrb[0].mxu0
  %v12504 = vadd.f32 %v12210, %v12503
  %v12505 = vpop.f32.mrb[0].mxu0
  %12506 = vmatprep.mubr.f32.mxu0 0.0
  %12507 = vmatmul.mubr.f32.gmra.mrb[0].mxu0 %v12398
  %v12508 = vpop.f32.mrb[0].mxu0
  %v12509 = vadd.f32 %v12210, %v12508
  %v12510 = vpop.f32.mrb[0].mxu0
  %12511 = vmatprep.mubr.f32.mxu0 0.0
  %12512 = vmatmul.mubr.f32.gmra.mrb[0].mxu0 %v12400
  %v12513 = vpop.f32.mrb[0].mxu0
  %v12514 = vadd.f32 %v12210, %v12513
  %v12515 = vpop.f32.mrb[0].mxu0
  %12516 = vdwg.mxu0
  %v12517 = vmax.f32 %v12469, 0.0
  %v12518 = vmax.f32 %v12474, 0.0
  %v12519 = vmax.f32 %v12479, 0.0
  %v12520 = vmax.f32 %v12484, 0.0
  %v12521 = vmax.f32 %v12489, 0.0
  %v12522 = vmax.f32 %v12494, 0.0
  %v12523 = vmax.f32 %v12499, 0.0
  %v12524 = vmax.f32 %v12504, 0.0
  %v12525 = vmax.f32 %v12509, 0.0
  %v12526 = vmax.f32 %v12514, 0.0
  %v12537 = vcombine.high %v12517, %v12517
  %v12539 = vunpack.c.l.s4 1983009808
  %v12540 = vunpack.c.0.s8 %v12539
  %v12541 = vlaneseq
  %v12542 = vshrl.u32 %v12541, 7
  %v12543 = vsub.s32 %v12540, %v12542
  %v12544 = vrot.slane %v12517, %v12543
  %v12546 = vunpack.c.l.s4 1983009808
  %v12547 = vunpack.c.0.s8 %v12546
  %v12548 = vlaneseq
  %v12549 = vshrl.u32 %v12548, 7
  %v12550 = vsub.s32 %v12547, %v12549
  %v12551 = vrot.slane %v12537, %v12550
  %v12552 = vcombine.high %v12544, %v12544
  %v12553 = vcombine.high %v12551, %v12551
  %v12554 = vcombine.high %v12518, %v12518
  %v12556 = vunpack.c.l.s4 1983009808
  %v12557 = vunpack.c.0.s8 %v12556
  %v12558 = vlaneseq
  %v12559 = vshrl.u32 %v12558, 7
  %v12560 = vsub.s32 %v12557, %v12559
  %v12561 = vrot.slane %v12518, %v12560
  %v12563 = vunpack.c.l.s4 1983009808
  %v12564 = vunpack.c.0.s8 %v12563
  %v12565 = vlaneseq
  %v12566 = vshrl.u32 %v12565, 7
  %v12567 = vsub.s32 %v12564, %v12566
  %v12568 = vrot.slane %v12554, %v12567
  %v12569 = vcombine.high %v12561, %v12561
  %v12570 = vcombine.high %v12568, %v12568
  %v12571 = vcombine.high %v12519, %v12519
  %v12573 = vunpack.c.l.s4 1983009808
  %v12574 = vunpack.c.0.s8 %v12573
  %v12575 = vlaneseq
  %v12576 = vshrl.u32 %v12575, 7
  %v12577 = vsub.s32 %v12574, %v12576
  %v12578 = vrot.slane %v12519, %v12577
  %v12580 = vunpack.c.l.s4 1983009808
  %v12581 = vunpack.c.0.s8 %v12580
  %v12582 = vlaneseq
  %v12583 = vshrl.u32 %v12582, 7
  %v12584 = vsub.s32 %v12581, %v12583
  %v12585 = vrot.slane %v12571, %v12584
  %v12586 = vcombine.high %v12578, %v12578
  %v12587 = vcombine.high %v12585, %v12585
  %v12588 = vcombine.high %v12520, %v12520
  %v12590 = vunpack.c.l.s4 1983009808
  %v12591 = vunpack.c.0.s8 %v12590
  %v12592 = vlaneseq
  %v12593 = vshrl.u32 %v12592, 7
  %v12594 = vsub.s32 %v12591, %v12593
  %v12595 = vrot.slane %v12520, %v12594
  %v12597 = vunpack.c.l.s4 1983009808
  %v12598 = vunpack.c.0.s8 %v12597
  %v12599 = vlaneseq
  %v12600 = vshrl.u32 %v12599, 7
  %v12601 = vsub.s32 %v12598, %v12600
  %v12602 = vrot.slane %v12588, %v12601
  %v12603 = vcombine.high %v12595, %v12595
  %v12604 = vcombine.high %v12602, %v12602
  %v12605 = vcombine.high %v12521, %v12521
  %v12607 = vunpack.c.l.s4 1983009808
  %v12608 = vunpack.c.0.s8 %v12607
  %v12609 = vlaneseq
  %v12610 = vshrl.u32 %v12609, 7
  %v12611 = vsub.s32 %v12608, %v12610
  %v12612 = vrot.slane %v12521, %v12611
  %v12614 = vunpack.c.l.s4 1983009808
  %v12615 = vunpack.c.0.s8 %v12614
  %v12616 = vlaneseq
  %v12617 = vshrl.u32 %v12616, 7
  %v12618 = vsub.s32 %v12615, %v12617
  %v12619 = vrot.slane %v12605, %v12618
  %v12620 = vcombine.high %v12612, %v12612
  %v12621 = vcombine.high %v12619, %v12619
  %v12622 = vcombine.high %v12522, %v12522
  %v12624 = vunpack.c.l.s4 1983009808
  %v12625 = vunpack.c.0.s8 %v12624
  %v12626 = vlaneseq
  %v12627 = vshrl.u32 %v12626, 7
  %v12628 = vsub.s32 %v12625, %v12627
  %v12629 = vrot.slane %v12522, %v12628
  %v12631 = vunpack.c.l.s4 1983009808
  %v12632 = vunpack.c.0.s8 %v12631
  %v12633 = vlaneseq
  %v12634 = vshrl.u32 %v12633, 7
  %v12635 = vsub.s32 %v12632, %v12634
  %v12636 = vrot.slane %v12622, %v12635
  %v12637 = vcombine.high %v12629, %v12629
  %v12638 = vcombine.high %v12636, %v12636
  %v12639 = vcombine.high %v12523, %v12523
  %v12641 = vunpack.c.l.s4 1983009808
  %v12642 = vunpack.c.0.s8 %v12641
  %v12643 = vlaneseq
  %v12644 = vshrl.u32 %v12643, 7
  %v12645 = vsub.s32 %v12642, %v12644
  %v12646 = vrot.slane %v12523, %v12645
  %v12648 = vunpack.c.l.s4 1983009808
  %v12649 = vunpack.c.0.s8 %v12648
  %v12650 = vlaneseq
  %v12651 = vshrl.u32 %v12650, 7
  %v12652 = vsub.s32 %v12649, %v12651
  %v12653 = vrot.slane %v12639, %v12652
  %v12654 = vcombine.high %v12646, %v12646
  %v12655 = vcombine.high %v12653, %v12653
  %v12656 = vcombine.high %v12524, %v12524
  %v12658 = vunpack.c.l.s4 1983009808
  %v12659 = vunpack.c.0.s8 %v12658
  %v12660 = vlaneseq
  %v12661 = vshrl.u32 %v12660, 7
  %v12662 = vsub.s32 %v12659, %v12661
  %v12663 = vrot.slane %v12524, %v12662
  %v12665 = vunpack.c.l.s4 1983009808
  %v12666 = vunpack.c.0.s8 %v12665
  %v12667 = vlaneseq
  %v12668 = vshrl.u32 %v12667, 7
  %v12669 = vsub.s32 %v12666, %v12668
  %v12670 = vrot.slane %v12656, %v12669
  %v12671 = vcombine.high %v12663, %v12663
  %v12672 = vcombine.high %v12670, %v12670
  %v12673 = vcombine.high %v12525, %v12525
  %v12675 = vunpack.c.l.s4 1983009808
  %v12676 = vunpack.c.0.s8 %v12675
  %v12677 = vlaneseq
  %v12678 = vshrl.u32 %v12677, 7
  %v12679 = vsub.s32 %v12676, %v12678
  %v12680 = vrot.slane %v12525, %v12679
  %v12682 = vunpack.c.l.s4 1983009808
  %v12683 = vunpack.c.0.s8 %v12682
  %v12684 = vlaneseq
  %v12685 = vshrl.u32 %v12684, 7
  %v12686 = vsub.s32 %v12683, %v12685
  %v12687 = vrot.slane %v12673, %v12686
  %v12688 = vcombine.high %v12680, %v12680
  %v12689 = vcombine.high %v12687, %v12687
  %v12690 = vcombine.high %v12526, %v12526
  %v12692 = vunpack.c.l.s4 1983009808
  %v12693 = vunpack.c.0.s8 %v12692
  %v12694 = vlaneseq
  %v12695 = vshrl.u32 %v12694, 7
  %v12696 = vsub.s32 %v12693, %v12695
  %v12697 = vrot.slane %v12526, %v12696
  %v12699 = vunpack.c.l.s4 1983009808
  %v12700 = vunpack.c.0.s8 %v12699
  %v12701 = vlaneseq
  %v12702 = vshrl.u32 %v12701, 7
  %v12703 = vsub.s32 %v12700, %v12702
  %v12704 = vrot.slane %v12690, %v12703
  %v12705 = vcombine.high %v12697, %v12697
  %v12706 = vcombine.high %v12704, %v12704
  %v12707 = vcombine.low %v12544, %v12552
  %v12708 = vcombine.low %v12551, %v12553
  %v12710 = vunpack.c.l.s4 1983009808
  %v12711 = vunpack.c.0.s8 %v12710
  %v12712 = vlaneseq
  %v12713 = vshrl.u32 %v12712, 7
  %v12714 = vsub.s32 %v12711, %v12713
  %v12715 = vrot.slane %v12707, %v12714
  %v12717 = vunpack.c.l.s4 1983009808
  %v12718 = vunpack.c.0.s8 %v12717
  %v12719 = vlaneseq
  %v12720 = vshrl.u32 %v12719, 7
  %v12721 = vsub.s32 %v12718, %v12720
  %v12722 = vrot.slane %v12708, %v12721
  %v12723 = vcombine.low %v12715, %v12722
  %v12725 = vunpack.c.l.s4 1983009808
  %v12726 = vunpack.c.0.s8 %v12725
  %v12727 = vlaneseq
  %v12728 = vshrl.u32 %v12727, 7
  %v12729 = vsub.s32 %v12726, %v12728
  %v12730 = vrot.slane %v12561, %v12729
  %v12731 = vcombine.low %v12569, %v12568
  %v12732 = vcombine.low %v12570, %v12578
  %v12734 = vunpack.c.l.s4 1983009808
  %v12735 = vunpack.c.0.s8 %v12734
  %v12736 = vlaneseq
  %v12737 = vshrl.u32 %v12736, 7
  %v12738 = vsub.s32 %v12735, %v12737
  %v12739 = vrot.slane %v12731, %v12738
  %v12741 = vunpack.c.l.s4 1983009808
  %v12742 = vunpack.c.0.s8 %v12741
  %v12743 = vlaneseq
  %v12744 = vshrl.u32 %v12743, 7
  %v12745 = vsub.s32 %v12742, %v12744
  %v12746 = vrot.slane %v12732, %v12745
  %v12747 = vcombine.low %v12739, %v12746
  %v12749 = vunpack.c.l.s4 1983009808
  %v12750 = vunpack.c.0.s8 %v12749
  %v12751 = vlaneseq
  %v12752 = vshrl.u32 %v12751, 7
  %v12753 = vsub.s32 %v12750, %v12752
  %v12754 = vrot.slane %v12586, %v12753
  %v12755 = vcombine.low %v12585, %v12587
  %v12756 = vcombine.low %v12595, %v12603
  %v12758 = vunpack.c.l.s4 1983009808
  %v12759 = vunpack.c.0.s8 %v12758
  %v12760 = vlaneseq
  %v12761 = vshrl.u32 %v12760, 7
  %v12762 = vsub.s32 %v12759, %v12761
  %v12763 = vrot.slane %v12755, %v12762
  %v12765 = vunpack.c.l.s4 1983009808
  %v12766 = vunpack.c.0.s8 %v12765
  %v12767 = vlaneseq
  %v12768 = vshrl.u32 %v12767, 7
  %v12769 = vsub.s32 %v12766, %v12768
  %v12770 = vrot.slane %v12756, %v12769
  %v12771 = vcombine.low %v12763, %v12770
  %v12773 = vunpack.c.l.s4 1983009808
  %v12774 = vunpack.c.0.s8 %v12773
  %v12775 = vlaneseq
  %v12776 = vshrl.u32 %v12775, 7
  %v12777 = vsub.s32 %v12774, %v12776
  %v12778 = vrot.slane %v12602, %v12777
  %v12779 = vcombine.low %v12604, %v12612
  %v12780 = vcombine.low %v12620, %v12619
  %v12782 = vunpack.c.l.s4 1983009808
  %v12783 = vunpack.c.0.s8 %v12782
  %v12784 = vlaneseq
  %v12785 = vshrl.u32 %v12784, 7
  %v12786 = vsub.s32 %v12783, %v12785
  %v12787 = vrot.slane %v12779, %v12786
  %v12789 = vunpack.c.l.s4 1983009808
  %v12790 = vunpack.c.0.s8 %v12789
  %v12791 = vlaneseq
  %v12792 = vshrl.u32 %v12791, 7
  %v12793 = vsub.s32 %v12790, %v12792
  %v12794 = vrot.slane %v12780, %v12793
  %v12795 = vcombine.low %v12787, %v12794
  %v12797 = vunpack.c.l.s4 1983009808
  %v12798 = vunpack.c.0.s8 %v12797
  %v12799 = vlaneseq
  %v12800 = vshrl.u32 %v12799, 7
  %v12801 = vsub.s32 %v12798, %v12800
  %v12802 = vrot.slane %v12621, %v12801
  %v12803 = vcombine.low %v12629, %v12637
  %v12804 = vcombine.low %v12636, %v12638
  %v12806 = vunpack.c.l.s4 1983009808
  %v12807 = vunpack.c.0.s8 %v12806
  %v12808 = vlaneseq
  %v12809 = vshrl.u32 %v12808, 7
  %v12810 = vsub.s32 %v12807, %v12809
  %v12811 = vrot.slane %v12803, %v12810
  %v12813 = vunpack.c.l.s4 1983009808
  %v12814 = vunpack.c.0.s8 %v12813
  %v12815 = vlaneseq
  %v12816 = vshrl.u32 %v12815, 7
  %v12817 = vsub.s32 %v12814, %v12816
  %v12818 = vrot.slane %v12804, %v12817
  %v12819 = vcombine.low %v12811, %v12818
  %v12821 = vunpack.c.l.s4 1983009808
  %v12822 = vunpack.c.0.s8 %v12821
  %v12823 = vlaneseq
  %v12824 = vshrl.u32 %v12823, 7
  %v12825 = vsub.s32 %v12822, %v12824
  %v12826 = vrot.slane %v12646, %v12825
  %v12827 = vcombine.low %v12654, %v12653
  %v12828 = vcombine.low %v12655, %v12663
  %v12830 = vunpack.c.l.s4 1983009808
  %v12831 = vunpack.c.0.s8 %v12830
  %v12832 = vlaneseq
  %v12833 = vshrl.u32 %v12832, 7
  %v12834 = vsub.s32 %v12831, %v12833
  %v12835 = vrot.slane %v12827, %v12834
  %v12837 = vunpack.c.l.s4 1983009808
  %v12838 = vunpack.c.0.s8 %v12837
  %v12839 = vlaneseq
  %v12840 = vshrl.u32 %v12839, 7
  %v12841 = vsub.s32 %v12838, %v12840
  %v12842 = vrot.slane %v12828, %v12841
  %v12843 = vcombine.low %v12835, %v12842
  %v12845 = vunpack.c.l.s4 1983009808
  %v12846 = vunpack.c.0.s8 %v12845
  %v12847 = vlaneseq
  %v12848 = vshrl.u32 %v12847, 7
  %v12849 = vsub.s32 %v12846, %v12848
  %v12850 = vrot.slane %v12671, %v12849
  %v12851 = vcombine.low %v12670, %v12672
  %v12852 = vcombine.low %v12680, %v12688
  %v12854 = vunpack.c.l.s4 1983009808
  %v12855 = vunpack.c.0.s8 %v12854
  %v12856 = vlaneseq
  %v12857 = vshrl.u32 %v12856, 7
  %v12858 = vsub.s32 %v12855, %v12857
  %v12859 = vrot.slane %v12851, %v12858
  %v12861 = vunpack.c.l.s4 1983009808
  %v12862 = vunpack.c.0.s8 %v12861
  %v12863 = vlaneseq
  %v12864 = vshrl.u32 %v12863, 7
  %v12865 = vsub.s32 %v12862, %v12864
  %v12866 = vrot.slane %v12852, %v12865
  %v12867 = vcombine.low %v12859, %v12866
  %v12869 = vunpack.c.l.s4 1983009808
  %v12870 = vunpack.c.0.s8 %v12869
  %v12871 = vlaneseq
  %v12872 = vshrl.u32 %v12871, 7
  %v12873 = vsub.s32 %v12870, %v12872
  %v12874 = vrot.slane %v12687, %v12873
  %v12875 = vcombine.low %v12689, %v12697
  %v12876 = vcombine.low %v12705, %v12704
  %v12878 = vunpack.c.l.s4 1983009808
  %v12879 = vunpack.c.0.s8 %v12878
  %v12880 = vlaneseq
  %v12881 = vshrl.u32 %v12880, 7
  %v12882 = vsub.s32 %v12879, %v12881
  %v12883 = vrot.slane %v12875, %v12882
  %v12885 = vunpack.c.l.s4 1983009808
  %v12886 = vunpack.c.0.s8 %v12885
  %v12887 = vlaneseq
  %v12888 = vshrl.u32 %v12887, 7
  %v12889 = vsub.s32 %v12886, %v12888
  %v12890 = vrot.slane %v12876, %v12889
  %v12891 = vcombine.low %v12883, %v12890
  %v12893 = vunpack.c.l.s4 1983009808
  %v12894 = vunpack.c.0.s8 %v12893
  %v12895 = vlaneseq
  %v12896 = vshrl.u32 %v12895, 7
  %v12897 = vsub.s32 %v12894, %v12896
  %v12898 = vrot.slane %v12706, %v12897
  %v12915 = vsel %vm278, %v12723, -inf
  %vm12916 = vcmask 123904
  %v12917 = vsel %vm12916, %v12730, -inf
  %v12918 = vmax.f32 %v12915, %v12917
  %v12919 = vrot.slane %v12918, 4
  %v12920 = vmax.f32 %v12918, %v12919
  %v12921 = vrot.slane %v12920, 2
  %v12922 = vmax.f32 %v12920, %v12921
  %v12923 = vrot.slane %v12922, 1
  %v12924 = vmax.f32 %v12922, %v12923
  %v12925 = vsel %vm278, %v12747, -inf
  %v12926 = vsel %vm12916, %v12754, -inf
  %v12927 = vmax.f32 %v12925, %v12926
  %v12928 = vrot.slane %v12927, 4
  %v12929 = vmax.f32 %v12927, %v12928
  %v12930 = vrot.slane %v12929, 2
  %v12931 = vmax.f32 %v12929, %v12930
  %v12932 = vrot.slane %v12931, 1
  %v12933 = vmax.f32 %v12931, %v12932
  %v12934 = vsel %vm278, %v12771, -inf
  %v12935 = vsel %vm12916, %v12778, -inf
  %v12936 = vmax.f32 %v12934, %v12935
  %v12937 = vrot.slane %v12936, 4
  %v12938 = vmax.f32 %v12936, %v12937
  %v12939 = vrot.slane %v12938, 2
  %v12940 = vmax.f32 %v12938, %v12939
  %v12941 = vrot.slane %v12940, 1
  %v12942 = vmax.f32 %v12940, %v12941
  %v12943 = vsel %vm278, %v12795, -inf
  %v12944 = vsel %vm12916, %v12802, -inf
  %v12945 = vmax.f32 %v12943, %v12944
  %v12946 = vrot.slane %v12945, 4
  %v12947 = vmax.f32 %v12945, %v12946
  %v12948 = vrot.slane %v12947, 2
  %v12949 = vmax.f32 %v12947, %v12948
  %v12950 = vrot.slane %v12949, 1
  %v12951 = vmax.f32 %v12949, %v12950
  %v12952 = vsel %vm278, %v12819, -inf
  %v12953 = vsel %vm12916, %v12826, -inf
  %v12954 = vmax.f32 %v12952, %v12953
  %v12955 = vrot.slane %v12954, 4
  %v12956 = vmax.f32 %v12954, %v12955
  %v12957 = vrot.slane %v12956, 2
  %v12958 = vmax.f32 %v12956, %v12957
  %v12959 = vrot.slane %v12958, 1
  %v12960 = vmax.f32 %v12958, %v12959
  %v12961 = vsel %vm278, %v12843, -inf
  %v12962 = vsel %vm12916, %v12850, -inf
  %v12963 = vmax.f32 %v12961, %v12962
  %v12964 = vrot.slane %v12963, 4
  %v12965 = vmax.f32 %v12963, %v12964
  %v12966 = vrot.slane %v12965, 2
  %v12967 = vmax.f32 %v12965, %v12966
  %v12968 = vrot.slane %v12967, 1
  %v12969 = vmax.f32 %v12967, %v12968
  %v12970 = vsel %vm278, %v12867, -inf
  %v12971 = vsel %vm12916, %v12874, -inf
  %v12972 = vmax.f32 %v12970, %v12971
  %v12973 = vrot.slane %v12972, 4
  %v12974 = vmax.f32 %v12972, %v12973
  %v12975 = vrot.slane %v12974, 2
  %v12976 = vmax.f32 %v12974, %v12975
  %v12977 = vrot.slane %v12976, 1
  %v12978 = vmax.f32 %v12976, %v12977
  %v12979 = vsel %vm278, %v12891, -inf
  %v12980 = vsel %vm12916, %v12898, -inf
  %v12981 = vmax.f32 %v12979, %v12980
  %v12982 = vrot.slane %v12981, 4
  %v12983 = vmax.f32 %v12981, %v12982
  %v12984 = vrot.slane %v12983, 2
  %v12985 = vmax.f32 %v12983, %v12984
  %v12986 = vrot.slane %v12985, 1
  %v12987 = vmax.f32 %v12985, %v12986
  %vm12988 = vcmask 1043456
  %v12989 = vrot.slane %v32, 4
  %v12990 = vrot.slane %v33, 4
  %v12991 = vsel %vm12988, %v12989, %v12990
  %v12992 = vrot.slane %v34, 4
  %v12993 = vrot.slane %v35, 4
  %v12994 = vsel %vm12988, %v12992, %v12993
  %v12995 = vrot.slane %v36, 4
  %v12996 = vrot.slane %v37, 4
  %v12997 = vsel %vm12988, %v12995, %v12996
  %v12998 = vrot.slane %v38, 4
  %v12999 = vrot.slane %v39, 4
  %v13000 = vsel %vm12988, %v12998, %v12999
  %v13001 = vrot.slane %v40, 4
  %v13002 = vrot.slane %v41, 4
  %v13003 = vsel %vm12988, %v13001, %v13002
  %v13004 = vrot.slane %v42, 4
  %v13005 = vrot.slane %v43, 4
  %v13006 = vsel %vm12988, %v13004, %v13005
  %v13007 = vrot.slane %v44, 4
  %v13008 = vrot.slane %v45, 4
  %v13009 = vsel %vm12988, %v13007, %v13008
  %v13010 = vrot.slane %v46, 4
  %v13011 = vrot.slane %v47, 4
  %v13012 = vsel %vm12988, %v13010, %v13011
  %v13013 = vcombine.low %v8039, %v12991
  %v13014 = vcombine.high %v8039, %v12991
  %v13015 = vcombine.low %v8040, %v12990
  %v13016 = vcombine.low %v8041, %v12994
  %v13017 = vcombine.high %v8041, %v12994
  %v13018 = vcombine.low %v8042, %v12993
  %v13019 = vcombine.low %v8043, %v12997
  %v13020 = vcombine.high %v8043, %v12997
  %v13021 = vcombine.low %v8044, %v12996
  %v13022 = vcombine.low %v8045, %v13000
  %v13023 = vcombine.high %v8045, %v13000
  %v13024 = vcombine.low %v8046, %v12999
  %v13025 = vcombine.low %v8047, %v13003
  %v13026 = vcombine.high %v8047, %v13003
  %v13027 = vcombine.low %v8048, %v13002
  %v13028 = vcombine.low %v8049, %v13006
  %v13029 = vcombine.high %v8049, %v13006
  %v13030 = vcombine.low %v8050, %v13005
  %v13031 = vcombine.low %v8051, %v13009
  %v13032 = vcombine.high %v8051, %v13009
  %v13033 = vcombine.low %v8052, %v13008
  %v13034 = vcombine.low %v8053, %v13012
  %v13035 = vcombine.high %v8053, %v13012
  %v13036 = vcombine.low %v8054, %v13011
  %s13037 = scalar_lea.vmem %s1, 640
  %v13038 = vld [vmem:[%s13037] sm:$0xff]
  %v13039 = vld [vmem:[%s13037 + $0x8] sm:$0xff]
  %v13040 = vld [vmem:[%s13037 + $0x10] sm:$0xff]
  %v13041 = vld [vmem:[%s13037 + $0x18] sm:$0xff]
  %v13042 = vld [vmem:[%s13037 + $0x20] sm:$0xff]
  %v13043 = vld [vmem:[%s13037 + $0x28] sm:$0xff]
  %v13044 = vld [vmem:[%s13037 + $0x30] sm:$0xff]
  %v13045 = vld [vmem:[%s13037 + $0x38] sm:$0xff]
  %v13046 = vld [vmem:[%s13037 + $0x40] sm:$0xff]
  %v13047 = vld [vmem:[%s13037 + $0x48] sm:$0xff]
  %v13048 = vld [vmem:[%s13037 + $0x50] sm:$0xff]
  %v13049 = vld [vmem:[%s13037 + $0x58] sm:$0xff]
  %v13050 = vld [vmem:[%s13037 + $0x60] sm:$0xff]
  %v13051 = vld [vmem:[%s13037 + $0x68] sm:$0xff]
  %v13052 = vld [vmem:[%s13037 + $0x70] sm:$0xff]
  %v13053 = vld [vmem:[%s13037 + $0x78] sm:$0xff]
  %v13054 = vld [vmem:[%s13037 + $0x80] sm:$0xff]
  %v13055 = vld [vmem:[%s13037 + $0x88] sm:$0xff]
  %v13056 = vld [vmem:[%s13037 + $0x90] sm:$0xff]
  %v13057 = vld [vmem:[%s13037 + $0x98] sm:$0xff]
  %s13058 = scalar_lea.vmem %s2, 4
  %v13059 = vld [vmem:[%s13058] sm:$0x1]
  %v13061 = vlaneseq
  %v13062 = vshrl.u32 %v13061, 7
  %v13063 = vsub.s32 0, %v13062
  %v13064 = vrot.slane %v13059, %v13063
  %v13066 = vcombine.low %v13013, %v13014
  %v13067 = vcombine.high %v13013, %v13014
  %v13068 = vcombine.low %v13015, %v13016
  %v13069 = vcombine.high %v13015, %v13016
  %v13070 = vcombine.low %v13017, %v13018
  %v13071 = vcombine.high %v13017, %v13018
  %v13072 = vcombine.low %v13019, %v13020
  %v13073 = vcombine.high %v13019, %v13020
  %v13074 = vcombine.low %v13021, %v13022
  %v13075 = vcombine.high %v13021, %v13022
  %v13076 = vcombine.low %v13023, %v13024
  %v13077 = vcombine.high %v13023, %v13024
  %v13078 = vcombine.low %v13025, %v13026
  %v13079 = vcombine.high %v13025, %v13026
  %v13080 = vcombine.low %v13027, %v13028
  %v13081 = vcombine.high %v13027, %v13028
  %v13082 = vcombine.low %v13029, %v13030
  %v13083 = vcombine.high %v13029, %v13030
  %v13084 = vcombine.low %v13031, %v13032
  %v13085 = vcombine.high %v13031, %v13032
  %v13086 = vcombine.low %v13033, %v13034
  %v13087 = vcombine.high %v13033, %v13034
  %v13088 = vcombine.low %v13035, %v13036
  %v13089 = vcombine.high %v13035, %v13036
  %v13102 = vsel %vm59, %v13067, 0
  %v13104 = vsel %vm59, %v13069, 0
  %v13106 = vsel %vm59, %v13071, 0
  %v13108 = vsel %vm59, %v13073, 0
  %v13110 = vsel %vm59, %v13075, 0
  %v13112 = vsel %vm59, %v13077, 0
  %v13114 = vsel %vm59, %v13079, 0
  %v13116 = vsel %vm59, %v13081, 0
  %v13118 = vsel %vm59, %v13083, 0
  %v13120 = vsel %vm59, %v13085, 0
  %v13122 = vsel %vm59, %v13087, 0
  %v13124 = vsel %vm59, %v13089, 0
  %13126 = vmatprep.subr.mxu0 0.0
  %13127 = vmatpush1.msra.mxu0 %v13038
  %13128 = vmatprep.subr.mxu0 0.0
  %13129 = vmatpush1.msra.mxu0 %v13039
  %13130 = vmatprep.subr.mxu0 0.0
  %13131 = vmatpush1.msra.mxu0 %v13040
  %13132 = vmatprep.subr.mxu0 0.0
  %13133 = vmatpush1.msra.mxu0 %v13041
  %13134 = vmatprep.subr.mxu0 0.0
  %13135 = vmatpush1.msra.mxu0 %v13042
  %13136 = vmatprep.subr.mxu0 0.0
  %13137 = vmatpush1.msra.mxu0 %v13043
  %13138 = vmatprep.subr.mxu0 0.0
  %13139 = vmatpush1.msra.mxu0 %v13044
  %13140 = vmatprep.subr.mxu0 0.0
  %13141 = vmatpush1.msra.mxu0 %v13045
  %13142 = vmatprep.subr.mxu0 0.0
  %13143 = vmatpush1.msra.mxu0 %v13046
  %13144 = vmatprep.subr.mxu0 0.0
  %13145 = vmatpush1.msra.mxu0 %v13047
  %13146 = vmatprep.subr.mxu0 0.0
  %13147 = vmatpush1.msra.mxu0 %v13048
  %13148 = vmatprep.subr.mxu0 0.0
  %13149 = vmatpush1.msra.mxu0 %v13049
  %13150 = vmatprep.subr.mxu0 0.0
  %13151 = vmatpush1.msra.mxu0 %v13050
  %13152 = vmatprep.subr.mxu0 0.0
  %13153 = vmatpush1.msra.mxu0 %v13051
  %13154 = vmatprep.subr.mxu0 0.0
  %13155 = vmatpush1.msra.mxu0 %v13052
  %13156 = vmatprep.subr.mxu0 0.0
  %13157 = vmatpush1.msra.mxu0 %v13053
  %13158 = vmatprep.subr.mxu0 0.0
  %13159 = vmatpush1.msra.mxu0 %v13054
  %13160 = vmatprep.subr.mxu0 0.0
  %13161 = vmatpush1.msra.mxu0 %v13055
  %13162 = vmatprep.subr.mxu0 0.0
  %13163 = vmatpush1.msra.mxu0 %v13056
  %13164 = vmatprep.subr.mxu0 0.0
  %13165 = vmatpush1.msra.mxu0 %v13057
  %13166 = vmatprep.subr.mxu0 0.0
  %13167 = vmatpush1.msra.mxu0 0.0
  %13168 = vmatprep.subr.mxu0 0.0
  %13169 = vmatpush1.msra.mxu0 0.0
  %13170 = vmatprep.subr.mxu0 0.0
  %13171 = vmatpush1.msra.mxu0 0.0
  %13172 = vmatprep.subr.mxu0 0.0
  %13173 = vmatpush1.msra.mxu0 0.0
  %13174 = vmatprep.subr.mxu0 0.0
  %13175 = vmatpush1.msra.mxu0 0.0
  %13176 = vmatprep.subr.mxu0 0.0
  %13177 = vmatpush1.msra.mxu0 0.0
  %13178 = vmatprep.subr.mxu0 0.0
  %13179 = vmatpush1.msra.mxu0 0.0
  %13180 = vmatprep.subr.mxu0 0.0
  %13181 = vmatpush1.msra.mxu0 0.0
  %13182 = vmatprep.subr.mxu0 0.0
  %13183 = vmatpush1.msra.mxu0 0.0
  %13184 = vmatprep.subr.mxu0 0.0
  %13185 = vmatpush1.msra.mxu0 0.0
  %13186 = vmatprep.subr.mxu0 0.0
  %13187 = vmatpush1.msra.mxu0 0.0
  %13188 = vmatprep.subr.mxu0 0.0
  %13189 = vmatpush1.msra.mxu0 0.0
  %13190 = vmatprep.mubr.f32.mxu0 %v13102
  %13191 = vmatmul.mubr.f32.gmra.mrb[0].mxu0 %v13066
  %v13192 = vpop.f32.mrb[0].mxu0
  %v13193 = vadd.f32 %v13064, %v13192
  %v13194 = vpop.f32.mrb[0].mxu0
  %13195 = vmatprep.mubr.f32.mxu0 %v13104
  %13196 = vmatmul.mubr.f32.gmra.mrb[0].mxu0 %v13068
  %v13197 = vpop.f32.mrb[0].mxu0
  %v13198 = vadd.f32 %v13064, %v13197
  %v13199 = vpop.f32.mrb[0].mxu0
  %13200 = vmatprep.mubr.f32.mxu0 %v13106
  %13201 = vmatmul.mubr.f32.gmra.mrb[0].mxu0 %v13070
  %v13202 = vpop.f32.mrb[0].mxu0
  %v13203 = vadd.f32 %v13064, %v13202
  %v13204 = vpop.f32.mrb[0].mxu0
  %13205 = vmatprep.mubr.f32.mxu0 %v13108
  %13206 = vmatmul.mubr.f32.gmra.mrb[0].mxu0 %v13072
  %v13207 = vpop.f32.mrb[0].mxu0
  %v13208 = vadd.f32 %v13064, %v13207
  %v13209 = vpop.f32.mrb[0].mxu0
  %13210 = vmatprep.mubr.f32.mxu0 %v13110
  %13211 = vmatmul.mubr.f32.gmra.mrb[0].mxu0 %v13074
  %v13212 = vpop.f32.mrb[0].mxu0
  %v13213 = vadd.f32 %v13064, %v13212
  %v13214 = vpop.f32.mrb[0].mxu0
  %13215 = vmatprep.mubr.f32.mxu0 %v13112
  %13216 = vmatmul.mubr.f32.gmra.mrb[0].mxu0 %v13076
  %v13217 = vpop.f32.mrb[0].mxu0
  %v13218 = vadd.f32 %v13064, %v13217
  %v13219 = vpop.f32.mrb[0].mxu0
  %13220 = vmatprep.mubr.f32.mxu0 %v13114
  %13221 = vmatmul.mubr.f32.gmra.mrb[0].mxu0 %v13078
  %v13222 = vpop.f32.mrb[0].mxu0
  %v13223 = vadd.f32 %v13064, %v13222
  %v13224 = vpop.f32.mrb[0].mxu0
  %13225 = vmatprep.mubr.f32.mxu0 %v13116
  %13226 = vmatmul.mubr.f32.gmra.mrb[0].mxu0 %v13080
  %v13227 = vpop.f32.mrb[0].mxu0
  %v13228 = vadd.f32 %v13064, %v13227
  %v13229 = vpop.f32.mrb[0].mxu0
  %13230 = vmatprep.mubr.f32.mxu0 %v13118
  %13231 = vmatmul.mubr.f32.gmra.mrb[0].mxu0 %v13082
  %v13232 = vpop.f32.mrb[0].mxu0
  %v13233 = vadd.f32 %v13064, %v13232
  %v13234 = vpop.f32.mrb[0].mxu0
  %13235 = vmatprep.mubr.f32.mxu0 %v13120
  %13236 = vmatmul.mubr.f32.gmra.mrb[0].mxu0 %v13084
  %v13237 = vpop.f32.mrb[0].mxu0
  %v13238 = vadd.f32 %v13064, %v13237
  %v13239 = vpop.f32.mrb[0].mxu0
  %13240 = vmatprep.mubr.f32.mxu0 %v13122
  %13241 = vmatmul.mubr.f32.gmra.mrb[0].mxu0 %v13086
  %v13242 = vpop.f32.mrb[0].mxu0
  %v13243 = vadd.f32 %v13064, %v13242
  %v13244 = vpop.f32.mrb[0].mxu0
  %13245 = vmatprep.mubr.f32.mxu0 %v13124
  %13246 = vmatmul.mubr.f32.gmra.mrb[0].mxu0 %v13088
  %v13247 = vpop.f32.mrb[0].mxu0
  %v13248 = vadd.f32 %v13064, %v13247
  %v13249 = vpop.f32.mrb[0].mxu0
  %13250 = vdwg.mxu0
  %v13251 = vmax.f32 %v13193, 0.0
  %v13252 = vmax.f32 %v13198, 0.0
  %v13253 = vmax.f32 %v13203, 0.0
  %v13254 = vmax.f32 %v13208, 0.0
  %v13255 = vmax.f32 %v13213, 0.0
  %v13256 = vmax.f32 %v13218, 0.0
  %v13257 = vmax.f32 %v13223, 0.0
  %v13258 = vmax.f32 %v13228, 0.0
  %v13259 = vmax.f32 %v13233, 0.0
  %v13260 = vmax.f32 %v13238, 0.0
  %v13261 = vmax.f32 %v13243, 0.0
  %v13262 = vmax.f32 %v13248, 0.0
  %v13275 = vcombine.high %v13251, %v13251
  %v13276 = vcombine.high %v13252, %v13252
  %v13277 = vcombine.high %v13253, %v13253
  %v13278 = vcombine.high %v13254, %v13254
  %v13279 = vcombine.high %v13255, %v13255
  %v13280 = vcombine.high %v13256, %v13256
  %v13281 = vcombine.high %v13257, %v13257
  %v13282 = vcombine.high %v13258, %v13258
  %v13283 = vcombine.high %v13259, %v13259
  %v13284 = vcombine.high %v13260, %v13260
  %v13285 = vcombine.high %v13261, %v13261
  %v13286 = vcombine.high %v13262, %v13262
  %v13287 = vcombine.low %v13251, %v13275
  %v13288 = vcombine.low %v13276, %v13253
  %v13289 = vcombine.low %v13254, %v13278
  %v13290 = vcombine.low %v13279, %v13256
  %v13291 = vcombine.low %v13257, %v13281
  %v13292 = vcombine.low %v13282, %v13259
  %v13293 = vcombine.low %v13260, %v13284
  %v13294 = vcombine.low %v13285, %v13262
  %v13303 = vrot.slane %v13287, 1
  %v13304 = vrot.slane %v13252, 1
  %v13305 = vsel %vm560, %v13303, %v13304
  %v13306 = vrot.slane %v13288, 1
  %v13307 = vrot.slane %v13277, 1
  %v13308 = vsel %vm560, %v13306, %v13307
  %v13309 = vrot.slane %v13289, 1
  %v13310 = vrot.slane %v13255, 1
  %v13311 = vsel %vm560, %v13309, %v13310
  %v13312 = vrot.slane %v13290, 1
  %v13313 = vrot.slane %v13280, 1
  %v13314 = vsel %vm560, %v13312, %v13313
  %v13315 = vrot.slane %v13291, 1
  %v13316 = vrot.slane %v13258, 1
  %v13317 = vsel %vm560, %v13315, %v13316
  %v13318 = vrot.slane %v13292, 1
  %v13319 = vrot.slane %v13283, 1
  %v13320 = vsel %vm560, %v13318, %v13319
  %v13321 = vrot.slane %v13293, 1
  %v13322 = vrot.slane %v13261, 1
  %v13323 = vsel %vm560, %v13321, %v13322
  %v13324 = vrot.slane %v13294, 1
  %v13325 = vrot.slane %v13286, 1
  %v13326 = vsel %vm560, %v13324, %v13325
  %13327 = vrot.lane.b32.xlu0 %v13305, 16
  %v13328 = vpop.permute.xlu0 %13327
  %13329 = vrot.lane.b32.xlu0 %v13308, 16
  %v13330 = vpop.permute.xlu0 %13329
  %13331 = vrot.lane.b32.xlu0 %v13311, 16
  %v13332 = vpop.permute.xlu0 %13331
  %13333 = vrot.lane.b32.xlu0 %v13314, 16
  %v13334 = vpop.permute.xlu0 %13333
  %13335 = vrot.lane.b32.xlu0 %v13317, 16
  %v13336 = vpop.permute.xlu0 %13335
  %13337 = vrot.lane.b32.xlu0 %v13320, 16
  %v13338 = vpop.permute.xlu0 %13337
  %13339 = vrot.lane.b32.xlu0 %v13323, 16
  %v13340 = vpop.permute.xlu0 %13339
  %13341 = vrot.lane.b32.xlu0 %v13326, 16
  %v13342 = vpop.permute.xlu0 %13341
  %v13351 = vrot.slane %v13287, 2
  %v13352 = vrot.slane %v13252, 2
  %v13353 = vsel %vm5946, %v13351, %v13352
  %v13354 = vrot.slane %v13288, 2
  %v13355 = vrot.slane %v13277, 2
  %v13356 = vsel %vm5946, %v13354, %v13355
  %v13357 = vrot.slane %v13289, 2
  %v13358 = vrot.slane %v13255, 2
  %v13359 = vsel %vm5946, %v13357, %v13358
  %v13360 = vrot.slane %v13290, 2
  %v13361 = vrot.slane %v13280, 2
  %v13362 = vsel %vm5946, %v13360, %v13361
  %v13363 = vrot.slane %v13291, 2
  %v13364 = vrot.slane %v13258, 2
  %v13365 = vsel %vm5946, %v13363, %v13364
  %v13366 = vrot.slane %v13292, 2
  %v13367 = vrot.slane %v13283, 2
  %v13368 = vsel %vm5946, %v13366, %v13367
  %v13369 = vrot.slane %v13293, 2
  %v13370 = vrot.slane %v13261, 2
  %v13371 = vsel %vm5946, %v13369, %v13370
  %v13372 = vrot.slane %v13294, 2
  %v13373 = vrot.slane %v13286, 2
  %v13374 = vsel %vm5946, %v13372, %v13373
  %13375 = vrot.lane.b32.xlu0 %v13353, 32
  %v13376 = vpop.permute.xlu0 %13375
  %13377 = vrot.lane.b32.xlu0 %v13356, 32
  %v13378 = vpop.permute.xlu0 %13377
  %13379 = vrot.lane.b32.xlu0 %v13359, 32
  %v13380 = vpop.permute.xlu0 %13379
  %13381 = vrot.lane.b32.xlu0 %v13362, 32
  %v13382 = vpop.permute.xlu0 %13381
  %13383 = vrot.lane.b32.xlu0 %v13365, 32
  %v13384 = vpop.permute.xlu0 %13383
  %13385 = vrot.lane.b32.xlu0 %v13368, 32
  %v13386 = vpop.permute.xlu0 %13385
  %13387 = vrot.lane.b32.xlu0 %v13371, 32
  %v13388 = vpop.permute.xlu0 %13387
  %13389 = vrot.lane.b32.xlu0 %v13374, 32
  %v13390 = vpop.permute.xlu0 %13389
  %v13399 = vrot.slane %v13287, 3
  %v13400 = vrot.slane %v13252, 3
  %v13401 = vsel %vm7966, %v13399, %v13400
  %v13402 = vrot.slane %v13288, 3
  %v13403 = vrot.slane %v13277, 3
  %v13404 = vsel %vm7966, %v13402, %v13403
  %v13405 = vrot.slane %v13289, 3
  %v13406 = vrot.slane %v13255, 3
  %v13407 = vsel %vm7966, %v13405, %v13406
  %v13408 = vrot.slane %v13290, 3
  %v13409 = vrot.slane %v13280, 3
  %v13410 = vsel %vm7966, %v13408, %v13409
  %v13411 = vrot.slane %v13291, 3
  %v13412 = vrot.slane %v13258, 3
  %v13413 = vsel %vm7966, %v13411, %v13412
  %v13414 = vrot.slane %v13292, 3
  %v13415 = vrot.slane %v13283, 3
  %v13416 = vsel %vm7966, %v13414, %v13415
  %v13417 = vrot.slane %v13293, 3
  %v13418 = vrot.slane %v13261, 3
  %v13419 = vsel %vm7966, %v13417, %v13418
  %v13420 = vrot.slane %v13294, 3
  %v13421 = vrot.slane %v13286, 3
  %v13422 = vsel %vm7966, %v13420, %v13421
  %13423 = vrot.lane.b32.xlu0 %v13401, 48
  %v13424 = vpop.permute.xlu0 %13423
  %13425 = vrot.lane.b32.xlu0 %v13404, 48
  %v13426 = vpop.permute.xlu0 %13425
  %13427 = vrot.lane.b32.xlu0 %v13407, 48
  %v13428 = vpop.permute.xlu0 %13427
  %13429 = vrot.lane.b32.xlu0 %v13410, 48
  %v13430 = vpop.permute.xlu0 %13429
  %13431 = vrot.lane.b32.xlu0 %v13413, 48
  %v13432 = vpop.permute.xlu0 %13431
  %13433 = vrot.lane.b32.xlu0 %v13416, 48
  %v13434 = vpop.permute.xlu0 %13433
  %13435 = vrot.lane.b32.xlu0 %v13419, 48
  %v13436 = vpop.permute.xlu0 %13435
  %13437 = vrot.lane.b32.xlu0 %v13422, 48
  %v13438 = vpop.permute.xlu0 %13437
  %v13447 = vcombine.low %v13275, %v13252
  %v13448 = vcombine.low %v13253, %v13277
  %v13449 = vcombine.low %v13278, %v13255
  %v13450 = vcombine.low %v13256, %v13280
  %v13451 = vcombine.low %v13281, %v13258
  %v13452 = vcombine.low %v13259, %v13283
  %v13453 = vcombine.low %v13284, %v13261
  %v13454 = vcombine.low %v13262, %v13286
  %13455 = vrot.lane.b32.xlu0 %v13447, 64
  %v13456 = vpop.permute.xlu0 %13455
  %13457 = vrot.lane.b32.xlu0 %v13448, 64
  %v13458 = vpop.permute.xlu0 %13457
  %13459 = vrot.lane.b32.xlu0 %v13449, 64
  %v13460 = vpop.permute.xlu0 %13459
  %13461 = vrot.lane.b32.xlu0 %v13450, 64
  %v13462 = vpop.permute.xlu0 %13461
  %13463 = vrot.lane.b32.xlu0 %v13451, 64
  %v13464 = vpop.permute.xlu0 %13463
  %13465 = vrot.lane.b32.xlu0 %v13452, 64
  %v13466 = vpop.permute.xlu0 %13465
  %13467 = vrot.lane.b32.xlu0 %v13453, 64
  %v13468 = vpop.permute.xlu0 %13467
  %13469 = vrot.lane.b32.xlu0 %v13454, 64
  %v13470 = vpop.permute.xlu0 %13469
  %v13479 = vsel %vm278, %v13287, %v13328
  %v13480 = vsel %vm278, %v13288, %v13330
  %v13481 = vsel %vm278, %v13289, %v13332
  %v13482 = vsel %vm278, %v13290, %v13334
  %v13483 = vsel %vm278, %v13291, %v13336
  %v13484 = vsel %vm278, %v13292, %v13338
  %v13485 = vsel %vm278, %v13293, %v13340
  %v13486 = vsel %vm278, %v13294, %v13342
  %v13487 = vsel %vm59, %v13479, %v13376
  %v13488 = vsel %vm59, %v13480, %v13378
  %v13489 = vsel %vm59, %v13481, %v13380
  %v13490 = vsel %vm59, %v13482, %v13382
  %v13491 = vsel %vm59, %v13483, %v13384
  %v13492 = vsel %vm59, %v13484, %v13386
  %v13493 = vsel %vm59, %v13485, %v13388
  %v13494 = vsel %vm59, %v13486, %v13390
  %v13495 = vsel %vm7687, %v13487, %v13424
  %v13496 = vsel %vm7687, %v13488, %v13426
  %v13497 = vsel %vm7687, %v13489, %v13428
  %v13498 = vsel %vm7687, %v13490, %v13430
  %v13499 = vsel %vm7687, %v13491, %v13432
  %v13500 = vsel %vm7687, %v13492, %v13434
  %v13501 = vsel %vm7687, %v13493, %v13436
  %v13502 = vsel %vm7687, %v13494, %v13438
  %v13503 = vsel %vm2193, %v13495, %v13456
  %v13504 = vsel %vm2193, %v13496, %v13458
  %v13505 = vsel %vm2193, %v13497, %v13460
  %v13506 = vsel %vm2193, %v13498, %v13462
  %v13507 = vsel %vm2193, %v13499, %v13464
  %v13508 = vsel %vm2193, %v13500, %v13466
  %v13509 = vsel %vm2193, %v13501, %v13468
  %v13510 = vsel %vm2193, %v13502, %v13470
  %s13511 = scalar_lea.vmem %s3, 320
  %v13512 = vld [vmem:[%s13511] sm:$0xff]
  %v13513 = vld [vmem:[%s13511 + $0x8] sm:$0xff]
  %v13514 = vld [vmem:[%s13511 + $0x10] sm:$0xff]
  %v13515 = vld [vmem:[%s13511 + $0x18] sm:$0xff]
  %v13516 = vld [vmem:[%s13511 + $0x20] sm:$0xff]
  %v13517 = vld [vmem:[%s13511 + $0x28] sm:$0xff]
  %v13518 = vld [vmem:[%s13511 + $0x30] sm:$0xff]
  %v13519 = vld [vmem:[%s13511 + $0x38] sm:$0xff]
  %v13520 = vld [vmem:[%s13511 + $0x40] sm:$0xff]
  %v13521 = vld [vmem:[%s13511 + $0x48] sm:$0xff]
  %s13522 = scalar_lea.vmem %s4, 4
  %v13523 = vld [vmem:[%s13522] sm:$0x1]
  %v13525 = vlaneseq
  %v13526 = vshrl.u32 %v13525, 7
  %v13527 = vsub.s32 0, %v13526
  %v13528 = vrot.slane %v13523, %v13527
  %vm13530 = vcmask 654336
  %v13532 = vsel %vm13530, %v13503, 0
  %v13535 = vsel %vm13530, %v13504, 0
  %v13538 = vsel %vm13530, %v13505, 0
  %v13541 = vsel %vm13530, %v13506, 0
  %v13544 = vsel %vm13530, %v13507, 0
  %v13547 = vsel %vm13530, %v13508, 0
  %v13550 = vsel %vm13530, %v13509, 0
  %v13553 = vsel %vm13530, %v13510, 0
  %13555 = vmatprep.subr.mxu0 0.0
  %13556 = vmatpush1.msra.mxu0 %v13512
  %13557 = vmatprep.subr.mxu0 0.0
  %13558 = vmatpush1.msra.mxu0 %v13513
  %13559 = vmatprep.subr.mxu0 0.0
  %13560 = vmatpush1.msra.mxu0 %v13514
  %13561 = vmatprep.subr.mxu0 0.0
  %13562 = vmatpush1.msra.mxu0 %v13515
  %13563 = vmatprep.subr.mxu0 0.0
  %13564 = vmatpush1.msra.mxu0 %v13516
  %13565 = vmatprep.subr.mxu0 0.0
  %13566 = vmatpush1.msra.mxu0 %v13517
  %13567 = vmatprep.subr.mxu0 0.0
  %13568 = vmatpush1.msra.mxu0 %v13518
  %13569 = vmatprep.subr.mxu0 0.0
  %13570 = vmatpush1.msra.mxu0 %v13519
  %13571 = vmatprep.subr.mxu0 0.0
  %13572 = vmatpush1.msra.mxu0 %v13520
  %13573 = vmatprep.subr.mxu0 0.0
  %13574 = vmatpush1.msra.mxu0 %v13521
  %13575 = vmatprep.subr.mxu0 0.0
  %13576 = vmatpush1.msra.mxu0 0.0
  %13577 = vmatprep.subr.mxu0 0.0
  %13578 = vmatpush1.msra.mxu0 0.0
  %13579 = vmatprep.subr.mxu0 0.0
  %13580 = vmatpush1.msra.mxu0 0.0
  %13581 = vmatprep.subr.mxu0 0.0
  %13582 = vmatpush1.msra.mxu0 0.0
  %13583 = vmatprep.subr.mxu0 0.0
  %13584 = vmatpush1.msra.mxu0 0.0
  %13585 = vmatprep.subr.mxu0 0.0
  %13586 = vmatpush1.msra.mxu0 0.0
  %13587 = vmatprep.subr.mxu0 0.0
  %13588 = vmatpush1.msra.mxu0 0.0
  %13589 = vmatprep.subr.mxu0 0.0
  %13590 = vmatpush1.msra.mxu0 0.0
  %13591 = vmatprep.subr.mxu0 0.0
  %13592 = vmatpush1.msra.mxu0 0.0
  %13593 = vmatprep.subr.mxu0 0.0
  %13594 = vmatpush1.msra.mxu0 0.0
  %13595 = vmatprep.subr.mxu0 0.0
  %13596 = vmatpush1.msra.mxu0 0.0
  %13597 = vmatprep.subr.mxu0 0.0
  %13598 = vmatpush1.msra.mxu0 0.0
  %13599 = vmatprep.subr.mxu0 0.0
  %13600 = vmatpush1.msra.mxu0 0.0
  %13601 = vmatprep.subr.mxu0 0.0
  %13602 = vmatpush1.msra.mxu0 0.0
  %13603 = vmatprep.subr.mxu0 0.0
  %13604 = vmatpush1.msra.mxu0 0.0
  %13605 = vmatprep.subr.mxu0 0.0
  %13606 = vmatpush1.msra.mxu0 0.0
  %13607 = vmatprep.subr.mxu0 0.0
  %13608 = vmatpush1.msra.mxu0 0.0
  %13609 = vmatprep.subr.mxu0 0.0
  %13610 = vmatpush1.msra.mxu0 0.0
  %13611 = vmatprep.subr.mxu0 0.0
  %13612 = vmatpush1.msra.mxu0 0.0
  %13613 = vmatprep.subr.mxu0 0.0
  %13614 = vmatpush1.msra.mxu0 0.0
  %13615 = vmatprep.subr.mxu0 0.0
  %13616 = vmatpush1.msra.mxu0 0.0
  %13617 = vmatprep.subr.mxu0 0.0
  %13618 = vmatpush1.msra.mxu0 0.0
  %13619 = vmatprep.mubr.f32.mxu0 0.0
  %13620 = vmatmul.mubr.f32.gmra.mrb[0].mxu0 %v13532
  %v13621 = vpop.f32.mrb[0].mxu0
  %v13622 = vadd.f32 %v13528, %v13621
  %v13623 = vpop.f32.mrb[0].mxu0
  %13624 = vmatprep.mubr.f32.mxu0 0.0
  %13625 = vmatmul.mubr.f32.gmra.mrb[0].mxu0 %v13535
  %v13626 = vpop.f32.mrb[0].mxu0
  %v13627 = vadd.f32 %v13528, %v13626
  %v13628 = vpop.f32.mrb[0].mxu0
  %13629 = vmatprep.mubr.f32.mxu0 0.0
  %13630 = vmatmul.mubr.f32.gmra.mrb[0].mxu0 %v13538
  %v13631 = vpop.f32.mrb[0].mxu0
  %v13632 = vadd.f32 %v13528, %v13631
  %v13633 = vpop.f32.mrb[0].mxu0
  %13634 = vmatprep.mubr.f32.mxu0 0.0
  %13635 = vmatmul.mubr.f32.gmra.mrb[0].mxu0 %v13541
  %v13636 = vpop.f32.mrb[0].mxu0
  %v13637 = vadd.f32 %v13528, %v13636
  %v13638 = vpop.f32.mrb[0].mxu0
  %13639 = vmatprep.mubr.f32.mxu0 0.0
  %13640 = vmatmul.mubr.f32.gmra.mrb[0].mxu0 %v13544
  %v13641 = vpop.f32.mrb[0].mxu0
  %v13642 = vadd.f32 %v13528, %v13641
  %v13643 = vpop.f32.mrb[0].mxu0
  %13644 = vmatprep.mubr.f32.mxu0 0.0
  %13645 = vmatmul.mubr.f32.gmra.mrb[0].mxu0 %v13547
  %v13646 = vpop.f32.mrb[0].mxu0
  %v13647 = vadd.f32 %v13528, %v13646
  %v13648 = vpop.f32.mrb[0].mxu0
  %13649 = vmatprep.mubr.f32.mxu0 0.0
  %13650 = vmatmul.mubr.f32.gmra.mrb[0].mxu0 %v13550
  %v13651 = vpop.f32.mrb[0].mxu0
  %v13652 = vadd.f32 %v13528, %v13651
  %v13653 = vpop.f32.mrb[0].mxu0
  %13654 = vmatprep.mubr.f32.mxu0 0.0
  %13655 = vmatmul.mubr.f32.gmra.mrb[0].mxu0 %v13553
  %v13656 = vpop.f32.mrb[0].mxu0
  %v13657 = vadd.f32 %v13528, %v13656
  %v13658 = vpop.f32.mrb[0].mxu0
  %13659 = vdwg.mxu0
  %v13660 = vmax.f32 %v13622, 0.0
  %v13661 = vmax.f32 %v13627, 0.0
  %v13662 = vmax.f32 %v13632, 0.0
  %v13663 = vmax.f32 %v13637, 0.0
  %v13664 = vmax.f32 %v13642, 0.0
  %v13665 = vmax.f32 %v13647, 0.0
  %v13666 = vmax.f32 %v13652, 0.0
  %v13667 = vmax.f32 %v13657, 0.0
  %v13668 = vsel %vm278, %v13660, -inf
  %v13669 = vrot.slane %v13668, 4
  %v13670 = vmax.f32 %v13668, %v13669
  %v13671 = vrot.slane %v13670, 2
  %v13672 = vmax.f32 %v13670, %v13671
  %v13673 = vrot.slane %v13672, 1
  %v13674 = vmax.f32 %v13672, %v13673
  %v13675 = vsel %vm278, %v13661, -inf
  %v13676 = vrot.slane %v13675, 4
  %v13677 = vmax.f32 %v13675, %v13676
  %v13678 = vrot.slane %v13677, 2
  %v13679 = vmax.f32 %v13677, %v13678
  %v13680 = vrot.slane %v13679, 1
  %v13681 = vmax.f32 %v13679, %v13680
  %v13682 = vsel %vm278, %v13662, -inf
  %v13683 = vrot.slane %v13682, 4
  %v13684 = vmax.f32 %v13682, %v13683
  %v13685 = vrot.slane %v13684, 2
  %v13686 = vmax.f32 %v13684, %v13685
  %v13687 = vrot.slane %v13686, 1
  %v13688 = vmax.f32 %v13686, %v13687
  %v13689 = vsel %vm278, %v13663, -inf
  %v13690 = vrot.slane %v13689, 4
  %v13691 = vmax.f32 %v13689, %v13690
  %v13692 = vrot.slane %v13691, 2
  %v13693 = vmax.f32 %v13691, %v13692
  %v13694 = vrot.slane %v13693, 1
  %v13695 = vmax.f32 %v13693, %v13694
  %v13696 = vsel %vm278, %v13664, -inf
  %v13697 = vrot.slane %v13696, 4
  %v13698 = vmax.f32 %v13696, %v13697
  %v13699 = vrot.slane %v13698, 2
  %v13700 = vmax.f32 %v13698, %v13699
  %v13701 = vrot.slane %v13700, 1
  %v13702 = vmax.f32 %v13700, %v13701
  %v13703 = vsel %vm278, %v13665, -inf
  %v13704 = vrot.slane %v13703, 4
  %v13705 = vmax.f32 %v13703, %v13704
  %v13706 = vrot.slane %v13705, 2
  %v13707 = vmax.f32 %v13705, %v13706
  %v13708 = vrot.slane %v13707, 1
  %v13709 = vmax.f32 %v13707, %v13708
  %v13710 = vsel %vm278, %v13666, -inf
  %v13711 = vrot.slane %v13710, 4
  %v13712 = vmax.f32 %v13710, %v13711
  %v13713 = vrot.slane %v13712, 2
  %v13714 = vmax.f32 %v13712, %v13713
  %v13715 = vrot.slane %v13714, 1
  %v13716 = vmax.f32 %v13714, %v13715
  %v13717 = vsel %vm278, %v13667, -inf
  %v13718 = vrot.slane %v13717, 4
  %v13719 = vmax.f32 %v13717, %v13718
  %v13720 = vrot.slane %v13719, 2
  %v13721 = vmax.f32 %v13719, %v13720
  %v13722 = vrot.slane %v13721, 1
  %v13723 = vmax.f32 %v13721, %v13722
  %vm13732 = vcmask 1041409
  %v13733 = vsel %vm13732, %v505, %v496
  %vm13734 = vcmask 1042434
  %v13735 = vsel %vm13734, %v514, %v13733
  %vm13736 = vcmask 1043459
  %v13737 = vsel %vm13736, %v523, %v13735
  %vm13738 = vcmask 1044484
  %v13739 = vsel %vm13738, %v532, %v13737
  %vm13740 = vcmask 1045509
  %v13741 = vsel %vm13740, %v541, %v13739
  %vm13742 = vcmask 1046534
  %v13743 = vsel %vm13742, %v550, %v13741
  %vm13744 = vcmask 1047559
  %v13745 = vsel %vm13744, %v559, %v13743
  %v13755 = vsel %vm13732, %v5891, %v5882
  %v13756 = vsel %vm13734, %v5900, %v13755
  %v13757 = vsel %vm13736, %v5909, %v13756
  %v13758 = vsel %vm13738, %v5918, %v13757
  %v13759 = vsel %vm13740, %v5927, %v13758
  %v13760 = vsel %vm13742, %v5936, %v13759
  %v13761 = vsel %vm13744, %v5945, %v13760
  %13762 = vrot.lane.b32.xlu0 %v13761, 16
  %v13763 = vpop.permute.xlu0 %13762
  %v13773 = vsel %vm13732, %v7911, %v7902
  %v13774 = vsel %vm13734, %v7920, %v13773
  %v13775 = vsel %vm13736, %v7929, %v13774
  %v13776 = vsel %vm13738, %v7938, %v13775
  %v13777 = vsel %vm13740, %v7947, %v13776
  %v13778 = vsel %vm13742, %v7956, %v13777
  %v13779 = vsel %vm13744, %v7965, %v13778
  %13780 = vrot.lane.b32.xlu0 %v13779, 32
  %v13781 = vpop.permute.xlu0 %13780
  %v13791 = vsel %vm13732, %v12933, %v12924
  %v13792 = vsel %vm13734, %v12942, %v13791
  %v13793 = vsel %vm13736, %v12951, %v13792
  %v13794 = vsel %vm13738, %v12960, %v13793
  %v13795 = vsel %vm13740, %v12969, %v13794
  %v13796 = vsel %vm13742, %v12978, %v13795
  %v13797 = vsel %vm13744, %v12987, %v13796
  %13798 = vrot.lane.b32.xlu0 %v13797, 48
  %v13799 = vpop.permute.xlu0 %13798
  %v13809 = vsel %vm13732, %v13681, %v13674
  %v13810 = vsel %vm13734, %v13688, %v13809
  %v13811 = vsel %vm13736, %v13695, %v13810
  %v13812 = vsel %vm13738, %v13702, %v13811
  %v13813 = vsel %vm13740, %v13709, %v13812
  %v13814 = vsel %vm13742, %v13716, %v13813
  %v13815 = vsel %vm13744, %v13723, %v13814
  %13816 = vrot.lane.b32.xlu0 %v13815, 64
  %v13817 = vpop.permute.xlu0 %13816
  %v13819 = vsel %vm278, %v13745, %v13763
  %v13820 = vsel %vm59, %v13819, %v13781
  %v13821 = vsel %vm7687, %v13820, %v13799
  %v13822 = vsel %vm2193, %v13821, %v13817
  %v13823 = vld [vmem:[%s5] sm:$0xff]
  %v13824 = vld [vmem:[%s5 + $0x8] sm:$0xff]
  %v13825 = vld [vmem:[%s5 + $0x10] sm:$0xff]
  %v13826 = vld [vmem:[%s5 + $0x18] sm:$0xff]
  %v13827 = vld [vmem:[%s5 + $0x20] sm:$0xff]
  %v13828 = vld [vmem:[%s5 + $0x28] sm:$0xff]
  %v13829 = vld [vmem:[%s5 + $0x30] sm:$0xff]
  %v13830 = vld [vmem:[%s5 + $0x38] sm:$0xff]
  %v13831 = vld [vmem:[%s5 + $0x40] sm:$0xff]
  %v13832 = vld [vmem:[%s5 + $0x48] sm:$0xff]
  %v13833 = vld [vmem:[%s6] sm:$0x1]
  %v13835 = vlaneseq
  %v13836 = vshrl.u32 %v13835, 7
  %v13837 = vsub.s32 0, %v13836
  %v13838 = vrot.slane %v13833, %v13837
  %v13841 = vsel %vm13530, %v13822, 0
  %13843 = vmatprep.subr.mxu0 0.0
  %13844 = vmatpush1.msra.mxu0 %v13823
  %13845 = vmatprep.subr.mxu0 0.0
  %13846 = vmatpush1.msra.mxu0 %v13824
  %13847 = vmatprep.subr.mxu0 0.0
  %13848 = vmatpush1.msra.mxu0 %v13825
  %13849 = vmatprep.subr.mxu0 0.0
  %13850 = vmatpush1.msra.mxu0 %v13826
  %13851 = vmatprep.subr.mxu0 0.0
  %13852 = vmatpush1.msra.mxu0 %v13827
  %13853 = vmatprep.subr.mxu0 0.0
  %13854 = vmatpush1.msra.mxu0 %v13828
  %13855 = vmatprep.subr.mxu0 0.0
  %13856 = vmatpush1.msra.mxu0 %v13829
  %13857 = vmatprep.subr.mxu0 0.0
  %13858 = vmatpush1.msra.mxu0 %v13830
  %13859 = vmatprep.subr.mxu0 0.0
  %13860 = vmatpush1.msra.mxu0 %v13831
  %13861 = vmatprep.subr.mxu0 0.0
  %13862 = vmatpush1.msra.mxu0 %v13832
  %13863 = vmatprep.subr.mxu0 0.0
  %13864 = vmatpush1.msra.mxu0 0.0
  %13865 = vmatprep.subr.mxu0 0.0
  %13866 = vmatpush1.msra.mxu0 0.0
  %13867 = vmatprep.subr.mxu0 0.0
  %13868 = vmatpush1.msra.mxu0 0.0
  %13869 = vmatprep.subr.mxu0 0.0
  %13870 = vmatpush1.msra.mxu0 0.0
  %13871 = vmatprep.subr.mxu0 0.0
  %13872 = vmatpush1.msra.mxu0 0.0
  %13873 = vmatprep.subr.mxu0 0.0
  %13874 = vmatpush1.msra.mxu0 0.0
  %13875 = vmatprep.subr.mxu0 0.0
  %13876 = vmatpush1.msra.mxu0 0.0
  %13877 = vmatprep.subr.mxu0 0.0
  %13878 = vmatpush1.msra.mxu0 0.0
  %13879 = vmatprep.subr.mxu0 0.0
  %13880 = vmatpush1.msra.mxu0 0.0
  %13881 = vmatprep.subr.mxu0 0.0
  %13882 = vmatpush1.msra.mxu0 0.0
  %13883 = vmatprep.subr.mxu0 0.0
  %13884 = vmatpush1.msra.mxu0 0.0
  %13885 = vmatprep.subr.mxu0 0.0
  %13886 = vmatpush1.msra.mxu0 0.0
  %13887 = vmatprep.subr.mxu0 0.0
  %13888 = vmatpush1.msra.mxu0 0.0
  %13889 = vmatprep.subr.mxu0 0.0
  %13890 = vmatpush1.msra.mxu0 0.0
  %13891 = vmatprep.subr.mxu0 0.0
  %13892 = vmatpush1.msra.mxu0 0.0
  %13893 = vmatprep.subr.mxu0 0.0
  %13894 = vmatpush1.msra.mxu0 0.0
  %13895 = vmatprep.subr.mxu0 0.0
  %13896 = vmatpush1.msra.mxu0 0.0
  %13897 = vmatprep.subr.mxu0 0.0
  %13898 = vmatpush1.msra.mxu0 0.0
  %13899 = vmatprep.subr.mxu0 0.0
  %13900 = vmatpush1.msra.mxu0 0.0
  %13901 = vmatprep.subr.mxu0 0.0
  %13902 = vmatpush1.msra.mxu0 0.0
  %13903 = vmatprep.subr.mxu0 0.0
  %13904 = vmatpush1.msra.mxu0 0.0
  %13905 = vmatprep.subr.mxu0 0.0
  %13906 = vmatpush1.msra.mxu0 0.0
  %13907 = vmatprep.mubr.f32.mxu0 0.0
  %13908 = vmatmul.mubr.f32.gmra.mrb[0].mxu0 %v13841
  %v13909 = vpop.f32.mrb[0].mxu0
  %v13910 = vadd.f32 %v13838, %v13909
  %v13911 = vpop.f32.mrb[0].mxu0
  %13912 = vdwg.mxu0
  %v13913 = vmax.f32 %v13910, 0.0
  %v13914 = vld [vmem:[%s7] sm:$0xff]
  %v13915 = vld [vmem:[%s7 + $0x8] sm:$0xff]
  %v13916 = vld [vmem:[%s7 + $0x10] sm:$0xff]
  %v13917 = vld [vmem:[%s7 + $0x18] sm:$0xff]
  %v13918 = vld [vmem:[%s8] sm:$0x1]
  %v13920 = vlaneseq
  %v13921 = vshrl.u32 %v13920, 7
  %v13922 = vsub.s32 0, %v13921
  %v13923 = vrot.slane %v13918, %v13922
  %v13926 = vsel %vm59, %v13913, 0
  %13928 = vmatprep.subr.mxu0 0.0
  %13929 = vmatpush1.msra.mxu0 %v13914
  %13930 = vmatprep.subr.mxu0 0.0
  %13931 = vmatpush1.msra.mxu0 %v13915
  %13932 = vmatprep.subr.mxu0 0.0
  %13933 = vmatpush1.msra.mxu0 %v13916
  %13934 = vmatprep.subr.mxu0 0.0
  %13935 = vmatpush1.msra.mxu0 %v13917
  %13936 = vmatprep.subr.mxu0 0.0
  %13937 = vmatpush1.msra.mxu0 0.0
  %13938 = vmatprep.subr.mxu0 0.0
  %13939 = vmatpush1.msra.mxu0 0.0
  %13940 = vmatprep.subr.mxu0 0.0
  %13941 = vmatpush1.msra.mxu0 0.0
  %13942 = vmatprep.subr.mxu0 0.0
  %13943 = vmatpush1.msra.mxu0 0.0
  %13944 = vmatprep.subr.mxu0 0.0
  %13945 = vmatpush1.msra.mxu0 0.0
  %13946 = vmatprep.subr.mxu0 0.0
  %13947 = vmatpush1.msra.mxu0 0.0
  %13948 = vmatprep.subr.mxu0 0.0
  %13949 = vmatpush1.msra.mxu0 0.0
  %13950 = vmatprep.subr.mxu0 0.0
  %13951 = vmatpush1.msra.mxu0 0.0
  %13952 = vmatprep.subr.mxu0 0.0
  %13953 = vmatpush1.msra.mxu0 0.0
  %13954 = vmatprep.subr.mxu0 0.0
  %13955 = vmatpush1.msra.mxu0 0.0
  %13956 = vmatprep.subr.mxu0 0.0
  %13957 = vmatpush1.msra.mxu0 0.0
  %13958 = vmatprep.subr.mxu0 0.0
  %13959 = vmatpush1.msra.mxu0 0.0
  %13960 = vmatprep.subr.mxu0 0.0
  %13961 = vmatpush1.msra.mxu0 0.0
  %13962 = vmatprep.subr.mxu0 0.0
  %13963 = vmatpush1.msra.mxu0 0.0
  %13964 = vmatprep.subr.mxu0 0.0
  %13965 = vmatpush1.msra.mxu0 0.0
  %13966 = vmatprep.subr.mxu0 0.0
  %13967 = vmatpush1.msra.mxu0 0.0
  %13968 = vmatprep.subr.mxu0 0.0
  %13969 = vmatpush1.msra.mxu0 0.0
  %13970 = vmatprep.subr.mxu0 0.0
  %13971 = vmatpush1.msra.mxu0 0.0
  %13972 = vmatprep.subr.mxu0 0.0
  %13973 = vmatpush1.msra.mxu0 0.0
  %13974 = vmatprep.subr.mxu0 0.0
  %13975 = vmatpush1.msra.mxu0 0.0
  %13976 = vmatprep.subr.mxu0 0.0
  %13977 = vmatpush1.msra.mxu0 0.0
  %13978 = vmatprep.subr.mxu0 0.0
  %13979 = vmatpush1.msra.mxu0 0.0
  %13980 = vmatprep.subr.mxu0 0.0
  %13981 = vmatpush1.msra.mxu0 0.0
  %13982 = vmatprep.subr.mxu0 0.0
  %13983 = vmatpush1.msra.mxu0 0.0
  %13984 = vmatprep.subr.mxu0 0.0
  %13985 = vmatpush1.msra.mxu0 0.0
  %13986 = vmatprep.subr.mxu0 0.0
  %13987 = vmatpush1.msra.mxu0 0.0
  %13988 = vmatprep.subr.mxu0 0.0
  %13989 = vmatpush1.msra.mxu0 0.0
  %13990 = vmatprep.subr.mxu0 0.0
  %13991 = vmatpush1.msra.mxu0 0.0
  %13992 = vmatprep.mubr.f32.mxu0 0.0
  %13993 = vmatmul.mubr.f32.gmra.mrb[0].mxu0 %v13926
  %v13994 = vpop.f32.mrb[0].mxu0
  %v13995 = vadd.f32 %v13923, %v13994
  %v13996 = vpop.f32.mrb[0].mxu0
  %13997 = vdwg.mxu0
  %13998 = vst [vmem:[%s9] sm:$0xff] %v13995
  // Predicated region
  $region38: #{textcnn_forward.1} parent=0 // pred_check
    _
  $region39: #{textcnn_forward.1} parent=0 // pred_check_branch
    %14000 = sbr.rel (0) target = $region41
  $region40: #{textcnn_forward.1} parent=0 // pred_region
    _
  $region41: #{textcnn_forward.1} parent=0 // pred_fallthru
    _
  // Predicated region
  $region42: #{textcnn_forward.1} parent=0 // pred_check
    _
  $region43: #{textcnn_forward.1} parent=0 // pred_check_branch
    %14002 = sbr.rel (0) target = $region45
  $region44: #{textcnn_forward.1} parent=0 // pred_region
    _
  $region45: #{textcnn_forward.1} parent=0 // pred_fallthru
    _

</llo_original>
